<compile_context>
chip_gen: v7x
topology: tpu7x:2x2x1
jax: 0.10.0
libtpu: 0.0.40
codegen_flags: <defaults>
</compile_context>

<pallas_src>
import jax
import jax.numpy as jnp
from jax.experimental import pallas as pl
from jax.experimental.pallas import tpu as pltpu

HIDDEN = 128
NUM_LAYERS = 3
FC_MID = 64
NUM_CLASSES = 8
BN_EPS = 1e-5


# ----------------------------- parameter preparation -----------------------------

def prepare_kernel_params(params):
    """torch-style params -> kernel layout.

    - transpose weights so matmuls are x @ W^T without in-kernel transposes
    - permute the 4H gate columns from torch order (i,f,g,o) to (i,f,o,g) so the three
      sigmoid gates are one contiguous lane slice
    - combine b_ih + b_hh
    - fold BatchNorm1d (eval, running stats) into the first FC layer
    """
    H = HIDDEN
    perm = jnp.concatenate([
        jnp.arange(0, H),           # i
        jnp.arange(H, 2 * H),       # f
        jnp.arange(3 * H, 4 * H),   # o
        jnp.arange(2 * H, 3 * H),   # g
    ])

    flat = []
    for (w_ih, w_hh, b_ih, b_hh) in params["lstm"]:
        flat.append(jnp.transpose(w_ih)[:, perm])          # (D, 4H)
        flat.append(jnp.transpose(w_hh)[:, perm])          # (H, 4H)
        flat.append((b_ih + b_hh)[perm][None, :])          # (1, 4H)

    fc = params["fc"]
    scale = fc["gamma"] * jax.lax.rsqrt(fc["var"] + BN_EPS)         # (64,)
    w1_folded = fc["w1"] * scale[:, None]                           # (64, 128)
    b1_folded = (fc["b1"] - fc["mean"]) * scale + fc["beta"]        # (64,)
    flat.append(jnp.transpose(w1_folded))                           # (128, 64)
    flat.append(b1_folded[None, :])                                 # (1, 64)
    flat.append(jnp.transpose(fc["w2"]))                            # (64, 8)
    flat.append(fc["b2"][None, :])                                  # (1, 8)
    return tuple(flat)


# --------------------------------- fused kernel -----------------------------------

def simple_lstm_forward(x_btd, params):
    """x_btd: (B, T, D) batch-first input. Returns (B, NUM_CLASSES) logits."""
    B, T, D = x_btd.shape
    H = HIDDEN
    BP = max(8, ((B + 7) // 8) * 8)          # pad batch to a full sublane group

    kp = prepare_kernel_params(params)

    # (B,T,D) -> (T,B,D) -> pad batch -> flatten time*batch (layout plumbing in XLA).
    x_tbd = jnp.transpose(x_btd, (1, 0, 2))
    x_pad = jnp.pad(x_tbd, ((0, 0), (0, BP - B), (0, 0)))
    x_flat = jnp.reshape(x_pad, (T * BP, D)).astype(jnp.float32)

    def kernel(x_ref,
               wih0, whh0, b0, wih1, whh1, b1, wih2, whh2, b2,
               fw1, fb1, fw2, fb2,
               out_ref,
               gx_ref, seq_a, seq_b):

        def lstm_layer(x_src_ref, wih_ref, whh_ref, b_ref, seq_out_ref):
            # Hoisted input projection: one matmul for the whole sequence + bias.
            gx_ref[...] = (jnp.dot(x_src_ref[...], wih_ref[...],
                                   preferred_element_type=jnp.float32) + b_ref[...])
            whh = whh_ref[...]                       # resident recurrent weights

            def step(t, carry):
                h, c = carry
                row = pl.multiple_of(t * BP, BP)
                gates = gx_ref[pl.ds(row, BP), :] + jnp.dot(
                    h, whh, preferred_element_type=jnp.float32)      # (BP, 4H)
                # gate order i, f, o (sigmoid) | g (tanh)
                sig = jax.nn.sigmoid(gates[:, :3 * H])
                i_g = sig[:, :H]
                f_g = sig[:, H:2 * H]
                o_g = sig[:, 2 * H:]
                g_g = jnp.tanh(gates[:, 3 * H:])
                c_new = f_g * c + i_g * g_g
                h_new = o_g * jnp.tanh(c_new)
                if seq_out_ref is not None:
                    seq_out_ref[pl.ds(row, BP), :] = h_new
                return h_new, c_new

            z = jnp.zeros((BP, H), jnp.float32)
            h_last, _ = jax.lax.fori_loop(0, T, step, (z, z), unroll=True)
            return h_last

        lstm_layer(x_ref, wih0, whh0, b0, seq_a)
        lstm_layer(seq_a, wih1, whh1, b1, seq_b)
        h_last = lstm_layer(seq_b, wih2, whh2, b2, None)   # only the last h is needed

        # FC head: Linear (BN folded) -> ReLU -> Linear.  Dropout = identity (eval).
        hid = jnp.dot(h_last, fw1[...], preferred_element_type=jnp.float32) + fb1[...]
        hid = jnp.maximum(hid, 0.0)
        out_ref[...] = (jnp.dot(hid, fw2[...], preferred_element_type=jnp.float32)
                        + fb2[...]).astype(out_ref.dtype)

    out = pl.pallas_call(
        kernel,
        out_shape=jax.ShapeDtypeStruct((BP, NUM_CLASSES), jnp.float32),
        scratch_shapes=[
            pltpu.VMEM((T * BP, 4 * H), jnp.float32),   # hoisted gate projections
            pltpu.VMEM((T * BP, H), jnp.float32),       # layer-0 output sequence
            pltpu.VMEM((T * BP, H), jnp.float32),       # layer-1 output sequence
        ],
    )(x_flat, *kp)

    return out[:B]


# --------------------------------- initialization ----------------------------------

def init_params(key, input_size, hidden=HIDDEN, num_layers=NUM_LAYERS):
    """torch-style parameters (torch shapes, torch i,f,g,o gate order)."""
    params = {"lstm": [], "fc": None}
    bound = float(1.0 / jnp.sqrt(hidden))
    for layer in range(num_layers):
        d = input_size if layer == 0 else hidden
        key, k1, k2, k3, k4 = jax.random.split(key, 5)
        w_ih = jax.random.uniform(k1, (4 * hidden, d), jnp.float32, -bound, bound)
        w_hh = jax.random.uniform(k2, (4 * hidden, hidden), jnp.float32, -bound, bound)
        b_ih = jax.random.uniform(k3, (4 * hidden,), jnp.float32, -bound, bound)
        b_hh = jax.random.uniform(k4, (4 * hidden,), jnp.float32, -bound, bound)
        params["lstm"].append((w_ih, w_hh, b_ih, b_hh))

    key, k1, k2, k3, k4, k5, k6, k7, k8 = jax.random.split(key, 9)
    lim1 = float(1.0 / jnp.sqrt(hidden))
    lim2 = float(1.0 / jnp.sqrt(FC_MID))
    params["fc"] = {
        "w1": jax.random.uniform(k1, (FC_MID, hidden), jnp.float32, -lim1, lim1),
        "b1": jax.random.uniform(k2, (FC_MID,), jnp.float32, -lim1, lim1),
        # non-trivial BN stats so the BN-folding path is actually exercised
        "gamma": jax.random.uniform(k3, (FC_MID,), jnp.float32, 0.5, 1.5),
        "beta": jax.random.normal(k4, (FC_MID,), jnp.float32) * 0.1,
        "mean": jax.random.normal(k5, (FC_MID,), jnp.float32) * 0.1,
        "var": jax.random.uniform(k6, (FC_MID,), jnp.float32, 0.5, 1.5),
        "w2": jax.random.uniform(k7, (NUM_CLASSES, FC_MID), jnp.float32, -lim2, lim2),
        "b2": jax.random.uniform(k8, (NUM_CLASSES,), jnp.float32, -lim2, lim2),
    }
    return params


# ----------------------------------- reference -------------------------------------

def reference_forward(x_btd, params):
    """Pure-JAX reference with torch semantics (torch gate order, explicit BN)."""
    B, T, _ = x_btd.shape
    h_in = x_btd
    for (w_ih, w_hh, b_ih, b_hh) in params["lstm"]:
        H = w_hh.shape[1]
        h = jnp.zeros((B, H), jnp.float32)
        c = jnp.zeros((B, H), jnp.float32)
        outs = []
        for t in range(T):
            gates = h_in[:, t, :] @ w_ih.T + h @ w_hh.T + b_ih + b_hh
            i = jax.nn.sigmoid(gates[:, :H])
            f = jax.nn.sigmoid(gates[:, H:2 * H])
            g = jnp.tanh(gates[:, 2 * H:3 * H])
            o = jax.nn.sigmoid(gates[:, 3 * H:])
            c = f * c + i * g
            h = o * jnp.tanh(c)
            outs.append(h)
        h_in = jnp.stack(outs, axis=1)

    x = h_in[:, -1, :]
    fc = params["fc"]
    x = x @ fc["w1"].T + fc["b1"]
    x = (x - fc["mean"]) / jnp.sqrt(fc["var"] + BN_EPS) * fc["gamma"] + fc["beta"]
    x = jnp.maximum(x, 0.0)            # Dropout(0.2) is identity in eval
    return x @ fc["w2"].T + fc["b2"]


# -------------------------------------- main ----------------------------------------

if __name__ == "__main__":
    INPUT_SIZE = 16
    BATCH = 2
    SEQ = 8

    key = jax.random.PRNGKey(0)
    key, xk = jax.random.split(key)
    x = jax.random.normal(xk, (BATCH, SEQ, INPUT_SIZE), jnp.float32)

    params = init_params(key, INPUT_SIZE)

    fwd = jax.jit(simple_lstm_forward)
    out = fwd(x, params)
    out = jax.block_until_ready(out)

    ref = reference_forward(x, params)
    assert out.shape == (BATCH, NUM_CLASSES), out.shape
    assert jnp.allclose(out, ref, atol=1e-3, rtol=1e-3), (out, ref)

    print("KERNEL_OK")
</pallas_src>

<mosaic_0001>
module attributes {stable_mosaic.version = 11 : i64} {
  func.func @kernel(%arg0: memref<64x16xf32, #tpu.memory_space<vmem>>, %arg1: memref<16x512xf32, #tpu.memory_space<vmem>>, %arg2: memref<128x512xf32, #tpu.memory_space<vmem>>, %arg3: memref<1x512xf32, #tpu.memory_space<vmem>>, %arg4: memref<128x512xf32, #tpu.memory_space<vmem>>, %arg5: memref<128x512xf32, #tpu.memory_space<vmem>>, %arg6: memref<1x512xf32, #tpu.memory_space<vmem>>, %arg7: memref<128x512xf32, #tpu.memory_space<vmem>>, %arg8: memref<128x512xf32, #tpu.memory_space<vmem>>, %arg9: memref<1x512xf32, #tpu.memory_space<vmem>>, %arg10: memref<128x64xf32, #tpu.memory_space<vmem>>, %arg11: memref<1x64xf32, #tpu.memory_space<vmem>>, %arg12: memref<64x8xf32, #tpu.memory_space<vmem>>, %arg13: memref<1x8xf32, #tpu.memory_space<vmem>>, %arg14: memref<8x8xf32, #tpu.memory_space<vmem>>, %arg15: memref<64x512xf32, #tpu.memory_space<vmem>>, %arg16: memref<64x128xf32, #tpu.memory_space<vmem>>, %arg17: memref<64x128xf32, #tpu.memory_space<vmem>>) attributes {dimension_semantics = [], scalar_prefetch = 0 : i64, scratch_operands = 3 : i64, tpu.core_type = #tpu.core_type<tc>} {
    %c0 = arith.constant 0 : index
    %c0_0 = arith.constant 0 : index
    %0 = vector.load %arg0[%c0, %c0_0] : memref<64x16xf32, #tpu.memory_space<vmem>>, vector<64x16xf32>
    %c0_1 = arith.constant 0 : index
    %c0_2 = arith.constant 0 : index
    %1 = vector.load %arg1[%c0_1, %c0_2] : memref<16x512xf32, #tpu.memory_space<vmem>>, vector<16x512xf32>
    %cst = arith.constant dense<0.000000e+00> : vector<64x512xf32>
    %2 = tpu.matmul %0, %1, %cst {dimension_numbers = #tpu.dot_dimension_numbers<[1], [0], [0], [1], [0, 0, 1, 1], [], []>} : vector<64x16xf32>, vector<16x512xf32>, vector<64x512xf32> -> vector<64x512xf32>
    %c0_3 = arith.constant 0 : index
    %c0_4 = arith.constant 0 : index
    %3 = vector.load %arg3[%c0_3, %c0_4] : memref<1x512xf32, #tpu.memory_space<vmem>>, vector<1x512xf32>
    %4 = vector.broadcast %3 : vector<1x512xf32> to vector<64x512xf32>
    %5 = arith.addf %2, %4 : vector<64x512xf32>
    %c0_5 = arith.constant 0 : index
    %c0_6 = arith.constant 0 : index
    %6 = vector.load %arg15[%c0_5, %c0_6] : memref<64x512xf32, #tpu.memory_space<vmem>>, vector<64x512xf32>
    tpu.vector_store %arg15[%c0_5, %c0_6], %5 {strides = array<i32>} : memref<64x512xf32, #tpu.memory_space<vmem>>, vector<64x512xf32>,
    %c0_7 = arith.constant 0 : index
    %c0_8 = arith.constant 0 : index
    %7 = vector.load %arg2[%c0_7, %c0_8] : memref<128x512xf32, #tpu.memory_space<vmem>>, vector<128x512xf32>
    %cst_9 = arith.constant 0.000000e+00 : f32
    %8 = vector.broadcast %cst_9 : f32 to vector<8x128xf32>
    %c0_i32 = arith.constant 0 : i32
    %c8_i32 = arith.constant 8 : i32
    %9 = arith.muli %c0_i32, %c8_i32 : i32
    %10 = tpu.assume_multiple %9, 8 : i32
    %11 = arith.index_cast %10 : i32 to index
    %c0_10 = arith.constant 0 : index
    %12 = vector.load %arg15[%11, %c0_10] : memref<64x512xf32, #tpu.memory_space<vmem>>, vector<8x512xf32>
    %cst_11 = arith.constant dense<0.000000e+00> : vector<8x512xf32>
    %13 = tpu.matmul %8, %7, %cst_11 {dimension_numbers = #tpu.dot_dimension_numbers<[1], [0], [0], [1], [0, 0, 1, 1], [], []>} : vector<8x128xf32>, vector<128x512xf32>, vector<8x512xf32> -> vector<8x512xf32>
    %14 = arith.addf %12, %13 : vector<8x512xf32>
    %15 = vector.extract_strided_slice %14 {offsets = [0, 0], sizes = [8, 384], strides = [1, 1]} : vector<8x512xf32> to vector<8x384xf32>
    %16 = arith.negf %15 : vector<8x384xf32>
    %17 = math.exp %16 : vector<8x384xf32>
    %cst_12 = arith.constant 1.000000e+00 : f32
    %18 = vector.broadcast %cst_12 : f32 to vector<8x384xf32>
    %19 = arith.addf %18, %17 : vector<8x384xf32>
    %20 = arith.divf %18, %19 : vector<8x384xf32>
    %21 = vector.extract_strided_slice %20 {offsets = [0, 0], sizes = [8, 128], strides = [1, 1]} : vector<8x384xf32> to vector<8x128xf32>
    %22 = vector.extract_strided_slice %20 {offsets = [0, 128], sizes = [8, 128], strides = [1, 1]} : vector<8x384xf32> to vector<8x128xf32>
    %23 = vector.extract_strided_slice %20 {offsets = [0, 256], sizes = [8, 128], strides = [1, 1]} : vector<8x384xf32> to vector<8x128xf32>
    %24 = vector.extract_strided_slice %14 {offsets = [0, 384], sizes = [8, 128], strides = [1, 1]} : vector<8x512xf32> to vector<8x128xf32>
    %25 = math.tanh %24 : vector<8x128xf32>
    %26 = arith.mulf %22, %8 : vector<8x128xf32>
    %27 = arith.mulf %21, %25 : vector<8x128xf32>
    %28 = arith.addf %26, %27 : vector<8x128xf32>
    %29 = math.tanh %28 : vector<8x128xf32>
    %30 = arith.mulf %23, %29 : vector<8x128xf32>
    %31 = arith.index_cast %10 : i32 to index
    %c0_13 = arith.constant 0 : index
    %32 = vector.load %arg16[%31, %c0_13] : memref<64x128xf32, #tpu.memory_space<vmem>>, vector<8x128xf32>
    tpu.vector_store %arg16[%31, %c0_13], %30 {strides = array<i32>} : memref<64x128xf32, #tpu.memory_space<vmem>>, vector<8x128xf32>,
    %c1_i32 = arith.constant 1 : i32
    %c8_i32_14 = arith.constant 8 : i32
    %33 = arith.muli %c1_i32, %c8_i32_14 : i32
    %34 = tpu.assume_multiple %33, 8 : i32
    %35 = arith.index_cast %34 : i32 to index
    %c0_15 = arith.constant 0 : index
    %36 = vector.load %arg15[%35, %c0_15] : memref<64x512xf32, #tpu.memory_space<vmem>>, vector<8x512xf32>
    %cst_16 = arith.constant dense<0.000000e+00> : vector<8x512xf32>
    %37 = tpu.matmul %30, %7, %cst_16 {dimension_numbers = #tpu.dot_dimension_numbers<[1], [0], [0], [1], [0, 0, 1, 1], [], []>} : vector<8x128xf32>, vector<128x512xf32>, vector<8x512xf32> -> vector<8x512xf32>
    %38 = arith.addf %36, %37 : vector<8x512xf32>
    %39 = vector.extract_strided_slice %38 {offsets = [0, 0], sizes = [8, 384], strides = [1, 1]} : vector<8x512xf32> to vector<8x384xf32>
    %40 = arith.negf %39 : vector<8x384xf32>
    %41 = math.exp %40 : vector<8x384xf32>
    %cst_17 = arith.constant 1.000000e+00 : f32
    %42 = vector.broadcast %cst_17 : f32 to vector<8x384xf32>
    %43 = arith.addf %42, %41 : vector<8x384xf32>
    %44 = arith.divf %42, %43 : vector<8x384xf32>
    %45 = vector.extract_strided_slice %44 {offsets = [0, 0], sizes = [8, 128], strides = [1, 1]} : vector<8x384xf32> to vector<8x128xf32>
    %46 = vector.extract_strided_slice %44 {offsets = [0, 128], sizes = [8, 128], strides = [1, 1]} : vector<8x384xf32> to vector<8x128xf32>
    %47 = vector.extract_strided_slice %44 {offsets = [0, 256], sizes = [8, 128], strides = [1, 1]} : vector<8x384xf32> to vector<8x128xf32>
    %48 = vector.extract_strided_slice %38 {offsets = [0, 384], sizes = [8, 128], strides = [1, 1]} : vector<8x512xf32> to vector<8x128xf32>
    %49 = math.tanh %48 : vector<8x128xf32>
    %50 = arith.mulf %46, %28 : vector<8x128xf32>
    %51 = arith.mulf %45, %49 : vector<8x128xf32>
    %52 = arith.addf %50, %51 : vector<8x128xf32>
    %53 = math.tanh %52 : vector<8x128xf32>
    %54 = arith.mulf %47, %53 : vector<8x128xf32>
    %55 = arith.index_cast %34 : i32 to index
    %c0_18 = arith.constant 0 : index
    %56 = vector.load %arg16[%55, %c0_18] : memref<64x128xf32, #tpu.memory_space<vmem>>, vector<8x128xf32>
    tpu.vector_store %arg16[%55, %c0_18], %54 {strides = array<i32>} : memref<64x128xf32, #tpu.memory_space<vmem>>, vector<8x128xf32>,
    %c2_i32 = arith.constant 2 : i32
    %c8_i32_19 = arith.constant 8 : i32
    %57 = arith.muli %c2_i32, %c8_i32_19 : i32
    %58 = tpu.assume_multiple %57, 8 : i32
    %59 = arith.index_cast %58 : i32 to index
    %c0_20 = arith.constant 0 : index
    %60 = vector.load %arg15[%59, %c0_20] : memref<64x512xf32, #tpu.memory_space<vmem>>, vector<8x512xf32>
    %cst_21 = arith.constant dense<0.000000e+00> : vector<8x512xf32>
    %61 = tpu.matmul %54, %7, %cst_21 {dimension_numbers = #tpu.dot_dimension_numbers<[1], [0], [0], [1], [0, 0, 1, 1], [], []>} : vector<8x128xf32>, vector<128x512xf32>, vector<8x512xf32> -> vector<8x512xf32>
    %62 = arith.addf %60, %61 : vector<8x512xf32>
    %63 = vector.extract_strided_slice %62 {offsets = [0, 0], sizes = [8, 384], strides = [1, 1]} : vector<8x512xf32> to vector<8x384xf32>
    %64 = arith.negf %63 : vector<8x384xf32>
    %65 = math.exp %64 : vector<8x384xf32>
    %cst_22 = arith.constant 1.000000e+00 : f32
    %66 = vector.broadcast %cst_22 : f32 to vector<8x384xf32>
    %67 = arith.addf %66, %65 : vector<8x384xf32>
    %68 = arith.divf %66, %67 : vector<8x384xf32>
    %69 = vector.extract_strided_slice %68 {offsets = [0, 0], sizes = [8, 128], strides = [1, 1]} : vector<8x384xf32> to vector<8x128xf32>
    %70 = vector.extract_strided_slice %68 {offsets = [0, 128], sizes = [8, 128], strides = [1, 1]} : vector<8x384xf32> to vector<8x128xf32>
    %71 = vector.extract_strided_slice %68 {offsets = [0, 256], sizes = [8, 128], strides = [1, 1]} : vector<8x384xf32> to vector<8x128xf32>
    %72 = vector.extract_strided_slice %62 {offsets = [0, 384], sizes = [8, 128], strides = [1, 1]} : vector<8x512xf32> to vector<8x128xf32>
    %73 = math.tanh %72 : vector<8x128xf32>
    %74 = arith.mulf %70, %52 : vector<8x128xf32>
    %75 = arith.mulf %69, %73 : vector<8x128xf32>
    %76 = arith.addf %74, %75 : vector<8x128xf32>
    %77 = math.tanh %76 : vector<8x128xf32>
    %78 = arith.mulf %71, %77 : vector<8x128xf32>
    %79 = arith.index_cast %58 : i32 to index
    %c0_23 = arith.constant 0 : index
    %80 = vector.load %arg16[%79, %c0_23] : memref<64x128xf32, #tpu.memory_space<vmem>>, vector<8x128xf32>
    tpu.vector_store %arg16[%79, %c0_23], %78 {strides = array<i32>} : memref<64x128xf32, #tpu.memory_space<vmem>>, vector<8x128xf32>,
    %c3_i32 = arith.constant 3 : i32
    %c8_i32_24 = arith.constant 8 : i32
    %81 = arith.muli %c3_i32, %c8_i32_24 : i32
    %82 = tpu.assume_multiple %81, 8 : i32
    %83 = arith.index_cast %82 : i32 to index
    %c0_25 = arith.constant 0 : index
    %84 = vector.load %arg15[%83, %c0_25] : memref<64x512xf32, #tpu.memory_space<vmem>>, vector<8x512xf32>
    %cst_26 = arith.constant dense<0.000000e+00> : vector<8x512xf32>
    %85 = tpu.matmul %78, %7, %cst_26 {dimension_numbers = #tpu.dot_dimension_numbers<[1], [0], [0], [1], [0, 0, 1, 1], [], []>} : vector<8x128xf32>, vector<128x512xf32>, vector<8x512xf32> -> vector<8x512xf32>
    %86 = arith.addf %84, %85 : vector<8x512xf32>
    %87 = vector.extract_strided_slice %86 {offsets = [0, 0], sizes = [8, 384], strides = [1, 1]} : vector<8x512xf32> to vector<8x384xf32>
    %88 = arith.negf %87 : vector<8x384xf32>
    %89 = math.exp %88 : vector<8x384xf32>
    %cst_27 = arith.constant 1.000000e+00 : f32
    %90 = vector.broadcast %cst_27 : f32 to vector<8x384xf32>
    %91 = arith.addf %90, %89 : vector<8x384xf32>
    %92 = arith.divf %90, %91 : vector<8x384xf32>
    %93 = vector.extract_strided_slice %92 {offsets = [0, 0], sizes = [8, 128], strides = [1, 1]} : vector<8x384xf32> to vector<8x128xf32>
    %94 = vector.extract_strided_slice %92 {offsets = [0, 128], sizes = [8, 128], strides = [1, 1]} : vector<8x384xf32> to vector<8x128xf32>
    %95 = vector.extract_strided_slice %92 {offsets = [0, 256], sizes = [8, 128], strides = [1, 1]} : vector<8x384xf32> to vector<8x128xf32>
    %96 = vector.extract_strided_slice %86 {offsets = [0, 384], sizes = [8, 128], strides = [1, 1]} : vector<8x512xf32> to vector<8x128xf32>
    %97 = math.tanh %96 : vector<8x128xf32>
    %98 = arith.mulf %94, %76 : vector<8x128xf32>
    %99 = arith.mulf %93, %97 : vector<8x128xf32>
    %100 = arith.addf %98, %99 : vector<8x128xf32>
    %101 = math.tanh %100 : vector<8x128xf32>
    %102 = arith.mulf %95, %101 : vector<8x128xf32>
    %103 = arith.index_cast %82 : i32 to index
    %c0_28 = arith.constant 0 : index
    %104 = vector.load %arg16[%103, %c0_28] : memref<64x128xf32, #tpu.memory_space<vmem>>, vector<8x128xf32>
    tpu.vector_store %arg16[%103, %c0_28], %102 {strides = array<i32>} : memref<64x128xf32, #tpu.memory_space<vmem>>, vector<8x128xf32>,
    %c4_i32 = arith.constant 4 : i32
    %c8_i32_29 = arith.constant 8 : i32
    %105 = arith.muli %c4_i32, %c8_i32_29 : i32
    %106 = tpu.assume_multiple %105, 8 : i32
    %107 = arith.index_cast %106 : i32 to index
    %c0_30 = arith.constant 0 : index
    %108 = vector.load %arg15[%107, %c0_30] : memref<64x512xf32, #tpu.memory_space<vmem>>, vector<8x512xf32>
    %cst_31 = arith.constant dense<0.000000e+00> : vector<8x512xf32>
    %109 = tpu.matmul %102, %7, %cst_31 {dimension_numbers = #tpu.dot_dimension_numbers<[1], [0], [0], [1], [0, 0, 1, 1], [], []>} : vector<8x128xf32>, vector<128x512xf32>, vector<8x512xf32> -> vector<8x512xf32>
    %110 = arith.addf %108, %109 : vector<8x512xf32>
    %111 = vector.extract_strided_slice %110 {offsets = [0, 0], sizes = [8, 384], strides = [1, 1]} : vector<8x512xf32> to vector<8x384xf32>
    %112 = arith.negf %111 : vector<8x384xf32>
    %113 = math.exp %112 : vector<8x384xf32>
    %cst_32 = arith.constant 1.000000e+00 : f32
    %114 = vector.broadcast %cst_32 : f32 to vector<8x384xf32>
    %115 = arith.addf %114, %113 : vector<8x384xf32>
    %116 = arith.divf %114, %115 : vector<8x384xf32>
    %117 = vector.extract_strided_slice %116 {offsets = [0, 0], sizes = [8, 128], strides = [1, 1]} : vector<8x384xf32> to vector<8x128xf32>
    %118 = vector.extract_strided_slice %116 {offsets = [0, 128], sizes = [8, 128], strides = [1, 1]} : vector<8x384xf32> to vector<8x128xf32>
    %119 = vector.extract_strided_slice %116 {offsets = [0, 256], sizes = [8, 128], strides = [1, 1]} : vector<8x384xf32> to vector<8x128xf32>
    %120 = vector.extract_strided_slice %110 {offsets = [0, 384], sizes = [8, 128], strides = [1, 1]} : vector<8x512xf32> to vector<8x128xf32>
    %121 = math.tanh %120 : vector<8x128xf32>
    %122 = arith.mulf %118, %100 : vector<8x128xf32>
    %123 = arith.mulf %117, %121 : vector<8x128xf32>
    %124 = arith.addf %122, %123 : vector<8x128xf32>
    %125 = math.tanh %124 : vector<8x128xf32>
    %126 = arith.mulf %119, %125 : vector<8x128xf32>
    %127 = arith.index_cast %106 : i32 to index
    %c0_33 = arith.constant 0 : index
    %128 = vector.load %arg16[%127, %c0_33] : memref<64x128xf32, #tpu.memory_space<vmem>>, vector<8x128xf32>
    tpu.vector_store %arg16[%127, %c0_33], %126 {strides = array<i32>} : memref<64x128xf32, #tpu.memory_space<vmem>>, vector<8x128xf32>,
    %c5_i32 = arith.constant 5 : i32
    %c8_i32_34 = arith.constant 8 : i32
    %129 = arith.muli %c5_i32, %c8_i32_34 : i32
    %130 = tpu.assume_multiple %129, 8 : i32
    %131 = arith.index_cast %130 : i32 to index
    %c0_35 = arith.constant 0 : index
    %132 = vector.load %arg15[%131, %c0_35] : memref<64x512xf32, #tpu.memory_space<vmem>>, vector<8x512xf32>
    %cst_36 = arith.constant dense<0.000000e+00> : vector<8x512xf32>
    %133 = tpu.matmul %126, %7, %cst_36 {dimension_numbers = #tpu.dot_dimension_numbers<[1], [0], [0], [1], [0, 0, 1, 1], [], []>} : vector<8x128xf32>, vector<128x512xf32>, vector<8x512xf32> -> vector<8x512xf32>
    %134 = arith.addf %132, %133 : vector<8x512xf32>
    %135 = vector.extract_strided_slice %134 {offsets = [0, 0], sizes = [8, 384], strides = [1, 1]} : vector<8x512xf32> to vector<8x384xf32>
    %136 = arith.negf %135 : vector<8x384xf32>
    %137 = math.exp %136 : vector<8x384xf32>
    %cst_37 = arith.constant 1.000000e+00 : f32
    %138 = vector.broadcast %cst_37 : f32 to vector<8x384xf32>
    %139 = arith.addf %138, %137 : vector<8x384xf32>
    %140 = arith.divf %138, %139 : vector<8x384xf32>
    %141 = vector.extract_strided_slice %140 {offsets = [0, 0], sizes = [8, 128], strides = [1, 1]} : vector<8x384xf32> to vector<8x128xf32>
    %142 = vector.extract_strided_slice %140 {offsets = [0, 128], sizes = [8, 128], strides = [1, 1]} : vector<8x384xf32> to vector<8x128xf32>
    %143 = vector.extract_strided_slice %140 {offsets = [0, 256], sizes = [8, 128], strides = [1, 1]} : vector<8x384xf32> to vector<8x128xf32>
    %144 = vector.extract_strided_slice %134 {offsets = [0, 384], sizes = [8, 128], strides = [1, 1]} : vector<8x512xf32> to vector<8x128xf32>
    %145 = math.tanh %144 : vector<8x128xf32>
    %146 = arith.mulf %142, %124 : vector<8x128xf32>
    %147 = arith.mulf %141, %145 : vector<8x128xf32>
    %148 = arith.addf %146, %147 : vector<8x128xf32>
    %149 = math.tanh %148 : vector<8x128xf32>
    %150 = arith.mulf %143, %149 : vector<8x128xf32>
    %151 = arith.index_cast %130 : i32 to index
    %c0_38 = arith.constant 0 : index
    %152 = vector.load %arg16[%151, %c0_38] : memref<64x128xf32, #tpu.memory_space<vmem>>, vector<8x128xf32>
    tpu.vector_store %arg16[%151, %c0_38], %150 {strides = array<i32>} : memref<64x128xf32, #tpu.memory_space<vmem>>, vector<8x128xf32>,
    %c6_i32 = arith.constant 6 : i32
    %c8_i32_39 = arith.constant 8 : i32
    %153 = arith.muli %c6_i32, %c8_i32_39 : i32
    %154 = tpu.assume_multiple %153, 8 : i32
    %155 = arith.index_cast %154 : i32 to index
    %c0_40 = arith.constant 0 : index
    %156 = vector.load %arg15[%155, %c0_40] : memref<64x512xf32, #tpu.memory_space<vmem>>, vector<8x512xf32>
    %cst_41 = arith.constant dense<0.000000e+00> : vector<8x512xf32>
    %157 = tpu.matmul %150, %7, %cst_41 {dimension_numbers = #tpu.dot_dimension_numbers<[1], [0], [0], [1], [0, 0, 1, 1], [], []>} : vector<8x128xf32>, vector<128x512xf32>, vector<8x512xf32> -> vector<8x512xf32>
    %158 = arith.addf %156, %157 : vector<8x512xf32>
    %159 = vector.extract_strided_slice %158 {offsets = [0, 0], sizes = [8, 384], strides = [1, 1]} : vector<8x512xf32> to vector<8x384xf32>
    %160 = arith.negf %159 : vector<8x384xf32>
    %161 = math.exp %160 : vector<8x384xf32>
    %cst_42 = arith.constant 1.000000e+00 : f32
    %162 = vector.broadcast %cst_42 : f32 to vector<8x384xf32>
    %163 = arith.addf %162, %161 : vector<8x384xf32>
    %164 = arith.divf %162, %163 : vector<8x384xf32>
    %165 = vector.extract_strided_slice %164 {offsets = [0, 0], sizes = [8, 128], strides = [1, 1]} : vector<8x384xf32> to vector<8x128xf32>
    %166 = vector.extract_strided_slice %164 {offsets = [0, 128], sizes = [8, 128], strides = [1, 1]} : vector<8x384xf32> to vector<8x128xf32>
    %167 = vector.extract_strided_slice %164 {offsets = [0, 256], sizes = [8, 128], strides = [1, 1]} : vector<8x384xf32> to vector<8x128xf32>
    %168 = vector.extract_strided_slice %158 {offsets = [0, 384], sizes = [8, 128], strides = [1, 1]} : vector<8x512xf32> to vector<8x128xf32>
    %169 = math.tanh %168 : vector<8x128xf32>
    %170 = arith.mulf %166, %148 : vector<8x128xf32>
    %171 = arith.mulf %165, %169 : vector<8x128xf32>
    %172 = arith.addf %170, %171 : vector<8x128xf32>
    %173 = math.tanh %172 : vector<8x128xf32>
    %174 = arith.mulf %167, %173 : vector<8x128xf32>
    %175 = arith.index_cast %154 : i32 to index
    %c0_43 = arith.constant 0 : index
    %176 = vector.load %arg16[%175, %c0_43] : memref<64x128xf32, #tpu.memory_space<vmem>>, vector<8x128xf32>
    tpu.vector_store %arg16[%175, %c0_43], %174 {strides = array<i32>} : memref<64x128xf32, #tpu.memory_space<vmem>>, vector<8x128xf32>,
    %c7_i32 = arith.constant 7 : i32
    %c8_i32_44 = arith.constant 8 : i32
    %177 = arith.muli %c7_i32, %c8_i32_44 : i32
    %178 = tpu.assume_multiple %177, 8 : i32
    %179 = arith.index_cast %178 : i32 to index
    %c0_45 = arith.constant 0 : index
    %180 = vector.load %arg15[%179, %c0_45] : memref<64x512xf32, #tpu.memory_space<vmem>>, vector<8x512xf32>
    %cst_46 = arith.constant dense<0.000000e+00> : vector<8x512xf32>
    %181 = tpu.matmul %174, %7, %cst_46 {dimension_numbers = #tpu.dot_dimension_numbers<[1], [0], [0], [1], [0, 0, 1, 1], [], []>} : vector<8x128xf32>, vector<128x512xf32>, vector<8x512xf32> -> vector<8x512xf32>
    %182 = arith.addf %180, %181 : vector<8x512xf32>
    %183 = vector.extract_strided_slice %182 {offsets = [0, 0], sizes = [8, 384], strides = [1, 1]} : vector<8x512xf32> to vector<8x384xf32>
    %184 = arith.negf %183 : vector<8x384xf32>
    %185 = math.exp %184 : vector<8x384xf32>
    %cst_47 = arith.constant 1.000000e+00 : f32
    %186 = vector.broadcast %cst_47 : f32 to vector<8x384xf32>
    %187 = arith.addf %186, %185 : vector<8x384xf32>
    %188 = arith.divf %186, %187 : vector<8x384xf32>
    %189 = vector.extract_strided_slice %188 {offsets = [0, 0], sizes = [8, 128], strides = [1, 1]} : vector<8x384xf32> to vector<8x128xf32>
    %190 = vector.extract_strided_slice %188 {offsets = [0, 128], sizes = [8, 128], strides = [1, 1]} : vector<8x384xf32> to vector<8x128xf32>
    %191 = vector.extract_strided_slice %188 {offsets = [0, 256], sizes = [8, 128], strides = [1, 1]} : vector<8x384xf32> to vector<8x128xf32>
    %192 = vector.extract_strided_slice %182 {offsets = [0, 384], sizes = [8, 128], strides = [1, 1]} : vector<8x512xf32> to vector<8x128xf32>
    %193 = math.tanh %192 : vector<8x128xf32>
    %194 = arith.mulf %190, %172 : vector<8x128xf32>
    %195 = arith.mulf %189, %193 : vector<8x128xf32>
    %196 = arith.addf %194, %195 : vector<8x128xf32>
    %197 = math.tanh %196 : vector<8x128xf32>
    %198 = arith.mulf %191, %197 : vector<8x128xf32>
    %199 = arith.index_cast %178 : i32 to index
    %c0_48 = arith.constant 0 : index
    %200 = vector.load %arg16[%199, %c0_48] : memref<64x128xf32, #tpu.memory_space<vmem>>, vector<8x128xf32>
    tpu.vector_store %arg16[%199, %c0_48], %198 {strides = array<i32>} : memref<64x128xf32, #tpu.memory_space<vmem>>, vector<8x128xf32>,
    %c8_i32_49 = arith.constant 8 : i32
    %c0_50 = arith.constant 0 : index
    %c0_51 = arith.constant 0 : index
    %201 = vector.load %arg16[%c0_50, %c0_51] : memref<64x128xf32, #tpu.memory_space<vmem>>, vector<64x128xf32>
    %c0_52 = arith.constant 0 : index
    %c0_53 = arith.constant 0 : index
    %202 = vector.load %arg4[%c0_52, %c0_53] : memref<128x512xf32, #tpu.memory_space<vmem>>, vector<128x512xf32>
    %cst_54 = arith.constant dense<0.000000e+00> : vector<64x512xf32>
    %203 = tpu.matmul %201, %202, %cst_54 {dimension_numbers = #tpu.dot_dimension_numbers<[1], [0], [0], [1], [0, 0, 1, 1], [], []>} : vector<64x128xf32>, vector<128x512xf32>, vector<64x512xf32> -> vector<64x512xf32>
    %c0_55 = arith.constant 0 : index
    %c0_56 = arith.constant 0 : index
    %204 = vector.load %arg6[%c0_55, %c0_56] : memref<1x512xf32, #tpu.memory_space<vmem>>, vector<1x512xf32>
    %205 = vector.broadcast %204 : vector<1x512xf32> to vector<64x512xf32>
    %206 = arith.addf %203, %205 : vector<64x512xf32>
    %c0_57 = arith.constant 0 : index
    %c0_58 = arith.constant 0 : index
    %207 = vector.load %arg15[%c0_57, %c0_58] : memref<64x512xf32, #tpu.memory_space<vmem>>, vector<64x512xf32>
    tpu.vector_store %arg15[%c0_57, %c0_58], %206 {strides = array<i32>} : memref<64x512xf32, #tpu.memory_space<vmem>>, vector<64x512xf32>,
    %c0_59 = arith.constant 0 : index
    %c0_60 = arith.constant 0 : index
    %208 = vector.load %arg5[%c0_59, %c0_60] : memref<128x512xf32, #tpu.memory_space<vmem>>, vector<128x512xf32>
    %cst_61 = arith.constant 0.000000e+00 : f32
    %209 = vector.broadcast %cst_61 : f32 to vector<8x128xf32>
    %c0_i32_62 = arith.constant 0 : i32
    %c8_i32_63 = arith.constant 8 : i32
    %210 = arith.muli %c0_i32_62, %c8_i32_63 : i32
    %211 = tpu.assume_multiple %210, 8 : i32
    %212 = arith.index_cast %211 : i32 to index
    %c0_64 = arith.constant 0 : index
    %213 = vector.load %arg15[%212, %c0_64] : memref<64x512xf32, #tpu.memory_space<vmem>>, vector<8x512xf32>
    %cst_65 = arith.constant dense<0.000000e+00> : vector<8x512xf32>
    %214 = tpu.matmul %209, %208, %cst_65 {dimension_numbers = #tpu.dot_dimension_numbers<[1], [0], [0], [1], [0, 0, 1, 1], [], []>} : vector<8x128xf32>, vector<128x512xf32>, vector<8x512xf32> -> vector<8x512xf32>
    %215 = arith.addf %213, %214 : vector<8x512xf32>
    %216 = vector.extract_strided_slice %215 {offsets = [0, 0], sizes = [8, 384], strides = [1, 1]} : vector<8x512xf32> to vector<8x384xf32>
    %217 = arith.negf %216 : vector<8x384xf32>
    %218 = math.exp %217 : vector<8x384xf32>
    %cst_66 = arith.constant 1.000000e+00 : f32
    %219 = vector.broadcast %cst_66 : f32 to vector<8x384xf32>
    %220 = arith.addf %219, %218 : vector<8x384xf32>
    %221 = arith.divf %219, %220 : vector<8x384xf32>
    %222 = vector.extract_strided_slice %221 {offsets = [0, 0], sizes = [8, 128], strides = [1, 1]} : vector<8x384xf32> to vector<8x128xf32>
    %223 = vector.extract_strided_slice %221 {offsets = [0, 128], sizes = [8, 128], strides = [1, 1]} : vector<8x384xf32> to vector<8x128xf32>
    %224 = vector.extract_strided_slice %221 {offsets = [0, 256], sizes = [8, 128], strides = [1, 1]} : vector<8x384xf32> to vector<8x128xf32>
    %225 = vector.extract_strided_slice %215 {offsets = [0, 384], sizes = [8, 128], strides = [1, 1]} : vector<8x512xf32> to vector<8x128xf32>
    %226 = math.tanh %225 : vector<8x128xf32>
    %227 = arith.mulf %223, %209 : vector<8x128xf32>
    %228 = arith.mulf %222, %226 : vector<8x128xf32>
    %229 = arith.addf %227, %228 : vector<8x128xf32>
    %230 = math.tanh %229 : vector<8x128xf32>
    %231 = arith.mulf %224, %230 : vector<8x128xf32>
    %232 = arith.index_cast %211 : i32 to index
    %c0_67 = arith.constant 0 : index
    %233 = vector.load %arg17[%232, %c0_67] : memref<64x128xf32, #tpu.memory_space<vmem>>, vector<8x128xf32>
    tpu.vector_store %arg17[%232, %c0_67], %231 {strides = array<i32>} : memref<64x128xf32, #tpu.memory_space<vmem>>, vector<8x128xf32>,
    %c1_i32_68 = arith.constant 1 : i32
    %c8_i32_69 = arith.constant 8 : i32
    %234 = arith.muli %c1_i32_68, %c8_i32_69 : i32
    %235 = tpu.assume_multiple %234, 8 : i32
    %236 = arith.index_cast %235 : i32 to index
    %c0_70 = arith.constant 0 : index
    %237 = vector.load %arg15[%236, %c0_70] : memref<64x512xf32, #tpu.memory_space<vmem>>, vector<8x512xf32>
    %cst_71 = arith.constant dense<0.000000e+00> : vector<8x512xf32>
    %238 = tpu.matmul %231, %208, %cst_71 {dimension_numbers = #tpu.dot_dimension_numbers<[1], [0], [0], [1], [0, 0, 1, 1], [], []>} : vector<8x128xf32>, vector<128x512xf32>, vector<8x512xf32> -> vector<8x512xf32>
    %239 = arith.addf %237, %238 : vector<8x512xf32>
    %240 = vector.extract_strided_slice %239 {offsets = [0, 0], sizes = [8, 384], strides = [1, 1]} : vector<8x512xf32> to vector<8x384xf32>
    %241 = arith.negf %240 : vector<8x384xf32>
    %242 = math.exp %241 : vector<8x384xf32>
    %cst_72 = arith.constant 1.000000e+00 : f32
    %243 = vector.broadcast %cst_72 : f32 to vector<8x384xf32>
    %244 = arith.addf %243, %242 : vector<8x384xf32>
    %245 = arith.divf %243, %244 : vector<8x384xf32>
    %246 = vector.extract_strided_slice %245 {offsets = [0, 0], sizes = [8, 128], strides = [1, 1]} : vector<8x384xf32> to vector<8x128xf32>
    %247 = vector.extract_strided_slice %245 {offsets = [0, 128], sizes = [8, 128], strides = [1, 1]} : vector<8x384xf32> to vector<8x128xf32>
    %248 = vector.extract_strided_slice %245 {offsets = [0, 256], sizes = [8, 128], strides = [1, 1]} : vector<8x384xf32> to vector<8x128xf32>
    %249 = vector.extract_strided_slice %239 {offsets = [0, 384], sizes = [8, 128], strides = [1, 1]} : vector<8x512xf32> to vector<8x128xf32>
    %250 = math.tanh %249 : vector<8x128xf32>
    %251 = arith.mulf %247, %229 : vector<8x128xf32>
    %252 = arith.mulf %246, %250 : vector<8x128xf32>
    %253 = arith.addf %251, %252 : vector<8x128xf32>
    %254 = math.tanh %253 : vector<8x128xf32>
    %255 = arith.mulf %248, %254 : vector<8x128xf32>
    %256 = arith.index_cast %235 : i32 to index
    %c0_73 = arith.constant 0 : index
    %257 = vector.load %arg17[%256, %c0_73] : memref<64x128xf32, #tpu.memory_space<vmem>>, vector<8x128xf32>
    tpu.vector_store %arg17[%256, %c0_73], %255 {strides = array<i32>} : memref<64x128xf32, #tpu.memory_space<vmem>>, vector<8x128xf32>,
    %c2_i32_74 = arith.constant 2 : i32
    %c8_i32_75 = arith.constant 8 : i32
    %258 = arith.muli %c2_i32_74, %c8_i32_75 : i32
    %259 = tpu.assume_multiple %258, 8 : i32
    %260 = arith.index_cast %259 : i32 to index
    %c0_76 = arith.constant 0 : index
    %261 = vector.load %arg15[%260, %c0_76] : memref<64x512xf32, #tpu.memory_space<vmem>>, vector<8x512xf32>
    %cst_77 = arith.constant dense<0.000000e+00> : vector<8x512xf32>
    %262 = tpu.matmul %255, %208, %cst_77 {dimension_numbers = #tpu.dot_dimension_numbers<[1], [0], [0], [1], [0, 0, 1, 1], [], []>} : vector<8x128xf32>, vector<128x512xf32>, vector<8x512xf32> -> vector<8x512xf32>
    %263 = arith.addf %261, %262 : vector<8x512xf32>
    %264 = vector.extract_strided_slice %263 {offsets = [0, 0], sizes = [8, 384], strides = [1, 1]} : vector<8x512xf32> to vector<8x384xf32>
    %265 = arith.negf %264 : vector<8x384xf32>
    %266 = math.exp %265 : vector<8x384xf32>
    %cst_78 = arith.constant 1.000000e+00 : f32
    %267 = vector.broadcast %cst_78 : f32 to vector<8x384xf32>
    %268 = arith.addf %267, %266 : vector<8x384xf32>
    %269 = arith.divf %267, %268 : vector<8x384xf32>
    %270 = vector.extract_strided_slice %269 {offsets = [0, 0], sizes = [8, 128], strides = [1, 1]} : vector<8x384xf32> to vector<8x128xf32>
    %271 = vector.extract_strided_slice %269 {offsets = [0, 128], sizes = [8, 128], strides = [1, 1]} : vector<8x384xf32> to vector<8x128xf32>
    %272 = vector.extract_strided_slice %269 {offsets = [0, 256], sizes = [8, 128], strides = [1, 1]} : vector<8x384xf32> to vector<8x128xf32>
    %273 = vector.extract_strided_slice %263 {offsets = [0, 384], sizes = [8, 128], strides = [1, 1]} : vector<8x512xf32> to vector<8x128xf32>
    %274 = math.tanh %273 : vector<8x128xf32>
    %275 = arith.mulf %271, %253 : vector<8x128xf32>
    %276 = arith.mulf %270, %274 : vector<8x128xf32>
    %277 = arith.addf %275, %276 : vector<8x128xf32>
    %278 = math.tanh %277 : vector<8x128xf32>
    %279 = arith.mulf %272, %278 : vector<8x128xf32>
    %280 = arith.index_cast %259 : i32 to index
    %c0_79 = arith.constant 0 : index
    %281 = vector.load %arg17[%280, %c0_79] : memref<64x128xf32, #tpu.memory_space<vmem>>, vector<8x128xf32>
    tpu.vector_store %arg17[%280, %c0_79], %279 {strides = array<i32>} : memref<64x128xf32, #tpu.memory_space<vmem>>, vector<8x128xf32>,
    %c3_i32_80 = arith.constant 3 : i32
    %c8_i32_81 = arith.constant 8 : i32
    %282 = arith.muli %c3_i32_80, %c8_i32_81 : i32
    %283 = tpu.assume_multiple %282, 8 : i32
    %284 = arith.index_cast %283 : i32 to index
    %c0_82 = arith.constant 0 : index
    %285 = vector.load %arg15[%284, %c0_82] : memref<64x512xf32, #tpu.memory_space<vmem>>, vector<8x512xf32>
    %cst_83 = arith.constant dense<0.000000e+00> : vector<8x512xf32>
    %286 = tpu.matmul %279, %208, %cst_83 {dimension_numbers = #tpu.dot_dimension_numbers<[1], [0], [0], [1], [0, 0, 1, 1], [], []>} : vector<8x128xf32>, vector<128x512xf32>, vector<8x512xf32> -> vector<8x512xf32>
    %287 = arith.addf %285, %286 : vector<8x512xf32>
    %288 = vector.extract_strided_slice %287 {offsets = [0, 0], sizes = [8, 384], strides = [1, 1]} : vector<8x512xf32> to vector<8x384xf32>
    %289 = arith.negf %288 : vector<8x384xf32>
    %290 = math.exp %289 : vector<8x384xf32>
    %cst_84 = arith.constant 1.000000e+00 : f32
    %291 = vector.broadcast %cst_84 : f32 to vector<8x384xf32>
    %292 = arith.addf %291, %290 : vector<8x384xf32>
    %293 = arith.divf %291, %292 : vector<8x384xf32>
    %294 = vector.extract_strided_slice %293 {offsets = [0, 0], sizes = [8, 128], strides = [1, 1]} : vector<8x384xf32> to vector<8x128xf32>
    %295 = vector.extract_strided_slice %293 {offsets = [0, 128], sizes = [8, 128], strides = [1, 1]} : vector<8x384xf32> to vector<8x128xf32>
    %296 = vector.extract_strided_slice %293 {offsets = [0, 256], sizes = [8, 128], strides = [1, 1]} : vector<8x384xf32> to vector<8x128xf32>
    %297 = vector.extract_strided_slice %287 {offsets = [0, 384], sizes = [8, 128], strides = [1, 1]} : vector<8x512xf32> to vector<8x128xf32>
    %298 = math.tanh %297 : vector<8x128xf32>
    %299 = arith.mulf %295, %277 : vector<8x128xf32>
    %300 = arith.mulf %294, %298 : vector<8x128xf32>
    %301 = arith.addf %299, %300 : vector<8x128xf32>
    %302 = math.tanh %301 : vector<8x128xf32>
    %303 = arith.mulf %296, %302 : vector<8x128xf32>
    %304 = arith.index_cast %283 : i32 to index
    %c0_85 = arith.constant 0 : index
    %305 = vector.load %arg17[%304, %c0_85] : memref<64x128xf32, #tpu.memory_space<vmem>>, vector<8x128xf32>
    tpu.vector_store %arg17[%304, %c0_85], %303 {strides = array<i32>} : memref<64x128xf32, #tpu.memory_space<vmem>>, vector<8x128xf32>,
    %c4_i32_86 = arith.constant 4 : i32
    %c8_i32_87 = arith.constant 8 : i32
    %306 = arith.muli %c4_i32_86, %c8_i32_87 : i32
    %307 = tpu.assume_multiple %306, 8 : i32
    %308 = arith.index_cast %307 : i32 to index
    %c0_88 = arith.constant 0 : index
    %309 = vector.load %arg15[%308, %c0_88] : memref<64x512xf32, #tpu.memory_space<vmem>>, vector<8x512xf32>
    %cst_89 = arith.constant dense<0.000000e+00> : vector<8x512xf32>
    %310 = tpu.matmul %303, %208, %cst_89 {dimension_numbers = #tpu.dot_dimension_numbers<[1], [0], [0], [1], [0, 0, 1, 1], [], []>} : vector<8x128xf32>, vector<128x512xf32>, vector<8x512xf32> -> vector<8x512xf32>
    %311 = arith.addf %309, %310 : vector<8x512xf32>
    %312 = vector.extract_strided_slice %311 {offsets = [0, 0], sizes = [8, 384], strides = [1, 1]} : vector<8x512xf32> to vector<8x384xf32>
    %313 = arith.negf %312 : vector<8x384xf32>
    %314 = math.exp %313 : vector<8x384xf32>
    %cst_90 = arith.constant 1.000000e+00 : f32
    %315 = vector.broadcast %cst_90 : f32 to vector<8x384xf32>
    %316 = arith.addf %315, %314 : vector<8x384xf32>
    %317 = arith.divf %315, %316 : vector<8x384xf32>
    %318 = vector.extract_strided_slice %317 {offsets = [0, 0], sizes = [8, 128], strides = [1, 1]} : vector<8x384xf32> to vector<8x128xf32>
    %319 = vector.extract_strided_slice %317 {offsets = [0, 128], sizes = [8, 128], strides = [1, 1]} : vector<8x384xf32> to vector<8x128xf32>
    %320 = vector.extract_strided_slice %317 {offsets = [0, 256], sizes = [8, 128], strides = [1, 1]} : vector<8x384xf32> to vector<8x128xf32>
    %321 = vector.extract_strided_slice %311 {offsets = [0, 384], sizes = [8, 128], strides = [1, 1]} : vector<8x512xf32> to vector<8x128xf32>
    %322 = math.tanh %321 : vector<8x128xf32>
    %323 = arith.mulf %319, %301 : vector<8x128xf32>
    %324 = arith.mulf %318, %322 : vector<8x128xf32>
    %325 = arith.addf %323, %324 : vector<8x128xf32>
    %326 = math.tanh %325 : vector<8x128xf32>
    %327 = arith.mulf %320, %326 : vector<8x128xf32>
    %328 = arith.index_cast %307 : i32 to index
    %c0_91 = arith.constant 0 : index
    %329 = vector.load %arg17[%328, %c0_91] : memref<64x128xf32, #tpu.memory_space<vmem>>, vector<8x128xf32>
    tpu.vector_store %arg17[%328, %c0_91], %327 {strides = array<i32>} : memref<64x128xf32, #tpu.memory_space<vmem>>, vector<8x128xf32>,
    %c5_i32_92 = arith.constant 5 : i32
    %c8_i32_93 = arith.constant 8 : i32
    %330 = arith.muli %c5_i32_92, %c8_i32_93 : i32
    %331 = tpu.assume_multiple %330, 8 : i32
    %332 = arith.index_cast %331 : i32 to index
    %c0_94 = arith.constant 0 : index
    %333 = vector.load %arg15[%332, %c0_94] : memref<64x512xf32, #tpu.memory_space<vmem>>, vector<8x512xf32>
    %cst_95 = arith.constant dense<0.000000e+00> : vector<8x512xf32>
    %334 = tpu.matmul %327, %208, %cst_95 {dimension_numbers = #tpu.dot_dimension_numbers<[1], [0], [0], [1], [0, 0, 1, 1], [], []>} : vector<8x128xf32>, vector<128x512xf32>, vector<8x512xf32> -> vector<8x512xf32>
    %335 = arith.addf %333, %334 : vector<8x512xf32>
    %336 = vector.extract_strided_slice %335 {offsets = [0, 0], sizes = [8, 384], strides = [1, 1]} : vector<8x512xf32> to vector<8x384xf32>
    %337 = arith.negf %336 : vector<8x384xf32>
    %338 = math.exp %337 : vector<8x384xf32>
    %cst_96 = arith.constant 1.000000e+00 : f32
    %339 = vector.broadcast %cst_96 : f32 to vector<8x384xf32>
    %340 = arith.addf %339, %338 : vector<8x384xf32>
    %341 = arith.divf %339, %340 : vector<8x384xf32>
    %342 = vector.extract_strided_slice %341 {offsets = [0, 0], sizes = [8, 128], strides = [1, 1]} : vector<8x384xf32> to vector<8x128xf32>
    %343 = vector.extract_strided_slice %341 {offsets = [0, 128], sizes = [8, 128], strides = [1, 1]} : vector<8x384xf32> to vector<8x128xf32>
    %344 = vector.extract_strided_slice %341 {offsets = [0, 256], sizes = [8, 128], strides = [1, 1]} : vector<8x384xf32> to vector<8x128xf32>
    %345 = vector.extract_strided_slice %335 {offsets = [0, 384], sizes = [8, 128], strides = [1, 1]} : vector<8x512xf32> to vector<8x128xf32>
    %346 = math.tanh %345 : vector<8x128xf32>
    %347 = arith.mulf %343, %325 : vector<8x128xf32>
    %348 = arith.mulf %342, %346 : vector<8x128xf32>
    %349 = arith.addf %347, %348 : vector<8x128xf32>
    %350 = math.tanh %349 : vector<8x128xf32>
    %351 = arith.mulf %344, %350 : vector<8x128xf32>
    %352 = arith.index_cast %331 : i32 to index
    %c0_97 = arith.constant 0 : index
    %353 = vector.load %arg17[%352, %c0_97] : memref<64x128xf32, #tpu.memory_space<vmem>>, vector<8x128xf32>
    tpu.vector_store %arg17[%352, %c0_97], %351 {strides = array<i32>} : memref<64x128xf32, #tpu.memory_space<vmem>>, vector<8x128xf32>,
    %c6_i32_98 = arith.constant 6 : i32
    %c8_i32_99 = arith.constant 8 : i32
    %354 = arith.muli %c6_i32_98, %c8_i32_99 : i32
    %355 = tpu.assume_multiple %354, 8 : i32
    %356 = arith.index_cast %355 : i32 to index
    %c0_100 = arith.constant 0 : index
    %357 = vector.load %arg15[%356, %c0_100] : memref<64x512xf32, #tpu.memory_space<vmem>>, vector<8x512xf32>
    %cst_101 = arith.constant dense<0.000000e+00> : vector<8x512xf32>
    %358 = tpu.matmul %351, %208, %cst_101 {dimension_numbers = #tpu.dot_dimension_numbers<[1], [0], [0], [1], [0, 0, 1, 1], [], []>} : vector<8x128xf32>, vector<128x512xf32>, vector<8x512xf32> -> vector<8x512xf32>
    %359 = arith.addf %357, %358 : vector<8x512xf32>
    %360 = vector.extract_strided_slice %359 {offsets = [0, 0], sizes = [8, 384], strides = [1, 1]} : vector<8x512xf32> to vector<8x384xf32>
    %361 = arith.negf %360 : vector<8x384xf32>
    %362 = math.exp %361 : vector<8x384xf32>
    %cst_102 = arith.constant 1.000000e+00 : f32
    %363 = vector.broadcast %cst_102 : f32 to vector<8x384xf32>
    %364 = arith.addf %363, %362 : vector<8x384xf32>
    %365 = arith.divf %363, %364 : vector<8x384xf32>
    %366 = vector.extract_strided_slice %365 {offsets = [0, 0], sizes = [8, 128], strides = [1, 1]} : vector<8x384xf32> to vector<8x128xf32>
    %367 = vector.extract_strided_slice %365 {offsets = [0, 128], sizes = [8, 128], strides = [1, 1]} : vector<8x384xf32> to vector<8x128xf32>
    %368 = vector.extract_strided_slice %365 {offsets = [0, 256], sizes = [8, 128], strides = [1, 1]} : vector<8x384xf32> to vector<8x128xf32>
    %369 = vector.extract_strided_slice %359 {offsets = [0, 384], sizes = [8, 128], strides = [1, 1]} : vector<8x512xf32> to vector<8x128xf32>
    %370 = math.tanh %369 : vector<8x128xf32>
    %371 = arith.mulf %367, %349 : vector<8x128xf32>
    %372 = arith.mulf %366, %370 : vector<8x128xf32>
    %373 = arith.addf %371, %372 : vector<8x128xf32>
    %374 = math.tanh %373 : vector<8x128xf32>
    %375 = arith.mulf %368, %374 : vector<8x128xf32>
    %376 = arith.index_cast %355 : i32 to index
    %c0_103 = arith.constant 0 : index
    %377 = vector.load %arg17[%376, %c0_103] : memref<64x128xf32, #tpu.memory_space<vmem>>, vector<8x128xf32>
    tpu.vector_store %arg17[%376, %c0_103], %375 {strides = array<i32>} : memref<64x128xf32, #tpu.memory_space<vmem>>, vector<8x128xf32>,
    %c7_i32_104 = arith.constant 7 : i32
    %c8_i32_105 = arith.constant 8 : i32
    %378 = arith.muli %c7_i32_104, %c8_i32_105 : i32
    %379 = tpu.assume_multiple %378, 8 : i32
    %380 = arith.index_cast %379 : i32 to index
    %c0_106 = arith.constant 0 : index
    %381 = vector.load %arg15[%380, %c0_106] : memref<64x512xf32, #tpu.memory_space<vmem>>, vector<8x512xf32>
    %cst_107 = arith.constant dense<0.000000e+00> : vector<8x512xf32>
    %382 = tpu.matmul %375, %208, %cst_107 {dimension_numbers = #tpu.dot_dimension_numbers<[1], [0], [0], [1], [0, 0, 1, 1], [], []>} : vector<8x128xf32>, vector<128x512xf32>, vector<8x512xf32> -> vector<8x512xf32>
    %383 = arith.addf %381, %382 : vector<8x512xf32>
    %384 = vector.extract_strided_slice %383 {offsets = [0, 0], sizes = [8, 384], strides = [1, 1]} : vector<8x512xf32> to vector<8x384xf32>
    %385 = arith.negf %384 : vector<8x384xf32>
    %386 = math.exp %385 : vector<8x384xf32>
    %cst_108 = arith.constant 1.000000e+00 : f32
    %387 = vector.broadcast %cst_108 : f32 to vector<8x384xf32>
    %388 = arith.addf %387, %386 : vector<8x384xf32>
    %389 = arith.divf %387, %388 : vector<8x384xf32>
    %390 = vector.extract_strided_slice %389 {offsets = [0, 0], sizes = [8, 128], strides = [1, 1]} : vector<8x384xf32> to vector<8x128xf32>
    %391 = vector.extract_strided_slice %389 {offsets = [0, 128], sizes = [8, 128], strides = [1, 1]} : vector<8x384xf32> to vector<8x128xf32>
    %392 = vector.extract_strided_slice %389 {offsets = [0, 256], sizes = [8, 128], strides = [1, 1]} : vector<8x384xf32> to vector<8x128xf32>
    %393 = vector.extract_strided_slice %383 {offsets = [0, 384], sizes = [8, 128], strides = [1, 1]} : vector<8x512xf32> to vector<8x128xf32>
    %394 = math.tanh %393 : vector<8x128xf32>
    %395 = arith.mulf %391, %373 : vector<8x128xf32>
    %396 = arith.mulf %390, %394 : vector<8x128xf32>
    %397 = arith.addf %395, %396 : vector<8x128xf32>
    %398 = math.tanh %397 : vector<8x128xf32>
    %399 = arith.mulf %392, %398 : vector<8x128xf32>
    %400 = arith.index_cast %379 : i32 to index
    %c0_109 = arith.constant 0 : index
    %401 = vector.load %arg17[%400, %c0_109] : memref<64x128xf32, #tpu.memory_space<vmem>>, vector<8x128xf32>
    tpu.vector_store %arg17[%400, %c0_109], %399 {strides = array<i32>} : memref<64x128xf32, #tpu.memory_space<vmem>>, vector<8x128xf32>,
    %c8_i32_110 = arith.constant 8 : i32
    %c0_111 = arith.constant 0 : index
    %c0_112 = arith.constant 0 : index
    %402 = vector.load %arg17[%c0_111, %c0_112] : memref<64x128xf32, #tpu.memory_space<vmem>>, vector<64x128xf32>
    %c0_113 = arith.constant 0 : index
    %c0_114 = arith.constant 0 : index
    %403 = vector.load %arg7[%c0_113, %c0_114] : memref<128x512xf32, #tpu.memory_space<vmem>>, vector<128x512xf32>
    %cst_115 = arith.constant dense<0.000000e+00> : vector<64x512xf32>
    %404 = tpu.matmul %402, %403, %cst_115 {dimension_numbers = #tpu.dot_dimension_numbers<[1], [0], [0], [1], [0, 0, 1, 1], [], []>} : vector<64x128xf32>, vector<128x512xf32>, vector<64x512xf32> -> vector<64x512xf32>
    %c0_116 = arith.constant 0 : index
    %c0_117 = arith.constant 0 : index
    %405 = vector.load %arg9[%c0_116, %c0_117] : memref<1x512xf32, #tpu.memory_space<vmem>>, vector<1x512xf32>
    %406 = vector.broadcast %405 : vector<1x512xf32> to vector<64x512xf32>
    %407 = arith.addf %404, %406 : vector<64x512xf32>
    %c0_118 = arith.constant 0 : index
    %c0_119 = arith.constant 0 : index
    %408 = vector.load %arg15[%c0_118, %c0_119] : memref<64x512xf32, #tpu.memory_space<vmem>>, vector<64x512xf32>
    tpu.vector_store %arg15[%c0_118, %c0_119], %407 {strides = array<i32>} : memref<64x512xf32, #tpu.memory_space<vmem>>, vector<64x512xf32>,
    %c0_120 = arith.constant 0 : index
    %c0_121 = arith.constant 0 : index
    %409 = vector.load %arg8[%c0_120, %c0_121] : memref<128x512xf32, #tpu.memory_space<vmem>>, vector<128x512xf32>
    %cst_122 = arith.constant 0.000000e+00 : f32
    %410 = vector.broadcast %cst_122 : f32 to vector<8x128xf32>
    %c0_i32_123 = arith.constant 0 : i32
    %c8_i32_124 = arith.constant 8 : i32
    %411 = arith.muli %c0_i32_123, %c8_i32_124 : i32
    %412 = tpu.assume_multiple %411, 8 : i32
    %413 = arith.index_cast %412 : i32 to index
    %c0_125 = arith.constant 0 : index
    %414 = vector.load %arg15[%413, %c0_125] : memref<64x512xf32, #tpu.memory_space<vmem>>, vector<8x512xf32>
    %cst_126 = arith.constant dense<0.000000e+00> : vector<8x512xf32>
    %415 = tpu.matmul %410, %409, %cst_126 {dimension_numbers = #tpu.dot_dimension_numbers<[1], [0], [0], [1], [0, 0, 1, 1], [], []>} : vector<8x128xf32>, vector<128x512xf32>, vector<8x512xf32> -> vector<8x512xf32>
    %416 = arith.addf %414, %415 : vector<8x512xf32>
    %417 = vector.extract_strided_slice %416 {offsets = [0, 0], sizes = [8, 384], strides = [1, 1]} : vector<8x512xf32> to vector<8x384xf32>
    %418 = arith.negf %417 : vector<8x384xf32>
    %419 = math.exp %418 : vector<8x384xf32>
    %cst_127 = arith.constant 1.000000e+00 : f32
    %420 = vector.broadcast %cst_127 : f32 to vector<8x384xf32>
    %421 = arith.addf %420, %419 : vector<8x384xf32>
    %422 = arith.divf %420, %421 : vector<8x384xf32>
    %423 = vector.extract_strided_slice %422 {offsets = [0, 0], sizes = [8, 128], strides = [1, 1]} : vector<8x384xf32> to vector<8x128xf32>
    %424 = vector.extract_strided_slice %422 {offsets = [0, 128], sizes = [8, 128], strides = [1, 1]} : vector<8x384xf32> to vector<8x128xf32>
    %425 = vector.extract_strided_slice %422 {offsets = [0, 256], sizes = [8, 128], strides = [1, 1]} : vector<8x384xf32> to vector<8x128xf32>
    %426 = vector.extract_strided_slice %416 {offsets = [0, 384], sizes = [8, 128], strides = [1, 1]} : vector<8x512xf32> to vector<8x128xf32>
    %427 = math.tanh %426 : vector<8x128xf32>
    %428 = arith.mulf %424, %410 : vector<8x128xf32>
    %429 = arith.mulf %423, %427 : vector<8x128xf32>
    %430 = arith.addf %428, %429 : vector<8x128xf32>
    %431 = math.tanh %430 : vector<8x128xf32>
    %432 = arith.mulf %425, %431 : vector<8x128xf32>
    %c1_i32_128 = arith.constant 1 : i32
    %c8_i32_129 = arith.constant 8 : i32
    %433 = arith.muli %c1_i32_128, %c8_i32_129 : i32
    %434 = tpu.assume_multiple %433, 8 : i32
    %435 = arith.index_cast %434 : i32 to index
    %c0_130 = arith.constant 0 : index
    %436 = vector.load %arg15[%435, %c0_130] : memref<64x512xf32, #tpu.memory_space<vmem>>, vector<8x512xf32>
    %cst_131 = arith.constant dense<0.000000e+00> : vector<8x512xf32>
    %437 = tpu.matmul %432, %409, %cst_131 {dimension_numbers = #tpu.dot_dimension_numbers<[1], [0], [0], [1], [0, 0, 1, 1], [], []>} : vector<8x128xf32>, vector<128x512xf32>, vector<8x512xf32> -> vector<8x512xf32>
    %438 = arith.addf %436, %437 : vector<8x512xf32>
    %439 = vector.extract_strided_slice %438 {offsets = [0, 0], sizes = [8, 384], strides = [1, 1]} : vector<8x512xf32> to vector<8x384xf32>
    %440 = arith.negf %439 : vector<8x384xf32>
    %441 = math.exp %440 : vector<8x384xf32>
    %cst_132 = arith.constant 1.000000e+00 : f32
    %442 = vector.broadcast %cst_132 : f32 to vector<8x384xf32>
    %443 = arith.addf %442, %441 : vector<8x384xf32>
    %444 = arith.divf %442, %443 : vector<8x384xf32>
    %445 = vector.extract_strided_slice %444 {offsets = [0, 0], sizes = [8, 128], strides = [1, 1]} : vector<8x384xf32> to vector<8x128xf32>
    %446 = vector.extract_strided_slice %444 {offsets = [0, 128], sizes = [8, 128], strides = [1, 1]} : vector<8x384xf32> to vector<8x128xf32>
    %447 = vector.extract_strided_slice %444 {offsets = [0, 256], sizes = [8, 128], strides = [1, 1]} : vector<8x384xf32> to vector<8x128xf32>
    %448 = vector.extract_strided_slice %438 {offsets = [0, 384], sizes = [8, 128], strides = [1, 1]} : vector<8x512xf32> to vector<8x128xf32>
    %449 = math.tanh %448 : vector<8x128xf32>
    %450 = arith.mulf %446, %430 : vector<8x128xf32>
    %451 = arith.mulf %445, %449 : vector<8x128xf32>
    %452 = arith.addf %450, %451 : vector<8x128xf32>
    %453 = math.tanh %452 : vector<8x128xf32>
    %454 = arith.mulf %447, %453 : vector<8x128xf32>
    %c2_i32_133 = arith.constant 2 : i32
    %c8_i32_134 = arith.constant 8 : i32
    %455 = arith.muli %c2_i32_133, %c8_i32_134 : i32
    %456 = tpu.assume_multiple %455, 8 : i32
    %457 = arith.index_cast %456 : i32 to index
    %c0_135 = arith.constant 0 : index
    %458 = vector.load %arg15[%457, %c0_135] : memref<64x512xf32, #tpu.memory_space<vmem>>, vector<8x512xf32>
    %cst_136 = arith.constant dense<0.000000e+00> : vector<8x512xf32>
    %459 = tpu.matmul %454, %409, %cst_136 {dimension_numbers = #tpu.dot_dimension_numbers<[1], [0], [0], [1], [0, 0, 1, 1], [], []>} : vector<8x128xf32>, vector<128x512xf32>, vector<8x512xf32> -> vector<8x512xf32>
    %460 = arith.addf %458, %459 : vector<8x512xf32>
    %461 = vector.extract_strided_slice %460 {offsets = [0, 0], sizes = [8, 384], strides = [1, 1]} : vector<8x512xf32> to vector<8x384xf32>
    %462 = arith.negf %461 : vector<8x384xf32>
    %463 = math.exp %462 : vector<8x384xf32>
    %cst_137 = arith.constant 1.000000e+00 : f32
    %464 = vector.broadcast %cst_137 : f32 to vector<8x384xf32>
    %465 = arith.addf %464, %463 : vector<8x384xf32>
    %466 = arith.divf %464, %465 : vector<8x384xf32>
    %467 = vector.extract_strided_slice %466 {offsets = [0, 0], sizes = [8, 128], strides = [1, 1]} : vector<8x384xf32> to vector<8x128xf32>
    %468 = vector.extract_strided_slice %466 {offsets = [0, 128], sizes = [8, 128], strides = [1, 1]} : vector<8x384xf32> to vector<8x128xf32>
    %469 = vector.extract_strided_slice %466 {offsets = [0, 256], sizes = [8, 128], strides = [1, 1]} : vector<8x384xf32> to vector<8x128xf32>
    %470 = vector.extract_strided_slice %460 {offsets = [0, 384], sizes = [8, 128], strides = [1, 1]} : vector<8x512xf32> to vector<8x128xf32>
    %471 = math.tanh %470 : vector<8x128xf32>
    %472 = arith.mulf %468, %452 : vector<8x128xf32>
    %473 = arith.mulf %467, %471 : vector<8x128xf32>
    %474 = arith.addf %472, %473 : vector<8x128xf32>
    %475 = math.tanh %474 : vector<8x128xf32>
    %476 = arith.mulf %469, %475 : vector<8x128xf32>
    %c3_i32_138 = arith.constant 3 : i32
    %c8_i32_139 = arith.constant 8 : i32
    %477 = arith.muli %c3_i32_138, %c8_i32_139 : i32
    %478 = tpu.assume_multiple %477, 8 : i32
    %479 = arith.index_cast %478 : i32 to index
    %c0_140 = arith.constant 0 : index
    %480 = vector.load %arg15[%479, %c0_140] : memref<64x512xf32, #tpu.memory_space<vmem>>, vector<8x512xf32>
    %cst_141 = arith.constant dense<0.000000e+00> : vector<8x512xf32>
    %481 = tpu.matmul %476, %409, %cst_141 {dimension_numbers = #tpu.dot_dimension_numbers<[1], [0], [0], [1], [0, 0, 1, 1], [], []>} : vector<8x128xf32>, vector<128x512xf32>, vector<8x512xf32> -> vector<8x512xf32>
    %482 = arith.addf %480, %481 : vector<8x512xf32>
    %483 = vector.extract_strided_slice %482 {offsets = [0, 0], sizes = [8, 384], strides = [1, 1]} : vector<8x512xf32> to vector<8x384xf32>
    %484 = arith.negf %483 : vector<8x384xf32>
    %485 = math.exp %484 : vector<8x384xf32>
    %cst_142 = arith.constant 1.000000e+00 : f32
    %486 = vector.broadcast %cst_142 : f32 to vector<8x384xf32>
    %487 = arith.addf %486, %485 : vector<8x384xf32>
    %488 = arith.divf %486, %487 : vector<8x384xf32>
    %489 = vector.extract_strided_slice %488 {offsets = [0, 0], sizes = [8, 128], strides = [1, 1]} : vector<8x384xf32> to vector<8x128xf32>
    %490 = vector.extract_strided_slice %488 {offsets = [0, 128], sizes = [8, 128], strides = [1, 1]} : vector<8x384xf32> to vector<8x128xf32>
    %491 = vector.extract_strided_slice %488 {offsets = [0, 256], sizes = [8, 128], strides = [1, 1]} : vector<8x384xf32> to vector<8x128xf32>
    %492 = vector.extract_strided_slice %482 {offsets = [0, 384], sizes = [8, 128], strides = [1, 1]} : vector<8x512xf32> to vector<8x128xf32>
    %493 = math.tanh %492 : vector<8x128xf32>
    %494 = arith.mulf %490, %474 : vector<8x128xf32>
    %495 = arith.mulf %489, %493 : vector<8x128xf32>
    %496 = arith.addf %494, %495 : vector<8x128xf32>
    %497 = math.tanh %496 : vector<8x128xf32>
    %498 = arith.mulf %491, %497 : vector<8x128xf32>
    %c4_i32_143 = arith.constant 4 : i32
    %c8_i32_144 = arith.constant 8 : i32
    %499 = arith.muli %c4_i32_143, %c8_i32_144 : i32
    %500 = tpu.assume_multiple %499, 8 : i32
    %501 = arith.index_cast %500 : i32 to index
    %c0_145 = arith.constant 0 : index
    %502 = vector.load %arg15[%501, %c0_145] : memref<64x512xf32, #tpu.memory_space<vmem>>, vector<8x512xf32>
    %cst_146 = arith.constant dense<0.000000e+00> : vector<8x512xf32>
    %503 = tpu.matmul %498, %409, %cst_146 {dimension_numbers = #tpu.dot_dimension_numbers<[1], [0], [0], [1], [0, 0, 1, 1], [], []>} : vector<8x128xf32>, vector<128x512xf32>, vector<8x512xf32> -> vector<8x512xf32>
    %504 = arith.addf %502, %503 : vector<8x512xf32>
    %505 = vector.extract_strided_slice %504 {offsets = [0, 0], sizes = [8, 384], strides = [1, 1]} : vector<8x512xf32> to vector<8x384xf32>
    %506 = arith.negf %505 : vector<8x384xf32>
    %507 = math.exp %506 : vector<8x384xf32>
    %cst_147 = arith.constant 1.000000e+00 : f32
    %508 = vector.broadcast %cst_147 : f32 to vector<8x384xf32>
    %509 = arith.addf %508, %507 : vector<8x384xf32>
    %510 = arith.divf %508, %509 : vector<8x384xf32>
    %511 = vector.extract_strided_slice %510 {offsets = [0, 0], sizes = [8, 128], strides = [1, 1]} : vector<8x384xf32> to vector<8x128xf32>
    %512 = vector.extract_strided_slice %510 {offsets = [0, 128], sizes = [8, 128], strides = [1, 1]} : vector<8x384xf32> to vector<8x128xf32>
    %513 = vector.extract_strided_slice %510 {offsets = [0, 256], sizes = [8, 128], strides = [1, 1]} : vector<8x384xf32> to vector<8x128xf32>
    %514 = vector.extract_strided_slice %504 {offsets = [0, 384], sizes = [8, 128], strides = [1, 1]} : vector<8x512xf32> to vector<8x128xf32>
    %515 = math.tanh %514 : vector<8x128xf32>
    %516 = arith.mulf %512, %496 : vector<8x128xf32>
    %517 = arith.mulf %511, %515 : vector<8x128xf32>
    %518 = arith.addf %516, %517 : vector<8x128xf32>
    %519 = math.tanh %518 : vector<8x128xf32>
    %520 = arith.mulf %513, %519 : vector<8x128xf32>
    %c5_i32_148 = arith.constant 5 : i32
    %c8_i32_149 = arith.constant 8 : i32
    %521 = arith.muli %c5_i32_148, %c8_i32_149 : i32
    %522 = tpu.assume_multiple %521, 8 : i32
    %523 = arith.index_cast %522 : i32 to index
    %c0_150 = arith.constant 0 : index
    %524 = vector.load %arg15[%523, %c0_150] : memref<64x512xf32, #tpu.memory_space<vmem>>, vector<8x512xf32>
    %cst_151 = arith.constant dense<0.000000e+00> : vector<8x512xf32>
    %525 = tpu.matmul %520, %409, %cst_151 {dimension_numbers = #tpu.dot_dimension_numbers<[1], [0], [0], [1], [0, 0, 1, 1], [], []>} : vector<8x128xf32>, vector<128x512xf32>, vector<8x512xf32> -> vector<8x512xf32>
    %526 = arith.addf %524, %525 : vector<8x512xf32>
    %527 = vector.extract_strided_slice %526 {offsets = [0, 0], sizes = [8, 384], strides = [1, 1]} : vector<8x512xf32> to vector<8x384xf32>
    %528 = arith.negf %527 : vector<8x384xf32>
    %529 = math.exp %528 : vector<8x384xf32>
    %cst_152 = arith.constant 1.000000e+00 : f32
    %530 = vector.broadcast %cst_152 : f32 to vector<8x384xf32>
    %531 = arith.addf %530, %529 : vector<8x384xf32>
    %532 = arith.divf %530, %531 : vector<8x384xf32>
    %533 = vector.extract_strided_slice %532 {offsets = [0, 0], sizes = [8, 128], strides = [1, 1]} : vector<8x384xf32> to vector<8x128xf32>
    %534 = vector.extract_strided_slice %532 {offsets = [0, 128], sizes = [8, 128], strides = [1, 1]} : vector<8x384xf32> to vector<8x128xf32>
    %535 = vector.extract_strided_slice %532 {offsets = [0, 256], sizes = [8, 128], strides = [1, 1]} : vector<8x384xf32> to vector<8x128xf32>
    %536 = vector.extract_strided_slice %526 {offsets = [0, 384], sizes = [8, 128], strides = [1, 1]} : vector<8x512xf32> to vector<8x128xf32>
    %537 = math.tanh %536 : vector<8x128xf32>
    %538 = arith.mulf %534, %518 : vector<8x128xf32>
    %539 = arith.mulf %533, %537 : vector<8x128xf32>
    %540 = arith.addf %538, %539 : vector<8x128xf32>
    %541 = math.tanh %540 : vector<8x128xf32>
    %542 = arith.mulf %535, %541 : vector<8x128xf32>
    %c6_i32_153 = arith.constant 6 : i32
    %c8_i32_154 = arith.constant 8 : i32
    %543 = arith.muli %c6_i32_153, %c8_i32_154 : i32
    %544 = tpu.assume_multiple %543, 8 : i32
    %545 = arith.index_cast %544 : i32 to index
    %c0_155 = arith.constant 0 : index
    %546 = vector.load %arg15[%545, %c0_155] : memref<64x512xf32, #tpu.memory_space<vmem>>, vector<8x512xf32>
    %cst_156 = arith.constant dense<0.000000e+00> : vector<8x512xf32>
    %547 = tpu.matmul %542, %409, %cst_156 {dimension_numbers = #tpu.dot_dimension_numbers<[1], [0], [0], [1], [0, 0, 1, 1], [], []>} : vector<8x128xf32>, vector<128x512xf32>, vector<8x512xf32> -> vector<8x512xf32>
    %548 = arith.addf %546, %547 : vector<8x512xf32>
    %549 = vector.extract_strided_slice %548 {offsets = [0, 0], sizes = [8, 384], strides = [1, 1]} : vector<8x512xf32> to vector<8x384xf32>
    %550 = arith.negf %549 : vector<8x384xf32>
    %551 = math.exp %550 : vector<8x384xf32>
    %cst_157 = arith.constant 1.000000e+00 : f32
    %552 = vector.broadcast %cst_157 : f32 to vector<8x384xf32>
    %553 = arith.addf %552, %551 : vector<8x384xf32>
    %554 = arith.divf %552, %553 : vector<8x384xf32>
    %555 = vector.extract_strided_slice %554 {offsets = [0, 0], sizes = [8, 128], strides = [1, 1]} : vector<8x384xf32> to vector<8x128xf32>
    %556 = vector.extract_strided_slice %554 {offsets = [0, 128], sizes = [8, 128], strides = [1, 1]} : vector<8x384xf32> to vector<8x128xf32>
    %557 = vector.extract_strided_slice %554 {offsets = [0, 256], sizes = [8, 128], strides = [1, 1]} : vector<8x384xf32> to vector<8x128xf32>
    %558 = vector.extract_strided_slice %548 {offsets = [0, 384], sizes = [8, 128], strides = [1, 1]} : vector<8x512xf32> to vector<8x128xf32>
    %559 = math.tanh %558 : vector<8x128xf32>
    %560 = arith.mulf %556, %540 : vector<8x128xf32>
    %561 = arith.mulf %555, %559 : vector<8x128xf32>
    %562 = arith.addf %560, %561 : vector<8x128xf32>
    %563 = math.tanh %562 : vector<8x128xf32>
    %564 = arith.mulf %557, %563 : vector<8x128xf32>
    %c7_i32_158 = arith.constant 7 : i32
    %c8_i32_159 = arith.constant 8 : i32
    %565 = arith.muli %c7_i32_158, %c8_i32_159 : i32
    %566 = tpu.assume_multiple %565, 8 : i32
    %567 = arith.index_cast %566 : i32 to index
    %c0_160 = arith.constant 0 : index
    %568 = vector.load %arg15[%567, %c0_160] : memref<64x512xf32, #tpu.memory_space<vmem>>, vector<8x512xf32>
    %cst_161 = arith.constant dense<0.000000e+00> : vector<8x512xf32>
    %569 = tpu.matmul %564, %409, %cst_161 {dimension_numbers = #tpu.dot_dimension_numbers<[1], [0], [0], [1], [0, 0, 1, 1], [], []>} : vector<8x128xf32>, vector<128x512xf32>, vector<8x512xf32> -> vector<8x512xf32>
    %570 = arith.addf %568, %569 : vector<8x512xf32>
    %571 = vector.extract_strided_slice %570 {offsets = [0, 0], sizes = [8, 384], strides = [1, 1]} : vector<8x512xf32> to vector<8x384xf32>
    %572 = arith.negf %571 : vector<8x384xf32>
    %573 = math.exp %572 : vector<8x384xf32>
    %cst_162 = arith.constant 1.000000e+00 : f32
    %574 = vector.broadcast %cst_162 : f32 to vector<8x384xf32>
    %575 = arith.addf %574, %573 : vector<8x384xf32>
    %576 = arith.divf %574, %575 : vector<8x384xf32>
    %577 = vector.extract_strided_slice %576 {offsets = [0, 0], sizes = [8, 128], strides = [1, 1]} : vector<8x384xf32> to vector<8x128xf32>
    %578 = vector.extract_strided_slice %576 {offsets = [0, 128], sizes = [8, 128], strides = [1, 1]} : vector<8x384xf32> to vector<8x128xf32>
    %579 = vector.extract_strided_slice %576 {offsets = [0, 256], sizes = [8, 128], strides = [1, 1]} : vector<8x384xf32> to vector<8x128xf32>
    %580 = vector.extract_strided_slice %570 {offsets = [0, 384], sizes = [8, 128], strides = [1, 1]} : vector<8x512xf32> to vector<8x128xf32>
    %581 = math.tanh %580 : vector<8x128xf32>
    %582 = arith.mulf %578, %562 : vector<8x128xf32>
    %583 = arith.mulf %577, %581 : vector<8x128xf32>
    %584 = arith.addf %582, %583 : vector<8x128xf32>
    %585 = math.tanh %584 : vector<8x128xf32>
    %586 = arith.mulf %579, %585 : vector<8x128xf32>
    %c8_i32_163 = arith.constant 8 : i32
    %c0_164 = arith.constant 0 : index
    %c0_165 = arith.constant 0 : index
    %587 = vector.load %arg10[%c0_164, %c0_165] : memref<128x64xf32, #tpu.memory_space<vmem>>, vector<128x64xf32>
    %cst_166 = arith.constant dense<0.000000e+00> : vector<8x64xf32>
    %588 = tpu.matmul %586, %587, %cst_166 {dimension_numbers = #tpu.dot_dimension_numbers<[1], [0], [0], [1], [0, 0, 1, 1], [], []>} : vector<8x128xf32>, vector<128x64xf32>, vector<8x64xf32> -> vector<8x64xf32>
    %c0_167 = arith.constant 0 : index
    %c0_168 = arith.constant 0 : index
    %589 = vector.load %arg11[%c0_167, %c0_168] : memref<1x64xf32, #tpu.memory_space<vmem>>, vector<1x64xf32>
    %590 = vector.broadcast %589 : vector<1x64xf32> to vector<8x64xf32>
    %591 = arith.addf %588, %590 : vector<8x64xf32>
    %cst_169 = arith.constant 0.000000e+00 : f32
    %592 = vector.broadcast %cst_169 : f32 to vector<8x64xf32>
    %593 = arith.maximumf %591, %592 : vector<8x64xf32>
    %c0_170 = arith.constant 0 : index
    %c0_171 = arith.constant 0 : index
    %594 = vector.load %arg12[%c0_170, %c0_171] : memref<64x8xf32, #tpu.memory_space<vmem>>, vector<64x8xf32>
    %cst_172 = arith.constant dense<0.000000e+00> : vector<8x8xf32>
    %595 = tpu.matmul %593, %594, %cst_172 {dimension_numbers = #tpu.dot_dimension_numbers<[1], [0], [0], [1], [0, 0, 1, 1], [], []>} : vector<8x64xf32>, vector<64x8xf32>, vector<8x8xf32> -> vector<8x8xf32>
    %c0_173 = arith.constant 0 : index
    %c0_174 = arith.constant 0 : index
    %596 = vector.load %arg13[%c0_173, %c0_174] : memref<1x8xf32, #tpu.memory_space<vmem>>, vector<1x8xf32>
    %597 = vector.broadcast %596 : vector<1x8xf32> to vector<8x8xf32>
    %598 = arith.addf %595, %597 : vector<8x8xf32>
    %c0_175 = arith.constant 0 : index
    %c0_176 = arith.constant 0 : index
    %599 = vector.load %arg14[%c0_175, %c0_176] : memref<8x8xf32, #tpu.memory_space<vmem>>, vector<8x8xf32>
    tpu.vector_store %arg14[%c0_175, %c0_176], %598 {strides = array<i32>} : memref<8x8xf32, #tpu.memory_space<vmem>>, vector<8x8xf32>,
    return
  }
}

</mosaic_0001>

<llo_original>
// kernel: simple_lstm_forward.1
$region0: #{simple_lstm_forward.1}
  #allocation0 [shape = 'u32[]', space=smem, size = 0x4, offset = 0x4, fixed_abs, tag = 'smem constant byte address 0x4 - core index']
  #allocation1 [shape = 'u32[144,128]{1,0:T(1,128)}', space=vmem, size = 0x12000, scoped, tag = 'internal scratch']
  #allocation2 [shape = 'f32[64,512]{1,0:T(8,128)}', space=vmem, size = 0x20000, scoped, tag = 'scratch operand']
  #allocation3 [shape = 'f32[64,128]{1,0:T(8,128)}', space=vmem, size = 0x8000, scoped, tag = 'scratch operand']
  #allocation4 [shape = 'f32[64,128]{1,0:T(8,128)}', space=vmem, size = 0x8000, scoped, tag = 'scratch operand']
  %s0 = inlined_call_operand.vmem [shape: f32[64,16], index: 0, kind: input, shape index: {}]
  %s1 = inlined_call_operand.vmem [shape: f32[16,512], index: 1, kind: input, shape index: {}]
  %s2 = inlined_call_operand.vmem [shape: f32[128,512], index: 2, kind: input, shape index: {}]
  %s3 = inlined_call_operand.vmem [shape: f32[1,512], index: 3, kind: input, shape index: {}]
  %s4 = inlined_call_operand.vmem [shape: f32[128,512], index: 4, kind: input, shape index: {}]
  %s5 = inlined_call_operand.vmem [shape: f32[128,512], index: 5, kind: input, shape index: {}]
  %s6 = inlined_call_operand.vmem [shape: f32[1,512], index: 6, kind: input, shape index: {}]
  %s7 = inlined_call_operand.vmem [shape: f32[128,512], index: 7, kind: input, shape index: {}]
  %s8 = inlined_call_operand.vmem [shape: f32[128,512], index: 8, kind: input, shape index: {}]
  %s9 = inlined_call_operand.vmem [shape: f32[1,512], index: 9, kind: input, shape index: {}]
  %s10 = inlined_call_operand.vmem [shape: f32[128,64], index: 10, kind: input, shape index: {}]
  %s11 = inlined_call_operand.vmem [shape: f32[1,64], index: 11, kind: input, shape index: {}]
  %s12 = inlined_call_operand.vmem [shape: f32[64,8], index: 12, kind: input, shape index: {}]
  %s13 = inlined_call_operand.vmem [shape: f32[1,8], index: 13, kind: input, shape index: {}]
  %s14 = inlined_call_operand.vmem [shape: f32[8,8], index: 14, kind: output, shape index: {}]
  %s15 = sld [smem:[#allocation0]]
  $region66: #{simple_lstm_forward.1} parent=0
    _
  %s17 = ssub.s32 1, %s15
  %s18 = scalar_select 0, %s17, %s15
  // Predicated region
  $region2: #{simple_lstm_forward.1} parent=0 // pred_check
    _
  $region3: #{simple_lstm_forward.1} parent=0 // pred_check_branch
    %20 = sbr.rel (0) target = $region5
  $region4: #{simple_lstm_forward.1} parent=0 // pred_region
    _
  $region5: #{simple_lstm_forward.1} parent=0 // pred_fallthru
    _
  // Predicated region
  $region6: #{simple_lstm_forward.1} parent=0 // pred_check
    _
  $region7: #{simple_lstm_forward.1} parent=0 // pred_check_branch
    %22 = sbr.rel (0) target = $region9
  $region8: #{simple_lstm_forward.1} parent=0 // pred_region
    _
  $region9: #{simple_lstm_forward.1} parent=0 // pred_fallthru
    _
  // Predicated region
  $region10: #{simple_lstm_forward.1} parent=0 // pred_check
    _
  $region11: #{simple_lstm_forward.1} parent=0 // pred_check_branch
    %24 = sbr.rel (0) target = $region13
  $region12: #{simple_lstm_forward.1} parent=0 // pred_region
    _
  $region13: #{simple_lstm_forward.1} parent=0 // pred_fallthru
    _
  // Predicated region
  $region14: #{simple_lstm_forward.1} parent=0 // pred_check
    _
  $region15: #{simple_lstm_forward.1} parent=0 // pred_check_branch
    %26 = sbr.rel (0) target = $region17
  $region16: #{simple_lstm_forward.1} parent=0 // pred_region
    _
  $region17: #{simple_lstm_forward.1} parent=0 // pred_fallthru
    _
  // Predicated region
  $region18: #{simple_lstm_forward.1} parent=0 // pred_check
    _
  $region19: #{simple_lstm_forward.1} parent=0 // pred_check_branch
    %28 = sbr.rel (0) target = $region21
  $region20: #{simple_lstm_forward.1} parent=0 // pred_region
    _
  $region21: #{simple_lstm_forward.1} parent=0 // pred_fallthru
    _
  // Predicated region
  $region22: #{simple_lstm_forward.1} parent=0 // pred_check
    _
  $region23: #{simple_lstm_forward.1} parent=0 // pred_check_branch
    %30 = sbr.rel (0) target = $region25
  $region24: #{simple_lstm_forward.1} parent=0 // pred_region
    _
  $region25: #{simple_lstm_forward.1} parent=0 // pred_fallthru
    _
  // Predicated region
  $region26: #{simple_lstm_forward.1} parent=0 // pred_check
    _
  $region27: #{simple_lstm_forward.1} parent=0 // pred_check_branch
    %32 = sbr.rel (0) target = $region29
  $region28: #{simple_lstm_forward.1} parent=0 // pred_region
    _
  $region29: #{simple_lstm_forward.1} parent=0 // pred_fallthru
    _
  // Predicated region
  $region30: #{simple_lstm_forward.1} parent=0 // pred_check
    _
  $region31: #{simple_lstm_forward.1} parent=0 // pred_check_branch
    %34 = sbr.rel (0) target = $region33
  $region32: #{simple_lstm_forward.1} parent=0 // pred_region
    _
  $region33: #{simple_lstm_forward.1} parent=0 // pred_fallthru
    _
  // Predicated region
  $region34: #{simple_lstm_forward.1} parent=0 // pred_check
    _
  $region35: #{simple_lstm_forward.1} parent=0 // pred_check_branch
    %36 = sbr.rel (0) target = $region37
  $region36: #{simple_lstm_forward.1} parent=0 // pred_region
    _
  $region37: #{simple_lstm_forward.1} parent=0 // pred_fallthru
    _
  // Predicated region
  $region38: #{simple_lstm_forward.1} parent=0 // pred_check
    _
  $region39: #{simple_lstm_forward.1} parent=0 // pred_check_branch
    %38 = sbr.rel (0) target = $region41
  $region40: #{simple_lstm_forward.1} parent=0 // pred_region
    _
  $region41: #{simple_lstm_forward.1} parent=0 // pred_fallthru
    _
  // Predicated region
  $region42: #{simple_lstm_forward.1} parent=0 // pred_check
    _
  $region43: #{simple_lstm_forward.1} parent=0 // pred_check_branch
    %40 = sbr.rel (0) target = $region45
  $region44: #{simple_lstm_forward.1} parent=0 // pred_region
    _
  $region45: #{simple_lstm_forward.1} parent=0 // pred_fallthru
    _
  // Predicated region
  $region46: #{simple_lstm_forward.1} parent=0 // pred_check
    _
  $region47: #{simple_lstm_forward.1} parent=0 // pred_check_branch
    %42 = sbr.rel (0) target = $region49
  $region48: #{simple_lstm_forward.1} parent=0 // pred_region
    _
  $region49: #{simple_lstm_forward.1} parent=0 // pred_fallthru
    _
  // Predicated region
  $region50: #{simple_lstm_forward.1} parent=0 // pred_check
    _
  $region51: #{simple_lstm_forward.1} parent=0 // pred_check_branch
    %44 = sbr.rel (0) target = $region53
  $region52: #{simple_lstm_forward.1} parent=0 // pred_region
    _
  $region53: #{simple_lstm_forward.1} parent=0 // pred_fallthru
    _
  // Predicated region
  $region54: #{simple_lstm_forward.1} parent=0 // pred_check
    _
  $region55: #{simple_lstm_forward.1} parent=0 // pred_check_branch
    %46 = sbr.rel (0) target = $region57
  $region56: #{simple_lstm_forward.1} parent=0 // pred_region
    _
  $region57: #{simple_lstm_forward.1} parent=0 // pred_fallthru
    _
  %v47 = vld [vmem:[%s0] sm:$0xff]
  %v48 = vld [vmem:[%s0 + $0x8] sm:$0xff]
  %v49 = vld [vmem:[%s0 + $0x10] sm:$0xff]
  %v50 = vld [vmem:[%s0 + $0x18] sm:$0xff]
  %v51 = vld [vmem:[%s0 + $0x20] sm:$0xff]
  %v52 = vld [vmem:[%s0 + $0x28] sm:$0xff]
  %v53 = vld [vmem:[%s0 + $0x30] sm:$0xff]
  %v54 = vld [vmem:[%s0 + $0x38] sm:$0xff]
  %v55 = vld [vmem:[%s1] sm:$0xff]
  %v56 = vld [vmem:[%s1 + $0x8] sm:$0xff]
  %v57 = vld [vmem:[%s1 + $0x10] sm:$0xff]
  %v58 = vld [vmem:[%s1 + $0x18] sm:$0xff]
  %v59 = vld [vmem:[%s1 + $0x20] sm:$0xff]
  %v60 = vld [vmem:[%s1 + $0x28] sm:$0xff]
  %v61 = vld [vmem:[%s1 + $0x30] sm:$0xff]
  %v62 = vld [vmem:[%s1 + $0x38] sm:$0xff]
  %v63 = vld [vmem:[%s3] sm:$0xf]
  %v65 = vlaneseq
  %v66 = vshrl.u32 %v65, 7
  %v67 = vsub.s32 0, %v66
  %v68 = vrot.slane %v63, %v67
  %v69 = vlaneseq
  %v70 = vshrl.u32 %v69, 7
  %v71 = vsub.s32 1, %v70
  %v72 = vrot.slane %v63, %v71
  %v73 = vlaneseq
  %v74 = vshrl.u32 %v73, 7
  %v75 = vsub.s32 2, %v74
  %v76 = vrot.slane %v63, %v75
  %v77 = vlaneseq
  %v78 = vshrl.u32 %v77, 7
  %v79 = vsub.s32 3, %v78
  %v80 = vrot.slane %v63, %v79
  %vm85 = vcmask 130048
  %v87 = vsel %vm85, %v47, 0
  %v90 = vsel %vm85, %v48, 0
  %v93 = vsel %vm85, %v49, 0
  %v96 = vsel %vm85, %v50, 0
  %v99 = vsel %vm85, %v51, 0
  %v102 = vsel %vm85, %v52, 0
  %v105 = vsel %vm85, %v53, 0
  %v108 = vsel %vm85, %v54, 0
  %110 = vmatprep.subr.mxu0 %v56
  %111 = vmatpush1.msra.mxu0 %v55
  %112 = vmatprep.subr.mxu0 %v60
  %113 = vmatpush1.msra.mxu0 %v59
  %114 = vmatprep.subr.mxu0 0.0
  %115 = vmatpush1.msra.mxu0 0.0
  %116 = vmatprep.subr.mxu0 0.0
  %117 = vmatpush1.msra.mxu0 0.0
  %118 = vmatprep.subr.mxu0 0.0
  %119 = vmatpush1.msra.mxu0 0.0
  %120 = vmatprep.subr.mxu0 0.0
  %121 = vmatpush1.msra.mxu0 0.0
  %122 = vmatprep.subr.mxu0 0.0
  %123 = vmatpush1.msra.mxu0 0.0
  %124 = vmatprep.subr.mxu0 0.0
  %125 = vmatpush1.msra.mxu0 0.0
  %126 = vmatprep.subr.mxu0 0.0
  %127 = vmatpush1.msra.mxu0 0.0
  %128 = vmatprep.subr.mxu0 0.0
  %129 = vmatpush1.msra.mxu0 0.0
  %130 = vmatprep.subr.mxu0 0.0
  %131 = vmatpush1.msra.mxu0 0.0
  %132 = vmatprep.subr.mxu0 0.0
  %133 = vmatpush1.msra.mxu0 0.0
  %134 = vmatprep.subr.mxu0 0.0
  %135 = vmatpush1.msra.mxu0 0.0
  %136 = vmatprep.subr.mxu0 0.0
  %137 = vmatpush1.msra.mxu0 0.0
  %138 = vmatprep.subr.mxu0 0.0
  %139 = vmatpush1.msra.mxu0 0.0
  %140 = vmatprep.subr.mxu0 0.0
  %141 = vmatpush1.msra.mxu0 0.0
  %142 = vmatprep.subr.mxu0 0.0
  %143 = vmatpush1.msra.mxu0 0.0
  %144 = vmatprep.subr.mxu0 0.0
  %145 = vmatpush1.msra.mxu0 0.0
  %146 = vmatprep.subr.mxu0 0.0
  %147 = vmatpush1.msra.mxu0 0.0
  %148 = vmatprep.subr.mxu0 0.0
  %149 = vmatpush1.msra.mxu0 0.0
  %150 = vmatprep.subr.mxu0 0.0
  %151 = vmatpush1.msra.mxu0 0.0
  %152 = vmatprep.subr.mxu0 0.0
  %153 = vmatpush1.msra.mxu0 0.0
  %154 = vmatprep.subr.mxu0 0.0
  %155 = vmatpush1.msra.mxu0 0.0
  %156 = vmatprep.subr.mxu0 0.0
  %157 = vmatpush1.msra.mxu0 0.0
  %158 = vmatprep.subr.mxu0 0.0
  %159 = vmatpush1.msra.mxu0 0.0
  %160 = vmatprep.subr.mxu0 0.0
  %161 = vmatpush1.msra.mxu0 0.0
  %162 = vmatprep.subr.mxu0 0.0
  %163 = vmatpush1.msra.mxu0 0.0
  %164 = vmatprep.subr.mxu0 0.0
  %165 = vmatpush1.msra.mxu0 0.0
  %166 = vmatprep.subr.mxu0 0.0
  %167 = vmatpush1.msra.mxu0 0.0
  %168 = vmatprep.subr.mxu0 0.0
  %169 = vmatpush1.msra.mxu0 0.0
  %170 = vmatprep.subr.mxu0 0.0
  %171 = vmatpush1.msra.mxu0 0.0
  %172 = vmatprep.subr.mxu0 0.0
  %173 = vmatpush1.msra.mxu0 0.0
  %174 = vmatprep.mubr.f32.mxu0 0.0
  %175 = vmatmul.mubr.f32.gmra.mrb[0].mxu0 %v87
  %v176 = vpop.f32.mrb[0].mxu0
  %v177 = vadd.f32 %v68, %v176
  %v178 = vpop.f32.mrb[0].mxu0
  %v179 = vadd.f32 %v72, %v178
  %180 = vmatprep.mubr.f32.mxu0 0.0
  %181 = vmatmul.mubr.f32.gmra.mrb[0].mxu0 %v90
  %v182 = vpop.f32.mrb[0].mxu0
  %v183 = vadd.f32 %v68, %v182
  %v184 = vpop.f32.mrb[0].mxu0
  %v185 = vadd.f32 %v72, %v184
  %186 = vmatprep.mubr.f32.mxu0 0.0
  %187 = vmatmul.mubr.f32.gmra.mrb[0].mxu0 %v93
  %v188 = vpop.f32.mrb[0].mxu0
  %v189 = vadd.f32 %v68, %v188
  %v190 = vpop.f32.mrb[0].mxu0
  %v191 = vadd.f32 %v72, %v190
  %192 = vmatprep.mubr.f32.mxu0 0.0
  %193 = vmatmul.mubr.f32.gmra.mrb[0].mxu0 %v96
  %v194 = vpop.f32.mrb[0].mxu0
  %v195 = vadd.f32 %v68, %v194
  %v196 = vpop.f32.mrb[0].mxu0
  %v197 = vadd.f32 %v72, %v196
  %198 = vmatprep.mubr.f32.mxu0 0.0
  %199 = vmatmul.mubr.f32.gmra.mrb[0].mxu0 %v99
  %v200 = vpop.f32.mrb[0].mxu0
  %v201 = vadd.f32 %v68, %v200
  %v202 = vpop.f32.mrb[0].mxu0
  %v203 = vadd.f32 %v72, %v202
  %204 = vmatprep.mubr.f32.mxu0 0.0
  %205 = vmatmul.mubr.f32.gmra.mrb[0].mxu0 %v102
  %v206 = vpop.f32.mrb[0].mxu0
  %v207 = vadd.f32 %v68, %v206
  %v208 = vpop.f32.mrb[0].mxu0
  %v209 = vadd.f32 %v72, %v208
  %210 = vmatprep.mubr.f32.mxu0 0.0
  %211 = vmatmul.mubr.f32.gmra.mrb[0].mxu0 %v105
  %v212 = vpop.f32.mrb[0].mxu0
  %v213 = vadd.f32 %v68, %v212
  %v214 = vpop.f32.mrb[0].mxu0
  %v215 = vadd.f32 %v72, %v214
  %216 = vmatprep.mubr.f32.mxu0 0.0
  %217 = vmatmul.mubr.f32.gmra.mrb[0].mxu0 %v108
  %v218 = vpop.f32.mrb[0].mxu0
  %v219 = vadd.f32 %v68, %v218
  %v220 = vpop.f32.mrb[0].mxu0
  %v221 = vadd.f32 %v72, %v220
  %222 = vdwg.mxu0
  %223 = vmatprep.subr.mxu0 %v58
  %224 = vmatpush1.msra.mxu0 %v57
  %225 = vmatprep.subr.mxu0 %v62
  %226 = vmatpush1.msra.mxu0 %v61
  %227 = vmatprep.subr.mxu0 0.0
  %228 = vmatpush1.msra.mxu0 0.0
  %229 = vmatprep.subr.mxu0 0.0
  %230 = vmatpush1.msra.mxu0 0.0
  %231 = vmatprep.subr.mxu0 0.0
  %232 = vmatpush1.msra.mxu0 0.0
  %233 = vmatprep.subr.mxu0 0.0
  %234 = vmatpush1.msra.mxu0 0.0
  %235 = vmatprep.subr.mxu0 0.0
  %236 = vmatpush1.msra.mxu0 0.0
  %237 = vmatprep.subr.mxu0 0.0
  %238 = vmatpush1.msra.mxu0 0.0
  %239 = vmatprep.subr.mxu0 0.0
  %240 = vmatpush1.msra.mxu0 0.0
  %241 = vmatprep.subr.mxu0 0.0
  %242 = vmatpush1.msra.mxu0 0.0
  %243 = vmatprep.subr.mxu0 0.0
  %244 = vmatpush1.msra.mxu0 0.0
  %245 = vmatprep.subr.mxu0 0.0
  %246 = vmatpush1.msra.mxu0 0.0
  %247 = vmatprep.subr.mxu0 0.0
  %248 = vmatpush1.msra.mxu0 0.0
  %249 = vmatprep.subr.mxu0 0.0
  %250 = vmatpush1.msra.mxu0 0.0
  %251 = vmatprep.subr.mxu0 0.0
  %252 = vmatpush1.msra.mxu0 0.0
  %253 = vmatprep.subr.mxu0 0.0
  %254 = vmatpush1.msra.mxu0 0.0
  %255 = vmatprep.subr.mxu0 0.0
  %256 = vmatpush1.msra.mxu0 0.0
  %257 = vmatprep.subr.mxu0 0.0
  %258 = vmatpush1.msra.mxu0 0.0
  %259 = vmatprep.subr.mxu0 0.0
  %260 = vmatpush1.msra.mxu0 0.0
  %261 = vmatprep.subr.mxu0 0.0
  %262 = vmatpush1.msra.mxu0 0.0
  %263 = vmatprep.subr.mxu0 0.0
  %264 = vmatpush1.msra.mxu0 0.0
  %265 = vmatprep.subr.mxu0 0.0
  %266 = vmatpush1.msra.mxu0 0.0
  %267 = vmatprep.subr.mxu0 0.0
  %268 = vmatpush1.msra.mxu0 0.0
  %269 = vmatprep.subr.mxu0 0.0
  %270 = vmatpush1.msra.mxu0 0.0
  %271 = vmatprep.subr.mxu0 0.0
  %272 = vmatpush1.msra.mxu0 0.0
  %273 = vmatprep.subr.mxu0 0.0
  %274 = vmatpush1.msra.mxu0 0.0
  %275 = vmatprep.subr.mxu0 0.0
  %276 = vmatpush1.msra.mxu0 0.0
  %277 = vmatprep.subr.mxu0 0.0
  %278 = vmatpush1.msra.mxu0 0.0
  %279 = vmatprep.subr.mxu0 0.0
  %280 = vmatpush1.msra.mxu0 0.0
  %281 = vmatprep.subr.mxu0 0.0
  %282 = vmatpush1.msra.mxu0 0.0
  %283 = vmatprep.subr.mxu0 0.0
  %284 = vmatpush1.msra.mxu0 0.0
  %285 = vmatprep.subr.mxu0 0.0
  %286 = vmatpush1.msra.mxu0 0.0
  %287 = vmatprep.mubr.f32.mxu0 0.0
  %288 = vmatmul.mubr.f32.gmra.mrb[0].mxu0 %v87
  %v289 = vpop.f32.mrb[0].mxu0
  %v290 = vadd.f32 %v76, %v289
  %v291 = vpop.f32.mrb[0].mxu0
  %v292 = vadd.f32 %v80, %v291
  %293 = vmatprep.mubr.f32.mxu0 0.0
  %294 = vmatmul.mubr.f32.gmra.mrb[0].mxu0 %v90
  %v295 = vpop.f32.mrb[0].mxu0
  %v296 = vadd.f32 %v76, %v295
  %v297 = vpop.f32.mrb[0].mxu0
  %v298 = vadd.f32 %v80, %v297
  %299 = vmatprep.mubr.f32.mxu0 0.0
  %300 = vmatmul.mubr.f32.gmra.mrb[0].mxu0 %v93
  %v301 = vpop.f32.mrb[0].mxu0
  %v302 = vadd.f32 %v76, %v301
  %v303 = vpop.f32.mrb[0].mxu0
  %v304 = vadd.f32 %v80, %v303
  %305 = vmatprep.mubr.f32.mxu0 0.0
  %306 = vmatmul.mubr.f32.gmra.mrb[0].mxu0 %v96
  %v307 = vpop.f32.mrb[0].mxu0
  %v308 = vadd.f32 %v76, %v307
  %v309 = vpop.f32.mrb[0].mxu0
  %v310 = vadd.f32 %v80, %v309
  %311 = vmatprep.mubr.f32.mxu0 0.0
  %312 = vmatmul.mubr.f32.gmra.mrb[0].mxu0 %v99
  %v313 = vpop.f32.mrb[0].mxu0
  %v314 = vadd.f32 %v76, %v313
  %v315 = vpop.f32.mrb[0].mxu0
  %v316 = vadd.f32 %v80, %v315
  %317 = vmatprep.mubr.f32.mxu0 0.0
  %318 = vmatmul.mubr.f32.gmra.mrb[0].mxu0 %v102
  %v319 = vpop.f32.mrb[0].mxu0
  %v320 = vadd.f32 %v76, %v319
  %v321 = vpop.f32.mrb[0].mxu0
  %v322 = vadd.f32 %v80, %v321
  %323 = vmatprep.mubr.f32.mxu0 0.0
  %324 = vmatmul.mubr.f32.gmra.mrb[0].mxu0 %v105
  %v325 = vpop.f32.mrb[0].mxu0
  %v326 = vadd.f32 %v76, %v325
  %v327 = vpop.f32.mrb[0].mxu0
  %v328 = vadd.f32 %v80, %v327
  %329 = vmatprep.mubr.f32.mxu0 0.0
  %330 = vmatmul.mubr.f32.gmra.mrb[0].mxu0 %v108
  %v331 = vpop.f32.mrb[0].mxu0
  %v332 = vadd.f32 %v76, %v331
  %v333 = vpop.f32.mrb[0].mxu0
  %v334 = vadd.f32 %v80, %v333
  %335 = vdwg.mxu0
  %336 = vst [vmem:[#allocation2] sm:$0xff] %v177
  %337 = vst [vmem:[#allocation2 + $0x8] sm:$0xff] %v179
  %338 = vst [vmem:[#allocation2 + $0x10] sm:$0xff] %v290
  %339 = vst [vmem:[#allocation2 + $0x18] sm:$0xff] %v292
  %340 = vst [vmem:[#allocation2 + $0x20] sm:$0xff] %v183
  %341 = vst [vmem:[#allocation2 + $0x28] sm:$0xff] %v185
  %342 = vst [vmem:[#allocation2 + $0x30] sm:$0xff] %v296
  %343 = vst [vmem:[#allocation2 + $0x38] sm:$0xff] %v298
  %344 = vst [vmem:[#allocation2 + $0x40] sm:$0xff] %v189
  %345 = vst [vmem:[#allocation2 + $0x48] sm:$0xff] %v191
  %346 = vst [vmem:[#allocation2 + $0x50] sm:$0xff] %v302
  %347 = vst [vmem:[#allocation2 + $0x58] sm:$0xff] %v304
  %348 = vst [vmem:[#allocation2 + $0x60] sm:$0xff] %v195
  %349 = vst [vmem:[#allocation2 + $0x68] sm:$0xff] %v197
  %350 = vst [vmem:[#allocation2 + $0x70] sm:$0xff] %v308
  %351 = vst [vmem:[#allocation2 + $0x78] sm:$0xff] %v310
  %352 = vst [vmem:[#allocation2 + $0x80] sm:$0xff] %v201
  %353 = vst [vmem:[#allocation2 + $0x88] sm:$0xff] %v203
  %354 = vst [vmem:[#allocation2 + $0x90] sm:$0xff] %v314
  %355 = vst [vmem:[#allocation2 + $0x98] sm:$0xff] %v316
  %356 = vst [vmem:[#allocation2 + $0xa0] sm:$0xff] %v207
  %357 = vst [vmem:[#allocation2 + $0xa8] sm:$0xff] %v209
  %358 = vst [vmem:[#allocation2 + $0xb0] sm:$0xff] %v320
  %359 = vst [vmem:[#allocation2 + $0xb8] sm:$0xff] %v322
  %360 = vst [vmem:[#allocation2 + $0xc0] sm:$0xff] %v213
  %361 = vst [vmem:[#allocation2 + $0xc8] sm:$0xff] %v215
  %362 = vst [vmem:[#allocation2 + $0xd0] sm:$0xff] %v326
  %363 = vst [vmem:[#allocation2 + $0xd8] sm:$0xff] %v328
  %364 = vst [vmem:[#allocation2 + $0xe0] sm:$0xff] %v219
  %365 = vst [vmem:[#allocation2 + $0xe8] sm:$0xff] %v221
  %366 = vst [vmem:[#allocation2 + $0xf0] sm:$0xff] %v332
  %367 = vst [vmem:[#allocation2 + $0xf8] sm:$0xff] %v334
  %v368 = vld [vmem:[%s2] sm:$0xff]
  %v369 = vld [vmem:[%s2 + $0x8] sm:$0xff]
  %v370 = vld [vmem:[%s2 + $0x10] sm:$0xff]
  %v371 = vld [vmem:[%s2 + $0x18] sm:$0xff]
  %v372 = vld [vmem:[%s2 + $0x20] sm:$0xff]
  %v373 = vld [vmem:[%s2 + $0x28] sm:$0xff]
  %v374 = vld [vmem:[%s2 + $0x30] sm:$0xff]
  %v375 = vld [vmem:[%s2 + $0x38] sm:$0xff]
  %v376 = vld [vmem:[%s2 + $0x40] sm:$0xff]
  %v377 = vld [vmem:[%s2 + $0x48] sm:$0xff]
  %v378 = vld [vmem:[%s2 + $0x50] sm:$0xff]
  %v379 = vld [vmem:[%s2 + $0x58] sm:$0xff]
  %v380 = vld [vmem:[%s2 + $0x60] sm:$0xff]
  %v381 = vld [vmem:[%s2 + $0x68] sm:$0xff]
  %v382 = vld [vmem:[%s2 + $0x70] sm:$0xff]
  %v383 = vld [vmem:[%s2 + $0x78] sm:$0xff]
  %v384 = vld [vmem:[%s2 + $0x80] sm:$0xff]
  %v385 = vld [vmem:[%s2 + $0x88] sm:$0xff]
  %v386 = vld [vmem:[%s2 + $0x90] sm:$0xff]
  %v387 = vld [vmem:[%s2 + $0x98] sm:$0xff]
  %v388 = vld [vmem:[%s2 + $0xa0] sm:$0xff]
  %v389 = vld [vmem:[%s2 + $0xa8] sm:$0xff]
  %v390 = vld [vmem:[%s2 + $0xb0] sm:$0xff]
  %v391 = vld [vmem:[%s2 + $0xb8] sm:$0xff]
  %v392 = vld [vmem:[%s2 + $0xc0] sm:$0xff]
  %v393 = vld [vmem:[%s2 + $0xc8] sm:$0xff]
  %v394 = vld [vmem:[%s2 + $0xd0] sm:$0xff]
  %v395 = vld [vmem:[%s2 + $0xd8] sm:$0xff]
  %v396 = vld [vmem:[%s2 + $0xe0] sm:$0xff]
  %v397 = vld [vmem:[%s2 + $0xe8] sm:$0xff]
  %v398 = vld [vmem:[%s2 + $0xf0] sm:$0xff]
  %v399 = vld [vmem:[%s2 + $0xf8] sm:$0xff]
  %v400 = vld [vmem:[%s2 + $0x100] sm:$0xff]
  %v401 = vld [vmem:[%s2 + $0x108] sm:$0xff]
  %v402 = vld [vmem:[%s2 + $0x110] sm:$0xff]
  %v403 = vld [vmem:[%s2 + $0x118] sm:$0xff]
  %v404 = vld [vmem:[%s2 + $0x120] sm:$0xff]
  %v405 = vld [vmem:[%s2 + $0x128] sm:$0xff]
  %v406 = vld [vmem:[%s2 + $0x130] sm:$0xff]
  %v407 = vld [vmem:[%s2 + $0x138] sm:$0xff]
  %v408 = vld [vmem:[%s2 + $0x140] sm:$0xff]
  %v409 = vld [vmem:[%s2 + $0x148] sm:$0xff]
  %v410 = vld [vmem:[%s2 + $0x150] sm:$0xff]
  %v411 = vld [vmem:[%s2 + $0x158] sm:$0xff]
  %v412 = vld [vmem:[%s2 + $0x160] sm:$0xff]
  %v413 = vld [vmem:[%s2 + $0x168] sm:$0xff]
  %v414 = vld [vmem:[%s2 + $0x170] sm:$0xff]
  %v415 = vld [vmem:[%s2 + $0x178] sm:$0xff]
  %v416 = vld [vmem:[%s2 + $0x180] sm:$0xff]
  %v417 = vld [vmem:[%s2 + $0x188] sm:$0xff]
  %v418 = vld [vmem:[%s2 + $0x190] sm:$0xff]
  %v419 = vld [vmem:[%s2 + $0x198] sm:$0xff]
  %v420 = vld [vmem:[%s2 + $0x1a0] sm:$0xff]
  %v421 = vld [vmem:[%s2 + $0x1a8] sm:$0xff]
  %v422 = vld [vmem:[%s2 + $0x1b0] sm:$0xff]
  %v423 = vld [vmem:[%s2 + $0x1b8] sm:$0xff]
  %v424 = vld [vmem:[%s2 + $0x1c0] sm:$0xff]
  %v425 = vld [vmem:[%s2 + $0x1c8] sm:$0xff]
  %v426 = vld [vmem:[%s2 + $0x1d0] sm:$0xff]
  %v427 = vld [vmem:[%s2 + $0x1d8] sm:$0xff]
  %v428 = vld [vmem:[%s2 + $0x1e0] sm:$0xff]
  %v429 = vld [vmem:[%s2 + $0x1e8] sm:$0xff]
  %v430 = vld [vmem:[%s2 + $0x1f0] sm:$0xff]
  %v431 = vld [vmem:[%s2 + $0x1f8] sm:$0xff]
  %s432 = smul.u32 0, 4
  %s433 = smul.addr %s432, 8
  %s434 = scalar_lea.vmem [#allocation2], %s433
  %v435 = vld [vmem:[%s434] sm:$0xff]
  %v436 = vld [vmem:[%s434 + $0x8] sm:$0xff]
  %v437 = vld [vmem:[%s434 + $0x10] sm:$0xff]
  %v438 = vld [vmem:[%s434 + $0x18] sm:$0xff]
  %439 = vmatprep.subr.mxu0 %v369
  %440 = vmatpush1.msra.mxu0 %v368
  %441 = vmatprep.subr.mxu0 %v373
  %442 = vmatpush1.msra.mxu0 %v372
  %443 = vmatprep.subr.mxu0 %v377
  %444 = vmatpush1.msra.mxu0 %v376
  %445 = vmatprep.subr.mxu0 %v381
  %446 = vmatpush1.msra.mxu0 %v380
  %447 = vmatprep.subr.mxu0 %v385
  %448 = vmatpush1.msra.mxu0 %v384
  %449 = vmatprep.subr.mxu0 %v389
  %450 = vmatpush1.msra.mxu0 %v388
  %451 = vmatprep.subr.mxu0 %v393
  %452 = vmatpush1.msra.mxu0 %v392
  %453 = vmatprep.subr.mxu0 %v397
  %454 = vmatpush1.msra.mxu0 %v396
  %455 = vmatprep.subr.mxu0 %v401
  %456 = vmatpush1.msra.mxu0 %v400
  %457 = vmatprep.subr.mxu0 %v405
  %458 = vmatpush1.msra.mxu0 %v404
  %459 = vmatprep.subr.mxu0 %v409
  %460 = vmatpush1.msra.mxu0 %v408
  %461 = vmatprep.subr.mxu0 %v413
  %462 = vmatpush1.msra.mxu0 %v412
  %463 = vmatprep.subr.mxu0 %v417
  %464 = vmatpush1.msra.mxu0 %v416
  %465 = vmatprep.subr.mxu0 %v421
  %466 = vmatpush1.msra.mxu0 %v420
  %467 = vmatprep.subr.mxu0 %v425
  %468 = vmatpush1.msra.mxu0 %v424
  %469 = vmatprep.subr.mxu0 %v429
  %470 = vmatpush1.msra.mxu0 %v428
  %471 = vmatprep.subr.mxu0 0.0
  %472 = vmatpush1.msra.mxu0 0.0
  %473 = vmatprep.subr.mxu0 0.0
  %474 = vmatpush1.msra.mxu0 0.0
  %475 = vmatprep.subr.mxu0 0.0
  %476 = vmatpush1.msra.mxu0 0.0
  %477 = vmatprep.subr.mxu0 0.0
  %478 = vmatpush1.msra.mxu0 0.0
  %479 = vmatprep.subr.mxu0 0.0
  %480 = vmatpush1.msra.mxu0 0.0
  %481 = vmatprep.subr.mxu0 0.0
  %482 = vmatpush1.msra.mxu0 0.0
  %483 = vmatprep.subr.mxu0 0.0
  %484 = vmatpush1.msra.mxu0 0.0
  %485 = vmatprep.subr.mxu0 0.0
  %486 = vmatpush1.msra.mxu0 0.0
  %487 = vmatprep.subr.mxu0 0.0
  %488 = vmatpush1.msra.mxu0 0.0
  %489 = vmatprep.subr.mxu0 0.0
  %490 = vmatpush1.msra.mxu0 0.0
  %491 = vmatprep.subr.mxu0 0.0
  %492 = vmatpush1.msra.mxu0 0.0
  %493 = vmatprep.subr.mxu0 0.0
  %494 = vmatpush1.msra.mxu0 0.0
  %495 = vmatprep.subr.mxu0 0.0
  %496 = vmatpush1.msra.mxu0 0.0
  %497 = vmatprep.subr.mxu0 0.0
  %498 = vmatpush1.msra.mxu0 0.0
  %499 = vmatprep.subr.mxu0 0.0
  %500 = vmatpush1.msra.mxu0 0.0
  %501 = vmatprep.subr.mxu0 0.0
  %502 = vmatpush1.msra.mxu0 0.0
  %503 = vmatprep.mubr.f32.mxu0 0.0
  %504 = vmatmul.mubr.f32.gmra.mrb[0].mxu0 0.0
  %v505 = vpop.f32.mrb[0].mxu0
  %v506 = vadd.f32 0.0, %v505
  %v507 = vpop.f32.mrb[0].mxu0
  %v508 = vadd.f32 0.0, %v507
  %509 = vdwg.mxu0
  %510 = vmatprep.subr.mxu0 %v371
  %511 = vmatpush1.msra.mxu0 %v370
  %512 = vmatprep.subr.mxu0 %v375
  %513 = vmatpush1.msra.mxu0 %v374
  %514 = vmatprep.subr.mxu0 %v379
  %515 = vmatpush1.msra.mxu0 %v378
  %516 = vmatprep.subr.mxu0 %v383
  %517 = vmatpush1.msra.mxu0 %v382
  %518 = vmatprep.subr.mxu0 %v387
  %519 = vmatpush1.msra.mxu0 %v386
  %520 = vmatprep.subr.mxu0 %v391
  %521 = vmatpush1.msra.mxu0 %v390
  %522 = vmatprep.subr.mxu0 %v395
  %523 = vmatpush1.msra.mxu0 %v394
  %524 = vmatprep.subr.mxu0 %v399
  %525 = vmatpush1.msra.mxu0 %v398
  %526 = vmatprep.subr.mxu0 %v403
  %527 = vmatpush1.msra.mxu0 %v402
  %528 = vmatprep.subr.mxu0 %v407
  %529 = vmatpush1.msra.mxu0 %v406
  %530 = vmatprep.subr.mxu0 %v411
  %531 = vmatpush1.msra.mxu0 %v410
  %532 = vmatprep.subr.mxu0 %v415
  %533 = vmatpush1.msra.mxu0 %v414
  %534 = vmatprep.subr.mxu0 %v419
  %535 = vmatpush1.msra.mxu0 %v418
  %536 = vmatprep.subr.mxu0 %v423
  %537 = vmatpush1.msra.mxu0 %v422
  %538 = vmatprep.subr.mxu0 %v427
  %539 = vmatpush1.msra.mxu0 %v426
  %540 = vmatprep.subr.mxu0 %v431
  %541 = vmatpush1.msra.mxu0 %v430
  %542 = vmatprep.subr.mxu0 0.0
  %543 = vmatpush1.msra.mxu0 0.0
  %544 = vmatprep.subr.mxu0 0.0
  %545 = vmatpush1.msra.mxu0 0.0
  %546 = vmatprep.subr.mxu0 0.0
  %547 = vmatpush1.msra.mxu0 0.0
  %548 = vmatprep.subr.mxu0 0.0
  %549 = vmatpush1.msra.mxu0 0.0
  %550 = vmatprep.subr.mxu0 0.0
  %551 = vmatpush1.msra.mxu0 0.0
  %552 = vmatprep.subr.mxu0 0.0
  %553 = vmatpush1.msra.mxu0 0.0
  %554 = vmatprep.subr.mxu0 0.0
  %555 = vmatpush1.msra.mxu0 0.0
  %556 = vmatprep.subr.mxu0 0.0
  %557 = vmatpush1.msra.mxu0 0.0
  %558 = vmatprep.subr.mxu0 0.0
  %559 = vmatpush1.msra.mxu0 0.0
  %560 = vmatprep.subr.mxu0 0.0
  %561 = vmatpush1.msra.mxu0 0.0
  %562 = vmatprep.subr.mxu0 0.0
  %563 = vmatpush1.msra.mxu0 0.0
  %564 = vmatprep.subr.mxu0 0.0
  %565 = vmatpush1.msra.mxu0 0.0
  %566 = vmatprep.subr.mxu0 0.0
  %567 = vmatpush1.msra.mxu0 0.0
  %568 = vmatprep.subr.mxu0 0.0
  %569 = vmatpush1.msra.mxu0 0.0
  %570 = vmatprep.subr.mxu0 0.0
  %571 = vmatpush1.msra.mxu0 0.0
  %572 = vmatprep.subr.mxu0 0.0
  %573 = vmatpush1.msra.mxu0 0.0
  %574 = vmatprep.mubr.f32.mxu0 0.0
  %575 = vmatmul.mubr.f32.gmra.mrb[0].mxu0 0.0
  %v576 = vpop.f32.mrb[0].mxu0
  %v577 = vadd.f32 0.0, %v576
  %v578 = vpop.f32.mrb[0].mxu0
  %v579 = vadd.f32 0.0, %v578
  %580 = vdwg.mxu0
  %v581 = vadd.f32 %v435, %v506
  %v582 = vadd.f32 %v436, %v508
  %v583 = vadd.f32 %v437, %v577
  %v584 = vadd.f32 %v438, %v579
  %v585 = vxor.u32 %v581, 2147483648
  %v586 = vxor.u32 %v582, 2147483648
  %v587 = vxor.u32 %v583, 2147483648
  %v588 = vmul.f32 %v585, 1.442695
  %v589 = vpow.pop %v588
  %v590 = vmul.f32 %v586, 1.442695
  %v591 = vpow.pop %v590
  %v592 = vmul.f32 %v587, 1.442695
  %v593 = vpow.pop %v592
  %v594 = vadd.f32 %v589, 1.0
  %v595 = vadd.f32 %v591, 1.0
  %v596 = vadd.f32 %v593, 1.0
  %v597 = vrcp.pop %v594
  %v598 = vmul.f32 1.0, %v597
  %v599 = vrcp.pop %v595
  %v600 = vmul.f32 1.0, %v599
  %v601 = vrcp.pop %v596
  %v602 = vmul.f32 1.0, %v601
  %v603 = vtanh.pop %v584
  %v604 = vmul.f32 %v600, 0.0
  %v605 = vmul.f32 %v598, %v603
  %v606 = vadd.f32 %v604, %v605
  %v607 = vtanh.pop %v606
  %v608 = vmul.f32 %v602, %v607
  %609 = vst [vmem:[#allocation3] sm:$0xff] %v608
  %s610 = smul.u32 1, 4
  %s611 = smul.addr %s610, 8
  %s612 = scalar_lea.vmem [#allocation2], %s611
  %v613 = vld [vmem:[%s612] sm:$0xff]
  %v614 = vld [vmem:[%s612 + $0x8] sm:$0xff]
  %v615 = vld [vmem:[%s612 + $0x10] sm:$0xff]
  %v616 = vld [vmem:[%s612 + $0x18] sm:$0xff]
  %617 = vmatprep.subr.mxu0 %v369
  %618 = vmatpush1.msra.mxu0 %v368
  %619 = vmatprep.subr.mxu0 %v373
  %620 = vmatpush1.msra.mxu0 %v372
  %621 = vmatprep.subr.mxu0 %v377
  %622 = vmatpush1.msra.mxu0 %v376
  %623 = vmatprep.subr.mxu0 %v381
  %624 = vmatpush1.msra.mxu0 %v380
  %625 = vmatprep.subr.mxu0 %v385
  %626 = vmatpush1.msra.mxu0 %v384
  %627 = vmatprep.subr.mxu0 %v389
  %628 = vmatpush1.msra.mxu0 %v388
  %629 = vmatprep.subr.mxu0 %v393
  %630 = vmatpush1.msra.mxu0 %v392
  %631 = vmatprep.subr.mxu0 %v397
  %632 = vmatpush1.msra.mxu0 %v396
  %633 = vmatprep.subr.mxu0 %v401
  %634 = vmatpush1.msra.mxu0 %v400
  %635 = vmatprep.subr.mxu0 %v405
  %636 = vmatpush1.msra.mxu0 %v404
  %637 = vmatprep.subr.mxu0 %v409
  %638 = vmatpush1.msra.mxu0 %v408
  %639 = vmatprep.subr.mxu0 %v413
  %640 = vmatpush1.msra.mxu0 %v412
  %641 = vmatprep.subr.mxu0 %v417
  %642 = vmatpush1.msra.mxu0 %v416
  %643 = vmatprep.subr.mxu0 %v421
  %644 = vmatpush1.msra.mxu0 %v420
  %645 = vmatprep.subr.mxu0 %v425
  %646 = vmatpush1.msra.mxu0 %v424
  %647 = vmatprep.subr.mxu0 %v429
  %648 = vmatpush1.msra.mxu0 %v428
  %649 = vmatprep.subr.mxu0 0.0
  %650 = vmatpush1.msra.mxu0 0.0
  %651 = vmatprep.subr.mxu0 0.0
  %652 = vmatpush1.msra.mxu0 0.0
  %653 = vmatprep.subr.mxu0 0.0
  %654 = vmatpush1.msra.mxu0 0.0
  %655 = vmatprep.subr.mxu0 0.0
  %656 = vmatpush1.msra.mxu0 0.0
  %657 = vmatprep.subr.mxu0 0.0
  %658 = vmatpush1.msra.mxu0 0.0
  %659 = vmatprep.subr.mxu0 0.0
  %660 = vmatpush1.msra.mxu0 0.0
  %661 = vmatprep.subr.mxu0 0.0
  %662 = vmatpush1.msra.mxu0 0.0
  %663 = vmatprep.subr.mxu0 0.0
  %664 = vmatpush1.msra.mxu0 0.0
  %665 = vmatprep.subr.mxu0 0.0
  %666 = vmatpush1.msra.mxu0 0.0
  %667 = vmatprep.subr.mxu0 0.0
  %668 = vmatpush1.msra.mxu0 0.0
  %669 = vmatprep.subr.mxu0 0.0
  %670 = vmatpush1.msra.mxu0 0.0
  %671 = vmatprep.subr.mxu0 0.0
  %672 = vmatpush1.msra.mxu0 0.0
  %673 = vmatprep.subr.mxu0 0.0
  %674 = vmatpush1.msra.mxu0 0.0
  %675 = vmatprep.subr.mxu0 0.0
  %676 = vmatpush1.msra.mxu0 0.0
  %677 = vmatprep.subr.mxu0 0.0
  %678 = vmatpush1.msra.mxu0 0.0
  %679 = vmatprep.subr.mxu0 0.0
  %680 = vmatpush1.msra.mxu0 0.0
  %681 = vmatprep.mubr.f32.mxu0 0.0
  %682 = vmatmul.mubr.f32.gmra.mrb[0].mxu0 %v608
  %v683 = vpop.f32.mrb[0].mxu0
  %v684 = vadd.f32 0.0, %v683
  %v685 = vpop.f32.mrb[0].mxu0
  %v686 = vadd.f32 0.0, %v685
  %687 = vdwg.mxu0
  %688 = vmatprep.subr.mxu0 %v371
  %689 = vmatpush1.msra.mxu0 %v370
  %690 = vmatprep.subr.mxu0 %v375
  %691 = vmatpush1.msra.mxu0 %v374
  %692 = vmatprep.subr.mxu0 %v379
  %693 = vmatpush1.msra.mxu0 %v378
  %694 = vmatprep.subr.mxu0 %v383
  %695 = vmatpush1.msra.mxu0 %v382
  %696 = vmatprep.subr.mxu0 %v387
  %697 = vmatpush1.msra.mxu0 %v386
  %698 = vmatprep.subr.mxu0 %v391
  %699 = vmatpush1.msra.mxu0 %v390
  %700 = vmatprep.subr.mxu0 %v395
  %701 = vmatpush1.msra.mxu0 %v394
  %702 = vmatprep.subr.mxu0 %v399
  %703 = vmatpush1.msra.mxu0 %v398
  %704 = vmatprep.subr.mxu0 %v403
  %705 = vmatpush1.msra.mxu0 %v402
  %706 = vmatprep.subr.mxu0 %v407
  %707 = vmatpush1.msra.mxu0 %v406
  %708 = vmatprep.subr.mxu0 %v411
  %709 = vmatpush1.msra.mxu0 %v410
  %710 = vmatprep.subr.mxu0 %v415
  %711 = vmatpush1.msra.mxu0 %v414
  %712 = vmatprep.subr.mxu0 %v419
  %713 = vmatpush1.msra.mxu0 %v418
  %714 = vmatprep.subr.mxu0 %v423
  %715 = vmatpush1.msra.mxu0 %v422
  %716 = vmatprep.subr.mxu0 %v427
  %717 = vmatpush1.msra.mxu0 %v426
  %718 = vmatprep.subr.mxu0 %v431
  %719 = vmatpush1.msra.mxu0 %v430
  %720 = vmatprep.subr.mxu0 0.0
  %721 = vmatpush1.msra.mxu0 0.0
  %722 = vmatprep.subr.mxu0 0.0
  %723 = vmatpush1.msra.mxu0 0.0
  %724 = vmatprep.subr.mxu0 0.0
  %725 = vmatpush1.msra.mxu0 0.0
  %726 = vmatprep.subr.mxu0 0.0
  %727 = vmatpush1.msra.mxu0 0.0
  %728 = vmatprep.subr.mxu0 0.0
  %729 = vmatpush1.msra.mxu0 0.0
  %730 = vmatprep.subr.mxu0 0.0
  %731 = vmatpush1.msra.mxu0 0.0
  %732 = vmatprep.subr.mxu0 0.0
  %733 = vmatpush1.msra.mxu0 0.0
  %734 = vmatprep.subr.mxu0 0.0
  %735 = vmatpush1.msra.mxu0 0.0
  %736 = vmatprep.subr.mxu0 0.0
  %737 = vmatpush1.msra.mxu0 0.0
  %738 = vmatprep.subr.mxu0 0.0
  %739 = vmatpush1.msra.mxu0 0.0
  %740 = vmatprep.subr.mxu0 0.0
  %741 = vmatpush1.msra.mxu0 0.0
  %742 = vmatprep.subr.mxu0 0.0
  %743 = vmatpush1.msra.mxu0 0.0
  %744 = vmatprep.subr.mxu0 0.0
  %745 = vmatpush1.msra.mxu0 0.0
  %746 = vmatprep.subr.mxu0 0.0
  %747 = vmatpush1.msra.mxu0 0.0
  %748 = vmatprep.subr.mxu0 0.0
  %749 = vmatpush1.msra.mxu0 0.0
  %750 = vmatprep.subr.mxu0 0.0
  %751 = vmatpush1.msra.mxu0 0.0
  %752 = vmatprep.mubr.f32.mxu0 0.0
  %753 = vmatmul.mubr.f32.gmra.mrb[0].mxu0 %v608
  %v754 = vpop.f32.mrb[0].mxu0
  %v755 = vadd.f32 0.0, %v754
  %v756 = vpop.f32.mrb[0].mxu0
  %v757 = vadd.f32 0.0, %v756
  %758 = vdwg.mxu0
  %v759 = vadd.f32 %v613, %v684
  %v760 = vadd.f32 %v614, %v686
  %v761 = vadd.f32 %v615, %v755
  %v762 = vadd.f32 %v616, %v757
  %v763 = vxor.u32 %v759, 2147483648
  %v764 = vxor.u32 %v760, 2147483648
  %v765 = vxor.u32 %v761, 2147483648
  %v766 = vmul.f32 %v763, 1.442695
  %v767 = vpow.pop %v766
  %v768 = vmul.f32 %v764, 1.442695
  %v769 = vpow.pop %v768
  %v770 = vmul.f32 %v765, 1.442695
  %v771 = vpow.pop %v770
  %v772 = vadd.f32 %v767, 1.0
  %v773 = vadd.f32 %v769, 1.0
  %v774 = vadd.f32 %v771, 1.0
  %v775 = vrcp.pop %v772
  %v776 = vmul.f32 1.0, %v775
  %v777 = vrcp.pop %v773
  %v778 = vmul.f32 1.0, %v777
  %v779 = vrcp.pop %v774
  %v780 = vmul.f32 1.0, %v779
  %v781 = vtanh.pop %v762
  %v782 = vmul.f32 %v778, %v606
  %v783 = vmul.f32 %v776, %v781
  %v784 = vadd.f32 %v782, %v783
  %v785 = vtanh.pop %v784
  %v786 = vmul.f32 %v780, %v785
  %s787 = scalar_lea.vmem [#allocation3], 8
  %788 = vst [vmem:[%s787] sm:$0xff] %v786
  %s789 = smul.u32 2, 4
  %s790 = smul.addr %s789, 8
  %s791 = scalar_lea.vmem [#allocation2], %s790
  %v792 = vld [vmem:[%s791] sm:$0xff]
  %v793 = vld [vmem:[%s791 + $0x8] sm:$0xff]
  %v794 = vld [vmem:[%s791 + $0x10] sm:$0xff]
  %v795 = vld [vmem:[%s791 + $0x18] sm:$0xff]
  %796 = vmatprep.subr.mxu0 %v369
  %797 = vmatpush1.msra.mxu0 %v368
  %798 = vmatprep.subr.mxu0 %v373
  %799 = vmatpush1.msra.mxu0 %v372
  %800 = vmatprep.subr.mxu0 %v377
  %801 = vmatpush1.msra.mxu0 %v376
  %802 = vmatprep.subr.mxu0 %v381
  %803 = vmatpush1.msra.mxu0 %v380
  %804 = vmatprep.subr.mxu0 %v385
  %805 = vmatpush1.msra.mxu0 %v384
  %806 = vmatprep.subr.mxu0 %v389
  %807 = vmatpush1.msra.mxu0 %v388
  %808 = vmatprep.subr.mxu0 %v393
  %809 = vmatpush1.msra.mxu0 %v392
  %810 = vmatprep.subr.mxu0 %v397
  %811 = vmatpush1.msra.mxu0 %v396
  %812 = vmatprep.subr.mxu0 %v401
  %813 = vmatpush1.msra.mxu0 %v400
  %814 = vmatprep.subr.mxu0 %v405
  %815 = vmatpush1.msra.mxu0 %v404
  %816 = vmatprep.subr.mxu0 %v409
  %817 = vmatpush1.msra.mxu0 %v408
  %818 = vmatprep.subr.mxu0 %v413
  %819 = vmatpush1.msra.mxu0 %v412
  %820 = vmatprep.subr.mxu0 %v417
  %821 = vmatpush1.msra.mxu0 %v416
  %822 = vmatprep.subr.mxu0 %v421
  %823 = vmatpush1.msra.mxu0 %v420
  %824 = vmatprep.subr.mxu0 %v425
  %825 = vmatpush1.msra.mxu0 %v424
  %826 = vmatprep.subr.mxu0 %v429
  %827 = vmatpush1.msra.mxu0 %v428
  %828 = vmatprep.subr.mxu0 0.0
  %829 = vmatpush1.msra.mxu0 0.0
  %830 = vmatprep.subr.mxu0 0.0
  %831 = vmatpush1.msra.mxu0 0.0
  %832 = vmatprep.subr.mxu0 0.0
  %833 = vmatpush1.msra.mxu0 0.0
  %834 = vmatprep.subr.mxu0 0.0
  %835 = vmatpush1.msra.mxu0 0.0
  %836 = vmatprep.subr.mxu0 0.0
  %837 = vmatpush1.msra.mxu0 0.0
  %838 = vmatprep.subr.mxu0 0.0
  %839 = vmatpush1.msra.mxu0 0.0
  %840 = vmatprep.subr.mxu0 0.0
  %841 = vmatpush1.msra.mxu0 0.0
  %842 = vmatprep.subr.mxu0 0.0
  %843 = vmatpush1.msra.mxu0 0.0
  %844 = vmatprep.subr.mxu0 0.0
  %845 = vmatpush1.msra.mxu0 0.0
  %846 = vmatprep.subr.mxu0 0.0
  %847 = vmatpush1.msra.mxu0 0.0
  %848 = vmatprep.subr.mxu0 0.0
  %849 = vmatpush1.msra.mxu0 0.0
  %850 = vmatprep.subr.mxu0 0.0
  %851 = vmatpush1.msra.mxu0 0.0
  %852 = vmatprep.subr.mxu0 0.0
  %853 = vmatpush1.msra.mxu0 0.0
  %854 = vmatprep.subr.mxu0 0.0
  %855 = vmatpush1.msra.mxu0 0.0
  %856 = vmatprep.subr.mxu0 0.0
  %857 = vmatpush1.msra.mxu0 0.0
  %858 = vmatprep.subr.mxu0 0.0
  %859 = vmatpush1.msra.mxu0 0.0
  %860 = vmatprep.mubr.f32.mxu0 0.0
  %861 = vmatmul.mubr.f32.gmra.mrb[0].mxu0 %v786
  %v862 = vpop.f32.mrb[0].mxu0
  %v863 = vadd.f32 0.0, %v862
  %v864 = vpop.f32.mrb[0].mxu0
  %v865 = vadd.f32 0.0, %v864
  %866 = vdwg.mxu0
  %867 = vmatprep.subr.mxu0 %v371
  %868 = vmatpush1.msra.mxu0 %v370
  %869 = vmatprep.subr.mxu0 %v375
  %870 = vmatpush1.msra.mxu0 %v374
  %871 = vmatprep.subr.mxu0 %v379
  %872 = vmatpush1.msra.mxu0 %v378
  %873 = vmatprep.subr.mxu0 %v383
  %874 = vmatpush1.msra.mxu0 %v382
  %875 = vmatprep.subr.mxu0 %v387
  %876 = vmatpush1.msra.mxu0 %v386
  %877 = vmatprep.subr.mxu0 %v391
  %878 = vmatpush1.msra.mxu0 %v390
  %879 = vmatprep.subr.mxu0 %v395
  %880 = vmatpush1.msra.mxu0 %v394
  %881 = vmatprep.subr.mxu0 %v399
  %882 = vmatpush1.msra.mxu0 %v398
  %883 = vmatprep.subr.mxu0 %v403
  %884 = vmatpush1.msra.mxu0 %v402
  %885 = vmatprep.subr.mxu0 %v407
  %886 = vmatpush1.msra.mxu0 %v406
  %887 = vmatprep.subr.mxu0 %v411
  %888 = vmatpush1.msra.mxu0 %v410
  %889 = vmatprep.subr.mxu0 %v415
  %890 = vmatpush1.msra.mxu0 %v414
  %891 = vmatprep.subr.mxu0 %v419
  %892 = vmatpush1.msra.mxu0 %v418
  %893 = vmatprep.subr.mxu0 %v423
  %894 = vmatpush1.msra.mxu0 %v422
  %895 = vmatprep.subr.mxu0 %v427
  %896 = vmatpush1.msra.mxu0 %v426
  %897 = vmatprep.subr.mxu0 %v431
  %898 = vmatpush1.msra.mxu0 %v430
  %899 = vmatprep.subr.mxu0 0.0
  %900 = vmatpush1.msra.mxu0 0.0
  %901 = vmatprep.subr.mxu0 0.0
  %902 = vmatpush1.msra.mxu0 0.0
  %903 = vmatprep.subr.mxu0 0.0
  %904 = vmatpush1.msra.mxu0 0.0
  %905 = vmatprep.subr.mxu0 0.0
  %906 = vmatpush1.msra.mxu0 0.0
  %907 = vmatprep.subr.mxu0 0.0
  %908 = vmatpush1.msra.mxu0 0.0
  %909 = vmatprep.subr.mxu0 0.0
  %910 = vmatpush1.msra.mxu0 0.0
  %911 = vmatprep.subr.mxu0 0.0
  %912 = vmatpush1.msra.mxu0 0.0
  %913 = vmatprep.subr.mxu0 0.0
  %914 = vmatpush1.msra.mxu0 0.0
  %915 = vmatprep.subr.mxu0 0.0
  %916 = vmatpush1.msra.mxu0 0.0
  %917 = vmatprep.subr.mxu0 0.0
  %918 = vmatpush1.msra.mxu0 0.0
  %919 = vmatprep.subr.mxu0 0.0
  %920 = vmatpush1.msra.mxu0 0.0
  %921 = vmatprep.subr.mxu0 0.0
  %922 = vmatpush1.msra.mxu0 0.0
  %923 = vmatprep.subr.mxu0 0.0
  %924 = vmatpush1.msra.mxu0 0.0
  %925 = vmatprep.subr.mxu0 0.0
  %926 = vmatpush1.msra.mxu0 0.0
  %927 = vmatprep.subr.mxu0 0.0
  %928 = vmatpush1.msra.mxu0 0.0
  %929 = vmatprep.subr.mxu0 0.0
  %930 = vmatpush1.msra.mxu0 0.0
  %931 = vmatprep.mubr.f32.mxu0 0.0
  %932 = vmatmul.mubr.f32.gmra.mrb[0].mxu0 %v786
  %v933 = vpop.f32.mrb[0].mxu0
  %v934 = vadd.f32 0.0, %v933
  %v935 = vpop.f32.mrb[0].mxu0
  %v936 = vadd.f32 0.0, %v935
  %937 = vdwg.mxu0
  %v938 = vadd.f32 %v792, %v863
  %v939 = vadd.f32 %v793, %v865
  %v940 = vadd.f32 %v794, %v934
  %v941 = vadd.f32 %v795, %v936
  %v942 = vxor.u32 %v938, 2147483648
  %v943 = vxor.u32 %v939, 2147483648
  %v944 = vxor.u32 %v940, 2147483648
  %v945 = vmul.f32 %v942, 1.442695
  %v946 = vpow.pop %v945
  %v947 = vmul.f32 %v943, 1.442695
  %v948 = vpow.pop %v947
  %v949 = vmul.f32 %v944, 1.442695
  %v950 = vpow.pop %v949
  %v951 = vadd.f32 %v946, 1.0
  %v952 = vadd.f32 %v948, 1.0
  %v953 = vadd.f32 %v950, 1.0
  %v954 = vrcp.pop %v951
  %v955 = vmul.f32 1.0, %v954
  %v956 = vrcp.pop %v952
  %v957 = vmul.f32 1.0, %v956
  %v958 = vrcp.pop %v953
  %v959 = vmul.f32 1.0, %v958
  %v960 = vtanh.pop %v941
  %v961 = vmul.f32 %v957, %v784
  %v962 = vmul.f32 %v955, %v960
  %v963 = vadd.f32 %v961, %v962
  %v964 = vtanh.pop %v963
  %v965 = vmul.f32 %v959, %v964
  %s966 = scalar_lea.vmem [#allocation3], 16
  %967 = vst [vmem:[%s966] sm:$0xff] %v965
  %s968 = smul.u32 3, 4
  %s969 = smul.addr %s968, 8
  %s970 = scalar_lea.vmem [#allocation2], %s969
  %v971 = vld [vmem:[%s970] sm:$0xff]
  %v972 = vld [vmem:[%s970 + $0x8] sm:$0xff]
  %v973 = vld [vmem:[%s970 + $0x10] sm:$0xff]
  %v974 = vld [vmem:[%s970 + $0x18] sm:$0xff]
  %975 = vmatprep.subr.mxu0 %v369
  %976 = vmatpush1.msra.mxu0 %v368
  %977 = vmatprep.subr.mxu0 %v373
  %978 = vmatpush1.msra.mxu0 %v372
  %979 = vmatprep.subr.mxu0 %v377
  %980 = vmatpush1.msra.mxu0 %v376
  %981 = vmatprep.subr.mxu0 %v381
  %982 = vmatpush1.msra.mxu0 %v380
  %983 = vmatprep.subr.mxu0 %v385
  %984 = vmatpush1.msra.mxu0 %v384
  %985 = vmatprep.subr.mxu0 %v389
  %986 = vmatpush1.msra.mxu0 %v388
  %987 = vmatprep.subr.mxu0 %v393
  %988 = vmatpush1.msra.mxu0 %v392
  %989 = vmatprep.subr.mxu0 %v397
  %990 = vmatpush1.msra.mxu0 %v396
  %991 = vmatprep.subr.mxu0 %v401
  %992 = vmatpush1.msra.mxu0 %v400
  %993 = vmatprep.subr.mxu0 %v405
  %994 = vmatpush1.msra.mxu0 %v404
  %995 = vmatprep.subr.mxu0 %v409
  %996 = vmatpush1.msra.mxu0 %v408
  %997 = vmatprep.subr.mxu0 %v413
  %998 = vmatpush1.msra.mxu0 %v412
  %999 = vmatprep.subr.mxu0 %v417
  %1000 = vmatpush1.msra.mxu0 %v416
  %1001 = vmatprep.subr.mxu0 %v421
  %1002 = vmatpush1.msra.mxu0 %v420
  %1003 = vmatprep.subr.mxu0 %v425
  %1004 = vmatpush1.msra.mxu0 %v424
  %1005 = vmatprep.subr.mxu0 %v429
  %1006 = vmatpush1.msra.mxu0 %v428
  %1007 = vmatprep.subr.mxu0 0.0
  %1008 = vmatpush1.msra.mxu0 0.0
  %1009 = vmatprep.subr.mxu0 0.0
  %1010 = vmatpush1.msra.mxu0 0.0
  %1011 = vmatprep.subr.mxu0 0.0
  %1012 = vmatpush1.msra.mxu0 0.0
  %1013 = vmatprep.subr.mxu0 0.0
  %1014 = vmatpush1.msra.mxu0 0.0
  %1015 = vmatprep.subr.mxu0 0.0
  %1016 = vmatpush1.msra.mxu0 0.0
  %1017 = vmatprep.subr.mxu0 0.0
  %1018 = vmatpush1.msra.mxu0 0.0
  %1019 = vmatprep.subr.mxu0 0.0
  %1020 = vmatpush1.msra.mxu0 0.0
  %1021 = vmatprep.subr.mxu0 0.0
  %1022 = vmatpush1.msra.mxu0 0.0
  %1023 = vmatprep.subr.mxu0 0.0
  %1024 = vmatpush1.msra.mxu0 0.0
  %1025 = vmatprep.subr.mxu0 0.0
  %1026 = vmatpush1.msra.mxu0 0.0
  %1027 = vmatprep.subr.mxu0 0.0
  %1028 = vmatpush1.msra.mxu0 0.0
  %1029 = vmatprep.subr.mxu0 0.0
  %1030 = vmatpush1.msra.mxu0 0.0
  %1031 = vmatprep.subr.mxu0 0.0
  %1032 = vmatpush1.msra.mxu0 0.0
  %1033 = vmatprep.subr.mxu0 0.0
  %1034 = vmatpush1.msra.mxu0 0.0
  %1035 = vmatprep.subr.mxu0 0.0
  %1036 = vmatpush1.msra.mxu0 0.0
  %1037 = vmatprep.subr.mxu0 0.0
  %1038 = vmatpush1.msra.mxu0 0.0
  %1039 = vmatprep.mubr.f32.mxu0 0.0
  %1040 = vmatmul.mubr.f32.gmra.mrb[0].mxu0 %v965
  %v1041 = vpop.f32.mrb[0].mxu0
  %v1042 = vadd.f32 0.0, %v1041
  %v1043 = vpop.f32.mrb[0].mxu0
  %v1044 = vadd.f32 0.0, %v1043
  %1045 = vdwg.mxu0
  %1046 = vmatprep.subr.mxu0 %v371
  %1047 = vmatpush1.msra.mxu0 %v370
  %1048 = vmatprep.subr.mxu0 %v375
  %1049 = vmatpush1.msra.mxu0 %v374
  %1050 = vmatprep.subr.mxu0 %v379
  %1051 = vmatpush1.msra.mxu0 %v378
  %1052 = vmatprep.subr.mxu0 %v383
  %1053 = vmatpush1.msra.mxu0 %v382
  %1054 = vmatprep.subr.mxu0 %v387
  %1055 = vmatpush1.msra.mxu0 %v386
  %1056 = vmatprep.subr.mxu0 %v391
  %1057 = vmatpush1.msra.mxu0 %v390
  %1058 = vmatprep.subr.mxu0 %v395
  %1059 = vmatpush1.msra.mxu0 %v394
  %1060 = vmatprep.subr.mxu0 %v399
  %1061 = vmatpush1.msra.mxu0 %v398
  %1062 = vmatprep.subr.mxu0 %v403
  %1063 = vmatpush1.msra.mxu0 %v402
  %1064 = vmatprep.subr.mxu0 %v407
  %1065 = vmatpush1.msra.mxu0 %v406
  %1066 = vmatprep.subr.mxu0 %v411
  %1067 = vmatpush1.msra.mxu0 %v410
  %1068 = vmatprep.subr.mxu0 %v415
  %1069 = vmatpush1.msra.mxu0 %v414
  %1070 = vmatprep.subr.mxu0 %v419
  %1071 = vmatpush1.msra.mxu0 %v418
  %1072 = vmatprep.subr.mxu0 %v423
  %1073 = vmatpush1.msra.mxu0 %v422
  %1074 = vmatprep.subr.mxu0 %v427
  %1075 = vmatpush1.msra.mxu0 %v426
  %1076 = vmatprep.subr.mxu0 %v431
  %1077 = vmatpush1.msra.mxu0 %v430
  %1078 = vmatprep.subr.mxu0 0.0
  %1079 = vmatpush1.msra.mxu0 0.0
  %1080 = vmatprep.subr.mxu0 0.0
  %1081 = vmatpush1.msra.mxu0 0.0
  %1082 = vmatprep.subr.mxu0 0.0
  %1083 = vmatpush1.msra.mxu0 0.0
  %1084 = vmatprep.subr.mxu0 0.0
  %1085 = vmatpush1.msra.mxu0 0.0
  %1086 = vmatprep.subr.mxu0 0.0
  %1087 = vmatpush1.msra.mxu0 0.0
  %1088 = vmatprep.subr.mxu0 0.0
  %1089 = vmatpush1.msra.mxu0 0.0
  %1090 = vmatprep.subr.mxu0 0.0
  %1091 = vmatpush1.msra.mxu0 0.0
  %1092 = vmatprep.subr.mxu0 0.0
  %1093 = vmatpush1.msra.mxu0 0.0
  %1094 = vmatprep.subr.mxu0 0.0
  %1095 = vmatpush1.msra.mxu0 0.0
  %1096 = vmatprep.subr.mxu0 0.0
  %1097 = vmatpush1.msra.mxu0 0.0
  %1098 = vmatprep.subr.mxu0 0.0
  %1099 = vmatpush1.msra.mxu0 0.0
  %1100 = vmatprep.subr.mxu0 0.0
  %1101 = vmatpush1.msra.mxu0 0.0
  %1102 = vmatprep.subr.mxu0 0.0
  %1103 = vmatpush1.msra.mxu0 0.0
  %1104 = vmatprep.subr.mxu0 0.0
  %1105 = vmatpush1.msra.mxu0 0.0
  %1106 = vmatprep.subr.mxu0 0.0
  %1107 = vmatpush1.msra.mxu0 0.0
  %1108 = vmatprep.subr.mxu0 0.0
  %1109 = vmatpush1.msra.mxu0 0.0
  %1110 = vmatprep.mubr.f32.mxu0 0.0
  %1111 = vmatmul.mubr.f32.gmra.mrb[0].mxu0 %v965
  %v1112 = vpop.f32.mrb[0].mxu0
  %v1113 = vadd.f32 0.0, %v1112
  %v1114 = vpop.f32.mrb[0].mxu0
  %v1115 = vadd.f32 0.0, %v1114
  %1116 = vdwg.mxu0
  %v1117 = vadd.f32 %v971, %v1042
  %v1118 = vadd.f32 %v972, %v1044
  %v1119 = vadd.f32 %v973, %v1113
  %v1120 = vadd.f32 %v974, %v1115
  %v1121 = vxor.u32 %v1117, 2147483648
  %v1122 = vxor.u32 %v1118, 2147483648
  %v1123 = vxor.u32 %v1119, 2147483648
  %v1124 = vmul.f32 %v1121, 1.442695
  %v1125 = vpow.pop %v1124
  %v1126 = vmul.f32 %v1122, 1.442695
  %v1127 = vpow.pop %v1126
  %v1128 = vmul.f32 %v1123, 1.442695
  %v1129 = vpow.pop %v1128
  %v1130 = vadd.f32 %v1125, 1.0
  %v1131 = vadd.f32 %v1127, 1.0
  %v1132 = vadd.f32 %v1129, 1.0
  %v1133 = vrcp.pop %v1130
  %v1134 = vmul.f32 1.0, %v1133
  %v1135 = vrcp.pop %v1131
  %v1136 = vmul.f32 1.0, %v1135
  %v1137 = vrcp.pop %v1132
  %v1138 = vmul.f32 1.0, %v1137
  %v1139 = vtanh.pop %v1120
  %v1140 = vmul.f32 %v1136, %v963
  %v1141 = vmul.f32 %v1134, %v1139
  %v1142 = vadd.f32 %v1140, %v1141
  %v1143 = vtanh.pop %v1142
  %v1144 = vmul.f32 %v1138, %v1143
  %s1145 = scalar_lea.vmem [#allocation3], 24
  %1146 = vst [vmem:[%s1145] sm:$0xff] %v1144
  %s1147 = smul.u32 4, 4
  %s1148 = smul.addr %s1147, 8
  %s1149 = scalar_lea.vmem [#allocation2], %s1148
  %v1150 = vld [vmem:[%s1149] sm:$0xff]
  %v1151 = vld [vmem:[%s1149 + $0x8] sm:$0xff]
  %v1152 = vld [vmem:[%s1149 + $0x10] sm:$0xff]
  %v1153 = vld [vmem:[%s1149 + $0x18] sm:$0xff]
  %1154 = vmatprep.subr.mxu0 %v369
  %1155 = vmatpush1.msra.mxu0 %v368
  %1156 = vmatprep.subr.mxu0 %v373
  %1157 = vmatpush1.msra.mxu0 %v372
  %1158 = vmatprep.subr.mxu0 %v377
  %1159 = vmatpush1.msra.mxu0 %v376
  %1160 = vmatprep.subr.mxu0 %v381
  %1161 = vmatpush1.msra.mxu0 %v380
  %1162 = vmatprep.subr.mxu0 %v385
  %1163 = vmatpush1.msra.mxu0 %v384
  %1164 = vmatprep.subr.mxu0 %v389
  %1165 = vmatpush1.msra.mxu0 %v388
  %1166 = vmatprep.subr.mxu0 %v393
  %1167 = vmatpush1.msra.mxu0 %v392
  %1168 = vmatprep.subr.mxu0 %v397
  %1169 = vmatpush1.msra.mxu0 %v396
  %1170 = vmatprep.subr.mxu0 %v401
  %1171 = vmatpush1.msra.mxu0 %v400
  %1172 = vmatprep.subr.mxu0 %v405
  %1173 = vmatpush1.msra.mxu0 %v404
  %1174 = vmatprep.subr.mxu0 %v409
  %1175 = vmatpush1.msra.mxu0 %v408
  %1176 = vmatprep.subr.mxu0 %v413
  %1177 = vmatpush1.msra.mxu0 %v412
  %1178 = vmatprep.subr.mxu0 %v417
  %1179 = vmatpush1.msra.mxu0 %v416
  %1180 = vmatprep.subr.mxu0 %v421
  %1181 = vmatpush1.msra.mxu0 %v420
  %1182 = vmatprep.subr.mxu0 %v425
  %1183 = vmatpush1.msra.mxu0 %v424
  %1184 = vmatprep.subr.mxu0 %v429
  %1185 = vmatpush1.msra.mxu0 %v428
  %1186 = vmatprep.subr.mxu0 0.0
  %1187 = vmatpush1.msra.mxu0 0.0
  %1188 = vmatprep.subr.mxu0 0.0
  %1189 = vmatpush1.msra.mxu0 0.0
  %1190 = vmatprep.subr.mxu0 0.0
  %1191 = vmatpush1.msra.mxu0 0.0
  %1192 = vmatprep.subr.mxu0 0.0
  %1193 = vmatpush1.msra.mxu0 0.0
  %1194 = vmatprep.subr.mxu0 0.0
  %1195 = vmatpush1.msra.mxu0 0.0
  %1196 = vmatprep.subr.mxu0 0.0
  %1197 = vmatpush1.msra.mxu0 0.0
  %1198 = vmatprep.subr.mxu0 0.0
  %1199 = vmatpush1.msra.mxu0 0.0
  %1200 = vmatprep.subr.mxu0 0.0
  %1201 = vmatpush1.msra.mxu0 0.0
  %1202 = vmatprep.subr.mxu0 0.0
  %1203 = vmatpush1.msra.mxu0 0.0
  %1204 = vmatprep.subr.mxu0 0.0
  %1205 = vmatpush1.msra.mxu0 0.0
  %1206 = vmatprep.subr.mxu0 0.0
  %1207 = vmatpush1.msra.mxu0 0.0
  %1208 = vmatprep.subr.mxu0 0.0
  %1209 = vmatpush1.msra.mxu0 0.0
  %1210 = vmatprep.subr.mxu0 0.0
  %1211 = vmatpush1.msra.mxu0 0.0
  %1212 = vmatprep.subr.mxu0 0.0
  %1213 = vmatpush1.msra.mxu0 0.0
  %1214 = vmatprep.subr.mxu0 0.0
  %1215 = vmatpush1.msra.mxu0 0.0
  %1216 = vmatprep.subr.mxu0 0.0
  %1217 = vmatpush1.msra.mxu0 0.0
  %1218 = vmatprep.mubr.f32.mxu0 0.0
  %1219 = vmatmul.mubr.f32.gmra.mrb[0].mxu0 %v1144
  %v1220 = vpop.f32.mrb[0].mxu0
  %v1221 = vadd.f32 0.0, %v1220
  %v1222 = vpop.f32.mrb[0].mxu0
  %v1223 = vadd.f32 0.0, %v1222
  %1224 = vdwg.mxu0
  %1225 = vmatprep.subr.mxu0 %v371
  %1226 = vmatpush1.msra.mxu0 %v370
  %1227 = vmatprep.subr.mxu0 %v375
  %1228 = vmatpush1.msra.mxu0 %v374
  %1229 = vmatprep.subr.mxu0 %v379
  %1230 = vmatpush1.msra.mxu0 %v378
  %1231 = vmatprep.subr.mxu0 %v383
  %1232 = vmatpush1.msra.mxu0 %v382
  %1233 = vmatprep.subr.mxu0 %v387
  %1234 = vmatpush1.msra.mxu0 %v386
  %1235 = vmatprep.subr.mxu0 %v391
  %1236 = vmatpush1.msra.mxu0 %v390
  %1237 = vmatprep.subr.mxu0 %v395
  %1238 = vmatpush1.msra.mxu0 %v394
  %1239 = vmatprep.subr.mxu0 %v399
  %1240 = vmatpush1.msra.mxu0 %v398
  %1241 = vmatprep.subr.mxu0 %v403
  %1242 = vmatpush1.msra.mxu0 %v402
  %1243 = vmatprep.subr.mxu0 %v407
  %1244 = vmatpush1.msra.mxu0 %v406
  %1245 = vmatprep.subr.mxu0 %v411
  %1246 = vmatpush1.msra.mxu0 %v410
  %1247 = vmatprep.subr.mxu0 %v415
  %1248 = vmatpush1.msra.mxu0 %v414
  %1249 = vmatprep.subr.mxu0 %v419
  %1250 = vmatpush1.msra.mxu0 %v418
  %1251 = vmatprep.subr.mxu0 %v423
  %1252 = vmatpush1.msra.mxu0 %v422
  %1253 = vmatprep.subr.mxu0 %v427
  %1254 = vmatpush1.msra.mxu0 %v426
  %1255 = vmatprep.subr.mxu0 %v431
  %1256 = vmatpush1.msra.mxu0 %v430
  %1257 = vmatprep.subr.mxu0 0.0
  %1258 = vmatpush1.msra.mxu0 0.0
  %1259 = vmatprep.subr.mxu0 0.0
  %1260 = vmatpush1.msra.mxu0 0.0
  %1261 = vmatprep.subr.mxu0 0.0
  %1262 = vmatpush1.msra.mxu0 0.0
  %1263 = vmatprep.subr.mxu0 0.0
  %1264 = vmatpush1.msra.mxu0 0.0
  %1265 = vmatprep.subr.mxu0 0.0
  %1266 = vmatpush1.msra.mxu0 0.0
  %1267 = vmatprep.subr.mxu0 0.0
  %1268 = vmatpush1.msra.mxu0 0.0
  %1269 = vmatprep.subr.mxu0 0.0
  %1270 = vmatpush1.msra.mxu0 0.0
  %1271 = vmatprep.subr.mxu0 0.0
  %1272 = vmatpush1.msra.mxu0 0.0
  %1273 = vmatprep.subr.mxu0 0.0
  %1274 = vmatpush1.msra.mxu0 0.0
  %1275 = vmatprep.subr.mxu0 0.0
  %1276 = vmatpush1.msra.mxu0 0.0
  %1277 = vmatprep.subr.mxu0 0.0
  %1278 = vmatpush1.msra.mxu0 0.0
  %1279 = vmatprep.subr.mxu0 0.0
  %1280 = vmatpush1.msra.mxu0 0.0
  %1281 = vmatprep.subr.mxu0 0.0
  %1282 = vmatpush1.msra.mxu0 0.0
  %1283 = vmatprep.subr.mxu0 0.0
  %1284 = vmatpush1.msra.mxu0 0.0
  %1285 = vmatprep.subr.mxu0 0.0
  %1286 = vmatpush1.msra.mxu0 0.0
  %1287 = vmatprep.subr.mxu0 0.0
  %1288 = vmatpush1.msra.mxu0 0.0
  %1289 = vmatprep.mubr.f32.mxu0 0.0
  %1290 = vmatmul.mubr.f32.gmra.mrb[0].mxu0 %v1144
  %v1291 = vpop.f32.mrb[0].mxu0
  %v1292 = vadd.f32 0.0, %v1291
  %v1293 = vpop.f32.mrb[0].mxu0
  %v1294 = vadd.f32 0.0, %v1293
  %1295 = vdwg.mxu0
  %v1296 = vadd.f32 %v1150, %v1221
  %v1297 = vadd.f32 %v1151, %v1223
  %v1298 = vadd.f32 %v1152, %v1292
  %v1299 = vadd.f32 %v1153, %v1294
  %v1300 = vxor.u32 %v1296, 2147483648
  %v1301 = vxor.u32 %v1297, 2147483648
  %v1302 = vxor.u32 %v1298, 2147483648
  %v1303 = vmul.f32 %v1300, 1.442695
  %v1304 = vpow.pop %v1303
  %v1305 = vmul.f32 %v1301, 1.442695
  %v1306 = vpow.pop %v1305
  %v1307 = vmul.f32 %v1302, 1.442695
  %v1308 = vpow.pop %v1307
  %v1309 = vadd.f32 %v1304, 1.0
  %v1310 = vadd.f32 %v1306, 1.0
  %v1311 = vadd.f32 %v1308, 1.0
  %v1312 = vrcp.pop %v1309
  %v1313 = vmul.f32 1.0, %v1312
  %v1314 = vrcp.pop %v1310
  %v1315 = vmul.f32 1.0, %v1314
  %v1316 = vrcp.pop %v1311
  %v1317 = vmul.f32 1.0, %v1316
  %v1318 = vtanh.pop %v1299
  %v1319 = vmul.f32 %v1315, %v1142
  %v1320 = vmul.f32 %v1313, %v1318
  %v1321 = vadd.f32 %v1319, %v1320
  %v1322 = vtanh.pop %v1321
  %v1323 = vmul.f32 %v1317, %v1322
  %s1324 = scalar_lea.vmem [#allocation3], 32
  %1325 = vst [vmem:[%s1324] sm:$0xff] %v1323
  %s1326 = smul.u32 5, 4
  %s1327 = smul.addr %s1326, 8
  %s1328 = scalar_lea.vmem [#allocation2], %s1327
  %v1329 = vld [vmem:[%s1328] sm:$0xff]
  %v1330 = vld [vmem:[%s1328 + $0x8] sm:$0xff]
  %v1331 = vld [vmem:[%s1328 + $0x10] sm:$0xff]
  %v1332 = vld [vmem:[%s1328 + $0x18] sm:$0xff]
  %1333 = vmatprep.subr.mxu0 %v369
  %1334 = vmatpush1.msra.mxu0 %v368
  %1335 = vmatprep.subr.mxu0 %v373
  %1336 = vmatpush1.msra.mxu0 %v372
  %1337 = vmatprep.subr.mxu0 %v377
  %1338 = vmatpush1.msra.mxu0 %v376
  %1339 = vmatprep.subr.mxu0 %v381
  %1340 = vmatpush1.msra.mxu0 %v380
  %1341 = vmatprep.subr.mxu0 %v385
  %1342 = vmatpush1.msra.mxu0 %v384
  %1343 = vmatprep.subr.mxu0 %v389
  %1344 = vmatpush1.msra.mxu0 %v388
  %1345 = vmatprep.subr.mxu0 %v393
  %1346 = vmatpush1.msra.mxu0 %v392
  %1347 = vmatprep.subr.mxu0 %v397
  %1348 = vmatpush1.msra.mxu0 %v396
  %1349 = vmatprep.subr.mxu0 %v401
  %1350 = vmatpush1.msra.mxu0 %v400
  %1351 = vmatprep.subr.mxu0 %v405
  %1352 = vmatpush1.msra.mxu0 %v404
  %1353 = vmatprep.subr.mxu0 %v409
  %1354 = vmatpush1.msra.mxu0 %v408
  %1355 = vmatprep.subr.mxu0 %v413
  %1356 = vmatpush1.msra.mxu0 %v412
  %1357 = vmatprep.subr.mxu0 %v417
  %1358 = vmatpush1.msra.mxu0 %v416
  %1359 = vmatprep.subr.mxu0 %v421
  %1360 = vmatpush1.msra.mxu0 %v420
  %1361 = vmatprep.subr.mxu0 %v425
  %1362 = vmatpush1.msra.mxu0 %v424
  %1363 = vmatprep.subr.mxu0 %v429
  %1364 = vmatpush1.msra.mxu0 %v428
  %1365 = vmatprep.subr.mxu0 0.0
  %1366 = vmatpush1.msra.mxu0 0.0
  %1367 = vmatprep.subr.mxu0 0.0
  %1368 = vmatpush1.msra.mxu0 0.0
  %1369 = vmatprep.subr.mxu0 0.0
  %1370 = vmatpush1.msra.mxu0 0.0
  %1371 = vmatprep.subr.mxu0 0.0
  %1372 = vmatpush1.msra.mxu0 0.0
  %1373 = vmatprep.subr.mxu0 0.0
  %1374 = vmatpush1.msra.mxu0 0.0
  %1375 = vmatprep.subr.mxu0 0.0
  %1376 = vmatpush1.msra.mxu0 0.0
  %1377 = vmatprep.subr.mxu0 0.0
  %1378 = vmatpush1.msra.mxu0 0.0
  %1379 = vmatprep.subr.mxu0 0.0
  %1380 = vmatpush1.msra.mxu0 0.0
  %1381 = vmatprep.subr.mxu0 0.0
  %1382 = vmatpush1.msra.mxu0 0.0
  %1383 = vmatprep.subr.mxu0 0.0
  %1384 = vmatpush1.msra.mxu0 0.0
  %1385 = vmatprep.subr.mxu0 0.0
  %1386 = vmatpush1.msra.mxu0 0.0
  %1387 = vmatprep.subr.mxu0 0.0
  %1388 = vmatpush1.msra.mxu0 0.0
  %1389 = vmatprep.subr.mxu0 0.0
  %1390 = vmatpush1.msra.mxu0 0.0
  %1391 = vmatprep.subr.mxu0 0.0
  %1392 = vmatpush1.msra.mxu0 0.0
  %1393 = vmatprep.subr.mxu0 0.0
  %1394 = vmatpush1.msra.mxu0 0.0
  %1395 = vmatprep.subr.mxu0 0.0
  %1396 = vmatpush1.msra.mxu0 0.0
  %1397 = vmatprep.mubr.f32.mxu0 0.0
  %1398 = vmatmul.mubr.f32.gmra.mrb[0].mxu0 %v1323
  %v1399 = vpop.f32.mrb[0].mxu0
  %v1400 = vadd.f32 0.0, %v1399
  %v1401 = vpop.f32.mrb[0].mxu0
  %v1402 = vadd.f32 0.0, %v1401
  %1403 = vdwg.mxu0
  %1404 = vmatprep.subr.mxu0 %v371
  %1405 = vmatpush1.msra.mxu0 %v370
  %1406 = vmatprep.subr.mxu0 %v375
  %1407 = vmatpush1.msra.mxu0 %v374
  %1408 = vmatprep.subr.mxu0 %v379
  %1409 = vmatpush1.msra.mxu0 %v378
  %1410 = vmatprep.subr.mxu0 %v383
  %1411 = vmatpush1.msra.mxu0 %v382
  %1412 = vmatprep.subr.mxu0 %v387
  %1413 = vmatpush1.msra.mxu0 %v386
  %1414 = vmatprep.subr.mxu0 %v391
  %1415 = vmatpush1.msra.mxu0 %v390
  %1416 = vmatprep.subr.mxu0 %v395
  %1417 = vmatpush1.msra.mxu0 %v394
  %1418 = vmatprep.subr.mxu0 %v399
  %1419 = vmatpush1.msra.mxu0 %v398
  %1420 = vmatprep.subr.mxu0 %v403
  %1421 = vmatpush1.msra.mxu0 %v402
  %1422 = vmatprep.subr.mxu0 %v407
  %1423 = vmatpush1.msra.mxu0 %v406
  %1424 = vmatprep.subr.mxu0 %v411
  %1425 = vmatpush1.msra.mxu0 %v410
  %1426 = vmatprep.subr.mxu0 %v415
  %1427 = vmatpush1.msra.mxu0 %v414
  %1428 = vmatprep.subr.mxu0 %v419
  %1429 = vmatpush1.msra.mxu0 %v418
  %1430 = vmatprep.subr.mxu0 %v423
  %1431 = vmatpush1.msra.mxu0 %v422
  %1432 = vmatprep.subr.mxu0 %v427
  %1433 = vmatpush1.msra.mxu0 %v426
  %1434 = vmatprep.subr.mxu0 %v431
  %1435 = vmatpush1.msra.mxu0 %v430
  %1436 = vmatprep.subr.mxu0 0.0
  %1437 = vmatpush1.msra.mxu0 0.0
  %1438 = vmatprep.subr.mxu0 0.0
  %1439 = vmatpush1.msra.mxu0 0.0
  %1440 = vmatprep.subr.mxu0 0.0
  %1441 = vmatpush1.msra.mxu0 0.0
  %1442 = vmatprep.subr.mxu0 0.0
  %1443 = vmatpush1.msra.mxu0 0.0
  %1444 = vmatprep.subr.mxu0 0.0
  %1445 = vmatpush1.msra.mxu0 0.0
  %1446 = vmatprep.subr.mxu0 0.0
  %1447 = vmatpush1.msra.mxu0 0.0
  %1448 = vmatprep.subr.mxu0 0.0
  %1449 = vmatpush1.msra.mxu0 0.0
  %1450 = vmatprep.subr.mxu0 0.0
  %1451 = vmatpush1.msra.mxu0 0.0
  %1452 = vmatprep.subr.mxu0 0.0
  %1453 = vmatpush1.msra.mxu0 0.0
  %1454 = vmatprep.subr.mxu0 0.0
  %1455 = vmatpush1.msra.mxu0 0.0
  %1456 = vmatprep.subr.mxu0 0.0
  %1457 = vmatpush1.msra.mxu0 0.0
  %1458 = vmatprep.subr.mxu0 0.0
  %1459 = vmatpush1.msra.mxu0 0.0
  %1460 = vmatprep.subr.mxu0 0.0
  %1461 = vmatpush1.msra.mxu0 0.0
  %1462 = vmatprep.subr.mxu0 0.0
  %1463 = vmatpush1.msra.mxu0 0.0
  %1464 = vmatprep.subr.mxu0 0.0
  %1465 = vmatpush1.msra.mxu0 0.0
  %1466 = vmatprep.subr.mxu0 0.0
  %1467 = vmatpush1.msra.mxu0 0.0
  %1468 = vmatprep.mubr.f32.mxu0 0.0
  %1469 = vmatmul.mubr.f32.gmra.mrb[0].mxu0 %v1323
  %v1470 = vpop.f32.mrb[0].mxu0
  %v1471 = vadd.f32 0.0, %v1470
  %v1472 = vpop.f32.mrb[0].mxu0
  %v1473 = vadd.f32 0.0, %v1472
  %1474 = vdwg.mxu0
  %v1475 = vadd.f32 %v1329, %v1400
  %v1476 = vadd.f32 %v1330, %v1402
  %v1477 = vadd.f32 %v1331, %v1471
  %v1478 = vadd.f32 %v1332, %v1473
  %v1479 = vxor.u32 %v1475, 2147483648
  %v1480 = vxor.u32 %v1476, 2147483648
  %v1481 = vxor.u32 %v1477, 2147483648
  %v1482 = vmul.f32 %v1479, 1.442695
  %v1483 = vpow.pop %v1482
  %v1484 = vmul.f32 %v1480, 1.442695
  %v1485 = vpow.pop %v1484
  %v1486 = vmul.f32 %v1481, 1.442695
  %v1487 = vpow.pop %v1486
  %v1488 = vadd.f32 %v1483, 1.0
  %v1489 = vadd.f32 %v1485, 1.0
  %v1490 = vadd.f32 %v1487, 1.0
  %v1491 = vrcp.pop %v1488
  %v1492 = vmul.f32 1.0, %v1491
  %v1493 = vrcp.pop %v1489
  %v1494 = vmul.f32 1.0, %v1493
  %v1495 = vrcp.pop %v1490
  %v1496 = vmul.f32 1.0, %v1495
  %v1497 = vtanh.pop %v1478
  %v1498 = vmul.f32 %v1494, %v1321
  %v1499 = vmul.f32 %v1492, %v1497
  %v1500 = vadd.f32 %v1498, %v1499
  %v1501 = vtanh.pop %v1500
  %v1502 = vmul.f32 %v1496, %v1501
  %s1503 = scalar_lea.vmem [#allocation3], 40
  %1504 = vst [vmem:[%s1503] sm:$0xff] %v1502
  %s1505 = smul.u32 6, 4
  %s1506 = smul.addr %s1505, 8
  %s1507 = scalar_lea.vmem [#allocation2], %s1506
  %v1508 = vld [vmem:[%s1507] sm:$0xff]
  %v1509 = vld [vmem:[%s1507 + $0x8] sm:$0xff]
  %v1510 = vld [vmem:[%s1507 + $0x10] sm:$0xff]
  %v1511 = vld [vmem:[%s1507 + $0x18] sm:$0xff]
  %1512 = vmatprep.subr.mxu0 %v369
  %1513 = vmatpush1.msra.mxu0 %v368
  %1514 = vmatprep.subr.mxu0 %v373
  %1515 = vmatpush1.msra.mxu0 %v372
  %1516 = vmatprep.subr.mxu0 %v377
  %1517 = vmatpush1.msra.mxu0 %v376
  %1518 = vmatprep.subr.mxu0 %v381
  %1519 = vmatpush1.msra.mxu0 %v380
  %1520 = vmatprep.subr.mxu0 %v385
  %1521 = vmatpush1.msra.mxu0 %v384
  %1522 = vmatprep.subr.mxu0 %v389
  %1523 = vmatpush1.msra.mxu0 %v388
  %1524 = vmatprep.subr.mxu0 %v393
  %1525 = vmatpush1.msra.mxu0 %v392
  %1526 = vmatprep.subr.mxu0 %v397
  %1527 = vmatpush1.msra.mxu0 %v396
  %1528 = vmatprep.subr.mxu0 %v401
  %1529 = vmatpush1.msra.mxu0 %v400
  %1530 = vmatprep.subr.mxu0 %v405
  %1531 = vmatpush1.msra.mxu0 %v404
  %1532 = vmatprep.subr.mxu0 %v409
  %1533 = vmatpush1.msra.mxu0 %v408
  %1534 = vmatprep.subr.mxu0 %v413
  %1535 = vmatpush1.msra.mxu0 %v412
  %1536 = vmatprep.subr.mxu0 %v417
  %1537 = vmatpush1.msra.mxu0 %v416
  %1538 = vmatprep.subr.mxu0 %v421
  %1539 = vmatpush1.msra.mxu0 %v420
  %1540 = vmatprep.subr.mxu0 %v425
  %1541 = vmatpush1.msra.mxu0 %v424
  %1542 = vmatprep.subr.mxu0 %v429
  %1543 = vmatpush1.msra.mxu0 %v428
  %1544 = vmatprep.subr.mxu0 0.0
  %1545 = vmatpush1.msra.mxu0 0.0
  %1546 = vmatprep.subr.mxu0 0.0
  %1547 = vmatpush1.msra.mxu0 0.0
  %1548 = vmatprep.subr.mxu0 0.0
  %1549 = vmatpush1.msra.mxu0 0.0
  %1550 = vmatprep.subr.mxu0 0.0
  %1551 = vmatpush1.msra.mxu0 0.0
  %1552 = vmatprep.subr.mxu0 0.0
  %1553 = vmatpush1.msra.mxu0 0.0
  %1554 = vmatprep.subr.mxu0 0.0
  %1555 = vmatpush1.msra.mxu0 0.0
  %1556 = vmatprep.subr.mxu0 0.0
  %1557 = vmatpush1.msra.mxu0 0.0
  %1558 = vmatprep.subr.mxu0 0.0
  %1559 = vmatpush1.msra.mxu0 0.0
  %1560 = vmatprep.subr.mxu0 0.0
  %1561 = vmatpush1.msra.mxu0 0.0
  %1562 = vmatprep.subr.mxu0 0.0
  %1563 = vmatpush1.msra.mxu0 0.0
  %1564 = vmatprep.subr.mxu0 0.0
  %1565 = vmatpush1.msra.mxu0 0.0
  %1566 = vmatprep.subr.mxu0 0.0
  %1567 = vmatpush1.msra.mxu0 0.0
  %1568 = vmatprep.subr.mxu0 0.0
  %1569 = vmatpush1.msra.mxu0 0.0
  %1570 = vmatprep.subr.mxu0 0.0
  %1571 = vmatpush1.msra.mxu0 0.0
  %1572 = vmatprep.subr.mxu0 0.0
  %1573 = vmatpush1.msra.mxu0 0.0
  %1574 = vmatprep.subr.mxu0 0.0
  %1575 = vmatpush1.msra.mxu0 0.0
  %1576 = vmatprep.mubr.f32.mxu0 0.0
  %1577 = vmatmul.mubr.f32.gmra.mrb[0].mxu0 %v1502
  %v1578 = vpop.f32.mrb[0].mxu0
  %v1579 = vadd.f32 0.0, %v1578
  %v1580 = vpop.f32.mrb[0].mxu0
  %v1581 = vadd.f32 0.0, %v1580
  %1582 = vdwg.mxu0
  %1583 = vmatprep.subr.mxu0 %v371
  %1584 = vmatpush1.msra.mxu0 %v370
  %1585 = vmatprep.subr.mxu0 %v375
  %1586 = vmatpush1.msra.mxu0 %v374
  %1587 = vmatprep.subr.mxu0 %v379
  %1588 = vmatpush1.msra.mxu0 %v378
  %1589 = vmatprep.subr.mxu0 %v383
  %1590 = vmatpush1.msra.mxu0 %v382
  %1591 = vmatprep.subr.mxu0 %v387
  %1592 = vmatpush1.msra.mxu0 %v386
  %1593 = vmatprep.subr.mxu0 %v391
  %1594 = vmatpush1.msra.mxu0 %v390
  %1595 = vmatprep.subr.mxu0 %v395
  %1596 = vmatpush1.msra.mxu0 %v394
  %1597 = vmatprep.subr.mxu0 %v399
  %1598 = vmatpush1.msra.mxu0 %v398
  %1599 = vmatprep.subr.mxu0 %v403
  %1600 = vmatpush1.msra.mxu0 %v402
  %1601 = vmatprep.subr.mxu0 %v407
  %1602 = vmatpush1.msra.mxu0 %v406
  %1603 = vmatprep.subr.mxu0 %v411
  %1604 = vmatpush1.msra.mxu0 %v410
  %1605 = vmatprep.subr.mxu0 %v415
  %1606 = vmatpush1.msra.mxu0 %v414
  %1607 = vmatprep.subr.mxu0 %v419
  %1608 = vmatpush1.msra.mxu0 %v418
  %1609 = vmatprep.subr.mxu0 %v423
  %1610 = vmatpush1.msra.mxu0 %v422
  %1611 = vmatprep.subr.mxu0 %v427
  %1612 = vmatpush1.msra.mxu0 %v426
  %1613 = vmatprep.subr.mxu0 %v431
  %1614 = vmatpush1.msra.mxu0 %v430
  %1615 = vmatprep.subr.mxu0 0.0
  %1616 = vmatpush1.msra.mxu0 0.0
  %1617 = vmatprep.subr.mxu0 0.0
  %1618 = vmatpush1.msra.mxu0 0.0
  %1619 = vmatprep.subr.mxu0 0.0
  %1620 = vmatpush1.msra.mxu0 0.0
  %1621 = vmatprep.subr.mxu0 0.0
  %1622 = vmatpush1.msra.mxu0 0.0
  %1623 = vmatprep.subr.mxu0 0.0
  %1624 = vmatpush1.msra.mxu0 0.0
  %1625 = vmatprep.subr.mxu0 0.0
  %1626 = vmatpush1.msra.mxu0 0.0
  %1627 = vmatprep.subr.mxu0 0.0
  %1628 = vmatpush1.msra.mxu0 0.0
  %1629 = vmatprep.subr.mxu0 0.0
  %1630 = vmatpush1.msra.mxu0 0.0
  %1631 = vmatprep.subr.mxu0 0.0
  %1632 = vmatpush1.msra.mxu0 0.0
  %1633 = vmatprep.subr.mxu0 0.0
  %1634 = vmatpush1.msra.mxu0 0.0
  %1635 = vmatprep.subr.mxu0 0.0
  %1636 = vmatpush1.msra.mxu0 0.0
  %1637 = vmatprep.subr.mxu0 0.0
  %1638 = vmatpush1.msra.mxu0 0.0
  %1639 = vmatprep.subr.mxu0 0.0
  %1640 = vmatpush1.msra.mxu0 0.0
  %1641 = vmatprep.subr.mxu0 0.0
  %1642 = vmatpush1.msra.mxu0 0.0
  %1643 = vmatprep.subr.mxu0 0.0
  %1644 = vmatpush1.msra.mxu0 0.0
  %1645 = vmatprep.subr.mxu0 0.0
  %1646 = vmatpush1.msra.mxu0 0.0
  %1647 = vmatprep.mubr.f32.mxu0 0.0
  %1648 = vmatmul.mubr.f32.gmra.mrb[0].mxu0 %v1502
  %v1649 = vpop.f32.mrb[0].mxu0
  %v1650 = vadd.f32 0.0, %v1649
  %v1651 = vpop.f32.mrb[0].mxu0
  %v1652 = vadd.f32 0.0, %v1651
  %1653 = vdwg.mxu0
  %v1654 = vadd.f32 %v1508, %v1579
  %v1655 = vadd.f32 %v1509, %v1581
  %v1656 = vadd.f32 %v1510, %v1650
  %v1657 = vadd.f32 %v1511, %v1652
  %v1658 = vxor.u32 %v1654, 2147483648
  %v1659 = vxor.u32 %v1655, 2147483648
  %v1660 = vxor.u32 %v1656, 2147483648
  %v1661 = vmul.f32 %v1658, 1.442695
  %v1662 = vpow.pop %v1661
  %v1663 = vmul.f32 %v1659, 1.442695
  %v1664 = vpow.pop %v1663
  %v1665 = vmul.f32 %v1660, 1.442695
  %v1666 = vpow.pop %v1665
  %v1667 = vadd.f32 %v1662, 1.0
  %v1668 = vadd.f32 %v1664, 1.0
  %v1669 = vadd.f32 %v1666, 1.0
  %v1670 = vrcp.pop %v1667
  %v1671 = vmul.f32 1.0, %v1670
  %v1672 = vrcp.pop %v1668
  %v1673 = vmul.f32 1.0, %v1672
  %v1674 = vrcp.pop %v1669
  %v1675 = vmul.f32 1.0, %v1674
  %v1676 = vtanh.pop %v1657
  %v1677 = vmul.f32 %v1673, %v1500
  %v1678 = vmul.f32 %v1671, %v1676
  %v1679 = vadd.f32 %v1677, %v1678
  %v1680 = vtanh.pop %v1679
  %v1681 = vmul.f32 %v1675, %v1680
  %s1682 = scalar_lea.vmem [#allocation3], 48
  %1683 = vst [vmem:[%s1682] sm:$0xff] %v1681
  %s1684 = smul.u32 7, 4
  %s1685 = smul.addr %s1684, 8
  %s1686 = scalar_lea.vmem [#allocation2], %s1685
  %v1687 = vld [vmem:[%s1686] sm:$0xff]
  %v1688 = vld [vmem:[%s1686 + $0x8] sm:$0xff]
  %v1689 = vld [vmem:[%s1686 + $0x10] sm:$0xff]
  %v1690 = vld [vmem:[%s1686 + $0x18] sm:$0xff]
  %1691 = vmatprep.subr.mxu0 %v369
  %1692 = vmatpush1.msra.mxu0 %v368
  %1693 = vmatprep.subr.mxu0 %v373
  %1694 = vmatpush1.msra.mxu0 %v372
  %1695 = vmatprep.subr.mxu0 %v377
  %1696 = vmatpush1.msra.mxu0 %v376
  %1697 = vmatprep.subr.mxu0 %v381
  %1698 = vmatpush1.msra.mxu0 %v380
  %1699 = vmatprep.subr.mxu0 %v385
  %1700 = vmatpush1.msra.mxu0 %v384
  %1701 = vmatprep.subr.mxu0 %v389
  %1702 = vmatpush1.msra.mxu0 %v388
  %1703 = vmatprep.subr.mxu0 %v393
  %1704 = vmatpush1.msra.mxu0 %v392
  %1705 = vmatprep.subr.mxu0 %v397
  %1706 = vmatpush1.msra.mxu0 %v396
  %1707 = vmatprep.subr.mxu0 %v401
  %1708 = vmatpush1.msra.mxu0 %v400
  %1709 = vmatprep.subr.mxu0 %v405
  %1710 = vmatpush1.msra.mxu0 %v404
  %1711 = vmatprep.subr.mxu0 %v409
  %1712 = vmatpush1.msra.mxu0 %v408
  %1713 = vmatprep.subr.mxu0 %v413
  %1714 = vmatpush1.msra.mxu0 %v412
  %1715 = vmatprep.subr.mxu0 %v417
  %1716 = vmatpush1.msra.mxu0 %v416
  %1717 = vmatprep.subr.mxu0 %v421
  %1718 = vmatpush1.msra.mxu0 %v420
  %1719 = vmatprep.subr.mxu0 %v425
  %1720 = vmatpush1.msra.mxu0 %v424
  %1721 = vmatprep.subr.mxu0 %v429
  %1722 = vmatpush1.msra.mxu0 %v428
  %1723 = vmatprep.subr.mxu0 0.0
  %1724 = vmatpush1.msra.mxu0 0.0
  %1725 = vmatprep.subr.mxu0 0.0
  %1726 = vmatpush1.msra.mxu0 0.0
  %1727 = vmatprep.subr.mxu0 0.0
  %1728 = vmatpush1.msra.mxu0 0.0
  %1729 = vmatprep.subr.mxu0 0.0
  %1730 = vmatpush1.msra.mxu0 0.0
  %1731 = vmatprep.subr.mxu0 0.0
  %1732 = vmatpush1.msra.mxu0 0.0
  %1733 = vmatprep.subr.mxu0 0.0
  %1734 = vmatpush1.msra.mxu0 0.0
  %1735 = vmatprep.subr.mxu0 0.0
  %1736 = vmatpush1.msra.mxu0 0.0
  %1737 = vmatprep.subr.mxu0 0.0
  %1738 = vmatpush1.msra.mxu0 0.0
  %1739 = vmatprep.subr.mxu0 0.0
  %1740 = vmatpush1.msra.mxu0 0.0
  %1741 = vmatprep.subr.mxu0 0.0
  %1742 = vmatpush1.msra.mxu0 0.0
  %1743 = vmatprep.subr.mxu0 0.0
  %1744 = vmatpush1.msra.mxu0 0.0
  %1745 = vmatprep.subr.mxu0 0.0
  %1746 = vmatpush1.msra.mxu0 0.0
  %1747 = vmatprep.subr.mxu0 0.0
  %1748 = vmatpush1.msra.mxu0 0.0
  %1749 = vmatprep.subr.mxu0 0.0
  %1750 = vmatpush1.msra.mxu0 0.0
  %1751 = vmatprep.subr.mxu0 0.0
  %1752 = vmatpush1.msra.mxu0 0.0
  %1753 = vmatprep.subr.mxu0 0.0
  %1754 = vmatpush1.msra.mxu0 0.0
  %1755 = vmatprep.mubr.f32.mxu0 0.0
  %1756 = vmatmul.mubr.f32.gmra.mrb[0].mxu0 %v1681
  %v1757 = vpop.f32.mrb[0].mxu0
  %v1758 = vadd.f32 0.0, %v1757
  %v1759 = vpop.f32.mrb[0].mxu0
  %v1760 = vadd.f32 0.0, %v1759
  %1761 = vdwg.mxu0
  %1762 = vmatprep.subr.mxu0 %v371
  %1763 = vmatpush1.msra.mxu0 %v370
  %1764 = vmatprep.subr.mxu0 %v375
  %1765 = vmatpush1.msra.mxu0 %v374
  %1766 = vmatprep.subr.mxu0 %v379
  %1767 = vmatpush1.msra.mxu0 %v378
  %1768 = vmatprep.subr.mxu0 %v383
  %1769 = vmatpush1.msra.mxu0 %v382
  %1770 = vmatprep.subr.mxu0 %v387
  %1771 = vmatpush1.msra.mxu0 %v386
  %1772 = vmatprep.subr.mxu0 %v391
  %1773 = vmatpush1.msra.mxu0 %v390
  %1774 = vmatprep.subr.mxu0 %v395
  %1775 = vmatpush1.msra.mxu0 %v394
  %1776 = vmatprep.subr.mxu0 %v399
  %1777 = vmatpush1.msra.mxu0 %v398
  %1778 = vmatprep.subr.mxu0 %v403
  %1779 = vmatpush1.msra.mxu0 %v402
  %1780 = vmatprep.subr.mxu0 %v407
  %1781 = vmatpush1.msra.mxu0 %v406
  %1782 = vmatprep.subr.mxu0 %v411
  %1783 = vmatpush1.msra.mxu0 %v410
  %1784 = vmatprep.subr.mxu0 %v415
  %1785 = vmatpush1.msra.mxu0 %v414
  %1786 = vmatprep.subr.mxu0 %v419
  %1787 = vmatpush1.msra.mxu0 %v418
  %1788 = vmatprep.subr.mxu0 %v423
  %1789 = vmatpush1.msra.mxu0 %v422
  %1790 = vmatprep.subr.mxu0 %v427
  %1791 = vmatpush1.msra.mxu0 %v426
  %1792 = vmatprep.subr.mxu0 %v431
  %1793 = vmatpush1.msra.mxu0 %v430
  %1794 = vmatprep.subr.mxu0 0.0
  %1795 = vmatpush1.msra.mxu0 0.0
  %1796 = vmatprep.subr.mxu0 0.0
  %1797 = vmatpush1.msra.mxu0 0.0
  %1798 = vmatprep.subr.mxu0 0.0
  %1799 = vmatpush1.msra.mxu0 0.0
  %1800 = vmatprep.subr.mxu0 0.0
  %1801 = vmatpush1.msra.mxu0 0.0
  %1802 = vmatprep.subr.mxu0 0.0
  %1803 = vmatpush1.msra.mxu0 0.0
  %1804 = vmatprep.subr.mxu0 0.0
  %1805 = vmatpush1.msra.mxu0 0.0
  %1806 = vmatprep.subr.mxu0 0.0
  %1807 = vmatpush1.msra.mxu0 0.0
  %1808 = vmatprep.subr.mxu0 0.0
  %1809 = vmatpush1.msra.mxu0 0.0
  %1810 = vmatprep.subr.mxu0 0.0
  %1811 = vmatpush1.msra.mxu0 0.0
  %1812 = vmatprep.subr.mxu0 0.0
  %1813 = vmatpush1.msra.mxu0 0.0
  %1814 = vmatprep.subr.mxu0 0.0
  %1815 = vmatpush1.msra.mxu0 0.0
  %1816 = vmatprep.subr.mxu0 0.0
  %1817 = vmatpush1.msra.mxu0 0.0
  %1818 = vmatprep.subr.mxu0 0.0
  %1819 = vmatpush1.msra.mxu0 0.0
  %1820 = vmatprep.subr.mxu0 0.0
  %1821 = vmatpush1.msra.mxu0 0.0
  %1822 = vmatprep.subr.mxu0 0.0
  %1823 = vmatpush1.msra.mxu0 0.0
  %1824 = vmatprep.subr.mxu0 0.0
  %1825 = vmatpush1.msra.mxu0 0.0
  %1826 = vmatprep.mubr.f32.mxu0 0.0
  %1827 = vmatmul.mubr.f32.gmra.mrb[0].mxu0 %v1681
  %v1828 = vpop.f32.mrb[0].mxu0
  %v1829 = vadd.f32 0.0, %v1828
  %v1830 = vpop.f32.mrb[0].mxu0
  %v1831 = vadd.f32 0.0, %v1830
  %1832 = vdwg.mxu0
  %v1833 = vadd.f32 %v1687, %v1758
  %v1834 = vadd.f32 %v1688, %v1760
  %v1835 = vadd.f32 %v1689, %v1829
  %v1836 = vadd.f32 %v1690, %v1831
  %v1837 = vxor.u32 %v1833, 2147483648
  %v1838 = vxor.u32 %v1834, 2147483648
  %v1839 = vxor.u32 %v1835, 2147483648
  %v1840 = vmul.f32 %v1837, 1.442695
  %v1841 = vpow.pop %v1840
  %v1842 = vmul.f32 %v1838, 1.442695
  %v1843 = vpow.pop %v1842
  %v1844 = vmul.f32 %v1839, 1.442695
  %v1845 = vpow.pop %v1844
  %v1846 = vadd.f32 %v1841, 1.0
  %v1847 = vadd.f32 %v1843, 1.0
  %v1848 = vadd.f32 %v1845, 1.0
  %v1849 = vrcp.pop %v1846
  %v1850 = vmul.f32 1.0, %v1849
  %v1851 = vrcp.pop %v1847
  %v1852 = vmul.f32 1.0, %v1851
  %v1853 = vrcp.pop %v1848
  %v1854 = vmul.f32 1.0, %v1853
  %v1855 = vtanh.pop %v1836
  %v1856 = vmul.f32 %v1852, %v1679
  %v1857 = vmul.f32 %v1850, %v1855
  %v1858 = vadd.f32 %v1856, %v1857
  %v1859 = vtanh.pop %v1858
  %v1860 = vmul.f32 %v1854, %v1859
  %s1861 = scalar_lea.vmem [#allocation3], 56
  %1862 = vst [vmem:[%s1861] sm:$0xff] %v1860
  %v1863 = vld [vmem:[#allocation3] sm:$0xff]
  %v1864 = vld [vmem:[#allocation3 + $0x8] sm:$0xff]
  %v1865 = vld [vmem:[#allocation3 + $0x10] sm:$0xff]
  %v1866 = vld [vmem:[#allocation3 + $0x18] sm:$0xff]
  %v1867 = vld [vmem:[#allocation3 + $0x20] sm:$0xff]
  %v1868 = vld [vmem:[#allocation3 + $0x28] sm:$0xff]
  %v1869 = vld [vmem:[#allocation3 + $0x30] sm:$0xff]
  %v1870 = vld [vmem:[#allocation3 + $0x38] sm:$0xff]
  %v1871 = vld [vmem:[%s4] sm:$0xff]
  %v1872 = vld [vmem:[%s4 + $0x8] sm:$0xff]
  %v1873 = vld [vmem:[%s4 + $0x10] sm:$0xff]
  %v1874 = vld [vmem:[%s4 + $0x18] sm:$0xff]
  %v1875 = vld [vmem:[%s4 + $0x20] sm:$0xff]
  %v1876 = vld [vmem:[%s4 + $0x28] sm:$0xff]
  %v1877 = vld [vmem:[%s4 + $0x30] sm:$0xff]
  %v1878 = vld [vmem:[%s4 + $0x38] sm:$0xff]
  %v1879 = vld [vmem:[%s4 + $0x40] sm:$0xff]
  %v1880 = vld [vmem:[%s4 + $0x48] sm:$0xff]
  %v1881 = vld [vmem:[%s4 + $0x50] sm:$0xff]
  %v1882 = vld [vmem:[%s4 + $0x58] sm:$0xff]
  %v1883 = vld [vmem:[%s4 + $0x60] sm:$0xff]
  %v1884 = vld [vmem:[%s4 + $0x68] sm:$0xff]
  %v1885 = vld [vmem:[%s4 + $0x70] sm:$0xff]
  %v1886 = vld [vmem:[%s4 + $0x78] sm:$0xff]
  %v1887 = vld [vmem:[%s4 + $0x80] sm:$0xff]
  %v1888 = vld [vmem:[%s4 + $0x88] sm:$0xff]
  %v1889 = vld [vmem:[%s4 + $0x90] sm:$0xff]
  %v1890 = vld [vmem:[%s4 + $0x98] sm:$0xff]
  %v1891 = vld [vmem:[%s4 + $0xa0] sm:$0xff]
  %v1892 = vld [vmem:[%s4 + $0xa8] sm:$0xff]
  %v1893 = vld [vmem:[%s4 + $0xb0] sm:$0xff]
  %v1894 = vld [vmem:[%s4 + $0xb8] sm:$0xff]
  %v1895 = vld [vmem:[%s4 + $0xc0] sm:$0xff]
  %v1896 = vld [vmem:[%s4 + $0xc8] sm:$0xff]
  %v1897 = vld [vmem:[%s4 + $0xd0] sm:$0xff]
  %v1898 = vld [vmem:[%s4 + $0xd8] sm:$0xff]
  %v1899 = vld [vmem:[%s4 + $0xe0] sm:$0xff]
  %v1900 = vld [vmem:[%s4 + $0xe8] sm:$0xff]
  %v1901 = vld [vmem:[%s4 + $0xf0] sm:$0xff]
  %v1902 = vld [vmem:[%s4 + $0xf8] sm:$0xff]
  %v1903 = vld [vmem:[%s4 + $0x100] sm:$0xff]
  %v1904 = vld [vmem:[%s4 + $0x108] sm:$0xff]
  %v1905 = vld [vmem:[%s4 + $0x110] sm:$0xff]
  %v1906 = vld [vmem:[%s4 + $0x118] sm:$0xff]
  %v1907 = vld [vmem:[%s4 + $0x120] sm:$0xff]
  %v1908 = vld [vmem:[%s4 + $0x128] sm:$0xff]
  %v1909 = vld [vmem:[%s4 + $0x130] sm:$0xff]
  %v1910 = vld [vmem:[%s4 + $0x138] sm:$0xff]
  %v1911 = vld [vmem:[%s4 + $0x140] sm:$0xff]
  %v1912 = vld [vmem:[%s4 + $0x148] sm:$0xff]
  %v1913 = vld [vmem:[%s4 + $0x150] sm:$0xff]
  %v1914 = vld [vmem:[%s4 + $0x158] sm:$0xff]
  %v1915 = vld [vmem:[%s4 + $0x160] sm:$0xff]
  %v1916 = vld [vmem:[%s4 + $0x168] sm:$0xff]
  %v1917 = vld [vmem:[%s4 + $0x170] sm:$0xff]
  %v1918 = vld [vmem:[%s4 + $0x178] sm:$0xff]
  %v1919 = vld [vmem:[%s4 + $0x180] sm:$0xff]
  %v1920 = vld [vmem:[%s4 + $0x188] sm:$0xff]
  %v1921 = vld [vmem:[%s4 + $0x190] sm:$0xff]
  %v1922 = vld [vmem:[%s4 + $0x198] sm:$0xff]
  %v1923 = vld [vmem:[%s4 + $0x1a0] sm:$0xff]
  %v1924 = vld [vmem:[%s4 + $0x1a8] sm:$0xff]
  %v1925 = vld [vmem:[%s4 + $0x1b0] sm:$0xff]
  %v1926 = vld [vmem:[%s4 + $0x1b8] sm:$0xff]
  %v1927 = vld [vmem:[%s4 + $0x1c0] sm:$0xff]
  %v1928 = vld [vmem:[%s4 + $0x1c8] sm:$0xff]
  %v1929 = vld [vmem:[%s4 + $0x1d0] sm:$0xff]
  %v1930 = vld [vmem:[%s4 + $0x1d8] sm:$0xff]
  %v1931 = vld [vmem:[%s4 + $0x1e0] sm:$0xff]
  %v1932 = vld [vmem:[%s4 + $0x1e8] sm:$0xff]
  %v1933 = vld [vmem:[%s4 + $0x1f0] sm:$0xff]
  %v1934 = vld [vmem:[%s4 + $0x1f8] sm:$0xff]
  %v1935 = vld [vmem:[%s6] sm:$0xf]
  %v1937 = vlaneseq
  %v1938 = vshrl.u32 %v1937, 7
  %v1939 = vsub.s32 0, %v1938
  %v1940 = vrot.slane %v1935, %v1939
  %v1941 = vlaneseq
  %v1942 = vshrl.u32 %v1941, 7
  %v1943 = vsub.s32 1, %v1942
  %v1944 = vrot.slane %v1935, %v1943
  %v1945 = vlaneseq
  %v1946 = vshrl.u32 %v1945, 7
  %v1947 = vsub.s32 2, %v1946
  %v1948 = vrot.slane %v1935, %v1947
  %v1949 = vlaneseq
  %v1950 = vshrl.u32 %v1949, 7
  %v1951 = vsub.s32 3, %v1950
  %v1952 = vrot.slane %v1935, %v1951
  %1957 = vmatprep.subr.mxu0 %v1872
  %1958 = vmatpush1.msra.mxu0 %v1871
  %1959 = vmatprep.subr.mxu0 %v1876
  %1960 = vmatpush1.msra.mxu0 %v1875
  %1961 = vmatprep.subr.mxu0 %v1880
  %1962 = vmatpush1.msra.mxu0 %v1879
  %1963 = vmatprep.subr.mxu0 %v1884
  %1964 = vmatpush1.msra.mxu0 %v1883
  %1965 = vmatprep.subr.mxu0 %v1888
  %1966 = vmatpush1.msra.mxu0 %v1887
  %1967 = vmatprep.subr.mxu0 %v1892
  %1968 = vmatpush1.msra.mxu0 %v1891
  %1969 = vmatprep.subr.mxu0 %v1896
  %1970 = vmatpush1.msra.mxu0 %v1895
  %1971 = vmatprep.subr.mxu0 %v1900
  %1972 = vmatpush1.msra.mxu0 %v1899
  %1973 = vmatprep.subr.mxu0 %v1904
  %1974 = vmatpush1.msra.mxu0 %v1903
  %1975 = vmatprep.subr.mxu0 %v1908
  %1976 = vmatpush1.msra.mxu0 %v1907
  %1977 = vmatprep.subr.mxu0 %v1912
  %1978 = vmatpush1.msra.mxu0 %v1911
  %1979 = vmatprep.subr.mxu0 %v1916
  %1980 = vmatpush1.msra.mxu0 %v1915
  %1981 = vmatprep.subr.mxu0 %v1920
  %1982 = vmatpush1.msra.mxu0 %v1919
  %1983 = vmatprep.subr.mxu0 %v1924
  %1984 = vmatpush1.msra.mxu0 %v1923
  %1985 = vmatprep.subr.mxu0 %v1928
  %1986 = vmatpush1.msra.mxu0 %v1927
  %1987 = vmatprep.subr.mxu0 %v1932
  %1988 = vmatpush1.msra.mxu0 %v1931
  %1989 = vmatprep.subr.mxu0 0.0
  %1990 = vmatpush1.msra.mxu0 0.0
  %1991 = vmatprep.subr.mxu0 0.0
  %1992 = vmatpush1.msra.mxu0 0.0
  %1993 = vmatprep.subr.mxu0 0.0
  %1994 = vmatpush1.msra.mxu0 0.0
  %1995 = vmatprep.subr.mxu0 0.0
  %1996 = vmatpush1.msra.mxu0 0.0
  %1997 = vmatprep.subr.mxu0 0.0
  %1998 = vmatpush1.msra.mxu0 0.0
  %1999 = vmatprep.subr.mxu0 0.0
  %2000 = vmatpush1.msra.mxu0 0.0
  %2001 = vmatprep.subr.mxu0 0.0
  %2002 = vmatpush1.msra.mxu0 0.0
  %2003 = vmatprep.subr.mxu0 0.0
  %2004 = vmatpush1.msra.mxu0 0.0
  %2005 = vmatprep.subr.mxu0 0.0
  %2006 = vmatpush1.msra.mxu0 0.0
  %2007 = vmatprep.subr.mxu0 0.0
  %2008 = vmatpush1.msra.mxu0 0.0
  %2009 = vmatprep.subr.mxu0 0.0
  %2010 = vmatpush1.msra.mxu0 0.0
  %2011 = vmatprep.subr.mxu0 0.0
  %2012 = vmatpush1.msra.mxu0 0.0
  %2013 = vmatprep.subr.mxu0 0.0
  %2014 = vmatpush1.msra.mxu0 0.0
  %2015 = vmatprep.subr.mxu0 0.0
  %2016 = vmatpush1.msra.mxu0 0.0
  %2017 = vmatprep.subr.mxu0 0.0
  %2018 = vmatpush1.msra.mxu0 0.0
  %2019 = vmatprep.subr.mxu0 0.0
  %2020 = vmatpush1.msra.mxu0 0.0
  %2021 = vmatprep.mubr.f32.mxu0 0.0
  %2022 = vmatmul.mubr.f32.gmra.mrb[0].mxu0 %v1863
  %v2023 = vpop.f32.mrb[0].mxu0
  %v2024 = vadd.f32 %v1940, %v2023
  %v2025 = vpop.f32.mrb[0].mxu0
  %v2026 = vadd.f32 %v1944, %v2025
  %2027 = vmatprep.mubr.f32.mxu0 0.0
  %2028 = vmatmul.mubr.f32.gmra.mrb[0].mxu0 %v1864
  %v2029 = vpop.f32.mrb[0].mxu0
  %v2030 = vadd.f32 %v1940, %v2029
  %v2031 = vpop.f32.mrb[0].mxu0
  %v2032 = vadd.f32 %v1944, %v2031
  %2033 = vmatprep.mubr.f32.mxu0 0.0
  %2034 = vmatmul.mubr.f32.gmra.mrb[0].mxu0 %v1865
  %v2035 = vpop.f32.mrb[0].mxu0
  %v2036 = vadd.f32 %v1940, %v2035
  %v2037 = vpop.f32.mrb[0].mxu0
  %v2038 = vadd.f32 %v1944, %v2037
  %2039 = vmatprep.mubr.f32.mxu0 0.0
  %2040 = vmatmul.mubr.f32.gmra.mrb[0].mxu0 %v1866
  %v2041 = vpop.f32.mrb[0].mxu0
  %v2042 = vadd.f32 %v1940, %v2041
  %v2043 = vpop.f32.mrb[0].mxu0
  %v2044 = vadd.f32 %v1944, %v2043
  %2045 = vmatprep.mubr.f32.mxu0 0.0
  %2046 = vmatmul.mubr.f32.gmra.mrb[0].mxu0 %v1867
  %v2047 = vpop.f32.mrb[0].mxu0
  %v2048 = vadd.f32 %v1940, %v2047
  %v2049 = vpop.f32.mrb[0].mxu0
  %v2050 = vadd.f32 %v1944, %v2049
  %2051 = vmatprep.mubr.f32.mxu0 0.0
  %2052 = vmatmul.mubr.f32.gmra.mrb[0].mxu0 %v1868
  %v2053 = vpop.f32.mrb[0].mxu0
  %v2054 = vadd.f32 %v1940, %v2053
  %v2055 = vpop.f32.mrb[0].mxu0
  %v2056 = vadd.f32 %v1944, %v2055
  %2057 = vmatprep.mubr.f32.mxu0 0.0
  %2058 = vmatmul.mubr.f32.gmra.mrb[0].mxu0 %v1869
  %v2059 = vpop.f32.mrb[0].mxu0
  %v2060 = vadd.f32 %v1940, %v2059
  %v2061 = vpop.f32.mrb[0].mxu0
  %v2062 = vadd.f32 %v1944, %v2061
  %2063 = vmatprep.mubr.f32.mxu0 0.0
  %2064 = vmatmul.mubr.f32.gmra.mrb[0].mxu0 %v1870
  %v2065 = vpop.f32.mrb[0].mxu0
  %v2066 = vadd.f32 %v1940, %v2065
  %v2067 = vpop.f32.mrb[0].mxu0
  %v2068 = vadd.f32 %v1944, %v2067
  %2069 = vdwg.mxu0
  %2070 = vmatprep.subr.mxu0 %v1874
  %2071 = vmatpush1.msra.mxu0 %v1873
  %2072 = vmatprep.subr.mxu0 %v1878
  %2073 = vmatpush1.msra.mxu0 %v1877
  %2074 = vmatprep.subr.mxu0 %v1882
  %2075 = vmatpush1.msra.mxu0 %v1881
  %2076 = vmatprep.subr.mxu0 %v1886
  %2077 = vmatpush1.msra.mxu0 %v1885
  %2078 = vmatprep.subr.mxu0 %v1890
  %2079 = vmatpush1.msra.mxu0 %v1889
  %2080 = vmatprep.subr.mxu0 %v1894
  %2081 = vmatpush1.msra.mxu0 %v1893
  %2082 = vmatprep.subr.mxu0 %v1898
  %2083 = vmatpush1.msra.mxu0 %v1897
  %2084 = vmatprep.subr.mxu0 %v1902
  %2085 = vmatpush1.msra.mxu0 %v1901
  %2086 = vmatprep.subr.mxu0 %v1906
  %2087 = vmatpush1.msra.mxu0 %v1905
  %2088 = vmatprep.subr.mxu0 %v1910
  %2089 = vmatpush1.msra.mxu0 %v1909
  %2090 = vmatprep.subr.mxu0 %v1914
  %2091 = vmatpush1.msra.mxu0 %v1913
  %2092 = vmatprep.subr.mxu0 %v1918
  %2093 = vmatpush1.msra.mxu0 %v1917
  %2094 = vmatprep.subr.mxu0 %v1922
  %2095 = vmatpush1.msra.mxu0 %v1921
  %2096 = vmatprep.subr.mxu0 %v1926
  %2097 = vmatpush1.msra.mxu0 %v1925
  %2098 = vmatprep.subr.mxu0 %v1930
  %2099 = vmatpush1.msra.mxu0 %v1929
  %2100 = vmatprep.subr.mxu0 %v1934
  %2101 = vmatpush1.msra.mxu0 %v1933
  %2102 = vmatprep.subr.mxu0 0.0
  %2103 = vmatpush1.msra.mxu0 0.0
  %2104 = vmatprep.subr.mxu0 0.0
  %2105 = vmatpush1.msra.mxu0 0.0
  %2106 = vmatprep.subr.mxu0 0.0
  %2107 = vmatpush1.msra.mxu0 0.0
  %2108 = vmatprep.subr.mxu0 0.0
  %2109 = vmatpush1.msra.mxu0 0.0
  %2110 = vmatprep.subr.mxu0 0.0
  %2111 = vmatpush1.msra.mxu0 0.0
  %2112 = vmatprep.subr.mxu0 0.0
  %2113 = vmatpush1.msra.mxu0 0.0
  %2114 = vmatprep.subr.mxu0 0.0
  %2115 = vmatpush1.msra.mxu0 0.0
  %2116 = vmatprep.subr.mxu0 0.0
  %2117 = vmatpush1.msra.mxu0 0.0
  %2118 = vmatprep.subr.mxu0 0.0
  %2119 = vmatpush1.msra.mxu0 0.0
  %2120 = vmatprep.subr.mxu0 0.0
  %2121 = vmatpush1.msra.mxu0 0.0
  %2122 = vmatprep.subr.mxu0 0.0
  %2123 = vmatpush1.msra.mxu0 0.0
  %2124 = vmatprep.subr.mxu0 0.0
  %2125 = vmatpush1.msra.mxu0 0.0
  %2126 = vmatprep.subr.mxu0 0.0
  %2127 = vmatpush1.msra.mxu0 0.0
  %2128 = vmatprep.subr.mxu0 0.0
  %2129 = vmatpush1.msra.mxu0 0.0
  %2130 = vmatprep.subr.mxu0 0.0
  %2131 = vmatpush1.msra.mxu0 0.0
  %2132 = vmatprep.subr.mxu0 0.0
  %2133 = vmatpush1.msra.mxu0 0.0
  %2134 = vmatprep.mubr.f32.mxu0 0.0
  %2135 = vmatmul.mubr.f32.gmra.mrb[0].mxu0 %v1863
  %v2136 = vpop.f32.mrb[0].mxu0
  %v2137 = vadd.f32 %v1948, %v2136
  %v2138 = vpop.f32.mrb[0].mxu0
  %v2139 = vadd.f32 %v1952, %v2138
  %2140 = vmatprep.mubr.f32.mxu0 0.0
  %2141 = vmatmul.mubr.f32.gmra.mrb[0].mxu0 %v1864
  %v2142 = vpop.f32.mrb[0].mxu0
  %v2143 = vadd.f32 %v1948, %v2142
  %v2144 = vpop.f32.mrb[0].mxu0
  %v2145 = vadd.f32 %v1952, %v2144
  %2146 = vmatprep.mubr.f32.mxu0 0.0
  %2147 = vmatmul.mubr.f32.gmra.mrb[0].mxu0 %v1865
  %v2148 = vpop.f32.mrb[0].mxu0
  %v2149 = vadd.f32 %v1948, %v2148
  %v2150 = vpop.f32.mrb[0].mxu0
  %v2151 = vadd.f32 %v1952, %v2150
  %2152 = vmatprep.mubr.f32.mxu0 0.0
  %2153 = vmatmul.mubr.f32.gmra.mrb[0].mxu0 %v1866
  %v2154 = vpop.f32.mrb[0].mxu0
  %v2155 = vadd.f32 %v1948, %v2154
  %v2156 = vpop.f32.mrb[0].mxu0
  %v2157 = vadd.f32 %v1952, %v2156
  %2158 = vmatprep.mubr.f32.mxu0 0.0
  %2159 = vmatmul.mubr.f32.gmra.mrb[0].mxu0 %v1867
  %v2160 = vpop.f32.mrb[0].mxu0
  %v2161 = vadd.f32 %v1948, %v2160
  %v2162 = vpop.f32.mrb[0].mxu0
  %v2163 = vadd.f32 %v1952, %v2162
  %2164 = vmatprep.mubr.f32.mxu0 0.0
  %2165 = vmatmul.mubr.f32.gmra.mrb[0].mxu0 %v1868
  %v2166 = vpop.f32.mrb[0].mxu0
  %v2167 = vadd.f32 %v1948, %v2166
  %v2168 = vpop.f32.mrb[0].mxu0
  %v2169 = vadd.f32 %v1952, %v2168
  %2170 = vmatprep.mubr.f32.mxu0 0.0
  %2171 = vmatmul.mubr.f32.gmra.mrb[0].mxu0 %v1869
  %v2172 = vpop.f32.mrb[0].mxu0
  %v2173 = vadd.f32 %v1948, %v2172
  %v2174 = vpop.f32.mrb[0].mxu0
  %v2175 = vadd.f32 %v1952, %v2174
  %2176 = vmatprep.mubr.f32.mxu0 0.0
  %2177 = vmatmul.mubr.f32.gmra.mrb[0].mxu0 %v1870
  %v2178 = vpop.f32.mrb[0].mxu0
  %v2179 = vadd.f32 %v1948, %v2178
  %v2180 = vpop.f32.mrb[0].mxu0
  %v2181 = vadd.f32 %v1952, %v2180
  %2182 = vdwg.mxu0
  %2183 = vst [vmem:[#allocation2] sm:$0xff] %v2024
  %2184 = vst [vmem:[#allocation2 + $0x8] sm:$0xff] %v2026
  %2185 = vst [vmem:[#allocation2 + $0x10] sm:$0xff] %v2137
  %2186 = vst [vmem:[#allocation2 + $0x18] sm:$0xff] %v2139
  %2187 = vst [vmem:[#allocation2 + $0x20] sm:$0xff] %v2030
  %2188 = vst [vmem:[#allocation2 + $0x28] sm:$0xff] %v2032
  %2189 = vst [vmem:[#allocation2 + $0x30] sm:$0xff] %v2143
  %2190 = vst [vmem:[#allocation2 + $0x38] sm:$0xff] %v2145
  %2191 = vst [vmem:[#allocation2 + $0x40] sm:$0xff] %v2036
  %2192 = vst [vmem:[#allocation2 + $0x48] sm:$0xff] %v2038
  %2193 = vst [vmem:[#allocation2 + $0x50] sm:$0xff] %v2149
  %2194 = vst [vmem:[#allocation2 + $0x58] sm:$0xff] %v2151
  %2195 = vst [vmem:[#allocation2 + $0x60] sm:$0xff] %v2042
  %2196 = vst [vmem:[#allocation2 + $0x68] sm:$0xff] %v2044
  %2197 = vst [vmem:[#allocation2 + $0x70] sm:$0xff] %v2155
  %2198 = vst [vmem:[#allocation2 + $0x78] sm:$0xff] %v2157
  %2199 = vst [vmem:[#allocation2 + $0x80] sm:$0xff] %v2048
  %2200 = vst [vmem:[#allocation2 + $0x88] sm:$0xff] %v2050
  %2201 = vst [vmem:[#allocation2 + $0x90] sm:$0xff] %v2161
  %2202 = vst [vmem:[#allocation2 + $0x98] sm:$0xff] %v2163
  %2203 = vst [vmem:[#allocation2 + $0xa0] sm:$0xff] %v2054
  %2204 = vst [vmem:[#allocation2 + $0xa8] sm:$0xff] %v2056
  %2205 = vst [vmem:[#allocation2 + $0xb0] sm:$0xff] %v2167
  %2206 = vst [vmem:[#allocation2 + $0xb8] sm:$0xff] %v2169
  %2207 = vst [vmem:[#allocation2 + $0xc0] sm:$0xff] %v2060
  %2208 = vst [vmem:[#allocation2 + $0xc8] sm:$0xff] %v2062
  %2209 = vst [vmem:[#allocation2 + $0xd0] sm:$0xff] %v2173
  %2210 = vst [vmem:[#allocation2 + $0xd8] sm:$0xff] %v2175
  %2211 = vst [vmem:[#allocation2 + $0xe0] sm:$0xff] %v2066
  %2212 = vst [vmem:[#allocation2 + $0xe8] sm:$0xff] %v2068
  %2213 = vst [vmem:[#allocation2 + $0xf0] sm:$0xff] %v2179
  %2214 = vst [vmem:[#allocation2 + $0xf8] sm:$0xff] %v2181
  %v2215 = vld [vmem:[%s5] sm:$0xff]
  %v2216 = vld [vmem:[%s5 + $0x8] sm:$0xff]
  %v2217 = vld [vmem:[%s5 + $0x10] sm:$0xff]
  %v2218 = vld [vmem:[%s5 + $0x18] sm:$0xff]
  %v2219 = vld [vmem:[%s5 + $0x20] sm:$0xff]
  %v2220 = vld [vmem:[%s5 + $0x28] sm:$0xff]
  %v2221 = vld [vmem:[%s5 + $0x30] sm:$0xff]
  %v2222 = vld [vmem:[%s5 + $0x38] sm:$0xff]
  %v2223 = vld [vmem:[%s5 + $0x40] sm:$0xff]
  %v2224 = vld [vmem:[%s5 + $0x48] sm:$0xff]
  %v2225 = vld [vmem:[%s5 + $0x50] sm:$0xff]
  %v2226 = vld [vmem:[%s5 + $0x58] sm:$0xff]
  %v2227 = vld [vmem:[%s5 + $0x60] sm:$0xff]
  %v2228 = vld [vmem:[%s5 + $0x68] sm:$0xff]
  %v2229 = vld [vmem:[%s5 + $0x70] sm:$0xff]
  %v2230 = vld [vmem:[%s5 + $0x78] sm:$0xff]
  %v2231 = vld [vmem:[%s5 + $0x80] sm:$0xff]
  %v2232 = vld [vmem:[%s5 + $0x88] sm:$0xff]
  %v2233 = vld [vmem:[%s5 + $0x90] sm:$0xff]
  %v2234 = vld [vmem:[%s5 + $0x98] sm:$0xff]
  %v2235 = vld [vmem:[%s5 + $0xa0] sm:$0xff]
  %v2236 = vld [vmem:[%s5 + $0xa8] sm:$0xff]
  %v2237 = vld [vmem:[%s5 + $0xb0] sm:$0xff]
  %v2238 = vld [vmem:[%s5 + $0xb8] sm:$0xff]
  %v2239 = vld [vmem:[%s5 + $0xc0] sm:$0xff]
  %v2240 = vld [vmem:[%s5 + $0xc8] sm:$0xff]
  %v2241 = vld [vmem:[%s5 + $0xd0] sm:$0xff]
  %v2242 = vld [vmem:[%s5 + $0xd8] sm:$0xff]
  %v2243 = vld [vmem:[%s5 + $0xe0] sm:$0xff]
  %v2244 = vld [vmem:[%s5 + $0xe8] sm:$0xff]
  %v2245 = vld [vmem:[%s5 + $0xf0] sm:$0xff]
  %v2246 = vld [vmem:[%s5 + $0xf8] sm:$0xff]
  %v2247 = vld [vmem:[%s5 + $0x100] sm:$0xff]
  %v2248 = vld [vmem:[%s5 + $0x108] sm:$0xff]
  %v2249 = vld [vmem:[%s5 + $0x110] sm:$0xff]
  %v2250 = vld [vmem:[%s5 + $0x118] sm:$0xff]
  %v2251 = vld [vmem:[%s5 + $0x120] sm:$0xff]
  %v2252 = vld [vmem:[%s5 + $0x128] sm:$0xff]
  %v2253 = vld [vmem:[%s5 + $0x130] sm:$0xff]
  %v2254 = vld [vmem:[%s5 + $0x138] sm:$0xff]
  %v2255 = vld [vmem:[%s5 + $0x140] sm:$0xff]
  %v2256 = vld [vmem:[%s5 + $0x148] sm:$0xff]
  %v2257 = vld [vmem:[%s5 + $0x150] sm:$0xff]
  %v2258 = vld [vmem:[%s5 + $0x158] sm:$0xff]
  %v2259 = vld [vmem:[%s5 + $0x160] sm:$0xff]
  %v2260 = vld [vmem:[%s5 + $0x168] sm:$0xff]
  %v2261 = vld [vmem:[%s5 + $0x170] sm:$0xff]
  %v2262 = vld [vmem:[%s5 + $0x178] sm:$0xff]
  %v2263 = vld [vmem:[%s5 + $0x180] sm:$0xff]
  %v2264 = vld [vmem:[%s5 + $0x188] sm:$0xff]
  %v2265 = vld [vmem:[%s5 + $0x190] sm:$0xff]
  %v2266 = vld [vmem:[%s5 + $0x198] sm:$0xff]
  %v2267 = vld [vmem:[%s5 + $0x1a0] sm:$0xff]
  %v2268 = vld [vmem:[%s5 + $0x1a8] sm:$0xff]
  %v2269 = vld [vmem:[%s5 + $0x1b0] sm:$0xff]
  %v2270 = vld [vmem:[%s5 + $0x1b8] sm:$0xff]
  %v2271 = vld [vmem:[%s5 + $0x1c0] sm:$0xff]
  %v2272 = vld [vmem:[%s5 + $0x1c8] sm:$0xff]
  %v2273 = vld [vmem:[%s5 + $0x1d0] sm:$0xff]
  %v2274 = vld [vmem:[%s5 + $0x1d8] sm:$0xff]
  %v2275 = vld [vmem:[%s5 + $0x1e0] sm:$0xff]
  %v2276 = vld [vmem:[%s5 + $0x1e8] sm:$0xff]
  %v2277 = vld [vmem:[%s5 + $0x1f0] sm:$0xff]
  %v2278 = vld [vmem:[%s5 + $0x1f8] sm:$0xff]
  %v2279 = vld [vmem:[%s434] sm:$0xff]
  %v2280 = vld [vmem:[%s434 + $0x8] sm:$0xff]
  %v2281 = vld [vmem:[%s434 + $0x10] sm:$0xff]
  %v2282 = vld [vmem:[%s434 + $0x18] sm:$0xff]
  %2283 = vmatprep.subr.mxu0 %v2216
  %2284 = vmatpush1.msra.mxu0 %v2215
  %2285 = vmatprep.subr.mxu0 %v2220
  %2286 = vmatpush1.msra.mxu0 %v2219
  %2287 = vmatprep.subr.mxu0 %v2224
  %2288 = vmatpush1.msra.mxu0 %v2223
  %2289 = vmatprep.subr.mxu0 %v2228
  %2290 = vmatpush1.msra.mxu0 %v2227
  %2291 = vmatprep.subr.mxu0 %v2232
  %2292 = vmatpush1.msra.mxu0 %v2231
  %2293 = vmatprep.subr.mxu0 %v2236
  %2294 = vmatpush1.msra.mxu0 %v2235
  %2295 = vmatprep.subr.mxu0 %v2240
  %2296 = vmatpush1.msra.mxu0 %v2239
  %2297 = vmatprep.subr.mxu0 %v2244
  %2298 = vmatpush1.msra.mxu0 %v2243
  %2299 = vmatprep.subr.mxu0 %v2248
  %2300 = vmatpush1.msra.mxu0 %v2247
  %2301 = vmatprep.subr.mxu0 %v2252
  %2302 = vmatpush1.msra.mxu0 %v2251
  %2303 = vmatprep.subr.mxu0 %v2256
  %2304 = vmatpush1.msra.mxu0 %v2255
  %2305 = vmatprep.subr.mxu0 %v2260
  %2306 = vmatpush1.msra.mxu0 %v2259
  %2307 = vmatprep.subr.mxu0 %v2264
  %2308 = vmatpush1.msra.mxu0 %v2263
  %2309 = vmatprep.subr.mxu0 %v2268
  %2310 = vmatpush1.msra.mxu0 %v2267
  %2311 = vmatprep.subr.mxu0 %v2272
  %2312 = vmatpush1.msra.mxu0 %v2271
  %2313 = vmatprep.subr.mxu0 %v2276
  %2314 = vmatpush1.msra.mxu0 %v2275
  %2315 = vmatprep.subr.mxu0 0.0
  %2316 = vmatpush1.msra.mxu0 0.0
  %2317 = vmatprep.subr.mxu0 0.0
  %2318 = vmatpush1.msra.mxu0 0.0
  %2319 = vmatprep.subr.mxu0 0.0
  %2320 = vmatpush1.msra.mxu0 0.0
  %2321 = vmatprep.subr.mxu0 0.0
  %2322 = vmatpush1.msra.mxu0 0.0
  %2323 = vmatprep.subr.mxu0 0.0
  %2324 = vmatpush1.msra.mxu0 0.0
  %2325 = vmatprep.subr.mxu0 0.0
  %2326 = vmatpush1.msra.mxu0 0.0
  %2327 = vmatprep.subr.mxu0 0.0
  %2328 = vmatpush1.msra.mxu0 0.0
  %2329 = vmatprep.subr.mxu0 0.0
  %2330 = vmatpush1.msra.mxu0 0.0
  %2331 = vmatprep.subr.mxu0 0.0
  %2332 = vmatpush1.msra.mxu0 0.0
  %2333 = vmatprep.subr.mxu0 0.0
  %2334 = vmatpush1.msra.mxu0 0.0
  %2335 = vmatprep.subr.mxu0 0.0
  %2336 = vmatpush1.msra.mxu0 0.0
  %2337 = vmatprep.subr.mxu0 0.0
  %2338 = vmatpush1.msra.mxu0 0.0
  %2339 = vmatprep.subr.mxu0 0.0
  %2340 = vmatpush1.msra.mxu0 0.0
  %2341 = vmatprep.subr.mxu0 0.0
  %2342 = vmatpush1.msra.mxu0 0.0
  %2343 = vmatprep.subr.mxu0 0.0
  %2344 = vmatpush1.msra.mxu0 0.0
  %2345 = vmatprep.subr.mxu0 0.0
  %2346 = vmatpush1.msra.mxu0 0.0
  %2347 = vmatprep.mubr.f32.mxu0 0.0
  %2348 = vmatmul.mubr.f32.gmra.mrb[0].mxu0 0.0
  %v2349 = vpop.f32.mrb[0].mxu0
  %v2350 = vadd.f32 0.0, %v2349
  %v2351 = vpop.f32.mrb[0].mxu0
  %v2352 = vadd.f32 0.0, %v2351
  %2353 = vdwg.mxu0
  %2354 = vmatprep.subr.mxu0 %v2218
  %2355 = vmatpush1.msra.mxu0 %v2217
  %2356 = vmatprep.subr.mxu0 %v2222
  %2357 = vmatpush1.msra.mxu0 %v2221
  %2358 = vmatprep.subr.mxu0 %v2226
  %2359 = vmatpush1.msra.mxu0 %v2225
  %2360 = vmatprep.subr.mxu0 %v2230
  %2361 = vmatpush1.msra.mxu0 %v2229
  %2362 = vmatprep.subr.mxu0 %v2234
  %2363 = vmatpush1.msra.mxu0 %v2233
  %2364 = vmatprep.subr.mxu0 %v2238
  %2365 = vmatpush1.msra.mxu0 %v2237
  %2366 = vmatprep.subr.mxu0 %v2242
  %2367 = vmatpush1.msra.mxu0 %v2241
  %2368 = vmatprep.subr.mxu0 %v2246
  %2369 = vmatpush1.msra.mxu0 %v2245
  %2370 = vmatprep.subr.mxu0 %v2250
  %2371 = vmatpush1.msra.mxu0 %v2249
  %2372 = vmatprep.subr.mxu0 %v2254
  %2373 = vmatpush1.msra.mxu0 %v2253
  %2374 = vmatprep.subr.mxu0 %v2258
  %2375 = vmatpush1.msra.mxu0 %v2257
  %2376 = vmatprep.subr.mxu0 %v2262
  %2377 = vmatpush1.msra.mxu0 %v2261
  %2378 = vmatprep.subr.mxu0 %v2266
  %2379 = vmatpush1.msra.mxu0 %v2265
  %2380 = vmatprep.subr.mxu0 %v2270
  %2381 = vmatpush1.msra.mxu0 %v2269
  %2382 = vmatprep.subr.mxu0 %v2274
  %2383 = vmatpush1.msra.mxu0 %v2273
  %2384 = vmatprep.subr.mxu0 %v2278
  %2385 = vmatpush1.msra.mxu0 %v2277
  %2386 = vmatprep.subr.mxu0 0.0
  %2387 = vmatpush1.msra.mxu0 0.0
  %2388 = vmatprep.subr.mxu0 0.0
  %2389 = vmatpush1.msra.mxu0 0.0
  %2390 = vmatprep.subr.mxu0 0.0
  %2391 = vmatpush1.msra.mxu0 0.0
  %2392 = vmatprep.subr.mxu0 0.0
  %2393 = vmatpush1.msra.mxu0 0.0
  %2394 = vmatprep.subr.mxu0 0.0
  %2395 = vmatpush1.msra.mxu0 0.0
  %2396 = vmatprep.subr.mxu0 0.0
  %2397 = vmatpush1.msra.mxu0 0.0
  %2398 = vmatprep.subr.mxu0 0.0
  %2399 = vmatpush1.msra.mxu0 0.0
  %2400 = vmatprep.subr.mxu0 0.0
  %2401 = vmatpush1.msra.mxu0 0.0
  %2402 = vmatprep.subr.mxu0 0.0
  %2403 = vmatpush1.msra.mxu0 0.0
  %2404 = vmatprep.subr.mxu0 0.0
  %2405 = vmatpush1.msra.mxu0 0.0
  %2406 = vmatprep.subr.mxu0 0.0
  %2407 = vmatpush1.msra.mxu0 0.0
  %2408 = vmatprep.subr.mxu0 0.0
  %2409 = vmatpush1.msra.mxu0 0.0
  %2410 = vmatprep.subr.mxu0 0.0
  %2411 = vmatpush1.msra.mxu0 0.0
  %2412 = vmatprep.subr.mxu0 0.0
  %2413 = vmatpush1.msra.mxu0 0.0
  %2414 = vmatprep.subr.mxu0 0.0
  %2415 = vmatpush1.msra.mxu0 0.0
  %2416 = vmatprep.subr.mxu0 0.0
  %2417 = vmatpush1.msra.mxu0 0.0
  %2418 = vmatprep.mubr.f32.mxu0 0.0
  %2419 = vmatmul.mubr.f32.gmra.mrb[0].mxu0 0.0
  %v2420 = vpop.f32.mrb[0].mxu0
  %v2421 = vadd.f32 0.0, %v2420
  %v2422 = vpop.f32.mrb[0].mxu0
  %v2423 = vadd.f32 0.0, %v2422
  %2424 = vdwg.mxu0
  %v2425 = vadd.f32 %v2279, %v2350
  %v2426 = vadd.f32 %v2280, %v2352
  %v2427 = vadd.f32 %v2281, %v2421
  %v2428 = vadd.f32 %v2282, %v2423
  %v2429 = vxor.u32 %v2425, 2147483648
  %v2430 = vxor.u32 %v2426, 2147483648
  %v2431 = vxor.u32 %v2427, 2147483648
  %v2432 = vmul.f32 %v2429, 1.442695
  %v2433 = vpow.pop %v2432
  %v2434 = vmul.f32 %v2430, 1.442695
  %v2435 = vpow.pop %v2434
  %v2436 = vmul.f32 %v2431, 1.442695
  %v2437 = vpow.pop %v2436
  %v2438 = vadd.f32 %v2433, 1.0
  %v2439 = vadd.f32 %v2435, 1.0
  %v2440 = vadd.f32 %v2437, 1.0
  %v2441 = vrcp.pop %v2438
  %v2442 = vmul.f32 1.0, %v2441
  %v2443 = vrcp.pop %v2439
  %v2444 = vmul.f32 1.0, %v2443
  %v2445 = vrcp.pop %v2440
  %v2446 = vmul.f32 1.0, %v2445
  %v2447 = vtanh.pop %v2428
  %v2448 = vmul.f32 %v2444, 0.0
  %v2449 = vmul.f32 %v2442, %v2447
  %v2450 = vadd.f32 %v2448, %v2449
  %v2451 = vtanh.pop %v2450
  %v2452 = vmul.f32 %v2446, %v2451
  %2453 = vst [vmem:[#allocation4] sm:$0xff] %v2452
  %v2454 = vld [vmem:[%s612] sm:$0xff]
  %v2455 = vld [vmem:[%s612 + $0x8] sm:$0xff]
  %v2456 = vld [vmem:[%s612 + $0x10] sm:$0xff]
  %v2457 = vld [vmem:[%s612 + $0x18] sm:$0xff]
  %2458 = vmatprep.subr.mxu0 %v2216
  %2459 = vmatpush1.msra.mxu0 %v2215
  %2460 = vmatprep.subr.mxu0 %v2220
  %2461 = vmatpush1.msra.mxu0 %v2219
  %2462 = vmatprep.subr.mxu0 %v2224
  %2463 = vmatpush1.msra.mxu0 %v2223
  %2464 = vmatprep.subr.mxu0 %v2228
  %2465 = vmatpush1.msra.mxu0 %v2227
  %2466 = vmatprep.subr.mxu0 %v2232
  %2467 = vmatpush1.msra.mxu0 %v2231
  %2468 = vmatprep.subr.mxu0 %v2236
  %2469 = vmatpush1.msra.mxu0 %v2235
  %2470 = vmatprep.subr.mxu0 %v2240
  %2471 = vmatpush1.msra.mxu0 %v2239
  %2472 = vmatprep.subr.mxu0 %v2244
  %2473 = vmatpush1.msra.mxu0 %v2243
  %2474 = vmatprep.subr.mxu0 %v2248
  %2475 = vmatpush1.msra.mxu0 %v2247
  %2476 = vmatprep.subr.mxu0 %v2252
  %2477 = vmatpush1.msra.mxu0 %v2251
  %2478 = vmatprep.subr.mxu0 %v2256
  %2479 = vmatpush1.msra.mxu0 %v2255
  %2480 = vmatprep.subr.mxu0 %v2260
  %2481 = vmatpush1.msra.mxu0 %v2259
  %2482 = vmatprep.subr.mxu0 %v2264
  %2483 = vmatpush1.msra.mxu0 %v2263
  %2484 = vmatprep.subr.mxu0 %v2268
  %2485 = vmatpush1.msra.mxu0 %v2267
  %2486 = vmatprep.subr.mxu0 %v2272
  %2487 = vmatpush1.msra.mxu0 %v2271
  %2488 = vmatprep.subr.mxu0 %v2276
  %2489 = vmatpush1.msra.mxu0 %v2275
  %2490 = vmatprep.subr.mxu0 0.0
  %2491 = vmatpush1.msra.mxu0 0.0
  %2492 = vmatprep.subr.mxu0 0.0
  %2493 = vmatpush1.msra.mxu0 0.0
  %2494 = vmatprep.subr.mxu0 0.0
  %2495 = vmatpush1.msra.mxu0 0.0
  %2496 = vmatprep.subr.mxu0 0.0
  %2497 = vmatpush1.msra.mxu0 0.0
  %2498 = vmatprep.subr.mxu0 0.0
  %2499 = vmatpush1.msra.mxu0 0.0
  %2500 = vmatprep.subr.mxu0 0.0
  %2501 = vmatpush1.msra.mxu0 0.0
  %2502 = vmatprep.subr.mxu0 0.0
  %2503 = vmatpush1.msra.mxu0 0.0
  %2504 = vmatprep.subr.mxu0 0.0
  %2505 = vmatpush1.msra.mxu0 0.0
  %2506 = vmatprep.subr.mxu0 0.0
  %2507 = vmatpush1.msra.mxu0 0.0
  %2508 = vmatprep.subr.mxu0 0.0
  %2509 = vmatpush1.msra.mxu0 0.0
  %2510 = vmatprep.subr.mxu0 0.0
  %2511 = vmatpush1.msra.mxu0 0.0
  %2512 = vmatprep.subr.mxu0 0.0
  %2513 = vmatpush1.msra.mxu0 0.0
  %2514 = vmatprep.subr.mxu0 0.0
  %2515 = vmatpush1.msra.mxu0 0.0
  %2516 = vmatprep.subr.mxu0 0.0
  %2517 = vmatpush1.msra.mxu0 0.0
  %2518 = vmatprep.subr.mxu0 0.0
  %2519 = vmatpush1.msra.mxu0 0.0
  %2520 = vmatprep.subr.mxu0 0.0
  %2521 = vmatpush1.msra.mxu0 0.0
  %2522 = vmatprep.mubr.f32.mxu0 0.0
  %2523 = vmatmul.mubr.f32.gmra.mrb[0].mxu0 %v2452
  %v2524 = vpop.f32.mrb[0].mxu0
  %v2525 = vadd.f32 0.0, %v2524
  %v2526 = vpop.f32.mrb[0].mxu0
  %v2527 = vadd.f32 0.0, %v2526
  %2528 = vdwg.mxu0
  %2529 = vmatprep.subr.mxu0 %v2218
  %2530 = vmatpush1.msra.mxu0 %v2217
  %2531 = vmatprep.subr.mxu0 %v2222
  %2532 = vmatpush1.msra.mxu0 %v2221
  %2533 = vmatprep.subr.mxu0 %v2226
  %2534 = vmatpush1.msra.mxu0 %v2225
  %2535 = vmatprep.subr.mxu0 %v2230
  %2536 = vmatpush1.msra.mxu0 %v2229
  %2537 = vmatprep.subr.mxu0 %v2234
  %2538 = vmatpush1.msra.mxu0 %v2233
  %2539 = vmatprep.subr.mxu0 %v2238
  %2540 = vmatpush1.msra.mxu0 %v2237
  %2541 = vmatprep.subr.mxu0 %v2242
  %2542 = vmatpush1.msra.mxu0 %v2241
  %2543 = vmatprep.subr.mxu0 %v2246
  %2544 = vmatpush1.msra.mxu0 %v2245
  %2545 = vmatprep.subr.mxu0 %v2250
  %2546 = vmatpush1.msra.mxu0 %v2249
  %2547 = vmatprep.subr.mxu0 %v2254
  %2548 = vmatpush1.msra.mxu0 %v2253
  %2549 = vmatprep.subr.mxu0 %v2258
  %2550 = vmatpush1.msra.mxu0 %v2257
  %2551 = vmatprep.subr.mxu0 %v2262
  %2552 = vmatpush1.msra.mxu0 %v2261
  %2553 = vmatprep.subr.mxu0 %v2266
  %2554 = vmatpush1.msra.mxu0 %v2265
  %2555 = vmatprep.subr.mxu0 %v2270
  %2556 = vmatpush1.msra.mxu0 %v2269
  %2557 = vmatprep.subr.mxu0 %v2274
  %2558 = vmatpush1.msra.mxu0 %v2273
  %2559 = vmatprep.subr.mxu0 %v2278
  %2560 = vmatpush1.msra.mxu0 %v2277
  %2561 = vmatprep.subr.mxu0 0.0
  %2562 = vmatpush1.msra.mxu0 0.0
  %2563 = vmatprep.subr.mxu0 0.0
  %2564 = vmatpush1.msra.mxu0 0.0
  %2565 = vmatprep.subr.mxu0 0.0
  %2566 = vmatpush1.msra.mxu0 0.0
  %2567 = vmatprep.subr.mxu0 0.0
  %2568 = vmatpush1.msra.mxu0 0.0
  %2569 = vmatprep.subr.mxu0 0.0
  %2570 = vmatpush1.msra.mxu0 0.0
  %2571 = vmatprep.subr.mxu0 0.0
  %2572 = vmatpush1.msra.mxu0 0.0
  %2573 = vmatprep.subr.mxu0 0.0
  %2574 = vmatpush1.msra.mxu0 0.0
  %2575 = vmatprep.subr.mxu0 0.0
  %2576 = vmatpush1.msra.mxu0 0.0
  %2577 = vmatprep.subr.mxu0 0.0
  %2578 = vmatpush1.msra.mxu0 0.0
  %2579 = vmatprep.subr.mxu0 0.0
  %2580 = vmatpush1.msra.mxu0 0.0
  %2581 = vmatprep.subr.mxu0 0.0
  %2582 = vmatpush1.msra.mxu0 0.0
  %2583 = vmatprep.subr.mxu0 0.0
  %2584 = vmatpush1.msra.mxu0 0.0
  %2585 = vmatprep.subr.mxu0 0.0
  %2586 = vmatpush1.msra.mxu0 0.0
  %2587 = vmatprep.subr.mxu0 0.0
  %2588 = vmatpush1.msra.mxu0 0.0
  %2589 = vmatprep.subr.mxu0 0.0
  %2590 = vmatpush1.msra.mxu0 0.0
  %2591 = vmatprep.subr.mxu0 0.0
  %2592 = vmatpush1.msra.mxu0 0.0
  %2593 = vmatprep.mubr.f32.mxu0 0.0
  %2594 = vmatmul.mubr.f32.gmra.mrb[0].mxu0 %v2452
  %v2595 = vpop.f32.mrb[0].mxu0
  %v2596 = vadd.f32 0.0, %v2595
  %v2597 = vpop.f32.mrb[0].mxu0
  %v2598 = vadd.f32 0.0, %v2597
  %2599 = vdwg.mxu0
  %v2600 = vadd.f32 %v2454, %v2525
  %v2601 = vadd.f32 %v2455, %v2527
  %v2602 = vadd.f32 %v2456, %v2596
  %v2603 = vadd.f32 %v2457, %v2598
  %v2604 = vxor.u32 %v2600, 2147483648
  %v2605 = vxor.u32 %v2601, 2147483648
  %v2606 = vxor.u32 %v2602, 2147483648
  %v2607 = vmul.f32 %v2604, 1.442695
  %v2608 = vpow.pop %v2607
  %v2609 = vmul.f32 %v2605, 1.442695
  %v2610 = vpow.pop %v2609
  %v2611 = vmul.f32 %v2606, 1.442695
  %v2612 = vpow.pop %v2611
  %v2613 = vadd.f32 %v2608, 1.0
  %v2614 = vadd.f32 %v2610, 1.0
  %v2615 = vadd.f32 %v2612, 1.0
  %v2616 = vrcp.pop %v2613
  %v2617 = vmul.f32 1.0, %v2616
  %v2618 = vrcp.pop %v2614
  %v2619 = vmul.f32 1.0, %v2618
  %v2620 = vrcp.pop %v2615
  %v2621 = vmul.f32 1.0, %v2620
  %v2622 = vtanh.pop %v2603
  %v2623 = vmul.f32 %v2619, %v2450
  %v2624 = vmul.f32 %v2617, %v2622
  %v2625 = vadd.f32 %v2623, %v2624
  %v2626 = vtanh.pop %v2625
  %v2627 = vmul.f32 %v2621, %v2626
  %s2628 = scalar_lea.vmem [#allocation4], 8
  %2629 = vst [vmem:[%s2628] sm:$0xff] %v2627
  %v2630 = vld [vmem:[%s791] sm:$0xff]
  %v2631 = vld [vmem:[%s791 + $0x8] sm:$0xff]
  %v2632 = vld [vmem:[%s791 + $0x10] sm:$0xff]
  %v2633 = vld [vmem:[%s791 + $0x18] sm:$0xff]
  %2634 = vmatprep.subr.mxu0 %v2216
  %2635 = vmatpush1.msra.mxu0 %v2215
  %2636 = vmatprep.subr.mxu0 %v2220
  %2637 = vmatpush1.msra.mxu0 %v2219
  %2638 = vmatprep.subr.mxu0 %v2224
  %2639 = vmatpush1.msra.mxu0 %v2223
  %2640 = vmatprep.subr.mxu0 %v2228
  %2641 = vmatpush1.msra.mxu0 %v2227
  %2642 = vmatprep.subr.mxu0 %v2232
  %2643 = vmatpush1.msra.mxu0 %v2231
  %2644 = vmatprep.subr.mxu0 %v2236
  %2645 = vmatpush1.msra.mxu0 %v2235
  %2646 = vmatprep.subr.mxu0 %v2240
  %2647 = vmatpush1.msra.mxu0 %v2239
  %2648 = vmatprep.subr.mxu0 %v2244
  %2649 = vmatpush1.msra.mxu0 %v2243
  %2650 = vmatprep.subr.mxu0 %v2248
  %2651 = vmatpush1.msra.mxu0 %v2247
  %2652 = vmatprep.subr.mxu0 %v2252
  %2653 = vmatpush1.msra.mxu0 %v2251
  %2654 = vmatprep.subr.mxu0 %v2256
  %2655 = vmatpush1.msra.mxu0 %v2255
  %2656 = vmatprep.subr.mxu0 %v2260
  %2657 = vmatpush1.msra.mxu0 %v2259
  %2658 = vmatprep.subr.mxu0 %v2264
  %2659 = vmatpush1.msra.mxu0 %v2263
  %2660 = vmatprep.subr.mxu0 %v2268
  %2661 = vmatpush1.msra.mxu0 %v2267
  %2662 = vmatprep.subr.mxu0 %v2272
  %2663 = vmatpush1.msra.mxu0 %v2271
  %2664 = vmatprep.subr.mxu0 %v2276
  %2665 = vmatpush1.msra.mxu0 %v2275
  %2666 = vmatprep.subr.mxu0 0.0
  %2667 = vmatpush1.msra.mxu0 0.0
  %2668 = vmatprep.subr.mxu0 0.0
  %2669 = vmatpush1.msra.mxu0 0.0
  %2670 = vmatprep.subr.mxu0 0.0
  %2671 = vmatpush1.msra.mxu0 0.0
  %2672 = vmatprep.subr.mxu0 0.0
  %2673 = vmatpush1.msra.mxu0 0.0
  %2674 = vmatprep.subr.mxu0 0.0
  %2675 = vmatpush1.msra.mxu0 0.0
  %2676 = vmatprep.subr.mxu0 0.0
  %2677 = vmatpush1.msra.mxu0 0.0
  %2678 = vmatprep.subr.mxu0 0.0
  %2679 = vmatpush1.msra.mxu0 0.0
  %2680 = vmatprep.subr.mxu0 0.0
  %2681 = vmatpush1.msra.mxu0 0.0
  %2682 = vmatprep.subr.mxu0 0.0
  %2683 = vmatpush1.msra.mxu0 0.0
  %2684 = vmatprep.subr.mxu0 0.0
  %2685 = vmatpush1.msra.mxu0 0.0
  %2686 = vmatprep.subr.mxu0 0.0
  %2687 = vmatpush1.msra.mxu0 0.0
  %2688 = vmatprep.subr.mxu0 0.0
  %2689 = vmatpush1.msra.mxu0 0.0
  %2690 = vmatprep.subr.mxu0 0.0
  %2691 = vmatpush1.msra.mxu0 0.0
  %2692 = vmatprep.subr.mxu0 0.0
  %2693 = vmatpush1.msra.mxu0 0.0
  %2694 = vmatprep.subr.mxu0 0.0
  %2695 = vmatpush1.msra.mxu0 0.0
  %2696 = vmatprep.subr.mxu0 0.0
  %2697 = vmatpush1.msra.mxu0 0.0
  %2698 = vmatprep.mubr.f32.mxu0 0.0
  %2699 = vmatmul.mubr.f32.gmra.mrb[0].mxu0 %v2627
  %v2700 = vpop.f32.mrb[0].mxu0
  %v2701 = vadd.f32 0.0, %v2700
  %v2702 = vpop.f32.mrb[0].mxu0
  %v2703 = vadd.f32 0.0, %v2702
  %2704 = vdwg.mxu0
  %2705 = vmatprep.subr.mxu0 %v2218
  %2706 = vmatpush1.msra.mxu0 %v2217
  %2707 = vmatprep.subr.mxu0 %v2222
  %2708 = vmatpush1.msra.mxu0 %v2221
  %2709 = vmatprep.subr.mxu0 %v2226
  %2710 = vmatpush1.msra.mxu0 %v2225
  %2711 = vmatprep.subr.mxu0 %v2230
  %2712 = vmatpush1.msra.mxu0 %v2229
  %2713 = vmatprep.subr.mxu0 %v2234
  %2714 = vmatpush1.msra.mxu0 %v2233
  %2715 = vmatprep.subr.mxu0 %v2238
  %2716 = vmatpush1.msra.mxu0 %v2237
  %2717 = vmatprep.subr.mxu0 %v2242
  %2718 = vmatpush1.msra.mxu0 %v2241
  %2719 = vmatprep.subr.mxu0 %v2246
  %2720 = vmatpush1.msra.mxu0 %v2245
  %2721 = vmatprep.subr.mxu0 %v2250
  %2722 = vmatpush1.msra.mxu0 %v2249
  %2723 = vmatprep.subr.mxu0 %v2254
  %2724 = vmatpush1.msra.mxu0 %v2253
  %2725 = vmatprep.subr.mxu0 %v2258
  %2726 = vmatpush1.msra.mxu0 %v2257
  %2727 = vmatprep.subr.mxu0 %v2262
  %2728 = vmatpush1.msra.mxu0 %v2261
  %2729 = vmatprep.subr.mxu0 %v2266
  %2730 = vmatpush1.msra.mxu0 %v2265
  %2731 = vmatprep.subr.mxu0 %v2270
  %2732 = vmatpush1.msra.mxu0 %v2269
  %2733 = vmatprep.subr.mxu0 %v2274
  %2734 = vmatpush1.msra.mxu0 %v2273
  %2735 = vmatprep.subr.mxu0 %v2278
  %2736 = vmatpush1.msra.mxu0 %v2277
  %2737 = vmatprep.subr.mxu0 0.0
  %2738 = vmatpush1.msra.mxu0 0.0
  %2739 = vmatprep.subr.mxu0 0.0
  %2740 = vmatpush1.msra.mxu0 0.0
  %2741 = vmatprep.subr.mxu0 0.0
  %2742 = vmatpush1.msra.mxu0 0.0
  %2743 = vmatprep.subr.mxu0 0.0
  %2744 = vmatpush1.msra.mxu0 0.0
  %2745 = vmatprep.subr.mxu0 0.0
  %2746 = vmatpush1.msra.mxu0 0.0
  %2747 = vmatprep.subr.mxu0 0.0
  %2748 = vmatpush1.msra.mxu0 0.0
  %2749 = vmatprep.subr.mxu0 0.0
  %2750 = vmatpush1.msra.mxu0 0.0
  %2751 = vmatprep.subr.mxu0 0.0
  %2752 = vmatpush1.msra.mxu0 0.0
  %2753 = vmatprep.subr.mxu0 0.0
  %2754 = vmatpush1.msra.mxu0 0.0
  %2755 = vmatprep.subr.mxu0 0.0
  %2756 = vmatpush1.msra.mxu0 0.0
  %2757 = vmatprep.subr.mxu0 0.0
  %2758 = vmatpush1.msra.mxu0 0.0
  %2759 = vmatprep.subr.mxu0 0.0
  %2760 = vmatpush1.msra.mxu0 0.0
  %2761 = vmatprep.subr.mxu0 0.0
  %2762 = vmatpush1.msra.mxu0 0.0
  %2763 = vmatprep.subr.mxu0 0.0
  %2764 = vmatpush1.msra.mxu0 0.0
  %2765 = vmatprep.subr.mxu0 0.0
  %2766 = vmatpush1.msra.mxu0 0.0
  %2767 = vmatprep.subr.mxu0 0.0
  %2768 = vmatpush1.msra.mxu0 0.0
  %2769 = vmatprep.mubr.f32.mxu0 0.0
  %2770 = vmatmul.mubr.f32.gmra.mrb[0].mxu0 %v2627
  %v2771 = vpop.f32.mrb[0].mxu0
  %v2772 = vadd.f32 0.0, %v2771
  %v2773 = vpop.f32.mrb[0].mxu0
  %v2774 = vadd.f32 0.0, %v2773
  %2775 = vdwg.mxu0
  %v2776 = vadd.f32 %v2630, %v2701
  %v2777 = vadd.f32 %v2631, %v2703
  %v2778 = vadd.f32 %v2632, %v2772
  %v2779 = vadd.f32 %v2633, %v2774
  %v2780 = vxor.u32 %v2776, 2147483648
  %v2781 = vxor.u32 %v2777, 2147483648
  %v2782 = vxor.u32 %v2778, 2147483648
  %v2783 = vmul.f32 %v2780, 1.442695
  %v2784 = vpow.pop %v2783
  %v2785 = vmul.f32 %v2781, 1.442695
  %v2786 = vpow.pop %v2785
  %v2787 = vmul.f32 %v2782, 1.442695
  %v2788 = vpow.pop %v2787
  %v2789 = vadd.f32 %v2784, 1.0
  %v2790 = vadd.f32 %v2786, 1.0
  %v2791 = vadd.f32 %v2788, 1.0
  %v2792 = vrcp.pop %v2789
  %v2793 = vmul.f32 1.0, %v2792
  %v2794 = vrcp.pop %v2790
  %v2795 = vmul.f32 1.0, %v2794
  %v2796 = vrcp.pop %v2791
  %v2797 = vmul.f32 1.0, %v2796
  %v2798 = vtanh.pop %v2779
  %v2799 = vmul.f32 %v2795, %v2625
  %v2800 = vmul.f32 %v2793, %v2798
  %v2801 = vadd.f32 %v2799, %v2800
  %v2802 = vtanh.pop %v2801
  %v2803 = vmul.f32 %v2797, %v2802
  %s2804 = scalar_lea.vmem [#allocation4], 16
  %2805 = vst [vmem:[%s2804] sm:$0xff] %v2803
  %v2806 = vld [vmem:[%s970] sm:$0xff]
  %v2807 = vld [vmem:[%s970 + $0x8] sm:$0xff]
  %v2808 = vld [vmem:[%s970 + $0x10] sm:$0xff]
  %v2809 = vld [vmem:[%s970 + $0x18] sm:$0xff]
  %2810 = vmatprep.subr.mxu0 %v2216
  %2811 = vmatpush1.msra.mxu0 %v2215
  %2812 = vmatprep.subr.mxu0 %v2220
  %2813 = vmatpush1.msra.mxu0 %v2219
  %2814 = vmatprep.subr.mxu0 %v2224
  %2815 = vmatpush1.msra.mxu0 %v2223
  %2816 = vmatprep.subr.mxu0 %v2228
  %2817 = vmatpush1.msra.mxu0 %v2227
  %2818 = vmatprep.subr.mxu0 %v2232
  %2819 = vmatpush1.msra.mxu0 %v2231
  %2820 = vmatprep.subr.mxu0 %v2236
  %2821 = vmatpush1.msra.mxu0 %v2235
  %2822 = vmatprep.subr.mxu0 %v2240
  %2823 = vmatpush1.msra.mxu0 %v2239
  %2824 = vmatprep.subr.mxu0 %v2244
  %2825 = vmatpush1.msra.mxu0 %v2243
  %2826 = vmatprep.subr.mxu0 %v2248
  %2827 = vmatpush1.msra.mxu0 %v2247
  %2828 = vmatprep.subr.mxu0 %v2252
  %2829 = vmatpush1.msra.mxu0 %v2251
  %2830 = vmatprep.subr.mxu0 %v2256
  %2831 = vmatpush1.msra.mxu0 %v2255
  %2832 = vmatprep.subr.mxu0 %v2260
  %2833 = vmatpush1.msra.mxu0 %v2259
  %2834 = vmatprep.subr.mxu0 %v2264
  %2835 = vmatpush1.msra.mxu0 %v2263
  %2836 = vmatprep.subr.mxu0 %v2268
  %2837 = vmatpush1.msra.mxu0 %v2267
  %2838 = vmatprep.subr.mxu0 %v2272
  %2839 = vmatpush1.msra.mxu0 %v2271
  %2840 = vmatprep.subr.mxu0 %v2276
  %2841 = vmatpush1.msra.mxu0 %v2275
  %2842 = vmatprep.subr.mxu0 0.0
  %2843 = vmatpush1.msra.mxu0 0.0
  %2844 = vmatprep.subr.mxu0 0.0
  %2845 = vmatpush1.msra.mxu0 0.0
  %2846 = vmatprep.subr.mxu0 0.0
  %2847 = vmatpush1.msra.mxu0 0.0
  %2848 = vmatprep.subr.mxu0 0.0
  %2849 = vmatpush1.msra.mxu0 0.0
  %2850 = vmatprep.subr.mxu0 0.0
  %2851 = vmatpush1.msra.mxu0 0.0
  %2852 = vmatprep.subr.mxu0 0.0
  %2853 = vmatpush1.msra.mxu0 0.0
  %2854 = vmatprep.subr.mxu0 0.0
  %2855 = vmatpush1.msra.mxu0 0.0
  %2856 = vmatprep.subr.mxu0 0.0
  %2857 = vmatpush1.msra.mxu0 0.0
  %2858 = vmatprep.subr.mxu0 0.0
  %2859 = vmatpush1.msra.mxu0 0.0
  %2860 = vmatprep.subr.mxu0 0.0
  %2861 = vmatpush1.msra.mxu0 0.0
  %2862 = vmatprep.subr.mxu0 0.0
  %2863 = vmatpush1.msra.mxu0 0.0
  %2864 = vmatprep.subr.mxu0 0.0
  %2865 = vmatpush1.msra.mxu0 0.0
  %2866 = vmatprep.subr.mxu0 0.0
  %2867 = vmatpush1.msra.mxu0 0.0
  %2868 = vmatprep.subr.mxu0 0.0
  %2869 = vmatpush1.msra.mxu0 0.0
  %2870 = vmatprep.subr.mxu0 0.0
  %2871 = vmatpush1.msra.mxu0 0.0
  %2872 = vmatprep.subr.mxu0 0.0
  %2873 = vmatpush1.msra.mxu0 0.0
  %2874 = vmatprep.mubr.f32.mxu0 0.0
  %2875 = vmatmul.mubr.f32.gmra.mrb[0].mxu0 %v2803
  %v2876 = vpop.f32.mrb[0].mxu0
  %v2877 = vadd.f32 0.0, %v2876
  %v2878 = vpop.f32.mrb[0].mxu0
  %v2879 = vadd.f32 0.0, %v2878
  %2880 = vdwg.mxu0
  %2881 = vmatprep.subr.mxu0 %v2218
  %2882 = vmatpush1.msra.mxu0 %v2217
  %2883 = vmatprep.subr.mxu0 %v2222
  %2884 = vmatpush1.msra.mxu0 %v2221
  %2885 = vmatprep.subr.mxu0 %v2226
  %2886 = vmatpush1.msra.mxu0 %v2225
  %2887 = vmatprep.subr.mxu0 %v2230
  %2888 = vmatpush1.msra.mxu0 %v2229
  %2889 = vmatprep.subr.mxu0 %v2234
  %2890 = vmatpush1.msra.mxu0 %v2233
  %2891 = vmatprep.subr.mxu0 %v2238
  %2892 = vmatpush1.msra.mxu0 %v2237
  %2893 = vmatprep.subr.mxu0 %v2242
  %2894 = vmatpush1.msra.mxu0 %v2241
  %2895 = vmatprep.subr.mxu0 %v2246
  %2896 = vmatpush1.msra.mxu0 %v2245
  %2897 = vmatprep.subr.mxu0 %v2250
  %2898 = vmatpush1.msra.mxu0 %v2249
  %2899 = vmatprep.subr.mxu0 %v2254
  %2900 = vmatpush1.msra.mxu0 %v2253
  %2901 = vmatprep.subr.mxu0 %v2258
  %2902 = vmatpush1.msra.mxu0 %v2257
  %2903 = vmatprep.subr.mxu0 %v2262
  %2904 = vmatpush1.msra.mxu0 %v2261
  %2905 = vmatprep.subr.mxu0 %v2266
  %2906 = vmatpush1.msra.mxu0 %v2265
  %2907 = vmatprep.subr.mxu0 %v2270
  %2908 = vmatpush1.msra.mxu0 %v2269
  %2909 = vmatprep.subr.mxu0 %v2274
  %2910 = vmatpush1.msra.mxu0 %v2273
  %2911 = vmatprep.subr.mxu0 %v2278
  %2912 = vmatpush1.msra.mxu0 %v2277
  %2913 = vmatprep.subr.mxu0 0.0
  %2914 = vmatpush1.msra.mxu0 0.0
  %2915 = vmatprep.subr.mxu0 0.0
  %2916 = vmatpush1.msra.mxu0 0.0
  %2917 = vmatprep.subr.mxu0 0.0
  %2918 = vmatpush1.msra.mxu0 0.0
  %2919 = vmatprep.subr.mxu0 0.0
  %2920 = vmatpush1.msra.mxu0 0.0
  %2921 = vmatprep.subr.mxu0 0.0
  %2922 = vmatpush1.msra.mxu0 0.0
  %2923 = vmatprep.subr.mxu0 0.0
  %2924 = vmatpush1.msra.mxu0 0.0
  %2925 = vmatprep.subr.mxu0 0.0
  %2926 = vmatpush1.msra.mxu0 0.0
  %2927 = vmatprep.subr.mxu0 0.0
  %2928 = vmatpush1.msra.mxu0 0.0
  %2929 = vmatprep.subr.mxu0 0.0
  %2930 = vmatpush1.msra.mxu0 0.0
  %2931 = vmatprep.subr.mxu0 0.0
  %2932 = vmatpush1.msra.mxu0 0.0
  %2933 = vmatprep.subr.mxu0 0.0
  %2934 = vmatpush1.msra.mxu0 0.0
  %2935 = vmatprep.subr.mxu0 0.0
  %2936 = vmatpush1.msra.mxu0 0.0
  %2937 = vmatprep.subr.mxu0 0.0
  %2938 = vmatpush1.msra.mxu0 0.0
  %2939 = vmatprep.subr.mxu0 0.0
  %2940 = vmatpush1.msra.mxu0 0.0
  %2941 = vmatprep.subr.mxu0 0.0
  %2942 = vmatpush1.msra.mxu0 0.0
  %2943 = vmatprep.subr.mxu0 0.0
  %2944 = vmatpush1.msra.mxu0 0.0
  %2945 = vmatprep.mubr.f32.mxu0 0.0
  %2946 = vmatmul.mubr.f32.gmra.mrb[0].mxu0 %v2803
  %v2947 = vpop.f32.mrb[0].mxu0
  %v2948 = vadd.f32 0.0, %v2947
  %v2949 = vpop.f32.mrb[0].mxu0
  %v2950 = vadd.f32 0.0, %v2949
  %2951 = vdwg.mxu0
  %v2952 = vadd.f32 %v2806, %v2877
  %v2953 = vadd.f32 %v2807, %v2879
  %v2954 = vadd.f32 %v2808, %v2948
  %v2955 = vadd.f32 %v2809, %v2950
  %v2956 = vxor.u32 %v2952, 2147483648
  %v2957 = vxor.u32 %v2953, 2147483648
  %v2958 = vxor.u32 %v2954, 2147483648
  %v2959 = vmul.f32 %v2956, 1.442695
  %v2960 = vpow.pop %v2959
  %v2961 = vmul.f32 %v2957, 1.442695
  %v2962 = vpow.pop %v2961
  %v2963 = vmul.f32 %v2958, 1.442695
  %v2964 = vpow.pop %v2963
  %v2965 = vadd.f32 %v2960, 1.0
  %v2966 = vadd.f32 %v2962, 1.0
  %v2967 = vadd.f32 %v2964, 1.0
  %v2968 = vrcp.pop %v2965
  %v2969 = vmul.f32 1.0, %v2968
  %v2970 = vrcp.pop %v2966
  %v2971 = vmul.f32 1.0, %v2970
  %v2972 = vrcp.pop %v2967
  %v2973 = vmul.f32 1.0, %v2972
  %v2974 = vtanh.pop %v2955
  %v2975 = vmul.f32 %v2971, %v2801
  %v2976 = vmul.f32 %v2969, %v2974
  %v2977 = vadd.f32 %v2975, %v2976
  %v2978 = vtanh.pop %v2977
  %v2979 = vmul.f32 %v2973, %v2978
  %s2980 = scalar_lea.vmem [#allocation4], 24
  %2981 = vst [vmem:[%s2980] sm:$0xff] %v2979
  %v2982 = vld [vmem:[%s1149] sm:$0xff]
  %v2983 = vld [vmem:[%s1149 + $0x8] sm:$0xff]
  %v2984 = vld [vmem:[%s1149 + $0x10] sm:$0xff]
  %v2985 = vld [vmem:[%s1149 + $0x18] sm:$0xff]
  %2986 = vmatprep.subr.mxu0 %v2216
  %2987 = vmatpush1.msra.mxu0 %v2215
  %2988 = vmatprep.subr.mxu0 %v2220
  %2989 = vmatpush1.msra.mxu0 %v2219
  %2990 = vmatprep.subr.mxu0 %v2224
  %2991 = vmatpush1.msra.mxu0 %v2223
  %2992 = vmatprep.subr.mxu0 %v2228
  %2993 = vmatpush1.msra.mxu0 %v2227
  %2994 = vmatprep.subr.mxu0 %v2232
  %2995 = vmatpush1.msra.mxu0 %v2231
  %2996 = vmatprep.subr.mxu0 %v2236
  %2997 = vmatpush1.msra.mxu0 %v2235
  %2998 = vmatprep.subr.mxu0 %v2240
  %2999 = vmatpush1.msra.mxu0 %v2239
  %3000 = vmatprep.subr.mxu0 %v2244
  %3001 = vmatpush1.msra.mxu0 %v2243
  %3002 = vmatprep.subr.mxu0 %v2248
  %3003 = vmatpush1.msra.mxu0 %v2247
  %3004 = vmatprep.subr.mxu0 %v2252
  %3005 = vmatpush1.msra.mxu0 %v2251
  %3006 = vmatprep.subr.mxu0 %v2256
  %3007 = vmatpush1.msra.mxu0 %v2255
  %3008 = vmatprep.subr.mxu0 %v2260
  %3009 = vmatpush1.msra.mxu0 %v2259
  %3010 = vmatprep.subr.mxu0 %v2264
  %3011 = vmatpush1.msra.mxu0 %v2263
  %3012 = vmatprep.subr.mxu0 %v2268
  %3013 = vmatpush1.msra.mxu0 %v2267
  %3014 = vmatprep.subr.mxu0 %v2272
  %3015 = vmatpush1.msra.mxu0 %v2271
  %3016 = vmatprep.subr.mxu0 %v2276
  %3017 = vmatpush1.msra.mxu0 %v2275
  %3018 = vmatprep.subr.mxu0 0.0
  %3019 = vmatpush1.msra.mxu0 0.0
  %3020 = vmatprep.subr.mxu0 0.0
  %3021 = vmatpush1.msra.mxu0 0.0
  %3022 = vmatprep.subr.mxu0 0.0
  %3023 = vmatpush1.msra.mxu0 0.0
  %3024 = vmatprep.subr.mxu0 0.0
  %3025 = vmatpush1.msra.mxu0 0.0
  %3026 = vmatprep.subr.mxu0 0.0
  %3027 = vmatpush1.msra.mxu0 0.0
  %3028 = vmatprep.subr.mxu0 0.0
  %3029 = vmatpush1.msra.mxu0 0.0
  %3030 = vmatprep.subr.mxu0 0.0
  %3031 = vmatpush1.msra.mxu0 0.0
  %3032 = vmatprep.subr.mxu0 0.0
  %3033 = vmatpush1.msra.mxu0 0.0
  %3034 = vmatprep.subr.mxu0 0.0
  %3035 = vmatpush1.msra.mxu0 0.0
  %3036 = vmatprep.subr.mxu0 0.0
  %3037 = vmatpush1.msra.mxu0 0.0
  %3038 = vmatprep.subr.mxu0 0.0
  %3039 = vmatpush1.msra.mxu0 0.0
  %3040 = vmatprep.subr.mxu0 0.0
  %3041 = vmatpush1.msra.mxu0 0.0
  %3042 = vmatprep.subr.mxu0 0.0
  %3043 = vmatpush1.msra.mxu0 0.0
  %3044 = vmatprep.subr.mxu0 0.0
  %3045 = vmatpush1.msra.mxu0 0.0
  %3046 = vmatprep.subr.mxu0 0.0
  %3047 = vmatpush1.msra.mxu0 0.0
  %3048 = vmatprep.subr.mxu0 0.0
  %3049 = vmatpush1.msra.mxu0 0.0
  %3050 = vmatprep.mubr.f32.mxu0 0.0
  %3051 = vmatmul.mubr.f32.gmra.mrb[0].mxu0 %v2979
  %v3052 = vpop.f32.mrb[0].mxu0
  %v3053 = vadd.f32 0.0, %v3052
  %v3054 = vpop.f32.mrb[0].mxu0
  %v3055 = vadd.f32 0.0, %v3054
  %3056 = vdwg.mxu0
  %3057 = vmatprep.subr.mxu0 %v2218
  %3058 = vmatpush1.msra.mxu0 %v2217
  %3059 = vmatprep.subr.mxu0 %v2222
  %3060 = vmatpush1.msra.mxu0 %v2221
  %3061 = vmatprep.subr.mxu0 %v2226
  %3062 = vmatpush1.msra.mxu0 %v2225
  %3063 = vmatprep.subr.mxu0 %v2230
  %3064 = vmatpush1.msra.mxu0 %v2229
  %3065 = vmatprep.subr.mxu0 %v2234
  %3066 = vmatpush1.msra.mxu0 %v2233
  %3067 = vmatprep.subr.mxu0 %v2238
  %3068 = vmatpush1.msra.mxu0 %v2237
  %3069 = vmatprep.subr.mxu0 %v2242
  %3070 = vmatpush1.msra.mxu0 %v2241
  %3071 = vmatprep.subr.mxu0 %v2246
  %3072 = vmatpush1.msra.mxu0 %v2245
  %3073 = vmatprep.subr.mxu0 %v2250
  %3074 = vmatpush1.msra.mxu0 %v2249
  %3075 = vmatprep.subr.mxu0 %v2254
  %3076 = vmatpush1.msra.mxu0 %v2253
  %3077 = vmatprep.subr.mxu0 %v2258
  %3078 = vmatpush1.msra.mxu0 %v2257
  %3079 = vmatprep.subr.mxu0 %v2262
  %3080 = vmatpush1.msra.mxu0 %v2261
  %3081 = vmatprep.subr.mxu0 %v2266
  %3082 = vmatpush1.msra.mxu0 %v2265
  %3083 = vmatprep.subr.mxu0 %v2270
  %3084 = vmatpush1.msra.mxu0 %v2269
  %3085 = vmatprep.subr.mxu0 %v2274
  %3086 = vmatpush1.msra.mxu0 %v2273
  %3087 = vmatprep.subr.mxu0 %v2278
  %3088 = vmatpush1.msra.mxu0 %v2277
  %3089 = vmatprep.subr.mxu0 0.0
  %3090 = vmatpush1.msra.mxu0 0.0
  %3091 = vmatprep.subr.mxu0 0.0
  %3092 = vmatpush1.msra.mxu0 0.0
  %3093 = vmatprep.subr.mxu0 0.0
  %3094 = vmatpush1.msra.mxu0 0.0
  %3095 = vmatprep.subr.mxu0 0.0
  %3096 = vmatpush1.msra.mxu0 0.0
  %3097 = vmatprep.subr.mxu0 0.0
  %3098 = vmatpush1.msra.mxu0 0.0
  %3099 = vmatprep.subr.mxu0 0.0
  %3100 = vmatpush1.msra.mxu0 0.0
  %3101 = vmatprep.subr.mxu0 0.0
  %3102 = vmatpush1.msra.mxu0 0.0
  %3103 = vmatprep.subr.mxu0 0.0
  %3104 = vmatpush1.msra.mxu0 0.0
  %3105 = vmatprep.subr.mxu0 0.0
  %3106 = vmatpush1.msra.mxu0 0.0
  %3107 = vmatprep.subr.mxu0 0.0
  %3108 = vmatpush1.msra.mxu0 0.0
  %3109 = vmatprep.subr.mxu0 0.0
  %3110 = vmatpush1.msra.mxu0 0.0
  %3111 = vmatprep.subr.mxu0 0.0
  %3112 = vmatpush1.msra.mxu0 0.0
  %3113 = vmatprep.subr.mxu0 0.0
  %3114 = vmatpush1.msra.mxu0 0.0
  %3115 = vmatprep.subr.mxu0 0.0
  %3116 = vmatpush1.msra.mxu0 0.0
  %3117 = vmatprep.subr.mxu0 0.0
  %3118 = vmatpush1.msra.mxu0 0.0
  %3119 = vmatprep.subr.mxu0 0.0
  %3120 = vmatpush1.msra.mxu0 0.0
  %3121 = vmatprep.mubr.f32.mxu0 0.0
  %3122 = vmatmul.mubr.f32.gmra.mrb[0].mxu0 %v2979
  %v3123 = vpop.f32.mrb[0].mxu0
  %v3124 = vadd.f32 0.0, %v3123
  %v3125 = vpop.f32.mrb[0].mxu0
  %v3126 = vadd.f32 0.0, %v3125
  %3127 = vdwg.mxu0
  %v3128 = vadd.f32 %v2982, %v3053
  %v3129 = vadd.f32 %v2983, %v3055
  %v3130 = vadd.f32 %v2984, %v3124
  %v3131 = vadd.f32 %v2985, %v3126
  %v3132 = vxor.u32 %v3128, 2147483648
  %v3133 = vxor.u32 %v3129, 2147483648
  %v3134 = vxor.u32 %v3130, 2147483648
  %v3135 = vmul.f32 %v3132, 1.442695
  %v3136 = vpow.pop %v3135
  %v3137 = vmul.f32 %v3133, 1.442695
  %v3138 = vpow.pop %v3137
  %v3139 = vmul.f32 %v3134, 1.442695
  %v3140 = vpow.pop %v3139
  %v3141 = vadd.f32 %v3136, 1.0
  %v3142 = vadd.f32 %v3138, 1.0
  %v3143 = vadd.f32 %v3140, 1.0
  %v3144 = vrcp.pop %v3141
  %v3145 = vmul.f32 1.0, %v3144
  %v3146 = vrcp.pop %v3142
  %v3147 = vmul.f32 1.0, %v3146
  %v3148 = vrcp.pop %v3143
  %v3149 = vmul.f32 1.0, %v3148
  %v3150 = vtanh.pop %v3131
  %v3151 = vmul.f32 %v3147, %v2977
  %v3152 = vmul.f32 %v3145, %v3150
  %v3153 = vadd.f32 %v3151, %v3152
  %v3154 = vtanh.pop %v3153
  %v3155 = vmul.f32 %v3149, %v3154
  %s3156 = scalar_lea.vmem [#allocation4], 32
  %3157 = vst [vmem:[%s3156] sm:$0xff] %v3155
  %v3158 = vld [vmem:[%s1328] sm:$0xff]
  %v3159 = vld [vmem:[%s1328 + $0x8] sm:$0xff]
  %v3160 = vld [vmem:[%s1328 + $0x10] sm:$0xff]
  %v3161 = vld [vmem:[%s1328 + $0x18] sm:$0xff]
  %3162 = vmatprep.subr.mxu0 %v2216
  %3163 = vmatpush1.msra.mxu0 %v2215
  %3164 = vmatprep.subr.mxu0 %v2220
  %3165 = vmatpush1.msra.mxu0 %v2219
  %3166 = vmatprep.subr.mxu0 %v2224
  %3167 = vmatpush1.msra.mxu0 %v2223
  %3168 = vmatprep.subr.mxu0 %v2228
  %3169 = vmatpush1.msra.mxu0 %v2227
  %3170 = vmatprep.subr.mxu0 %v2232
  %3171 = vmatpush1.msra.mxu0 %v2231
  %3172 = vmatprep.subr.mxu0 %v2236
  %3173 = vmatpush1.msra.mxu0 %v2235
  %3174 = vmatprep.subr.mxu0 %v2240
  %3175 = vmatpush1.msra.mxu0 %v2239
  %3176 = vmatprep.subr.mxu0 %v2244
  %3177 = vmatpush1.msra.mxu0 %v2243
  %3178 = vmatprep.subr.mxu0 %v2248
  %3179 = vmatpush1.msra.mxu0 %v2247
  %3180 = vmatprep.subr.mxu0 %v2252
  %3181 = vmatpush1.msra.mxu0 %v2251
  %3182 = vmatprep.subr.mxu0 %v2256
  %3183 = vmatpush1.msra.mxu0 %v2255
  %3184 = vmatprep.subr.mxu0 %v2260
  %3185 = vmatpush1.msra.mxu0 %v2259
  %3186 = vmatprep.subr.mxu0 %v2264
  %3187 = vmatpush1.msra.mxu0 %v2263
  %3188 = vmatprep.subr.mxu0 %v2268
  %3189 = vmatpush1.msra.mxu0 %v2267
  %3190 = vmatprep.subr.mxu0 %v2272
  %3191 = vmatpush1.msra.mxu0 %v2271
  %3192 = vmatprep.subr.mxu0 %v2276
  %3193 = vmatpush1.msra.mxu0 %v2275
  %3194 = vmatprep.subr.mxu0 0.0
  %3195 = vmatpush1.msra.mxu0 0.0
  %3196 = vmatprep.subr.mxu0 0.0
  %3197 = vmatpush1.msra.mxu0 0.0
  %3198 = vmatprep.subr.mxu0 0.0
  %3199 = vmatpush1.msra.mxu0 0.0
  %3200 = vmatprep.subr.mxu0 0.0
  %3201 = vmatpush1.msra.mxu0 0.0
  %3202 = vmatprep.subr.mxu0 0.0
  %3203 = vmatpush1.msra.mxu0 0.0
  %3204 = vmatprep.subr.mxu0 0.0
  %3205 = vmatpush1.msra.mxu0 0.0
  %3206 = vmatprep.subr.mxu0 0.0
  %3207 = vmatpush1.msra.mxu0 0.0
  %3208 = vmatprep.subr.mxu0 0.0
  %3209 = vmatpush1.msra.mxu0 0.0
  %3210 = vmatprep.subr.mxu0 0.0
  %3211 = vmatpush1.msra.mxu0 0.0
  %3212 = vmatprep.subr.mxu0 0.0
  %3213 = vmatpush1.msra.mxu0 0.0
  %3214 = vmatprep.subr.mxu0 0.0
  %3215 = vmatpush1.msra.mxu0 0.0
  %3216 = vmatprep.subr.mxu0 0.0
  %3217 = vmatpush1.msra.mxu0 0.0
  %3218 = vmatprep.subr.mxu0 0.0
  %3219 = vmatpush1.msra.mxu0 0.0
  %3220 = vmatprep.subr.mxu0 0.0
  %3221 = vmatpush1.msra.mxu0 0.0
  %3222 = vmatprep.subr.mxu0 0.0
  %3223 = vmatpush1.msra.mxu0 0.0
  %3224 = vmatprep.subr.mxu0 0.0
  %3225 = vmatpush1.msra.mxu0 0.0
  %3226 = vmatprep.mubr.f32.mxu0 0.0
  %3227 = vmatmul.mubr.f32.gmra.mrb[0].mxu0 %v3155
  %v3228 = vpop.f32.mrb[0].mxu0
  %v3229 = vadd.f32 0.0, %v3228
  %v3230 = vpop.f32.mrb[0].mxu0
  %v3231 = vadd.f32 0.0, %v3230
  %3232 = vdwg.mxu0
  %3233 = vmatprep.subr.mxu0 %v2218
  %3234 = vmatpush1.msra.mxu0 %v2217
  %3235 = vmatprep.subr.mxu0 %v2222
  %3236 = vmatpush1.msra.mxu0 %v2221
  %3237 = vmatprep.subr.mxu0 %v2226
  %3238 = vmatpush1.msra.mxu0 %v2225
  %3239 = vmatprep.subr.mxu0 %v2230
  %3240 = vmatpush1.msra.mxu0 %v2229
  %3241 = vmatprep.subr.mxu0 %v2234
  %3242 = vmatpush1.msra.mxu0 %v2233
  %3243 = vmatprep.subr.mxu0 %v2238
  %3244 = vmatpush1.msra.mxu0 %v2237
  %3245 = vmatprep.subr.mxu0 %v2242
  %3246 = vmatpush1.msra.mxu0 %v2241
  %3247 = vmatprep.subr.mxu0 %v2246
  %3248 = vmatpush1.msra.mxu0 %v2245
  %3249 = vmatprep.subr.mxu0 %v2250
  %3250 = vmatpush1.msra.mxu0 %v2249
  %3251 = vmatprep.subr.mxu0 %v2254
  %3252 = vmatpush1.msra.mxu0 %v2253
  %3253 = vmatprep.subr.mxu0 %v2258
  %3254 = vmatpush1.msra.mxu0 %v2257
  %3255 = vmatprep.subr.mxu0 %v2262
  %3256 = vmatpush1.msra.mxu0 %v2261
  %3257 = vmatprep.subr.mxu0 %v2266
  %3258 = vmatpush1.msra.mxu0 %v2265
  %3259 = vmatprep.subr.mxu0 %v2270
  %3260 = vmatpush1.msra.mxu0 %v2269
  %3261 = vmatprep.subr.mxu0 %v2274
  %3262 = vmatpush1.msra.mxu0 %v2273
  %3263 = vmatprep.subr.mxu0 %v2278
  %3264 = vmatpush1.msra.mxu0 %v2277
  %3265 = vmatprep.subr.mxu0 0.0
  %3266 = vmatpush1.msra.mxu0 0.0
  %3267 = vmatprep.subr.mxu0 0.0
  %3268 = vmatpush1.msra.mxu0 0.0
  %3269 = vmatprep.subr.mxu0 0.0
  %3270 = vmatpush1.msra.mxu0 0.0
  %3271 = vmatprep.subr.mxu0 0.0
  %3272 = vmatpush1.msra.mxu0 0.0
  %3273 = vmatprep.subr.mxu0 0.0
  %3274 = vmatpush1.msra.mxu0 0.0
  %3275 = vmatprep.subr.mxu0 0.0
  %3276 = vmatpush1.msra.mxu0 0.0
  %3277 = vmatprep.subr.mxu0 0.0
  %3278 = vmatpush1.msra.mxu0 0.0
  %3279 = vmatprep.subr.mxu0 0.0
  %3280 = vmatpush1.msra.mxu0 0.0
  %3281 = vmatprep.subr.mxu0 0.0
  %3282 = vmatpush1.msra.mxu0 0.0
  %3283 = vmatprep.subr.mxu0 0.0
  %3284 = vmatpush1.msra.mxu0 0.0
  %3285 = vmatprep.subr.mxu0 0.0
  %3286 = vmatpush1.msra.mxu0 0.0
  %3287 = vmatprep.subr.mxu0 0.0
  %3288 = vmatpush1.msra.mxu0 0.0
  %3289 = vmatprep.subr.mxu0 0.0
  %3290 = vmatpush1.msra.mxu0 0.0
  %3291 = vmatprep.subr.mxu0 0.0
  %3292 = vmatpush1.msra.mxu0 0.0
  %3293 = vmatprep.subr.mxu0 0.0
  %3294 = vmatpush1.msra.mxu0 0.0
  %3295 = vmatprep.subr.mxu0 0.0
  %3296 = vmatpush1.msra.mxu0 0.0
  %3297 = vmatprep.mubr.f32.mxu0 0.0
  %3298 = vmatmul.mubr.f32.gmra.mrb[0].mxu0 %v3155
  %v3299 = vpop.f32.mrb[0].mxu0
  %v3300 = vadd.f32 0.0, %v3299
  %v3301 = vpop.f32.mrb[0].mxu0
  %v3302 = vadd.f32 0.0, %v3301
  %3303 = vdwg.mxu0
  %v3304 = vadd.f32 %v3158, %v3229
  %v3305 = vadd.f32 %v3159, %v3231
  %v3306 = vadd.f32 %v3160, %v3300
  %v3307 = vadd.f32 %v3161, %v3302
  %v3308 = vxor.u32 %v3304, 2147483648
  %v3309 = vxor.u32 %v3305, 2147483648
  %v3310 = vxor.u32 %v3306, 2147483648
  %v3311 = vmul.f32 %v3308, 1.442695
  %v3312 = vpow.pop %v3311
  %v3313 = vmul.f32 %v3309, 1.442695
  %v3314 = vpow.pop %v3313
  %v3315 = vmul.f32 %v3310, 1.442695
  %v3316 = vpow.pop %v3315
  %v3317 = vadd.f32 %v3312, 1.0
  %v3318 = vadd.f32 %v3314, 1.0
  %v3319 = vadd.f32 %v3316, 1.0
  %v3320 = vrcp.pop %v3317
  %v3321 = vmul.f32 1.0, %v3320
  %v3322 = vrcp.pop %v3318
  %v3323 = vmul.f32 1.0, %v3322
  %v3324 = vrcp.pop %v3319
  %v3325 = vmul.f32 1.0, %v3324
  %v3326 = vtanh.pop %v3307
  %v3327 = vmul.f32 %v3323, %v3153
  %v3328 = vmul.f32 %v3321, %v3326
  %v3329 = vadd.f32 %v3327, %v3328
  %v3330 = vtanh.pop %v3329
  %v3331 = vmul.f32 %v3325, %v3330
  %s3332 = scalar_lea.vmem [#allocation4], 40
  %3333 = vst [vmem:[%s3332] sm:$0xff] %v3331
  %v3334 = vld [vmem:[%s1507] sm:$0xff]
  %v3335 = vld [vmem:[%s1507 + $0x8] sm:$0xff]
  %v3336 = vld [vmem:[%s1507 + $0x10] sm:$0xff]
  %v3337 = vld [vmem:[%s1507 + $0x18] sm:$0xff]
  %3338 = vmatprep.subr.mxu0 %v2216
  %3339 = vmatpush1.msra.mxu0 %v2215
  %3340 = vmatprep.subr.mxu0 %v2220
  %3341 = vmatpush1.msra.mxu0 %v2219
  %3342 = vmatprep.subr.mxu0 %v2224
  %3343 = vmatpush1.msra.mxu0 %v2223
  %3344 = vmatprep.subr.mxu0 %v2228
  %3345 = vmatpush1.msra.mxu0 %v2227
  %3346 = vmatprep.subr.mxu0 %v2232
  %3347 = vmatpush1.msra.mxu0 %v2231
  %3348 = vmatprep.subr.mxu0 %v2236
  %3349 = vmatpush1.msra.mxu0 %v2235
  %3350 = vmatprep.subr.mxu0 %v2240
  %3351 = vmatpush1.msra.mxu0 %v2239
  %3352 = vmatprep.subr.mxu0 %v2244
  %3353 = vmatpush1.msra.mxu0 %v2243
  %3354 = vmatprep.subr.mxu0 %v2248
  %3355 = vmatpush1.msra.mxu0 %v2247
  %3356 = vmatprep.subr.mxu0 %v2252
  %3357 = vmatpush1.msra.mxu0 %v2251
  %3358 = vmatprep.subr.mxu0 %v2256
  %3359 = vmatpush1.msra.mxu0 %v2255
  %3360 = vmatprep.subr.mxu0 %v2260
  %3361 = vmatpush1.msra.mxu0 %v2259
  %3362 = vmatprep.subr.mxu0 %v2264
  %3363 = vmatpush1.msra.mxu0 %v2263
  %3364 = vmatprep.subr.mxu0 %v2268
  %3365 = vmatpush1.msra.mxu0 %v2267
  %3366 = vmatprep.subr.mxu0 %v2272
  %3367 = vmatpush1.msra.mxu0 %v2271
  %3368 = vmatprep.subr.mxu0 %v2276
  %3369 = vmatpush1.msra.mxu0 %v2275
  %3370 = vmatprep.subr.mxu0 0.0
  %3371 = vmatpush1.msra.mxu0 0.0
  %3372 = vmatprep.subr.mxu0 0.0
  %3373 = vmatpush1.msra.mxu0 0.0
  %3374 = vmatprep.subr.mxu0 0.0
  %3375 = vmatpush1.msra.mxu0 0.0
  %3376 = vmatprep.subr.mxu0 0.0
  %3377 = vmatpush1.msra.mxu0 0.0
  %3378 = vmatprep.subr.mxu0 0.0
  %3379 = vmatpush1.msra.mxu0 0.0
  %3380 = vmatprep.subr.mxu0 0.0
  %3381 = vmatpush1.msra.mxu0 0.0
  %3382 = vmatprep.subr.mxu0 0.0
  %3383 = vmatpush1.msra.mxu0 0.0
  %3384 = vmatprep.subr.mxu0 0.0
  %3385 = vmatpush1.msra.mxu0 0.0
  %3386 = vmatprep.subr.mxu0 0.0
  %3387 = vmatpush1.msra.mxu0 0.0
  %3388 = vmatprep.subr.mxu0 0.0
  %3389 = vmatpush1.msra.mxu0 0.0
  %3390 = vmatprep.subr.mxu0 0.0
  %3391 = vmatpush1.msra.mxu0 0.0
  %3392 = vmatprep.subr.mxu0 0.0
  %3393 = vmatpush1.msra.mxu0 0.0
  %3394 = vmatprep.subr.mxu0 0.0
  %3395 = vmatpush1.msra.mxu0 0.0
  %3396 = vmatprep.subr.mxu0 0.0
  %3397 = vmatpush1.msra.mxu0 0.0
  %3398 = vmatprep.subr.mxu0 0.0
  %3399 = vmatpush1.msra.mxu0 0.0
  %3400 = vmatprep.subr.mxu0 0.0
  %3401 = vmatpush1.msra.mxu0 0.0
  %3402 = vmatprep.mubr.f32.mxu0 0.0
  %3403 = vmatmul.mubr.f32.gmra.mrb[0].mxu0 %v3331
  %v3404 = vpop.f32.mrb[0].mxu0
  %v3405 = vadd.f32 0.0, %v3404
  %v3406 = vpop.f32.mrb[0].mxu0
  %v3407 = vadd.f32 0.0, %v3406
  %3408 = vdwg.mxu0
  %3409 = vmatprep.subr.mxu0 %v2218
  %3410 = vmatpush1.msra.mxu0 %v2217
  %3411 = vmatprep.subr.mxu0 %v2222
  %3412 = vmatpush1.msra.mxu0 %v2221
  %3413 = vmatprep.subr.mxu0 %v2226
  %3414 = vmatpush1.msra.mxu0 %v2225
  %3415 = vmatprep.subr.mxu0 %v2230
  %3416 = vmatpush1.msra.mxu0 %v2229
  %3417 = vmatprep.subr.mxu0 %v2234
  %3418 = vmatpush1.msra.mxu0 %v2233
  %3419 = vmatprep.subr.mxu0 %v2238
  %3420 = vmatpush1.msra.mxu0 %v2237
  %3421 = vmatprep.subr.mxu0 %v2242
  %3422 = vmatpush1.msra.mxu0 %v2241
  %3423 = vmatprep.subr.mxu0 %v2246
  %3424 = vmatpush1.msra.mxu0 %v2245
  %3425 = vmatprep.subr.mxu0 %v2250
  %3426 = vmatpush1.msra.mxu0 %v2249
  %3427 = vmatprep.subr.mxu0 %v2254
  %3428 = vmatpush1.msra.mxu0 %v2253
  %3429 = vmatprep.subr.mxu0 %v2258
  %3430 = vmatpush1.msra.mxu0 %v2257
  %3431 = vmatprep.subr.mxu0 %v2262
  %3432 = vmatpush1.msra.mxu0 %v2261
  %3433 = vmatprep.subr.mxu0 %v2266
  %3434 = vmatpush1.msra.mxu0 %v2265
  %3435 = vmatprep.subr.mxu0 %v2270
  %3436 = vmatpush1.msra.mxu0 %v2269
  %3437 = vmatprep.subr.mxu0 %v2274
  %3438 = vmatpush1.msra.mxu0 %v2273
  %3439 = vmatprep.subr.mxu0 %v2278
  %3440 = vmatpush1.msra.mxu0 %v2277
  %3441 = vmatprep.subr.mxu0 0.0
  %3442 = vmatpush1.msra.mxu0 0.0
  %3443 = vmatprep.subr.mxu0 0.0
  %3444 = vmatpush1.msra.mxu0 0.0
  %3445 = vmatprep.subr.mxu0 0.0
  %3446 = vmatpush1.msra.mxu0 0.0
  %3447 = vmatprep.subr.mxu0 0.0
  %3448 = vmatpush1.msra.mxu0 0.0
  %3449 = vmatprep.subr.mxu0 0.0
  %3450 = vmatpush1.msra.mxu0 0.0
  %3451 = vmatprep.subr.mxu0 0.0
  %3452 = vmatpush1.msra.mxu0 0.0
  %3453 = vmatprep.subr.mxu0 0.0
  %3454 = vmatpush1.msra.mxu0 0.0
  %3455 = vmatprep.subr.mxu0 0.0
  %3456 = vmatpush1.msra.mxu0 0.0
  %3457 = vmatprep.subr.mxu0 0.0
  %3458 = vmatpush1.msra.mxu0 0.0
  %3459 = vmatprep.subr.mxu0 0.0
  %3460 = vmatpush1.msra.mxu0 0.0
  %3461 = vmatprep.subr.mxu0 0.0
  %3462 = vmatpush1.msra.mxu0 0.0
  %3463 = vmatprep.subr.mxu0 0.0
  %3464 = vmatpush1.msra.mxu0 0.0
  %3465 = vmatprep.subr.mxu0 0.0
  %3466 = vmatpush1.msra.mxu0 0.0
  %3467 = vmatprep.subr.mxu0 0.0
  %3468 = vmatpush1.msra.mxu0 0.0
  %3469 = vmatprep.subr.mxu0 0.0
  %3470 = vmatpush1.msra.mxu0 0.0
  %3471 = vmatprep.subr.mxu0 0.0
  %3472 = vmatpush1.msra.mxu0 0.0
  %3473 = vmatprep.mubr.f32.mxu0 0.0
  %3474 = vmatmul.mubr.f32.gmra.mrb[0].mxu0 %v3331
  %v3475 = vpop.f32.mrb[0].mxu0
  %v3476 = vadd.f32 0.0, %v3475
  %v3477 = vpop.f32.mrb[0].mxu0
  %v3478 = vadd.f32 0.0, %v3477
  %3479 = vdwg.mxu0
  %v3480 = vadd.f32 %v3334, %v3405
  %v3481 = vadd.f32 %v3335, %v3407
  %v3482 = vadd.f32 %v3336, %v3476
  %v3483 = vadd.f32 %v3337, %v3478
  %v3484 = vxor.u32 %v3480, 2147483648
  %v3485 = vxor.u32 %v3481, 2147483648
  %v3486 = vxor.u32 %v3482, 2147483648
  %v3487 = vmul.f32 %v3484, 1.442695
  %v3488 = vpow.pop %v3487
  %v3489 = vmul.f32 %v3485, 1.442695
  %v3490 = vpow.pop %v3489
  %v3491 = vmul.f32 %v3486, 1.442695
  %v3492 = vpow.pop %v3491
  %v3493 = vadd.f32 %v3488, 1.0
  %v3494 = vadd.f32 %v3490, 1.0
  %v3495 = vadd.f32 %v3492, 1.0
  %v3496 = vrcp.pop %v3493
  %v3497 = vmul.f32 1.0, %v3496
  %v3498 = vrcp.pop %v3494
  %v3499 = vmul.f32 1.0, %v3498
  %v3500 = vrcp.pop %v3495
  %v3501 = vmul.f32 1.0, %v3500
  %v3502 = vtanh.pop %v3483
  %v3503 = vmul.f32 %v3499, %v3329
  %v3504 = vmul.f32 %v3497, %v3502
  %v3505 = vadd.f32 %v3503, %v3504
  %v3506 = vtanh.pop %v3505
  %v3507 = vmul.f32 %v3501, %v3506
  %s3508 = scalar_lea.vmem [#allocation4], 48
  %3509 = vst [vmem:[%s3508] sm:$0xff] %v3507
  %v3510 = vld [vmem:[%s1686] sm:$0xff]
  %v3511 = vld [vmem:[%s1686 + $0x8] sm:$0xff]
  %v3512 = vld [vmem:[%s1686 + $0x10] sm:$0xff]
  %v3513 = vld [vmem:[%s1686 + $0x18] sm:$0xff]
  %3514 = vmatprep.subr.mxu0 %v2216
  %3515 = vmatpush1.msra.mxu0 %v2215
  %3516 = vmatprep.subr.mxu0 %v2220
  %3517 = vmatpush1.msra.mxu0 %v2219
  %3518 = vmatprep.subr.mxu0 %v2224
  %3519 = vmatpush1.msra.mxu0 %v2223
  %3520 = vmatprep.subr.mxu0 %v2228
  %3521 = vmatpush1.msra.mxu0 %v2227
  %3522 = vmatprep.subr.mxu0 %v2232
  %3523 = vmatpush1.msra.mxu0 %v2231
  %3524 = vmatprep.subr.mxu0 %v2236
  %3525 = vmatpush1.msra.mxu0 %v2235
  %3526 = vmatprep.subr.mxu0 %v2240
  %3527 = vmatpush1.msra.mxu0 %v2239
  %3528 = vmatprep.subr.mxu0 %v2244
  %3529 = vmatpush1.msra.mxu0 %v2243
  %3530 = vmatprep.subr.mxu0 %v2248
  %3531 = vmatpush1.msra.mxu0 %v2247
  %3532 = vmatprep.subr.mxu0 %v2252
  %3533 = vmatpush1.msra.mxu0 %v2251
  %3534 = vmatprep.subr.mxu0 %v2256
  %3535 = vmatpush1.msra.mxu0 %v2255
  %3536 = vmatprep.subr.mxu0 %v2260
  %3537 = vmatpush1.msra.mxu0 %v2259
  %3538 = vmatprep.subr.mxu0 %v2264
  %3539 = vmatpush1.msra.mxu0 %v2263
  %3540 = vmatprep.subr.mxu0 %v2268
  %3541 = vmatpush1.msra.mxu0 %v2267
  %3542 = vmatprep.subr.mxu0 %v2272
  %3543 = vmatpush1.msra.mxu0 %v2271
  %3544 = vmatprep.subr.mxu0 %v2276
  %3545 = vmatpush1.msra.mxu0 %v2275
  %3546 = vmatprep.subr.mxu0 0.0
  %3547 = vmatpush1.msra.mxu0 0.0
  %3548 = vmatprep.subr.mxu0 0.0
  %3549 = vmatpush1.msra.mxu0 0.0
  %3550 = vmatprep.subr.mxu0 0.0
  %3551 = vmatpush1.msra.mxu0 0.0
  %3552 = vmatprep.subr.mxu0 0.0
  %3553 = vmatpush1.msra.mxu0 0.0
  %3554 = vmatprep.subr.mxu0 0.0
  %3555 = vmatpush1.msra.mxu0 0.0
  %3556 = vmatprep.subr.mxu0 0.0
  %3557 = vmatpush1.msra.mxu0 0.0
  %3558 = vmatprep.subr.mxu0 0.0
  %3559 = vmatpush1.msra.mxu0 0.0
  %3560 = vmatprep.subr.mxu0 0.0
  %3561 = vmatpush1.msra.mxu0 0.0
  %3562 = vmatprep.subr.mxu0 0.0
  %3563 = vmatpush1.msra.mxu0 0.0
  %3564 = vmatprep.subr.mxu0 0.0
  %3565 = vmatpush1.msra.mxu0 0.0
  %3566 = vmatprep.subr.mxu0 0.0
  %3567 = vmatpush1.msra.mxu0 0.0
  %3568 = vmatprep.subr.mxu0 0.0
  %3569 = vmatpush1.msra.mxu0 0.0
  %3570 = vmatprep.subr.mxu0 0.0
  %3571 = vmatpush1.msra.mxu0 0.0
  %3572 = vmatprep.subr.mxu0 0.0
  %3573 = vmatpush1.msra.mxu0 0.0
  %3574 = vmatprep.subr.mxu0 0.0
  %3575 = vmatpush1.msra.mxu0 0.0
  %3576 = vmatprep.subr.mxu0 0.0
  %3577 = vmatpush1.msra.mxu0 0.0
  %3578 = vmatprep.mubr.f32.mxu0 0.0
  %3579 = vmatmul.mubr.f32.gmra.mrb[0].mxu0 %v3507
  %v3580 = vpop.f32.mrb[0].mxu0
  %v3581 = vadd.f32 0.0, %v3580
  %v3582 = vpop.f32.mrb[0].mxu0
  %v3583 = vadd.f32 0.0, %v3582
  %3584 = vdwg.mxu0
  %3585 = vmatprep.subr.mxu0 %v2218
  %3586 = vmatpush1.msra.mxu0 %v2217
  %3587 = vmatprep.subr.mxu0 %v2222
  %3588 = vmatpush1.msra.mxu0 %v2221
  %3589 = vmatprep.subr.mxu0 %v2226
  %3590 = vmatpush1.msra.mxu0 %v2225
  %3591 = vmatprep.subr.mxu0 %v2230
  %3592 = vmatpush1.msra.mxu0 %v2229
  %3593 = vmatprep.subr.mxu0 %v2234
  %3594 = vmatpush1.msra.mxu0 %v2233
  %3595 = vmatprep.subr.mxu0 %v2238
  %3596 = vmatpush1.msra.mxu0 %v2237
  %3597 = vmatprep.subr.mxu0 %v2242
  %3598 = vmatpush1.msra.mxu0 %v2241
  %3599 = vmatprep.subr.mxu0 %v2246
  %3600 = vmatpush1.msra.mxu0 %v2245
  %3601 = vmatprep.subr.mxu0 %v2250
  %3602 = vmatpush1.msra.mxu0 %v2249
  %3603 = vmatprep.subr.mxu0 %v2254
  %3604 = vmatpush1.msra.mxu0 %v2253
  %3605 = vmatprep.subr.mxu0 %v2258
  %3606 = vmatpush1.msra.mxu0 %v2257
  %3607 = vmatprep.subr.mxu0 %v2262
  %3608 = vmatpush1.msra.mxu0 %v2261
  %3609 = vmatprep.subr.mxu0 %v2266
  %3610 = vmatpush1.msra.mxu0 %v2265
  %3611 = vmatprep.subr.mxu0 %v2270
  %3612 = vmatpush1.msra.mxu0 %v2269
  %3613 = vmatprep.subr.mxu0 %v2274
  %3614 = vmatpush1.msra.mxu0 %v2273
  %3615 = vmatprep.subr.mxu0 %v2278
  %3616 = vmatpush1.msra.mxu0 %v2277
  %3617 = vmatprep.subr.mxu0 0.0
  %3618 = vmatpush1.msra.mxu0 0.0
  %3619 = vmatprep.subr.mxu0 0.0
  %3620 = vmatpush1.msra.mxu0 0.0
  %3621 = vmatprep.subr.mxu0 0.0
  %3622 = vmatpush1.msra.mxu0 0.0
  %3623 = vmatprep.subr.mxu0 0.0
  %3624 = vmatpush1.msra.mxu0 0.0
  %3625 = vmatprep.subr.mxu0 0.0
  %3626 = vmatpush1.msra.mxu0 0.0
  %3627 = vmatprep.subr.mxu0 0.0
  %3628 = vmatpush1.msra.mxu0 0.0
  %3629 = vmatprep.subr.mxu0 0.0
  %3630 = vmatpush1.msra.mxu0 0.0
  %3631 = vmatprep.subr.mxu0 0.0
  %3632 = vmatpush1.msra.mxu0 0.0
  %3633 = vmatprep.subr.mxu0 0.0
  %3634 = vmatpush1.msra.mxu0 0.0
  %3635 = vmatprep.subr.mxu0 0.0
  %3636 = vmatpush1.msra.mxu0 0.0
  %3637 = vmatprep.subr.mxu0 0.0
  %3638 = vmatpush1.msra.mxu0 0.0
  %3639 = vmatprep.subr.mxu0 0.0
  %3640 = vmatpush1.msra.mxu0 0.0
  %3641 = vmatprep.subr.mxu0 0.0
  %3642 = vmatpush1.msra.mxu0 0.0
  %3643 = vmatprep.subr.mxu0 0.0
  %3644 = vmatpush1.msra.mxu0 0.0
  %3645 = vmatprep.subr.mxu0 0.0
  %3646 = vmatpush1.msra.mxu0 0.0
  %3647 = vmatprep.subr.mxu0 0.0
  %3648 = vmatpush1.msra.mxu0 0.0
  %3649 = vmatprep.mubr.f32.mxu0 0.0
  %3650 = vmatmul.mubr.f32.gmra.mrb[0].mxu0 %v3507
  %v3651 = vpop.f32.mrb[0].mxu0
  %v3652 = vadd.f32 0.0, %v3651
  %v3653 = vpop.f32.mrb[0].mxu0
  %v3654 = vadd.f32 0.0, %v3653
  %3655 = vdwg.mxu0
  %v3656 = vadd.f32 %v3510, %v3581
  %v3657 = vadd.f32 %v3511, %v3583
  %v3658 = vadd.f32 %v3512, %v3652
  %v3659 = vadd.f32 %v3513, %v3654
  %v3660 = vxor.u32 %v3656, 2147483648
  %v3661 = vxor.u32 %v3657, 2147483648
  %v3662 = vxor.u32 %v3658, 2147483648
  %v3663 = vmul.f32 %v3660, 1.442695
  %v3664 = vpow.pop %v3663
  %v3665 = vmul.f32 %v3661, 1.442695
  %v3666 = vpow.pop %v3665
  %v3667 = vmul.f32 %v3662, 1.442695
  %v3668 = vpow.pop %v3667
  %v3669 = vadd.f32 %v3664, 1.0
  %v3670 = vadd.f32 %v3666, 1.0
  %v3671 = vadd.f32 %v3668, 1.0
  %v3672 = vrcp.pop %v3669
  %v3673 = vmul.f32 1.0, %v3672
  %v3674 = vrcp.pop %v3670
  %v3675 = vmul.f32 1.0, %v3674
  %v3676 = vrcp.pop %v3671
  %v3677 = vmul.f32 1.0, %v3676
  %v3678 = vtanh.pop %v3659
  %v3679 = vmul.f32 %v3675, %v3505
  %v3680 = vmul.f32 %v3673, %v3678
  %v3681 = vadd.f32 %v3679, %v3680
  %v3682 = vtanh.pop %v3681
  %v3683 = vmul.f32 %v3677, %v3682
  %s3684 = scalar_lea.vmem [#allocation4], 56
  %3685 = vst [vmem:[%s3684] sm:$0xff] %v3683
  %v3686 = vld [vmem:[#allocation4] sm:$0xff]
  %v3687 = vld [vmem:[#allocation4 + $0x8] sm:$0xff]
  %v3688 = vld [vmem:[#allocation4 + $0x10] sm:$0xff]
  %v3689 = vld [vmem:[#allocation4 + $0x18] sm:$0xff]
  %v3690 = vld [vmem:[#allocation4 + $0x20] sm:$0xff]
  %v3691 = vld [vmem:[#allocation4 + $0x28] sm:$0xff]
  %v3692 = vld [vmem:[#allocation4 + $0x30] sm:$0xff]
  %v3693 = vld [vmem:[#allocation4 + $0x38] sm:$0xff]
  %v3694 = vld [vmem:[%s7] sm:$0xff]
  %v3695 = vld [vmem:[%s7 + $0x8] sm:$0xff]
  %v3696 = vld [vmem:[%s7 + $0x10] sm:$0xff]
  %v3697 = vld [vmem:[%s7 + $0x18] sm:$0xff]
  %v3698 = vld [vmem:[%s7 + $0x20] sm:$0xff]
  %v3699 = vld [vmem:[%s7 + $0x28] sm:$0xff]
  %v3700 = vld [vmem:[%s7 + $0x30] sm:$0xff]
  %v3701 = vld [vmem:[%s7 + $0x38] sm:$0xff]
  %v3702 = vld [vmem:[%s7 + $0x40] sm:$0xff]
  %v3703 = vld [vmem:[%s7 + $0x48] sm:$0xff]
  %v3704 = vld [vmem:[%s7 + $0x50] sm:$0xff]
  %v3705 = vld [vmem:[%s7 + $0x58] sm:$0xff]
  %v3706 = vld [vmem:[%s7 + $0x60] sm:$0xff]
  %v3707 = vld [vmem:[%s7 + $0x68] sm:$0xff]
  %v3708 = vld [vmem:[%s7 + $0x70] sm:$0xff]
  %v3709 = vld [vmem:[%s7 + $0x78] sm:$0xff]
  %v3710 = vld [vmem:[%s7 + $0x80] sm:$0xff]
  %v3711 = vld [vmem:[%s7 + $0x88] sm:$0xff]
  %v3712 = vld [vmem:[%s7 + $0x90] sm:$0xff]
  %v3713 = vld [vmem:[%s7 + $0x98] sm:$0xff]
  %v3714 = vld [vmem:[%s7 + $0xa0] sm:$0xff]
  %v3715 = vld [vmem:[%s7 + $0xa8] sm:$0xff]
  %v3716 = vld [vmem:[%s7 + $0xb0] sm:$0xff]
  %v3717 = vld [vmem:[%s7 + $0xb8] sm:$0xff]
  %v3718 = vld [vmem:[%s7 + $0xc0] sm:$0xff]
  %v3719 = vld [vmem:[%s7 + $0xc8] sm:$0xff]
  %v3720 = vld [vmem:[%s7 + $0xd0] sm:$0xff]
  %v3721 = vld [vmem:[%s7 + $0xd8] sm:$0xff]
  %v3722 = vld [vmem:[%s7 + $0xe0] sm:$0xff]
  %v3723 = vld [vmem:[%s7 + $0xe8] sm:$0xff]
  %v3724 = vld [vmem:[%s7 + $0xf0] sm:$0xff]
  %v3725 = vld [vmem:[%s7 + $0xf8] sm:$0xff]
  %v3726 = vld [vmem:[%s7 + $0x100] sm:$0xff]
  %v3727 = vld [vmem:[%s7 + $0x108] sm:$0xff]
  %v3728 = vld [vmem:[%s7 + $0x110] sm:$0xff]
  %v3729 = vld [vmem:[%s7 + $0x118] sm:$0xff]
  %v3730 = vld [vmem:[%s7 + $0x120] sm:$0xff]
  %v3731 = vld [vmem:[%s7 + $0x128] sm:$0xff]
  %v3732 = vld [vmem:[%s7 + $0x130] sm:$0xff]
  %v3733 = vld [vmem:[%s7 + $0x138] sm:$0xff]
  %v3734 = vld [vmem:[%s7 + $0x140] sm:$0xff]
  %v3735 = vld [vmem:[%s7 + $0x148] sm:$0xff]
  %v3736 = vld [vmem:[%s7 + $0x150] sm:$0xff]
  %v3737 = vld [vmem:[%s7 + $0x158] sm:$0xff]
  %v3738 = vld [vmem:[%s7 + $0x160] sm:$0xff]
  %v3739 = vld [vmem:[%s7 + $0x168] sm:$0xff]
  %v3740 = vld [vmem:[%s7 + $0x170] sm:$0xff]
  %v3741 = vld [vmem:[%s7 + $0x178] sm:$0xff]
  %v3742 = vld [vmem:[%s7 + $0x180] sm:$0xff]
  %v3743 = vld [vmem:[%s7 + $0x188] sm:$0xff]
  %v3744 = vld [vmem:[%s7 + $0x190] sm:$0xff]
  %v3745 = vld [vmem:[%s7 + $0x198] sm:$0xff]
  %v3746 = vld [vmem:[%s7 + $0x1a0] sm:$0xff]
  %v3747 = vld [vmem:[%s7 + $0x1a8] sm:$0xff]
  %v3748 = vld [vmem:[%s7 + $0x1b0] sm:$0xff]
  %v3749 = vld [vmem:[%s7 + $0x1b8] sm:$0xff]
  %v3750 = vld [vmem:[%s7 + $0x1c0] sm:$0xff]
  %v3751 = vld [vmem:[%s7 + $0x1c8] sm:$0xff]
  %v3752 = vld [vmem:[%s7 + $0x1d0] sm:$0xff]
  %v3753 = vld [vmem:[%s7 + $0x1d8] sm:$0xff]
  %v3754 = vld [vmem:[%s7 + $0x1e0] sm:$0xff]
  %v3755 = vld [vmem:[%s7 + $0x1e8] sm:$0xff]
  %v3756 = vld [vmem:[%s7 + $0x1f0] sm:$0xff]
  %v3757 = vld [vmem:[%s7 + $0x1f8] sm:$0xff]
  %v3758 = vld [vmem:[%s9] sm:$0xf]
  %v3760 = vlaneseq
  %v3761 = vshrl.u32 %v3760, 7
  %v3762 = vsub.s32 0, %v3761
  %v3763 = vrot.slane %v3758, %v3762
  %v3764 = vlaneseq
  %v3765 = vshrl.u32 %v3764, 7
  %v3766 = vsub.s32 1, %v3765
  %v3767 = vrot.slane %v3758, %v3766
  %v3768 = vlaneseq
  %v3769 = vshrl.u32 %v3768, 7
  %v3770 = vsub.s32 2, %v3769
  %v3771 = vrot.slane %v3758, %v3770
  %v3772 = vlaneseq
  %v3773 = vshrl.u32 %v3772, 7
  %v3774 = vsub.s32 3, %v3773
  %v3775 = vrot.slane %v3758, %v3774
  %3780 = vmatprep.subr.mxu0 %v3695
  %3781 = vmatpush1.msra.mxu0 %v3694
  %3782 = vmatprep.subr.mxu0 %v3699
  %3783 = vmatpush1.msra.mxu0 %v3698
  %3784 = vmatprep.subr.mxu0 %v3703
  %3785 = vmatpush1.msra.mxu0 %v3702
  %3786 = vmatprep.subr.mxu0 %v3707
  %3787 = vmatpush1.msra.mxu0 %v3706
  %3788 = vmatprep.subr.mxu0 %v3711
  %3789 = vmatpush1.msra.mxu0 %v3710
  %3790 = vmatprep.subr.mxu0 %v3715
  %3791 = vmatpush1.msra.mxu0 %v3714
  %3792 = vmatprep.subr.mxu0 %v3719
  %3793 = vmatpush1.msra.mxu0 %v3718
  %3794 = vmatprep.subr.mxu0 %v3723
  %3795 = vmatpush1.msra.mxu0 %v3722
  %3796 = vmatprep.subr.mxu0 %v3727
  %3797 = vmatpush1.msra.mxu0 %v3726
  %3798 = vmatprep.subr.mxu0 %v3731
  %3799 = vmatpush1.msra.mxu0 %v3730
  %3800 = vmatprep.subr.mxu0 %v3735
  %3801 = vmatpush1.msra.mxu0 %v3734
  %3802 = vmatprep.subr.mxu0 %v3739
  %3803 = vmatpush1.msra.mxu0 %v3738
  %3804 = vmatprep.subr.mxu0 %v3743
  %3805 = vmatpush1.msra.mxu0 %v3742
  %3806 = vmatprep.subr.mxu0 %v3747
  %3807 = vmatpush1.msra.mxu0 %v3746
  %3808 = vmatprep.subr.mxu0 %v3751
  %3809 = vmatpush1.msra.mxu0 %v3750
  %3810 = vmatprep.subr.mxu0 %v3755
  %3811 = vmatpush1.msra.mxu0 %v3754
  %3812 = vmatprep.subr.mxu0 0.0
  %3813 = vmatpush1.msra.mxu0 0.0
  %3814 = vmatprep.subr.mxu0 0.0
  %3815 = vmatpush1.msra.mxu0 0.0
  %3816 = vmatprep.subr.mxu0 0.0
  %3817 = vmatpush1.msra.mxu0 0.0
  %3818 = vmatprep.subr.mxu0 0.0
  %3819 = vmatpush1.msra.mxu0 0.0
  %3820 = vmatprep.subr.mxu0 0.0
  %3821 = vmatpush1.msra.mxu0 0.0
  %3822 = vmatprep.subr.mxu0 0.0
  %3823 = vmatpush1.msra.mxu0 0.0
  %3824 = vmatprep.subr.mxu0 0.0
  %3825 = vmatpush1.msra.mxu0 0.0
  %3826 = vmatprep.subr.mxu0 0.0
  %3827 = vmatpush1.msra.mxu0 0.0
  %3828 = vmatprep.subr.mxu0 0.0
  %3829 = vmatpush1.msra.mxu0 0.0
  %3830 = vmatprep.subr.mxu0 0.0
  %3831 = vmatpush1.msra.mxu0 0.0
  %3832 = vmatprep.subr.mxu0 0.0
  %3833 = vmatpush1.msra.mxu0 0.0
  %3834 = vmatprep.subr.mxu0 0.0
  %3835 = vmatpush1.msra.mxu0 0.0
  %3836 = vmatprep.subr.mxu0 0.0
  %3837 = vmatpush1.msra.mxu0 0.0
  %3838 = vmatprep.subr.mxu0 0.0
  %3839 = vmatpush1.msra.mxu0 0.0
  %3840 = vmatprep.subr.mxu0 0.0
  %3841 = vmatpush1.msra.mxu0 0.0
  %3842 = vmatprep.subr.mxu0 0.0
  %3843 = vmatpush1.msra.mxu0 0.0
  %3844 = vmatprep.mubr.f32.mxu0 0.0
  %3845 = vmatmul.mubr.f32.gmra.mrb[0].mxu0 %v3686
  %v3846 = vpop.f32.mrb[0].mxu0
  %v3847 = vadd.f32 %v3763, %v3846
  %v3848 = vpop.f32.mrb[0].mxu0
  %v3849 = vadd.f32 %v3767, %v3848
  %3850 = vmatprep.mubr.f32.mxu0 0.0
  %3851 = vmatmul.mubr.f32.gmra.mrb[0].mxu0 %v3687
  %v3852 = vpop.f32.mrb[0].mxu0
  %v3853 = vadd.f32 %v3763, %v3852
  %v3854 = vpop.f32.mrb[0].mxu0
  %v3855 = vadd.f32 %v3767, %v3854
  %3856 = vmatprep.mubr.f32.mxu0 0.0
  %3857 = vmatmul.mubr.f32.gmra.mrb[0].mxu0 %v3688
  %v3858 = vpop.f32.mrb[0].mxu0
  %v3859 = vadd.f32 %v3763, %v3858
  %v3860 = vpop.f32.mrb[0].mxu0
  %v3861 = vadd.f32 %v3767, %v3860
  %3862 = vmatprep.mubr.f32.mxu0 0.0
  %3863 = vmatmul.mubr.f32.gmra.mrb[0].mxu0 %v3689
  %v3864 = vpop.f32.mrb[0].mxu0
  %v3865 = vadd.f32 %v3763, %v3864
  %v3866 = vpop.f32.mrb[0].mxu0
  %v3867 = vadd.f32 %v3767, %v3866
  %3868 = vmatprep.mubr.f32.mxu0 0.0
  %3869 = vmatmul.mubr.f32.gmra.mrb[0].mxu0 %v3690
  %v3870 = vpop.f32.mrb[0].mxu0
  %v3871 = vadd.f32 %v3763, %v3870
  %v3872 = vpop.f32.mrb[0].mxu0
  %v3873 = vadd.f32 %v3767, %v3872
  %3874 = vmatprep.mubr.f32.mxu0 0.0
  %3875 = vmatmul.mubr.f32.gmra.mrb[0].mxu0 %v3691
  %v3876 = vpop.f32.mrb[0].mxu0
  %v3877 = vadd.f32 %v3763, %v3876
  %v3878 = vpop.f32.mrb[0].mxu0
  %v3879 = vadd.f32 %v3767, %v3878
  %3880 = vmatprep.mubr.f32.mxu0 0.0
  %3881 = vmatmul.mubr.f32.gmra.mrb[0].mxu0 %v3692
  %v3882 = vpop.f32.mrb[0].mxu0
  %v3883 = vadd.f32 %v3763, %v3882
  %v3884 = vpop.f32.mrb[0].mxu0
  %v3885 = vadd.f32 %v3767, %v3884
  %3886 = vmatprep.mubr.f32.mxu0 0.0
  %3887 = vmatmul.mubr.f32.gmra.mrb[0].mxu0 %v3693
  %v3888 = vpop.f32.mrb[0].mxu0
  %v3889 = vadd.f32 %v3763, %v3888
  %v3890 = vpop.f32.mrb[0].mxu0
  %v3891 = vadd.f32 %v3767, %v3890
  %3892 = vdwg.mxu0
  %3893 = vmatprep.subr.mxu0 %v3697
  %3894 = vmatpush1.msra.mxu0 %v3696
  %3895 = vmatprep.subr.mxu0 %v3701
  %3896 = vmatpush1.msra.mxu0 %v3700
  %3897 = vmatprep.subr.mxu0 %v3705
  %3898 = vmatpush1.msra.mxu0 %v3704
  %3899 = vmatprep.subr.mxu0 %v3709
  %3900 = vmatpush1.msra.mxu0 %v3708
  %3901 = vmatprep.subr.mxu0 %v3713
  %3902 = vmatpush1.msra.mxu0 %v3712
  %3903 = vmatprep.subr.mxu0 %v3717
  %3904 = vmatpush1.msra.mxu0 %v3716
  %3905 = vmatprep.subr.mxu0 %v3721
  %3906 = vmatpush1.msra.mxu0 %v3720
  %3907 = vmatprep.subr.mxu0 %v3725
  %3908 = vmatpush1.msra.mxu0 %v3724
  %3909 = vmatprep.subr.mxu0 %v3729
  %3910 = vmatpush1.msra.mxu0 %v3728
  %3911 = vmatprep.subr.mxu0 %v3733
  %3912 = vmatpush1.msra.mxu0 %v3732
  %3913 = vmatprep.subr.mxu0 %v3737
  %3914 = vmatpush1.msra.mxu0 %v3736
  %3915 = vmatprep.subr.mxu0 %v3741
  %3916 = vmatpush1.msra.mxu0 %v3740
  %3917 = vmatprep.subr.mxu0 %v3745
  %3918 = vmatpush1.msra.mxu0 %v3744
  %3919 = vmatprep.subr.mxu0 %v3749
  %3920 = vmatpush1.msra.mxu0 %v3748
  %3921 = vmatprep.subr.mxu0 %v3753
  %3922 = vmatpush1.msra.mxu0 %v3752
  %3923 = vmatprep.subr.mxu0 %v3757
  %3924 = vmatpush1.msra.mxu0 %v3756
  %3925 = vmatprep.subr.mxu0 0.0
  %3926 = vmatpush1.msra.mxu0 0.0
  %3927 = vmatprep.subr.mxu0 0.0
  %3928 = vmatpush1.msra.mxu0 0.0
  %3929 = vmatprep.subr.mxu0 0.0
  %3930 = vmatpush1.msra.mxu0 0.0
  %3931 = vmatprep.subr.mxu0 0.0
  %3932 = vmatpush1.msra.mxu0 0.0
  %3933 = vmatprep.subr.mxu0 0.0
  %3934 = vmatpush1.msra.mxu0 0.0
  %3935 = vmatprep.subr.mxu0 0.0
  %3936 = vmatpush1.msra.mxu0 0.0
  %3937 = vmatprep.subr.mxu0 0.0
  %3938 = vmatpush1.msra.mxu0 0.0
  %3939 = vmatprep.subr.mxu0 0.0
  %3940 = vmatpush1.msra.mxu0 0.0
  %3941 = vmatprep.subr.mxu0 0.0
  %3942 = vmatpush1.msra.mxu0 0.0
  %3943 = vmatprep.subr.mxu0 0.0
  %3944 = vmatpush1.msra.mxu0 0.0
  %3945 = vmatprep.subr.mxu0 0.0
  %3946 = vmatpush1.msra.mxu0 0.0
  %3947 = vmatprep.subr.mxu0 0.0
  %3948 = vmatpush1.msra.mxu0 0.0
  %3949 = vmatprep.subr.mxu0 0.0
  %3950 = vmatpush1.msra.mxu0 0.0
  %3951 = vmatprep.subr.mxu0 0.0
  %3952 = vmatpush1.msra.mxu0 0.0
  %3953 = vmatprep.subr.mxu0 0.0
  %3954 = vmatpush1.msra.mxu0 0.0
  %3955 = vmatprep.subr.mxu0 0.0
  %3956 = vmatpush1.msra.mxu0 0.0
  %3957 = vmatprep.mubr.f32.mxu0 0.0
  %3958 = vmatmul.mubr.f32.gmra.mrb[0].mxu0 %v3686
  %v3959 = vpop.f32.mrb[0].mxu0
  %v3960 = vadd.f32 %v3771, %v3959
  %v3961 = vpop.f32.mrb[0].mxu0
  %v3962 = vadd.f32 %v3775, %v3961
  %3963 = vmatprep.mubr.f32.mxu0 0.0
  %3964 = vmatmul.mubr.f32.gmra.mrb[0].mxu0 %v3687
  %v3965 = vpop.f32.mrb[0].mxu0
  %v3966 = vadd.f32 %v3771, %v3965
  %v3967 = vpop.f32.mrb[0].mxu0
  %v3968 = vadd.f32 %v3775, %v3967
  %3969 = vmatprep.mubr.f32.mxu0 0.0
  %3970 = vmatmul.mubr.f32.gmra.mrb[0].mxu0 %v3688
  %v3971 = vpop.f32.mrb[0].mxu0
  %v3972 = vadd.f32 %v3771, %v3971
  %v3973 = vpop.f32.mrb[0].mxu0
  %v3974 = vadd.f32 %v3775, %v3973
  %3975 = vmatprep.mubr.f32.mxu0 0.0
  %3976 = vmatmul.mubr.f32.gmra.mrb[0].mxu0 %v3689
  %v3977 = vpop.f32.mrb[0].mxu0
  %v3978 = vadd.f32 %v3771, %v3977
  %v3979 = vpop.f32.mrb[0].mxu0
  %v3980 = vadd.f32 %v3775, %v3979
  %3981 = vmatprep.mubr.f32.mxu0 0.0
  %3982 = vmatmul.mubr.f32.gmra.mrb[0].mxu0 %v3690
  %v3983 = vpop.f32.mrb[0].mxu0
  %v3984 = vadd.f32 %v3771, %v3983
  %v3985 = vpop.f32.mrb[0].mxu0
  %v3986 = vadd.f32 %v3775, %v3985
  %3987 = vmatprep.mubr.f32.mxu0 0.0
  %3988 = vmatmul.mubr.f32.gmra.mrb[0].mxu0 %v3691
  %v3989 = vpop.f32.mrb[0].mxu0
  %v3990 = vadd.f32 %v3771, %v3989
  %v3991 = vpop.f32.mrb[0].mxu0
  %v3992 = vadd.f32 %v3775, %v3991
  %3993 = vmatprep.mubr.f32.mxu0 0.0
  %3994 = vmatmul.mubr.f32.gmra.mrb[0].mxu0 %v3692
  %v3995 = vpop.f32.mrb[0].mxu0
  %v3996 = vadd.f32 %v3771, %v3995
  %v3997 = vpop.f32.mrb[0].mxu0
  %v3998 = vadd.f32 %v3775, %v3997
  %3999 = vmatprep.mubr.f32.mxu0 0.0
  %4000 = vmatmul.mubr.f32.gmra.mrb[0].mxu0 %v3693
  %v4001 = vpop.f32.mrb[0].mxu0
  %v4002 = vadd.f32 %v3771, %v4001
  %v4003 = vpop.f32.mrb[0].mxu0
  %v4004 = vadd.f32 %v3775, %v4003
  %4005 = vdwg.mxu0
  %4006 = vst [vmem:[#allocation2] sm:$0xff] %v3847
  %4007 = vst [vmem:[#allocation2 + $0x8] sm:$0xff] %v3849
  %4008 = vst [vmem:[#allocation2 + $0x10] sm:$0xff] %v3960
  %4009 = vst [vmem:[#allocation2 + $0x18] sm:$0xff] %v3962
  %4010 = vst [vmem:[#allocation2 + $0x20] sm:$0xff] %v3853
  %4011 = vst [vmem:[#allocation2 + $0x28] sm:$0xff] %v3855
  %4012 = vst [vmem:[#allocation2 + $0x30] sm:$0xff] %v3966
  %4013 = vst [vmem:[#allocation2 + $0x38] sm:$0xff] %v3968
  %4014 = vst [vmem:[#allocation2 + $0x40] sm:$0xff] %v3859
  %4015 = vst [vmem:[#allocation2 + $0x48] sm:$0xff] %v3861
  %4016 = vst [vmem:[#allocation2 + $0x50] sm:$0xff] %v3972
  %4017 = vst [vmem:[#allocation2 + $0x58] sm:$0xff] %v3974
  %4018 = vst [vmem:[#allocation2 + $0x60] sm:$0xff] %v3865
  %4019 = vst [vmem:[#allocation2 + $0x68] sm:$0xff] %v3867
  %4020 = vst [vmem:[#allocation2 + $0x70] sm:$0xff] %v3978
  %4021 = vst [vmem:[#allocation2 + $0x78] sm:$0xff] %v3980
  %4022 = vst [vmem:[#allocation2 + $0x80] sm:$0xff] %v3871
  %4023 = vst [vmem:[#allocation2 + $0x88] sm:$0xff] %v3873
  %4024 = vst [vmem:[#allocation2 + $0x90] sm:$0xff] %v3984
  %4025 = vst [vmem:[#allocation2 + $0x98] sm:$0xff] %v3986
  %4026 = vst [vmem:[#allocation2 + $0xa0] sm:$0xff] %v3877
  %4027 = vst [vmem:[#allocation2 + $0xa8] sm:$0xff] %v3879
  %4028 = vst [vmem:[#allocation2 + $0xb0] sm:$0xff] %v3990
  %4029 = vst [vmem:[#allocation2 + $0xb8] sm:$0xff] %v3992
  %4030 = vst [vmem:[#allocation2 + $0xc0] sm:$0xff] %v3883
  %4031 = vst [vmem:[#allocation2 + $0xc8] sm:$0xff] %v3885
  %4032 = vst [vmem:[#allocation2 + $0xd0] sm:$0xff] %v3996
  %4033 = vst [vmem:[#allocation2 + $0xd8] sm:$0xff] %v3998
  %4034 = vst [vmem:[#allocation2 + $0xe0] sm:$0xff] %v3889
  %4035 = vst [vmem:[#allocation2 + $0xe8] sm:$0xff] %v3891
  %4036 = vst [vmem:[#allocation2 + $0xf0] sm:$0xff] %v4002
  %4037 = vst [vmem:[#allocation2 + $0xf8] sm:$0xff] %v4004
  %v4038 = vld [vmem:[%s8] sm:$0xff]
  %v4039 = vld [vmem:[%s8 + $0x8] sm:$0xff]
  %v4040 = vld [vmem:[%s8 + $0x10] sm:$0xff]
  %v4041 = vld [vmem:[%s8 + $0x18] sm:$0xff]
  %v4042 = vld [vmem:[%s8 + $0x20] sm:$0xff]
  %v4043 = vld [vmem:[%s8 + $0x28] sm:$0xff]
  %v4044 = vld [vmem:[%s8 + $0x30] sm:$0xff]
  %v4045 = vld [vmem:[%s8 + $0x38] sm:$0xff]
  %v4046 = vld [vmem:[%s8 + $0x40] sm:$0xff]
  %v4047 = vld [vmem:[%s8 + $0x48] sm:$0xff]
  %v4048 = vld [vmem:[%s8 + $0x50] sm:$0xff]
  %v4049 = vld [vmem:[%s8 + $0x58] sm:$0xff]
  %v4050 = vld [vmem:[%s8 + $0x60] sm:$0xff]
  %v4051 = vld [vmem:[%s8 + $0x68] sm:$0xff]
  %v4052 = vld [vmem:[%s8 + $0x70] sm:$0xff]
  %v4053 = vld [vmem:[%s8 + $0x78] sm:$0xff]
  %v4054 = vld [vmem:[%s8 + $0x80] sm:$0xff]
  %v4055 = vld [vmem:[%s8 + $0x88] sm:$0xff]
  %v4056 = vld [vmem:[%s8 + $0x90] sm:$0xff]
  %v4057 = vld [vmem:[%s8 + $0x98] sm:$0xff]
  %v4058 = vld [vmem:[%s8 + $0xa0] sm:$0xff]
  %v4059 = vld [vmem:[%s8 + $0xa8] sm:$0xff]
  %v4060 = vld [vmem:[%s8 + $0xb0] sm:$0xff]
  %v4061 = vld [vmem:[%s8 + $0xb8] sm:$0xff]
  %v4062 = vld [vmem:[%s8 + $0xc0] sm:$0xff]
  %v4063 = vld [vmem:[%s8 + $0xc8] sm:$0xff]
  %v4064 = vld [vmem:[%s8 + $0xd0] sm:$0xff]
  %v4065 = vld [vmem:[%s8 + $0xd8] sm:$0xff]
  %v4066 = vld [vmem:[%s8 + $0xe0] sm:$0xff]
  %v4067 = vld [vmem:[%s8 + $0xe8] sm:$0xff]
  %v4068 = vld [vmem:[%s8 + $0xf0] sm:$0xff]
  %v4069 = vld [vmem:[%s8 + $0xf8] sm:$0xff]
  %v4070 = vld [vmem:[%s8 + $0x100] sm:$0xff]
  %v4071 = vld [vmem:[%s8 + $0x108] sm:$0xff]
  %v4072 = vld [vmem:[%s8 + $0x110] sm:$0xff]
  %v4073 = vld [vmem:[%s8 + $0x118] sm:$0xff]
  %v4074 = vld [vmem:[%s8 + $0x120] sm:$0xff]
  %v4075 = vld [vmem:[%s8 + $0x128] sm:$0xff]
  %v4076 = vld [vmem:[%s8 + $0x130] sm:$0xff]
  %v4077 = vld [vmem:[%s8 + $0x138] sm:$0xff]
  %v4078 = vld [vmem:[%s8 + $0x140] sm:$0xff]
  %v4079 = vld [vmem:[%s8 + $0x148] sm:$0xff]
  %v4080 = vld [vmem:[%s8 + $0x150] sm:$0xff]
  %v4081 = vld [vmem:[%s8 + $0x158] sm:$0xff]
  %v4082 = vld [vmem:[%s8 + $0x160] sm:$0xff]
  %v4083 = vld [vmem:[%s8 + $0x168] sm:$0xff]
  %v4084 = vld [vmem:[%s8 + $0x170] sm:$0xff]
  %v4085 = vld [vmem:[%s8 + $0x178] sm:$0xff]
  %v4086 = vld [vmem:[%s8 + $0x180] sm:$0xff]
  %v4087 = vld [vmem:[%s8 + $0x188] sm:$0xff]
  %v4088 = vld [vmem:[%s8 + $0x190] sm:$0xff]
  %v4089 = vld [vmem:[%s8 + $0x198] sm:$0xff]
  %v4090 = vld [vmem:[%s8 + $0x1a0] sm:$0xff]
  %v4091 = vld [vmem:[%s8 + $0x1a8] sm:$0xff]
  %v4092 = vld [vmem:[%s8 + $0x1b0] sm:$0xff]
  %v4093 = vld [vmem:[%s8 + $0x1b8] sm:$0xff]
  %v4094 = vld [vmem:[%s8 + $0x1c0] sm:$0xff]
  %v4095 = vld [vmem:[%s8 + $0x1c8] sm:$0xff]
  %v4096 = vld [vmem:[%s8 + $0x1d0] sm:$0xff]
  %v4097 = vld [vmem:[%s8 + $0x1d8] sm:$0xff]
  %v4098 = vld [vmem:[%s8 + $0x1e0] sm:$0xff]
  %v4099 = vld [vmem:[%s8 + $0x1e8] sm:$0xff]
  %v4100 = vld [vmem:[%s8 + $0x1f0] sm:$0xff]
  %v4101 = vld [vmem:[%s8 + $0x1f8] sm:$0xff]
  %v4102 = vld [vmem:[%s434] sm:$0xff]
  %v4103 = vld [vmem:[%s434 + $0x8] sm:$0xff]
  %v4104 = vld [vmem:[%s434 + $0x10] sm:$0xff]
  %v4105 = vld [vmem:[%s434 + $0x18] sm:$0xff]
  %4106 = vmatprep.subr.mxu0 %v4039
  %4107 = vmatpush1.msra.mxu0 %v4038
  %4108 = vmatprep.subr.mxu0 %v4043
  %4109 = vmatpush1.msra.mxu0 %v4042
  %4110 = vmatprep.subr.mxu0 %v4047
  %4111 = vmatpush1.msra.mxu0 %v4046
  %4112 = vmatprep.subr.mxu0 %v4051
  %4113 = vmatpush1.msra.mxu0 %v4050
  %4114 = vmatprep.subr.mxu0 %v4055
  %4115 = vmatpush1.msra.mxu0 %v4054
  %4116 = vmatprep.subr.mxu0 %v4059
  %4117 = vmatpush1.msra.mxu0 %v4058
  %4118 = vmatprep.subr.mxu0 %v4063
  %4119 = vmatpush1.msra.mxu0 %v4062
  %4120 = vmatprep.subr.mxu0 %v4067
  %4121 = vmatpush1.msra.mxu0 %v4066
  %4122 = vmatprep.subr.mxu0 %v4071
  %4123 = vmatpush1.msra.mxu0 %v4070
  %4124 = vmatprep.subr.mxu0 %v4075
  %4125 = vmatpush1.msra.mxu0 %v4074
  %4126 = vmatprep.subr.mxu0 %v4079
  %4127 = vmatpush1.msra.mxu0 %v4078
  %4128 = vmatprep.subr.mxu0 %v4083
  %4129 = vmatpush1.msra.mxu0 %v4082
  %4130 = vmatprep.subr.mxu0 %v4087
  %4131 = vmatpush1.msra.mxu0 %v4086
  %4132 = vmatprep.subr.mxu0 %v4091
  %4133 = vmatpush1.msra.mxu0 %v4090
  %4134 = vmatprep.subr.mxu0 %v4095
  %4135 = vmatpush1.msra.mxu0 %v4094
  %4136 = vmatprep.subr.mxu0 %v4099
  %4137 = vmatpush1.msra.mxu0 %v4098
  %4138 = vmatprep.subr.mxu0 0.0
  %4139 = vmatpush1.msra.mxu0 0.0
  %4140 = vmatprep.subr.mxu0 0.0
  %4141 = vmatpush1.msra.mxu0 0.0
  %4142 = vmatprep.subr.mxu0 0.0
  %4143 = vmatpush1.msra.mxu0 0.0
  %4144 = vmatprep.subr.mxu0 0.0
  %4145 = vmatpush1.msra.mxu0 0.0
  %4146 = vmatprep.subr.mxu0 0.0
  %4147 = vmatpush1.msra.mxu0 0.0
  %4148 = vmatprep.subr.mxu0 0.0
  %4149 = vmatpush1.msra.mxu0 0.0
  %4150 = vmatprep.subr.mxu0 0.0
  %4151 = vmatpush1.msra.mxu0 0.0
  %4152 = vmatprep.subr.mxu0 0.0
  %4153 = vmatpush1.msra.mxu0 0.0
  %4154 = vmatprep.subr.mxu0 0.0
  %4155 = vmatpush1.msra.mxu0 0.0
  %4156 = vmatprep.subr.mxu0 0.0
  %4157 = vmatpush1.msra.mxu0 0.0
  %4158 = vmatprep.subr.mxu0 0.0
  %4159 = vmatpush1.msra.mxu0 0.0
  %4160 = vmatprep.subr.mxu0 0.0
  %4161 = vmatpush1.msra.mxu0 0.0
  %4162 = vmatprep.subr.mxu0 0.0
  %4163 = vmatpush1.msra.mxu0 0.0
  %4164 = vmatprep.subr.mxu0 0.0
  %4165 = vmatpush1.msra.mxu0 0.0
  %4166 = vmatprep.subr.mxu0 0.0
  %4167 = vmatpush1.msra.mxu0 0.0
  %4168 = vmatprep.subr.mxu0 0.0
  %4169 = vmatpush1.msra.mxu0 0.0
  %4170 = vmatprep.mubr.f32.mxu0 0.0
  %4171 = vmatmul.mubr.f32.gmra.mrb[0].mxu0 0.0
  %v4172 = vpop.f32.mrb[0].mxu0
  %v4173 = vadd.f32 0.0, %v4172
  %v4174 = vpop.f32.mrb[0].mxu0
  %v4175 = vadd.f32 0.0, %v4174
  %4176 = vdwg.mxu0
  %4177 = vmatprep.subr.mxu0 %v4041
  %4178 = vmatpush1.msra.mxu0 %v4040
  %4179 = vmatprep.subr.mxu0 %v4045
  %4180 = vmatpush1.msra.mxu0 %v4044
  %4181 = vmatprep.subr.mxu0 %v4049
  %4182 = vmatpush1.msra.mxu0 %v4048
  %4183 = vmatprep.subr.mxu0 %v4053
  %4184 = vmatpush1.msra.mxu0 %v4052
  %4185 = vmatprep.subr.mxu0 %v4057
  %4186 = vmatpush1.msra.mxu0 %v4056
  %4187 = vmatprep.subr.mxu0 %v4061
  %4188 = vmatpush1.msra.mxu0 %v4060
  %4189 = vmatprep.subr.mxu0 %v4065
  %4190 = vmatpush1.msra.mxu0 %v4064
  %4191 = vmatprep.subr.mxu0 %v4069
  %4192 = vmatpush1.msra.mxu0 %v4068
  %4193 = vmatprep.subr.mxu0 %v4073
  %4194 = vmatpush1.msra.mxu0 %v4072
  %4195 = vmatprep.subr.mxu0 %v4077
  %4196 = vmatpush1.msra.mxu0 %v4076
  %4197 = vmatprep.subr.mxu0 %v4081
  %4198 = vmatpush1.msra.mxu0 %v4080
  %4199 = vmatprep.subr.mxu0 %v4085
  %4200 = vmatpush1.msra.mxu0 %v4084
  %4201 = vmatprep.subr.mxu0 %v4089
  %4202 = vmatpush1.msra.mxu0 %v4088
  %4203 = vmatprep.subr.mxu0 %v4093
  %4204 = vmatpush1.msra.mxu0 %v4092
  %4205 = vmatprep.subr.mxu0 %v4097
  %4206 = vmatpush1.msra.mxu0 %v4096
  %4207 = vmatprep.subr.mxu0 %v4101
  %4208 = vmatpush1.msra.mxu0 %v4100
  %4209 = vmatprep.subr.mxu0 0.0
  %4210 = vmatpush1.msra.mxu0 0.0
  %4211 = vmatprep.subr.mxu0 0.0
  %4212 = vmatpush1.msra.mxu0 0.0
  %4213 = vmatprep.subr.mxu0 0.0
  %4214 = vmatpush1.msra.mxu0 0.0
  %4215 = vmatprep.subr.mxu0 0.0
  %4216 = vmatpush1.msra.mxu0 0.0
  %4217 = vmatprep.subr.mxu0 0.0
  %4218 = vmatpush1.msra.mxu0 0.0
  %4219 = vmatprep.subr.mxu0 0.0
  %4220 = vmatpush1.msra.mxu0 0.0
  %4221 = vmatprep.subr.mxu0 0.0
  %4222 = vmatpush1.msra.mxu0 0.0
  %4223 = vmatprep.subr.mxu0 0.0
  %4224 = vmatpush1.msra.mxu0 0.0
  %4225 = vmatprep.subr.mxu0 0.0
  %4226 = vmatpush1.msra.mxu0 0.0
  %4227 = vmatprep.subr.mxu0 0.0
  %4228 = vmatpush1.msra.mxu0 0.0
  %4229 = vmatprep.subr.mxu0 0.0
  %4230 = vmatpush1.msra.mxu0 0.0
  %4231 = vmatprep.subr.mxu0 0.0
  %4232 = vmatpush1.msra.mxu0 0.0
  %4233 = vmatprep.subr.mxu0 0.0
  %4234 = vmatpush1.msra.mxu0 0.0
  %4235 = vmatprep.subr.mxu0 0.0
  %4236 = vmatpush1.msra.mxu0 0.0
  %4237 = vmatprep.subr.mxu0 0.0
  %4238 = vmatpush1.msra.mxu0 0.0
  %4239 = vmatprep.subr.mxu0 0.0
  %4240 = vmatpush1.msra.mxu0 0.0
  %4241 = vmatprep.mubr.f32.mxu0 0.0
  %4242 = vmatmul.mubr.f32.gmra.mrb[0].mxu0 0.0
  %v4243 = vpop.f32.mrb[0].mxu0
  %v4244 = vadd.f32 0.0, %v4243
  %v4245 = vpop.f32.mrb[0].mxu0
  %v4246 = vadd.f32 0.0, %v4245
  %4247 = vdwg.mxu0
  %v4248 = vadd.f32 %v4102, %v4173
  %v4249 = vadd.f32 %v4103, %v4175
  %v4250 = vadd.f32 %v4104, %v4244
  %v4251 = vadd.f32 %v4105, %v4246
  %v4252 = vxor.u32 %v4248, 2147483648
  %v4253 = vxor.u32 %v4249, 2147483648
  %v4254 = vxor.u32 %v4250, 2147483648
  %v4255 = vmul.f32 %v4252, 1.442695
  %v4256 = vpow.pop %v4255
  %v4257 = vmul.f32 %v4253, 1.442695
  %v4258 = vpow.pop %v4257
  %v4259 = vmul.f32 %v4254, 1.442695
  %v4260 = vpow.pop %v4259
  %v4261 = vadd.f32 %v4256, 1.0
  %v4262 = vadd.f32 %v4258, 1.0
  %v4263 = vadd.f32 %v4260, 1.0
  %v4264 = vrcp.pop %v4261
  %v4265 = vmul.f32 1.0, %v4264
  %v4266 = vrcp.pop %v4262
  %v4267 = vmul.f32 1.0, %v4266
  %v4268 = vrcp.pop %v4263
  %v4269 = vmul.f32 1.0, %v4268
  %v4270 = vtanh.pop %v4251
  %v4271 = vmul.f32 %v4267, 0.0
  %v4272 = vmul.f32 %v4265, %v4270
  %v4273 = vadd.f32 %v4271, %v4272
  %v4274 = vtanh.pop %v4273
  %v4275 = vmul.f32 %v4269, %v4274
  %v4276 = vld [vmem:[%s612] sm:$0xff]
  %v4277 = vld [vmem:[%s612 + $0x8] sm:$0xff]
  %v4278 = vld [vmem:[%s612 + $0x10] sm:$0xff]
  %v4279 = vld [vmem:[%s612 + $0x18] sm:$0xff]
  %4280 = vmatprep.subr.mxu0 %v4039
  %4281 = vmatpush1.msra.mxu0 %v4038
  %4282 = vmatprep.subr.mxu0 %v4043
  %4283 = vmatpush1.msra.mxu0 %v4042
  %4284 = vmatprep.subr.mxu0 %v4047
  %4285 = vmatpush1.msra.mxu0 %v4046
  %4286 = vmatprep.subr.mxu0 %v4051
  %4287 = vmatpush1.msra.mxu0 %v4050
  %4288 = vmatprep.subr.mxu0 %v4055
  %4289 = vmatpush1.msra.mxu0 %v4054
  %4290 = vmatprep.subr.mxu0 %v4059
  %4291 = vmatpush1.msra.mxu0 %v4058
  %4292 = vmatprep.subr.mxu0 %v4063
  %4293 = vmatpush1.msra.mxu0 %v4062
  %4294 = vmatprep.subr.mxu0 %v4067
  %4295 = vmatpush1.msra.mxu0 %v4066
  %4296 = vmatprep.subr.mxu0 %v4071
  %4297 = vmatpush1.msra.mxu0 %v4070
  %4298 = vmatprep.subr.mxu0 %v4075
  %4299 = vmatpush1.msra.mxu0 %v4074
  %4300 = vmatprep.subr.mxu0 %v4079
  %4301 = vmatpush1.msra.mxu0 %v4078
  %4302 = vmatprep.subr.mxu0 %v4083
  %4303 = vmatpush1.msra.mxu0 %v4082
  %4304 = vmatprep.subr.mxu0 %v4087
  %4305 = vmatpush1.msra.mxu0 %v4086
  %4306 = vmatprep.subr.mxu0 %v4091
  %4307 = vmatpush1.msra.mxu0 %v4090
  %4308 = vmatprep.subr.mxu0 %v4095
  %4309 = vmatpush1.msra.mxu0 %v4094
  %4310 = vmatprep.subr.mxu0 %v4099
  %4311 = vmatpush1.msra.mxu0 %v4098
  %4312 = vmatprep.subr.mxu0 0.0
  %4313 = vmatpush1.msra.mxu0 0.0
  %4314 = vmatprep.subr.mxu0 0.0
  %4315 = vmatpush1.msra.mxu0 0.0
  %4316 = vmatprep.subr.mxu0 0.0
  %4317 = vmatpush1.msra.mxu0 0.0
  %4318 = vmatprep.subr.mxu0 0.0
  %4319 = vmatpush1.msra.mxu0 0.0
  %4320 = vmatprep.subr.mxu0 0.0
  %4321 = vmatpush1.msra.mxu0 0.0
  %4322 = vmatprep.subr.mxu0 0.0
  %4323 = vmatpush1.msra.mxu0 0.0
  %4324 = vmatprep.subr.mxu0 0.0
  %4325 = vmatpush1.msra.mxu0 0.0
  %4326 = vmatprep.subr.mxu0 0.0
  %4327 = vmatpush1.msra.mxu0 0.0
  %4328 = vmatprep.subr.mxu0 0.0
  %4329 = vmatpush1.msra.mxu0 0.0
  %4330 = vmatprep.subr.mxu0 0.0
  %4331 = vmatpush1.msra.mxu0 0.0
  %4332 = vmatprep.subr.mxu0 0.0
  %4333 = vmatpush1.msra.mxu0 0.0
  %4334 = vmatprep.subr.mxu0 0.0
  %4335 = vmatpush1.msra.mxu0 0.0
  %4336 = vmatprep.subr.mxu0 0.0
  %4337 = vmatpush1.msra.mxu0 0.0
  %4338 = vmatprep.subr.mxu0 0.0
  %4339 = vmatpush1.msra.mxu0 0.0
  %4340 = vmatprep.subr.mxu0 0.0
  %4341 = vmatpush1.msra.mxu0 0.0
  %4342 = vmatprep.subr.mxu0 0.0
  %4343 = vmatpush1.msra.mxu0 0.0
  %4344 = vmatprep.mubr.f32.mxu0 0.0
  %4345 = vmatmul.mubr.f32.gmra.mrb[0].mxu0 %v4275
  %v4346 = vpop.f32.mrb[0].mxu0
  %v4347 = vadd.f32 0.0, %v4346
  %v4348 = vpop.f32.mrb[0].mxu0
  %v4349 = vadd.f32 0.0, %v4348
  %4350 = vdwg.mxu0
  %4351 = vmatprep.subr.mxu0 %v4041
  %4352 = vmatpush1.msra.mxu0 %v4040
  %4353 = vmatprep.subr.mxu0 %v4045
  %4354 = vmatpush1.msra.mxu0 %v4044
  %4355 = vmatprep.subr.mxu0 %v4049
  %4356 = vmatpush1.msra.mxu0 %v4048
  %4357 = vmatprep.subr.mxu0 %v4053
  %4358 = vmatpush1.msra.mxu0 %v4052
  %4359 = vmatprep.subr.mxu0 %v4057
  %4360 = vmatpush1.msra.mxu0 %v4056
  %4361 = vmatprep.subr.mxu0 %v4061
  %4362 = vmatpush1.msra.mxu0 %v4060
  %4363 = vmatprep.subr.mxu0 %v4065
  %4364 = vmatpush1.msra.mxu0 %v4064
  %4365 = vmatprep.subr.mxu0 %v4069
  %4366 = vmatpush1.msra.mxu0 %v4068
  %4367 = vmatprep.subr.mxu0 %v4073
  %4368 = vmatpush1.msra.mxu0 %v4072
  %4369 = vmatprep.subr.mxu0 %v4077
  %4370 = vmatpush1.msra.mxu0 %v4076
  %4371 = vmatprep.subr.mxu0 %v4081
  %4372 = vmatpush1.msra.mxu0 %v4080
  %4373 = vmatprep.subr.mxu0 %v4085
  %4374 = vmatpush1.msra.mxu0 %v4084
  %4375 = vmatprep.subr.mxu0 %v4089
  %4376 = vmatpush1.msra.mxu0 %v4088
  %4377 = vmatprep.subr.mxu0 %v4093
  %4378 = vmatpush1.msra.mxu0 %v4092
  %4379 = vmatprep.subr.mxu0 %v4097
  %4380 = vmatpush1.msra.mxu0 %v4096
  %4381 = vmatprep.subr.mxu0 %v4101
  %4382 = vmatpush1.msra.mxu0 %v4100
  %4383 = vmatprep.subr.mxu0 0.0
  %4384 = vmatpush1.msra.mxu0 0.0
  %4385 = vmatprep.subr.mxu0 0.0
  %4386 = vmatpush1.msra.mxu0 0.0
  %4387 = vmatprep.subr.mxu0 0.0
  %4388 = vmatpush1.msra.mxu0 0.0
  %4389 = vmatprep.subr.mxu0 0.0
  %4390 = vmatpush1.msra.mxu0 0.0
  %4391 = vmatprep.subr.mxu0 0.0
  %4392 = vmatpush1.msra.mxu0 0.0
  %4393 = vmatprep.subr.mxu0 0.0
  %4394 = vmatpush1.msra.mxu0 0.0
  %4395 = vmatprep.subr.mxu0 0.0
  %4396 = vmatpush1.msra.mxu0 0.0
  %4397 = vmatprep.subr.mxu0 0.0
  %4398 = vmatpush1.msra.mxu0 0.0
  %4399 = vmatprep.subr.mxu0 0.0
  %4400 = vmatpush1.msra.mxu0 0.0
  %4401 = vmatprep.subr.mxu0 0.0
  %4402 = vmatpush1.msra.mxu0 0.0
  %4403 = vmatprep.subr.mxu0 0.0
  %4404 = vmatpush1.msra.mxu0 0.0
  %4405 = vmatprep.subr.mxu0 0.0
  %4406 = vmatpush1.msra.mxu0 0.0
  %4407 = vmatprep.subr.mxu0 0.0
  %4408 = vmatpush1.msra.mxu0 0.0
  %4409 = vmatprep.subr.mxu0 0.0
  %4410 = vmatpush1.msra.mxu0 0.0
  %4411 = vmatprep.subr.mxu0 0.0
  %4412 = vmatpush1.msra.mxu0 0.0
  %4413 = vmatprep.subr.mxu0 0.0
  %4414 = vmatpush1.msra.mxu0 0.0
  %4415 = vmatprep.mubr.f32.mxu0 0.0
  %4416 = vmatmul.mubr.f32.gmra.mrb[0].mxu0 %v4275
  %v4417 = vpop.f32.mrb[0].mxu0
  %v4418 = vadd.f32 0.0, %v4417
  %v4419 = vpop.f32.mrb[0].mxu0
  %v4420 = vadd.f32 0.0, %v4419
  %4421 = vdwg.mxu0
  %v4422 = vadd.f32 %v4276, %v4347
  %v4423 = vadd.f32 %v4277, %v4349
  %v4424 = vadd.f32 %v4278, %v4418
  %v4425 = vadd.f32 %v4279, %v4420
  %v4426 = vxor.u32 %v4422, 2147483648
  %v4427 = vxor.u32 %v4423, 2147483648
  %v4428 = vxor.u32 %v4424, 2147483648
  %v4429 = vmul.f32 %v4426, 1.442695
  %v4430 = vpow.pop %v4429
  %v4431 = vmul.f32 %v4427, 1.442695
  %v4432 = vpow.pop %v4431
  %v4433 = vmul.f32 %v4428, 1.442695
  %v4434 = vpow.pop %v4433
  %v4435 = vadd.f32 %v4430, 1.0
  %v4436 = vadd.f32 %v4432, 1.0
  %v4437 = vadd.f32 %v4434, 1.0
  %v4438 = vrcp.pop %v4435
  %v4439 = vmul.f32 1.0, %v4438
  %v4440 = vrcp.pop %v4436
  %v4441 = vmul.f32 1.0, %v4440
  %v4442 = vrcp.pop %v4437
  %v4443 = vmul.f32 1.0, %v4442
  %v4444 = vtanh.pop %v4425
  %v4445 = vmul.f32 %v4441, %v4273
  %v4446 = vmul.f32 %v4439, %v4444
  %v4447 = vadd.f32 %v4445, %v4446
  %v4448 = vtanh.pop %v4447
  %v4449 = vmul.f32 %v4443, %v4448
  %v4450 = vld [vmem:[%s791] sm:$0xff]
  %v4451 = vld [vmem:[%s791 + $0x8] sm:$0xff]
  %v4452 = vld [vmem:[%s791 + $0x10] sm:$0xff]
  %v4453 = vld [vmem:[%s791 + $0x18] sm:$0xff]
  %4454 = vmatprep.subr.mxu0 %v4039
  %4455 = vmatpush1.msra.mxu0 %v4038
  %4456 = vmatprep.subr.mxu0 %v4043
  %4457 = vmatpush1.msra.mxu0 %v4042
  %4458 = vmatprep.subr.mxu0 %v4047
  %4459 = vmatpush1.msra.mxu0 %v4046
  %4460 = vmatprep.subr.mxu0 %v4051
  %4461 = vmatpush1.msra.mxu0 %v4050
  %4462 = vmatprep.subr.mxu0 %v4055
  %4463 = vmatpush1.msra.mxu0 %v4054
  %4464 = vmatprep.subr.mxu0 %v4059
  %4465 = vmatpush1.msra.mxu0 %v4058
  %4466 = vmatprep.subr.mxu0 %v4063
  %4467 = vmatpush1.msra.mxu0 %v4062
  %4468 = vmatprep.subr.mxu0 %v4067
  %4469 = vmatpush1.msra.mxu0 %v4066
  %4470 = vmatprep.subr.mxu0 %v4071
  %4471 = vmatpush1.msra.mxu0 %v4070
  %4472 = vmatprep.subr.mxu0 %v4075
  %4473 = vmatpush1.msra.mxu0 %v4074
  %4474 = vmatprep.subr.mxu0 %v4079
  %4475 = vmatpush1.msra.mxu0 %v4078
  %4476 = vmatprep.subr.mxu0 %v4083
  %4477 = vmatpush1.msra.mxu0 %v4082
  %4478 = vmatprep.subr.mxu0 %v4087
  %4479 = vmatpush1.msra.mxu0 %v4086
  %4480 = vmatprep.subr.mxu0 %v4091
  %4481 = vmatpush1.msra.mxu0 %v4090
  %4482 = vmatprep.subr.mxu0 %v4095
  %4483 = vmatpush1.msra.mxu0 %v4094
  %4484 = vmatprep.subr.mxu0 %v4099
  %4485 = vmatpush1.msra.mxu0 %v4098
  %4486 = vmatprep.subr.mxu0 0.0
  %4487 = vmatpush1.msra.mxu0 0.0
  %4488 = vmatprep.subr.mxu0 0.0
  %4489 = vmatpush1.msra.mxu0 0.0
  %4490 = vmatprep.subr.mxu0 0.0
  %4491 = vmatpush1.msra.mxu0 0.0
  %4492 = vmatprep.subr.mxu0 0.0
  %4493 = vmatpush1.msra.mxu0 0.0
  %4494 = vmatprep.subr.mxu0 0.0
  %4495 = vmatpush1.msra.mxu0 0.0
  %4496 = vmatprep.subr.mxu0 0.0
  %4497 = vmatpush1.msra.mxu0 0.0
  %4498 = vmatprep.subr.mxu0 0.0
  %4499 = vmatpush1.msra.mxu0 0.0
  %4500 = vmatprep.subr.mxu0 0.0
  %4501 = vmatpush1.msra.mxu0 0.0
  %4502 = vmatprep.subr.mxu0 0.0
  %4503 = vmatpush1.msra.mxu0 0.0
  %4504 = vmatprep.subr.mxu0 0.0
  %4505 = vmatpush1.msra.mxu0 0.0
  %4506 = vmatprep.subr.mxu0 0.0
  %4507 = vmatpush1.msra.mxu0 0.0
  %4508 = vmatprep.subr.mxu0 0.0
  %4509 = vmatpush1.msra.mxu0 0.0
  %4510 = vmatprep.subr.mxu0 0.0
  %4511 = vmatpush1.msra.mxu0 0.0
  %4512 = vmatprep.subr.mxu0 0.0
  %4513 = vmatpush1.msra.mxu0 0.0
  %4514 = vmatprep.subr.mxu0 0.0
  %4515 = vmatpush1.msra.mxu0 0.0
  %4516 = vmatprep.subr.mxu0 0.0
  %4517 = vmatpush1.msra.mxu0 0.0
  %4518 = vmatprep.mubr.f32.mxu0 0.0
  %4519 = vmatmul.mubr.f32.gmra.mrb[0].mxu0 %v4449
  %v4520 = vpop.f32.mrb[0].mxu0
  %v4521 = vadd.f32 0.0, %v4520
  %v4522 = vpop.f32.mrb[0].mxu0
  %v4523 = vadd.f32 0.0, %v4522
  %4524 = vdwg.mxu0
  %4525 = vmatprep.subr.mxu0 %v4041
  %4526 = vmatpush1.msra.mxu0 %v4040
  %4527 = vmatprep.subr.mxu0 %v4045
  %4528 = vmatpush1.msra.mxu0 %v4044
  %4529 = vmatprep.subr.mxu0 %v4049
  %4530 = vmatpush1.msra.mxu0 %v4048
  %4531 = vmatprep.subr.mxu0 %v4053
  %4532 = vmatpush1.msra.mxu0 %v4052
  %4533 = vmatprep.subr.mxu0 %v4057
  %4534 = vmatpush1.msra.mxu0 %v4056
  %4535 = vmatprep.subr.mxu0 %v4061
  %4536 = vmatpush1.msra.mxu0 %v4060
  %4537 = vmatprep.subr.mxu0 %v4065
  %4538 = vmatpush1.msra.mxu0 %v4064
  %4539 = vmatprep.subr.mxu0 %v4069
  %4540 = vmatpush1.msra.mxu0 %v4068
  %4541 = vmatprep.subr.mxu0 %v4073
  %4542 = vmatpush1.msra.mxu0 %v4072
  %4543 = vmatprep.subr.mxu0 %v4077
  %4544 = vmatpush1.msra.mxu0 %v4076
  %4545 = vmatprep.subr.mxu0 %v4081
  %4546 = vmatpush1.msra.mxu0 %v4080
  %4547 = vmatprep.subr.mxu0 %v4085
  %4548 = vmatpush1.msra.mxu0 %v4084
  %4549 = vmatprep.subr.mxu0 %v4089
  %4550 = vmatpush1.msra.mxu0 %v4088
  %4551 = vmatprep.subr.mxu0 %v4093
  %4552 = vmatpush1.msra.mxu0 %v4092
  %4553 = vmatprep.subr.mxu0 %v4097
  %4554 = vmatpush1.msra.mxu0 %v4096
  %4555 = vmatprep.subr.mxu0 %v4101
  %4556 = vmatpush1.msra.mxu0 %v4100
  %4557 = vmatprep.subr.mxu0 0.0
  %4558 = vmatpush1.msra.mxu0 0.0
  %4559 = vmatprep.subr.mxu0 0.0
  %4560 = vmatpush1.msra.mxu0 0.0
  %4561 = vmatprep.subr.mxu0 0.0
  %4562 = vmatpush1.msra.mxu0 0.0
  %4563 = vmatprep.subr.mxu0 0.0
  %4564 = vmatpush1.msra.mxu0 0.0
  %4565 = vmatprep.subr.mxu0 0.0
  %4566 = vmatpush1.msra.mxu0 0.0
  %4567 = vmatprep.subr.mxu0 0.0
  %4568 = vmatpush1.msra.mxu0 0.0
  %4569 = vmatprep.subr.mxu0 0.0
  %4570 = vmatpush1.msra.mxu0 0.0
  %4571 = vmatprep.subr.mxu0 0.0
  %4572 = vmatpush1.msra.mxu0 0.0
  %4573 = vmatprep.subr.mxu0 0.0
  %4574 = vmatpush1.msra.mxu0 0.0
  %4575 = vmatprep.subr.mxu0 0.0
  %4576 = vmatpush1.msra.mxu0 0.0
  %4577 = vmatprep.subr.mxu0 0.0
  %4578 = vmatpush1.msra.mxu0 0.0
  %4579 = vmatprep.subr.mxu0 0.0
  %4580 = vmatpush1.msra.mxu0 0.0
  %4581 = vmatprep.subr.mxu0 0.0
  %4582 = vmatpush1.msra.mxu0 0.0
  %4583 = vmatprep.subr.mxu0 0.0
  %4584 = vmatpush1.msra.mxu0 0.0
  %4585 = vmatprep.subr.mxu0 0.0
  %4586 = vmatpush1.msra.mxu0 0.0
  %4587 = vmatprep.subr.mxu0 0.0
  %4588 = vmatpush1.msra.mxu0 0.0
  %4589 = vmatprep.mubr.f32.mxu0 0.0
  %4590 = vmatmul.mubr.f32.gmra.mrb[0].mxu0 %v4449
  %v4591 = vpop.f32.mrb[0].mxu0
  %v4592 = vadd.f32 0.0, %v4591
  %v4593 = vpop.f32.mrb[0].mxu0
  %v4594 = vadd.f32 0.0, %v4593
  %4595 = vdwg.mxu0
  %v4596 = vadd.f32 %v4450, %v4521
  %v4597 = vadd.f32 %v4451, %v4523
  %v4598 = vadd.f32 %v4452, %v4592
  %v4599 = vadd.f32 %v4453, %v4594
  %v4600 = vxor.u32 %v4596, 2147483648
  %v4601 = vxor.u32 %v4597, 2147483648
  %v4602 = vxor.u32 %v4598, 2147483648
  %v4603 = vmul.f32 %v4600, 1.442695
  %v4604 = vpow.pop %v4603
  %v4605 = vmul.f32 %v4601, 1.442695
  %v4606 = vpow.pop %v4605
  %v4607 = vmul.f32 %v4602, 1.442695
  %v4608 = vpow.pop %v4607
  %v4609 = vadd.f32 %v4604, 1.0
  %v4610 = vadd.f32 %v4606, 1.0
  %v4611 = vadd.f32 %v4608, 1.0
  %v4612 = vrcp.pop %v4609
  %v4613 = vmul.f32 1.0, %v4612
  %v4614 = vrcp.pop %v4610
  %v4615 = vmul.f32 1.0, %v4614
  %v4616 = vrcp.pop %v4611
  %v4617 = vmul.f32 1.0, %v4616
  %v4618 = vtanh.pop %v4599
  %v4619 = vmul.f32 %v4615, %v4447
  %v4620 = vmul.f32 %v4613, %v4618
  %v4621 = vadd.f32 %v4619, %v4620
  %v4622 = vtanh.pop %v4621
  %v4623 = vmul.f32 %v4617, %v4622
  %v4624 = vld [vmem:[%s970] sm:$0xff]
  %v4625 = vld [vmem:[%s970 + $0x8] sm:$0xff]
  %v4626 = vld [vmem:[%s970 + $0x10] sm:$0xff]
  %v4627 = vld [vmem:[%s970 + $0x18] sm:$0xff]
  %4628 = vmatprep.subr.mxu0 %v4039
  %4629 = vmatpush1.msra.mxu0 %v4038
  %4630 = vmatprep.subr.mxu0 %v4043
  %4631 = vmatpush1.msra.mxu0 %v4042
  %4632 = vmatprep.subr.mxu0 %v4047
  %4633 = vmatpush1.msra.mxu0 %v4046
  %4634 = vmatprep.subr.mxu0 %v4051
  %4635 = vmatpush1.msra.mxu0 %v4050
  %4636 = vmatprep.subr.mxu0 %v4055
  %4637 = vmatpush1.msra.mxu0 %v4054
  %4638 = vmatprep.subr.mxu0 %v4059
  %4639 = vmatpush1.msra.mxu0 %v4058
  %4640 = vmatprep.subr.mxu0 %v4063
  %4641 = vmatpush1.msra.mxu0 %v4062
  %4642 = vmatprep.subr.mxu0 %v4067
  %4643 = vmatpush1.msra.mxu0 %v4066
  %4644 = vmatprep.subr.mxu0 %v4071
  %4645 = vmatpush1.msra.mxu0 %v4070
  %4646 = vmatprep.subr.mxu0 %v4075
  %4647 = vmatpush1.msra.mxu0 %v4074
  %4648 = vmatprep.subr.mxu0 %v4079
  %4649 = vmatpush1.msra.mxu0 %v4078
  %4650 = vmatprep.subr.mxu0 %v4083
  %4651 = vmatpush1.msra.mxu0 %v4082
  %4652 = vmatprep.subr.mxu0 %v4087
  %4653 = vmatpush1.msra.mxu0 %v4086
  %4654 = vmatprep.subr.mxu0 %v4091
  %4655 = vmatpush1.msra.mxu0 %v4090
  %4656 = vmatprep.subr.mxu0 %v4095
  %4657 = vmatpush1.msra.mxu0 %v4094
  %4658 = vmatprep.subr.mxu0 %v4099
  %4659 = vmatpush1.msra.mxu0 %v4098
  %4660 = vmatprep.subr.mxu0 0.0
  %4661 = vmatpush1.msra.mxu0 0.0
  %4662 = vmatprep.subr.mxu0 0.0
  %4663 = vmatpush1.msra.mxu0 0.0
  %4664 = vmatprep.subr.mxu0 0.0
  %4665 = vmatpush1.msra.mxu0 0.0
  %4666 = vmatprep.subr.mxu0 0.0
  %4667 = vmatpush1.msra.mxu0 0.0
  %4668 = vmatprep.subr.mxu0 0.0
  %4669 = vmatpush1.msra.mxu0 0.0
  %4670 = vmatprep.subr.mxu0 0.0
  %4671 = vmatpush1.msra.mxu0 0.0
  %4672 = vmatprep.subr.mxu0 0.0
  %4673 = vmatpush1.msra.mxu0 0.0
  %4674 = vmatprep.subr.mxu0 0.0
  %4675 = vmatpush1.msra.mxu0 0.0
  %4676 = vmatprep.subr.mxu0 0.0
  %4677 = vmatpush1.msra.mxu0 0.0
  %4678 = vmatprep.subr.mxu0 0.0
  %4679 = vmatpush1.msra.mxu0 0.0
  %4680 = vmatprep.subr.mxu0 0.0
  %4681 = vmatpush1.msra.mxu0 0.0
  %4682 = vmatprep.subr.mxu0 0.0
  %4683 = vmatpush1.msra.mxu0 0.0
  %4684 = vmatprep.subr.mxu0 0.0
  %4685 = vmatpush1.msra.mxu0 0.0
  %4686 = vmatprep.subr.mxu0 0.0
  %4687 = vmatpush1.msra.mxu0 0.0
  %4688 = vmatprep.subr.mxu0 0.0
  %4689 = vmatpush1.msra.mxu0 0.0
  %4690 = vmatprep.subr.mxu0 0.0
  %4691 = vmatpush1.msra.mxu0 0.0
  %4692 = vmatprep.mubr.f32.mxu0 0.0
  %4693 = vmatmul.mubr.f32.gmra.mrb[0].mxu0 %v4623
  %v4694 = vpop.f32.mrb[0].mxu0
  %v4695 = vadd.f32 0.0, %v4694
  %v4696 = vpop.f32.mrb[0].mxu0
  %v4697 = vadd.f32 0.0, %v4696
  %4698 = vdwg.mxu0
  %4699 = vmatprep.subr.mxu0 %v4041
  %4700 = vmatpush1.msra.mxu0 %v4040
  %4701 = vmatprep.subr.mxu0 %v4045
  %4702 = vmatpush1.msra.mxu0 %v4044
  %4703 = vmatprep.subr.mxu0 %v4049
  %4704 = vmatpush1.msra.mxu0 %v4048
  %4705 = vmatprep.subr.mxu0 %v4053
  %4706 = vmatpush1.msra.mxu0 %v4052
  %4707 = vmatprep.subr.mxu0 %v4057
  %4708 = vmatpush1.msra.mxu0 %v4056
  %4709 = vmatprep.subr.mxu0 %v4061
  %4710 = vmatpush1.msra.mxu0 %v4060
  %4711 = vmatprep.subr.mxu0 %v4065
  %4712 = vmatpush1.msra.mxu0 %v4064
  %4713 = vmatprep.subr.mxu0 %v4069
  %4714 = vmatpush1.msra.mxu0 %v4068
  %4715 = vmatprep.subr.mxu0 %v4073
  %4716 = vmatpush1.msra.mxu0 %v4072
  %4717 = vmatprep.subr.mxu0 %v4077
  %4718 = vmatpush1.msra.mxu0 %v4076
  %4719 = vmatprep.subr.mxu0 %v4081
  %4720 = vmatpush1.msra.mxu0 %v4080
  %4721 = vmatprep.subr.mxu0 %v4085
  %4722 = vmatpush1.msra.mxu0 %v4084
  %4723 = vmatprep.subr.mxu0 %v4089
  %4724 = vmatpush1.msra.mxu0 %v4088
  %4725 = vmatprep.subr.mxu0 %v4093
  %4726 = vmatpush1.msra.mxu0 %v4092
  %4727 = vmatprep.subr.mxu0 %v4097
  %4728 = vmatpush1.msra.mxu0 %v4096
  %4729 = vmatprep.subr.mxu0 %v4101
  %4730 = vmatpush1.msra.mxu0 %v4100
  %4731 = vmatprep.subr.mxu0 0.0
  %4732 = vmatpush1.msra.mxu0 0.0
  %4733 = vmatprep.subr.mxu0 0.0
  %4734 = vmatpush1.msra.mxu0 0.0
  %4735 = vmatprep.subr.mxu0 0.0
  %4736 = vmatpush1.msra.mxu0 0.0
  %4737 = vmatprep.subr.mxu0 0.0
  %4738 = vmatpush1.msra.mxu0 0.0
  %4739 = vmatprep.subr.mxu0 0.0
  %4740 = vmatpush1.msra.mxu0 0.0
  %4741 = vmatprep.subr.mxu0 0.0
  %4742 = vmatpush1.msra.mxu0 0.0
  %4743 = vmatprep.subr.mxu0 0.0
  %4744 = vmatpush1.msra.mxu0 0.0
  %4745 = vmatprep.subr.mxu0 0.0
  %4746 = vmatpush1.msra.mxu0 0.0
  %4747 = vmatprep.subr.mxu0 0.0
  %4748 = vmatpush1.msra.mxu0 0.0
  %4749 = vmatprep.subr.mxu0 0.0
  %4750 = vmatpush1.msra.mxu0 0.0
  %4751 = vmatprep.subr.mxu0 0.0
  %4752 = vmatpush1.msra.mxu0 0.0
  %4753 = vmatprep.subr.mxu0 0.0
  %4754 = vmatpush1.msra.mxu0 0.0
  %4755 = vmatprep.subr.mxu0 0.0
  %4756 = vmatpush1.msra.mxu0 0.0
  %4757 = vmatprep.subr.mxu0 0.0
  %4758 = vmatpush1.msra.mxu0 0.0
  %4759 = vmatprep.subr.mxu0 0.0
  %4760 = vmatpush1.msra.mxu0 0.0
  %4761 = vmatprep.subr.mxu0 0.0
  %4762 = vmatpush1.msra.mxu0 0.0
  %4763 = vmatprep.mubr.f32.mxu0 0.0
  %4764 = vmatmul.mubr.f32.gmra.mrb[0].mxu0 %v4623
  %v4765 = vpop.f32.mrb[0].mxu0
  %v4766 = vadd.f32 0.0, %v4765
  %v4767 = vpop.f32.mrb[0].mxu0
  %v4768 = vadd.f32 0.0, %v4767
  %4769 = vdwg.mxu0
  %v4770 = vadd.f32 %v4624, %v4695
  %v4771 = vadd.f32 %v4625, %v4697
  %v4772 = vadd.f32 %v4626, %v4766
  %v4773 = vadd.f32 %v4627, %v4768
  %v4774 = vxor.u32 %v4770, 2147483648
  %v4775 = vxor.u32 %v4771, 2147483648
  %v4776 = vxor.u32 %v4772, 2147483648
  %v4777 = vmul.f32 %v4774, 1.442695
  %v4778 = vpow.pop %v4777
  %v4779 = vmul.f32 %v4775, 1.442695
  %v4780 = vpow.pop %v4779
  %v4781 = vmul.f32 %v4776, 1.442695
  %v4782 = vpow.pop %v4781
  %v4783 = vadd.f32 %v4778, 1.0
  %v4784 = vadd.f32 %v4780, 1.0
  %v4785 = vadd.f32 %v4782, 1.0
  %v4786 = vrcp.pop %v4783
  %v4787 = vmul.f32 1.0, %v4786
  %v4788 = vrcp.pop %v4784
  %v4789 = vmul.f32 1.0, %v4788
  %v4790 = vrcp.pop %v4785
  %v4791 = vmul.f32 1.0, %v4790
  %v4792 = vtanh.pop %v4773
  %v4793 = vmul.f32 %v4789, %v4621
  %v4794 = vmul.f32 %v4787, %v4792
  %v4795 = vadd.f32 %v4793, %v4794
  %v4796 = vtanh.pop %v4795
  %v4797 = vmul.f32 %v4791, %v4796
  %v4798 = vld [vmem:[%s1149] sm:$0xff]
  %v4799 = vld [vmem:[%s1149 + $0x8] sm:$0xff]
  %v4800 = vld [vmem:[%s1149 + $0x10] sm:$0xff]
  %v4801 = vld [vmem:[%s1149 + $0x18] sm:$0xff]
  %4802 = vmatprep.subr.mxu0 %v4039
  %4803 = vmatpush1.msra.mxu0 %v4038
  %4804 = vmatprep.subr.mxu0 %v4043
  %4805 = vmatpush1.msra.mxu0 %v4042
  %4806 = vmatprep.subr.mxu0 %v4047
  %4807 = vmatpush1.msra.mxu0 %v4046
  %4808 = vmatprep.subr.mxu0 %v4051
  %4809 = vmatpush1.msra.mxu0 %v4050
  %4810 = vmatprep.subr.mxu0 %v4055
  %4811 = vmatpush1.msra.mxu0 %v4054
  %4812 = vmatprep.subr.mxu0 %v4059
  %4813 = vmatpush1.msra.mxu0 %v4058
  %4814 = vmatprep.subr.mxu0 %v4063
  %4815 = vmatpush1.msra.mxu0 %v4062
  %4816 = vmatprep.subr.mxu0 %v4067
  %4817 = vmatpush1.msra.mxu0 %v4066
  %4818 = vmatprep.subr.mxu0 %v4071
  %4819 = vmatpush1.msra.mxu0 %v4070
  %4820 = vmatprep.subr.mxu0 %v4075
  %4821 = vmatpush1.msra.mxu0 %v4074
  %4822 = vmatprep.subr.mxu0 %v4079
  %4823 = vmatpush1.msra.mxu0 %v4078
  %4824 = vmatprep.subr.mxu0 %v4083
  %4825 = vmatpush1.msra.mxu0 %v4082
  %4826 = vmatprep.subr.mxu0 %v4087
  %4827 = vmatpush1.msra.mxu0 %v4086
  %4828 = vmatprep.subr.mxu0 %v4091
  %4829 = vmatpush1.msra.mxu0 %v4090
  %4830 = vmatprep.subr.mxu0 %v4095
  %4831 = vmatpush1.msra.mxu0 %v4094
  %4832 = vmatprep.subr.mxu0 %v4099
  %4833 = vmatpush1.msra.mxu0 %v4098
  %4834 = vmatprep.subr.mxu0 0.0
  %4835 = vmatpush1.msra.mxu0 0.0
  %4836 = vmatprep.subr.mxu0 0.0
  %4837 = vmatpush1.msra.mxu0 0.0
  %4838 = vmatprep.subr.mxu0 0.0
  %4839 = vmatpush1.msra.mxu0 0.0
  %4840 = vmatprep.subr.mxu0 0.0
  %4841 = vmatpush1.msra.mxu0 0.0
  %4842 = vmatprep.subr.mxu0 0.0
  %4843 = vmatpush1.msra.mxu0 0.0
  %4844 = vmatprep.subr.mxu0 0.0
  %4845 = vmatpush1.msra.mxu0 0.0
  %4846 = vmatprep.subr.mxu0 0.0
  %4847 = vmatpush1.msra.mxu0 0.0
  %4848 = vmatprep.subr.mxu0 0.0
  %4849 = vmatpush1.msra.mxu0 0.0
  %4850 = vmatprep.subr.mxu0 0.0
  %4851 = vmatpush1.msra.mxu0 0.0
  %4852 = vmatprep.subr.mxu0 0.0
  %4853 = vmatpush1.msra.mxu0 0.0
  %4854 = vmatprep.subr.mxu0 0.0
  %4855 = vmatpush1.msra.mxu0 0.0
  %4856 = vmatprep.subr.mxu0 0.0
  %4857 = vmatpush1.msra.mxu0 0.0
  %4858 = vmatprep.subr.mxu0 0.0
  %4859 = vmatpush1.msra.mxu0 0.0
  %4860 = vmatprep.subr.mxu0 0.0
  %4861 = vmatpush1.msra.mxu0 0.0
  %4862 = vmatprep.subr.mxu0 0.0
  %4863 = vmatpush1.msra.mxu0 0.0
  %4864 = vmatprep.subr.mxu0 0.0
  %4865 = vmatpush1.msra.mxu0 0.0
  %4866 = vmatprep.mubr.f32.mxu0 0.0
  %4867 = vmatmul.mubr.f32.gmra.mrb[0].mxu0 %v4797
  %v4868 = vpop.f32.mrb[0].mxu0
  %v4869 = vadd.f32 0.0, %v4868
  %v4870 = vpop.f32.mrb[0].mxu0
  %v4871 = vadd.f32 0.0, %v4870
  %4872 = vdwg.mxu0
  %4873 = vmatprep.subr.mxu0 %v4041
  %4874 = vmatpush1.msra.mxu0 %v4040
  %4875 = vmatprep.subr.mxu0 %v4045
  %4876 = vmatpush1.msra.mxu0 %v4044
  %4877 = vmatprep.subr.mxu0 %v4049
  %4878 = vmatpush1.msra.mxu0 %v4048
  %4879 = vmatprep.subr.mxu0 %v4053
  %4880 = vmatpush1.msra.mxu0 %v4052
  %4881 = vmatprep.subr.mxu0 %v4057
  %4882 = vmatpush1.msra.mxu0 %v4056
  %4883 = vmatprep.subr.mxu0 %v4061
  %4884 = vmatpush1.msra.mxu0 %v4060
  %4885 = vmatprep.subr.mxu0 %v4065
  %4886 = vmatpush1.msra.mxu0 %v4064
  %4887 = vmatprep.subr.mxu0 %v4069
  %4888 = vmatpush1.msra.mxu0 %v4068
  %4889 = vmatprep.subr.mxu0 %v4073
  %4890 = vmatpush1.msra.mxu0 %v4072
  %4891 = vmatprep.subr.mxu0 %v4077
  %4892 = vmatpush1.msra.mxu0 %v4076
  %4893 = vmatprep.subr.mxu0 %v4081
  %4894 = vmatpush1.msra.mxu0 %v4080
  %4895 = vmatprep.subr.mxu0 %v4085
  %4896 = vmatpush1.msra.mxu0 %v4084
  %4897 = vmatprep.subr.mxu0 %v4089
  %4898 = vmatpush1.msra.mxu0 %v4088
  %4899 = vmatprep.subr.mxu0 %v4093
  %4900 = vmatpush1.msra.mxu0 %v4092
  %4901 = vmatprep.subr.mxu0 %v4097
  %4902 = vmatpush1.msra.mxu0 %v4096
  %4903 = vmatprep.subr.mxu0 %v4101
  %4904 = vmatpush1.msra.mxu0 %v4100
  %4905 = vmatprep.subr.mxu0 0.0
  %4906 = vmatpush1.msra.mxu0 0.0
  %4907 = vmatprep.subr.mxu0 0.0
  %4908 = vmatpush1.msra.mxu0 0.0
  %4909 = vmatprep.subr.mxu0 0.0
  %4910 = vmatpush1.msra.mxu0 0.0
  %4911 = vmatprep.subr.mxu0 0.0
  %4912 = vmatpush1.msra.mxu0 0.0
  %4913 = vmatprep.subr.mxu0 0.0
  %4914 = vmatpush1.msra.mxu0 0.0
  %4915 = vmatprep.subr.mxu0 0.0
  %4916 = vmatpush1.msra.mxu0 0.0
  %4917 = vmatprep.subr.mxu0 0.0
  %4918 = vmatpush1.msra.mxu0 0.0
  %4919 = vmatprep.subr.mxu0 0.0
  %4920 = vmatpush1.msra.mxu0 0.0
  %4921 = vmatprep.subr.mxu0 0.0
  %4922 = vmatpush1.msra.mxu0 0.0
  %4923 = vmatprep.subr.mxu0 0.0
  %4924 = vmatpush1.msra.mxu0 0.0
  %4925 = vmatprep.subr.mxu0 0.0
  %4926 = vmatpush1.msra.mxu0 0.0
  %4927 = vmatprep.subr.mxu0 0.0
  %4928 = vmatpush1.msra.mxu0 0.0
  %4929 = vmatprep.subr.mxu0 0.0
  %4930 = vmatpush1.msra.mxu0 0.0
  %4931 = vmatprep.subr.mxu0 0.0
  %4932 = vmatpush1.msra.mxu0 0.0
  %4933 = vmatprep.subr.mxu0 0.0
  %4934 = vmatpush1.msra.mxu0 0.0
  %4935 = vmatprep.subr.mxu0 0.0
  %4936 = vmatpush1.msra.mxu0 0.0
  %4937 = vmatprep.mubr.f32.mxu0 0.0
  %4938 = vmatmul.mubr.f32.gmra.mrb[0].mxu0 %v4797
  %v4939 = vpop.f32.mrb[0].mxu0
  %v4940 = vadd.f32 0.0, %v4939
  %v4941 = vpop.f32.mrb[0].mxu0
  %v4942 = vadd.f32 0.0, %v4941
  %4943 = vdwg.mxu0
  %v4944 = vadd.f32 %v4798, %v4869
  %v4945 = vadd.f32 %v4799, %v4871
  %v4946 = vadd.f32 %v4800, %v4940
  %v4947 = vadd.f32 %v4801, %v4942
  %v4948 = vxor.u32 %v4944, 2147483648
  %v4949 = vxor.u32 %v4945, 2147483648
  %v4950 = vxor.u32 %v4946, 2147483648
  %v4951 = vmul.f32 %v4948, 1.442695
  %v4952 = vpow.pop %v4951
  %v4953 = vmul.f32 %v4949, 1.442695
  %v4954 = vpow.pop %v4953
  %v4955 = vmul.f32 %v4950, 1.442695
  %v4956 = vpow.pop %v4955
  %v4957 = vadd.f32 %v4952, 1.0
  %v4958 = vadd.f32 %v4954, 1.0
  %v4959 = vadd.f32 %v4956, 1.0
  %v4960 = vrcp.pop %v4957
  %v4961 = vmul.f32 1.0, %v4960
  %v4962 = vrcp.pop %v4958
  %v4963 = vmul.f32 1.0, %v4962
  %v4964 = vrcp.pop %v4959
  %v4965 = vmul.f32 1.0, %v4964
  %v4966 = vtanh.pop %v4947
  %v4967 = vmul.f32 %v4963, %v4795
  %v4968 = vmul.f32 %v4961, %v4966
  %v4969 = vadd.f32 %v4967, %v4968
  %v4970 = vtanh.pop %v4969
  %v4971 = vmul.f32 %v4965, %v4970
  %v4972 = vld [vmem:[%s1328] sm:$0xff]
  %v4973 = vld [vmem:[%s1328 + $0x8] sm:$0xff]
  %v4974 = vld [vmem:[%s1328 + $0x10] sm:$0xff]
  %v4975 = vld [vmem:[%s1328 + $0x18] sm:$0xff]
  %4976 = vmatprep.subr.mxu0 %v4039
  %4977 = vmatpush1.msra.mxu0 %v4038
  %4978 = vmatprep.subr.mxu0 %v4043
  %4979 = vmatpush1.msra.mxu0 %v4042
  %4980 = vmatprep.subr.mxu0 %v4047
  %4981 = vmatpush1.msra.mxu0 %v4046
  %4982 = vmatprep.subr.mxu0 %v4051
  %4983 = vmatpush1.msra.mxu0 %v4050
  %4984 = vmatprep.subr.mxu0 %v4055
  %4985 = vmatpush1.msra.mxu0 %v4054
  %4986 = vmatprep.subr.mxu0 %v4059
  %4987 = vmatpush1.msra.mxu0 %v4058
  %4988 = vmatprep.subr.mxu0 %v4063
  %4989 = vmatpush1.msra.mxu0 %v4062
  %4990 = vmatprep.subr.mxu0 %v4067
  %4991 = vmatpush1.msra.mxu0 %v4066
  %4992 = vmatprep.subr.mxu0 %v4071
  %4993 = vmatpush1.msra.mxu0 %v4070
  %4994 = vmatprep.subr.mxu0 %v4075
  %4995 = vmatpush1.msra.mxu0 %v4074
  %4996 = vmatprep.subr.mxu0 %v4079
  %4997 = vmatpush1.msra.mxu0 %v4078
  %4998 = vmatprep.subr.mxu0 %v4083
  %4999 = vmatpush1.msra.mxu0 %v4082
  %5000 = vmatprep.subr.mxu0 %v4087
  %5001 = vmatpush1.msra.mxu0 %v4086
  %5002 = vmatprep.subr.mxu0 %v4091
  %5003 = vmatpush1.msra.mxu0 %v4090
  %5004 = vmatprep.subr.mxu0 %v4095
  %5005 = vmatpush1.msra.mxu0 %v4094
  %5006 = vmatprep.subr.mxu0 %v4099
  %5007 = vmatpush1.msra.mxu0 %v4098
  %5008 = vmatprep.subr.mxu0 0.0
  %5009 = vmatpush1.msra.mxu0 0.0
  %5010 = vmatprep.subr.mxu0 0.0
  %5011 = vmatpush1.msra.mxu0 0.0
  %5012 = vmatprep.subr.mxu0 0.0
  %5013 = vmatpush1.msra.mxu0 0.0
  %5014 = vmatprep.subr.mxu0 0.0
  %5015 = vmatpush1.msra.mxu0 0.0
  %5016 = vmatprep.subr.mxu0 0.0
  %5017 = vmatpush1.msra.mxu0 0.0
  %5018 = vmatprep.subr.mxu0 0.0
  %5019 = vmatpush1.msra.mxu0 0.0
  %5020 = vmatprep.subr.mxu0 0.0
  %5021 = vmatpush1.msra.mxu0 0.0
  %5022 = vmatprep.subr.mxu0 0.0
  %5023 = vmatpush1.msra.mxu0 0.0
  %5024 = vmatprep.subr.mxu0 0.0
  %5025 = vmatpush1.msra.mxu0 0.0
  %5026 = vmatprep.subr.mxu0 0.0
  %5027 = vmatpush1.msra.mxu0 0.0
  %5028 = vmatprep.subr.mxu0 0.0
  %5029 = vmatpush1.msra.mxu0 0.0
  %5030 = vmatprep.subr.mxu0 0.0
  %5031 = vmatpush1.msra.mxu0 0.0
  %5032 = vmatprep.subr.mxu0 0.0
  %5033 = vmatpush1.msra.mxu0 0.0
  %5034 = vmatprep.subr.mxu0 0.0
  %5035 = vmatpush1.msra.mxu0 0.0
  %5036 = vmatprep.subr.mxu0 0.0
  %5037 = vmatpush1.msra.mxu0 0.0
  %5038 = vmatprep.subr.mxu0 0.0
  %5039 = vmatpush1.msra.mxu0 0.0
  %5040 = vmatprep.mubr.f32.mxu0 0.0
  %5041 = vmatmul.mubr.f32.gmra.mrb[0].mxu0 %v4971
  %v5042 = vpop.f32.mrb[0].mxu0
  %v5043 = vadd.f32 0.0, %v5042
  %v5044 = vpop.f32.mrb[0].mxu0
  %v5045 = vadd.f32 0.0, %v5044
  %5046 = vdwg.mxu0
  %5047 = vmatprep.subr.mxu0 %v4041
  %5048 = vmatpush1.msra.mxu0 %v4040
  %5049 = vmatprep.subr.mxu0 %v4045
  %5050 = vmatpush1.msra.mxu0 %v4044
  %5051 = vmatprep.subr.mxu0 %v4049
  %5052 = vmatpush1.msra.mxu0 %v4048
  %5053 = vmatprep.subr.mxu0 %v4053
  %5054 = vmatpush1.msra.mxu0 %v4052
  %5055 = vmatprep.subr.mxu0 %v4057
  %5056 = vmatpush1.msra.mxu0 %v4056
  %5057 = vmatprep.subr.mxu0 %v4061
  %5058 = vmatpush1.msra.mxu0 %v4060
  %5059 = vmatprep.subr.mxu0 %v4065
  %5060 = vmatpush1.msra.mxu0 %v4064
  %5061 = vmatprep.subr.mxu0 %v4069
  %5062 = vmatpush1.msra.mxu0 %v4068
  %5063 = vmatprep.subr.mxu0 %v4073
  %5064 = vmatpush1.msra.mxu0 %v4072
  %5065 = vmatprep.subr.mxu0 %v4077
  %5066 = vmatpush1.msra.mxu0 %v4076
  %5067 = vmatprep.subr.mxu0 %v4081
  %5068 = vmatpush1.msra.mxu0 %v4080
  %5069 = vmatprep.subr.mxu0 %v4085
  %5070 = vmatpush1.msra.mxu0 %v4084
  %5071 = vmatprep.subr.mxu0 %v4089
  %5072 = vmatpush1.msra.mxu0 %v4088
  %5073 = vmatprep.subr.mxu0 %v4093
  %5074 = vmatpush1.msra.mxu0 %v4092
  %5075 = vmatprep.subr.mxu0 %v4097
  %5076 = vmatpush1.msra.mxu0 %v4096
  %5077 = vmatprep.subr.mxu0 %v4101
  %5078 = vmatpush1.msra.mxu0 %v4100
  %5079 = vmatprep.subr.mxu0 0.0
  %5080 = vmatpush1.msra.mxu0 0.0
  %5081 = vmatprep.subr.mxu0 0.0
  %5082 = vmatpush1.msra.mxu0 0.0
  %5083 = vmatprep.subr.mxu0 0.0
  %5084 = vmatpush1.msra.mxu0 0.0
  %5085 = vmatprep.subr.mxu0 0.0
  %5086 = vmatpush1.msra.mxu0 0.0
  %5087 = vmatprep.subr.mxu0 0.0
  %5088 = vmatpush1.msra.mxu0 0.0
  %5089 = vmatprep.subr.mxu0 0.0
  %5090 = vmatpush1.msra.mxu0 0.0
  %5091 = vmatprep.subr.mxu0 0.0
  %5092 = vmatpush1.msra.mxu0 0.0
  %5093 = vmatprep.subr.mxu0 0.0
  %5094 = vmatpush1.msra.mxu0 0.0
  %5095 = vmatprep.subr.mxu0 0.0
  %5096 = vmatpush1.msra.mxu0 0.0
  %5097 = vmatprep.subr.mxu0 0.0
  %5098 = vmatpush1.msra.mxu0 0.0
  %5099 = vmatprep.subr.mxu0 0.0
  %5100 = vmatpush1.msra.mxu0 0.0
  %5101 = vmatprep.subr.mxu0 0.0
  %5102 = vmatpush1.msra.mxu0 0.0
  %5103 = vmatprep.subr.mxu0 0.0
  %5104 = vmatpush1.msra.mxu0 0.0
  %5105 = vmatprep.subr.mxu0 0.0
  %5106 = vmatpush1.msra.mxu0 0.0
  %5107 = vmatprep.subr.mxu0 0.0
  %5108 = vmatpush1.msra.mxu0 0.0
  %5109 = vmatprep.subr.mxu0 0.0
  %5110 = vmatpush1.msra.mxu0 0.0
  %5111 = vmatprep.mubr.f32.mxu0 0.0
  %5112 = vmatmul.mubr.f32.gmra.mrb[0].mxu0 %v4971
  %v5113 = vpop.f32.mrb[0].mxu0
  %v5114 = vadd.f32 0.0, %v5113
  %v5115 = vpop.f32.mrb[0].mxu0
  %v5116 = vadd.f32 0.0, %v5115
  %5117 = vdwg.mxu0
  %v5118 = vadd.f32 %v4972, %v5043
  %v5119 = vadd.f32 %v4973, %v5045
  %v5120 = vadd.f32 %v4974, %v5114
  %v5121 = vadd.f32 %v4975, %v5116
  %v5122 = vxor.u32 %v5118, 2147483648
  %v5123 = vxor.u32 %v5119, 2147483648
  %v5124 = vxor.u32 %v5120, 2147483648
  %v5125 = vmul.f32 %v5122, 1.442695
  %v5126 = vpow.pop %v5125
  %v5127 = vmul.f32 %v5123, 1.442695
  %v5128 = vpow.pop %v5127
  %v5129 = vmul.f32 %v5124, 1.442695
  %v5130 = vpow.pop %v5129
  %v5131 = vadd.f32 %v5126, 1.0
  %v5132 = vadd.f32 %v5128, 1.0
  %v5133 = vadd.f32 %v5130, 1.0
  %v5134 = vrcp.pop %v5131
  %v5135 = vmul.f32 1.0, %v5134
  %v5136 = vrcp.pop %v5132
  %v5137 = vmul.f32 1.0, %v5136
  %v5138 = vrcp.pop %v5133
  %v5139 = vmul.f32 1.0, %v5138
  %v5140 = vtanh.pop %v5121
  %v5141 = vmul.f32 %v5137, %v4969
  %v5142 = vmul.f32 %v5135, %v5140
  %v5143 = vadd.f32 %v5141, %v5142
  %v5144 = vtanh.pop %v5143
  %v5145 = vmul.f32 %v5139, %v5144
  %v5146 = vld [vmem:[%s1507] sm:$0xff]
  %v5147 = vld [vmem:[%s1507 + $0x8] sm:$0xff]
  %v5148 = vld [vmem:[%s1507 + $0x10] sm:$0xff]
  %v5149 = vld [vmem:[%s1507 + $0x18] sm:$0xff]
  %5150 = vmatprep.subr.mxu0 %v4039
  %5151 = vmatpush1.msra.mxu0 %v4038
  %5152 = vmatprep.subr.mxu0 %v4043
  %5153 = vmatpush1.msra.mxu0 %v4042
  %5154 = vmatprep.subr.mxu0 %v4047
  %5155 = vmatpush1.msra.mxu0 %v4046
  %5156 = vmatprep.subr.mxu0 %v4051
  %5157 = vmatpush1.msra.mxu0 %v4050
  %5158 = vmatprep.subr.mxu0 %v4055
  %5159 = vmatpush1.msra.mxu0 %v4054
  %5160 = vmatprep.subr.mxu0 %v4059
  %5161 = vmatpush1.msra.mxu0 %v4058
  %5162 = vmatprep.subr.mxu0 %v4063
  %5163 = vmatpush1.msra.mxu0 %v4062
  %5164 = vmatprep.subr.mxu0 %v4067
  %5165 = vmatpush1.msra.mxu0 %v4066
  %5166 = vmatprep.subr.mxu0 %v4071
  %5167 = vmatpush1.msra.mxu0 %v4070
  %5168 = vmatprep.subr.mxu0 %v4075
  %5169 = vmatpush1.msra.mxu0 %v4074
  %5170 = vmatprep.subr.mxu0 %v4079
  %5171 = vmatpush1.msra.mxu0 %v4078
  %5172 = vmatprep.subr.mxu0 %v4083
  %5173 = vmatpush1.msra.mxu0 %v4082
  %5174 = vmatprep.subr.mxu0 %v4087
  %5175 = vmatpush1.msra.mxu0 %v4086
  %5176 = vmatprep.subr.mxu0 %v4091
  %5177 = vmatpush1.msra.mxu0 %v4090
  %5178 = vmatprep.subr.mxu0 %v4095
  %5179 = vmatpush1.msra.mxu0 %v4094
  %5180 = vmatprep.subr.mxu0 %v4099
  %5181 = vmatpush1.msra.mxu0 %v4098
  %5182 = vmatprep.subr.mxu0 0.0
  %5183 = vmatpush1.msra.mxu0 0.0
  %5184 = vmatprep.subr.mxu0 0.0
  %5185 = vmatpush1.msra.mxu0 0.0
  %5186 = vmatprep.subr.mxu0 0.0
  %5187 = vmatpush1.msra.mxu0 0.0
  %5188 = vmatprep.subr.mxu0 0.0
  %5189 = vmatpush1.msra.mxu0 0.0
  %5190 = vmatprep.subr.mxu0 0.0
  %5191 = vmatpush1.msra.mxu0 0.0
  %5192 = vmatprep.subr.mxu0 0.0
  %5193 = vmatpush1.msra.mxu0 0.0
  %5194 = vmatprep.subr.mxu0 0.0
  %5195 = vmatpush1.msra.mxu0 0.0
  %5196 = vmatprep.subr.mxu0 0.0
  %5197 = vmatpush1.msra.mxu0 0.0
  %5198 = vmatprep.subr.mxu0 0.0
  %5199 = vmatpush1.msra.mxu0 0.0
  %5200 = vmatprep.subr.mxu0 0.0
  %5201 = vmatpush1.msra.mxu0 0.0
  %5202 = vmatprep.subr.mxu0 0.0
  %5203 = vmatpush1.msra.mxu0 0.0
  %5204 = vmatprep.subr.mxu0 0.0
  %5205 = vmatpush1.msra.mxu0 0.0
  %5206 = vmatprep.subr.mxu0 0.0
  %5207 = vmatpush1.msra.mxu0 0.0
  %5208 = vmatprep.subr.mxu0 0.0
  %5209 = vmatpush1.msra.mxu0 0.0
  %5210 = vmatprep.subr.mxu0 0.0
  %5211 = vmatpush1.msra.mxu0 0.0
  %5212 = vmatprep.subr.mxu0 0.0
  %5213 = vmatpush1.msra.mxu0 0.0
  %5214 = vmatprep.mubr.f32.mxu0 0.0
  %5215 = vmatmul.mubr.f32.gmra.mrb[0].mxu0 %v5145
  %v5216 = vpop.f32.mrb[0].mxu0
  %v5217 = vadd.f32 0.0, %v5216
  %v5218 = vpop.f32.mrb[0].mxu0
  %v5219 = vadd.f32 0.0, %v5218
  %5220 = vdwg.mxu0
  %5221 = vmatprep.subr.mxu0 %v4041
  %5222 = vmatpush1.msra.mxu0 %v4040
  %5223 = vmatprep.subr.mxu0 %v4045
  %5224 = vmatpush1.msra.mxu0 %v4044
  %5225 = vmatprep.subr.mxu0 %v4049
  %5226 = vmatpush1.msra.mxu0 %v4048
  %5227 = vmatprep.subr.mxu0 %v4053
  %5228 = vmatpush1.msra.mxu0 %v4052
  %5229 = vmatprep.subr.mxu0 %v4057
  %5230 = vmatpush1.msra.mxu0 %v4056
  %5231 = vmatprep.subr.mxu0 %v4061
  %5232 = vmatpush1.msra.mxu0 %v4060
  %5233 = vmatprep.subr.mxu0 %v4065
  %5234 = vmatpush1.msra.mxu0 %v4064
  %5235 = vmatprep.subr.mxu0 %v4069
  %5236 = vmatpush1.msra.mxu0 %v4068
  %5237 = vmatprep.subr.mxu0 %v4073
  %5238 = vmatpush1.msra.mxu0 %v4072
  %5239 = vmatprep.subr.mxu0 %v4077
  %5240 = vmatpush1.msra.mxu0 %v4076
  %5241 = vmatprep.subr.mxu0 %v4081
  %5242 = vmatpush1.msra.mxu0 %v4080
  %5243 = vmatprep.subr.mxu0 %v4085
  %5244 = vmatpush1.msra.mxu0 %v4084
  %5245 = vmatprep.subr.mxu0 %v4089
  %5246 = vmatpush1.msra.mxu0 %v4088
  %5247 = vmatprep.subr.mxu0 %v4093
  %5248 = vmatpush1.msra.mxu0 %v4092
  %5249 = vmatprep.subr.mxu0 %v4097
  %5250 = vmatpush1.msra.mxu0 %v4096
  %5251 = vmatprep.subr.mxu0 %v4101
  %5252 = vmatpush1.msra.mxu0 %v4100
  %5253 = vmatprep.subr.mxu0 0.0
  %5254 = vmatpush1.msra.mxu0 0.0
  %5255 = vmatprep.subr.mxu0 0.0
  %5256 = vmatpush1.msra.mxu0 0.0
  %5257 = vmatprep.subr.mxu0 0.0
  %5258 = vmatpush1.msra.mxu0 0.0
  %5259 = vmatprep.subr.mxu0 0.0
  %5260 = vmatpush1.msra.mxu0 0.0
  %5261 = vmatprep.subr.mxu0 0.0
  %5262 = vmatpush1.msra.mxu0 0.0
  %5263 = vmatprep.subr.mxu0 0.0
  %5264 = vmatpush1.msra.mxu0 0.0
  %5265 = vmatprep.subr.mxu0 0.0
  %5266 = vmatpush1.msra.mxu0 0.0
  %5267 = vmatprep.subr.mxu0 0.0
  %5268 = vmatpush1.msra.mxu0 0.0
  %5269 = vmatprep.subr.mxu0 0.0
  %5270 = vmatpush1.msra.mxu0 0.0
  %5271 = vmatprep.subr.mxu0 0.0
  %5272 = vmatpush1.msra.mxu0 0.0
  %5273 = vmatprep.subr.mxu0 0.0
  %5274 = vmatpush1.msra.mxu0 0.0
  %5275 = vmatprep.subr.mxu0 0.0
  %5276 = vmatpush1.msra.mxu0 0.0
  %5277 = vmatprep.subr.mxu0 0.0
  %5278 = vmatpush1.msra.mxu0 0.0
  %5279 = vmatprep.subr.mxu0 0.0
  %5280 = vmatpush1.msra.mxu0 0.0
  %5281 = vmatprep.subr.mxu0 0.0
  %5282 = vmatpush1.msra.mxu0 0.0
  %5283 = vmatprep.subr.mxu0 0.0
  %5284 = vmatpush1.msra.mxu0 0.0
  %5285 = vmatprep.mubr.f32.mxu0 0.0
  %5286 = vmatmul.mubr.f32.gmra.mrb[0].mxu0 %v5145
  %v5287 = vpop.f32.mrb[0].mxu0
  %v5288 = vadd.f32 0.0, %v5287
  %v5289 = vpop.f32.mrb[0].mxu0
  %v5290 = vadd.f32 0.0, %v5289
  %5291 = vdwg.mxu0
  %v5292 = vadd.f32 %v5146, %v5217
  %v5293 = vadd.f32 %v5147, %v5219
  %v5294 = vadd.f32 %v5148, %v5288
  %v5295 = vadd.f32 %v5149, %v5290
  %v5296 = vxor.u32 %v5292, 2147483648
  %v5297 = vxor.u32 %v5293, 2147483648
  %v5298 = vxor.u32 %v5294, 2147483648
  %v5299 = vmul.f32 %v5296, 1.442695
  %v5300 = vpow.pop %v5299
  %v5301 = vmul.f32 %v5297, 1.442695
  %v5302 = vpow.pop %v5301
  %v5303 = vmul.f32 %v5298, 1.442695
  %v5304 = vpow.pop %v5303
  %v5305 = vadd.f32 %v5300, 1.0
  %v5306 = vadd.f32 %v5302, 1.0
  %v5307 = vadd.f32 %v5304, 1.0
  %v5308 = vrcp.pop %v5305
  %v5309 = vmul.f32 1.0, %v5308
  %v5310 = vrcp.pop %v5306
  %v5311 = vmul.f32 1.0, %v5310
  %v5312 = vrcp.pop %v5307
  %v5313 = vmul.f32 1.0, %v5312
  %v5314 = vtanh.pop %v5295
  %v5315 = vmul.f32 %v5311, %v5143
  %v5316 = vmul.f32 %v5309, %v5314
  %v5317 = vadd.f32 %v5315, %v5316
  %v5318 = vtanh.pop %v5317
  %v5319 = vmul.f32 %v5313, %v5318
  %v5320 = vld [vmem:[%s1686] sm:$0xff]
  %v5321 = vld [vmem:[%s1686 + $0x8] sm:$0xff]
  %v5322 = vld [vmem:[%s1686 + $0x10] sm:$0xff]
  %v5323 = vld [vmem:[%s1686 + $0x18] sm:$0xff]
  %5324 = vmatprep.subr.mxu0 %v4039
  %5325 = vmatpush1.msra.mxu0 %v4038
  %5326 = vmatprep.subr.mxu0 %v4043
  %5327 = vmatpush1.msra.mxu0 %v4042
  %5328 = vmatprep.subr.mxu0 %v4047
  %5329 = vmatpush1.msra.mxu0 %v4046
  %5330 = vmatprep.subr.mxu0 %v4051
  %5331 = vmatpush1.msra.mxu0 %v4050
  %5332 = vmatprep.subr.mxu0 %v4055
  %5333 = vmatpush1.msra.mxu0 %v4054
  %5334 = vmatprep.subr.mxu0 %v4059
  %5335 = vmatpush1.msra.mxu0 %v4058
  %5336 = vmatprep.subr.mxu0 %v4063
  %5337 = vmatpush1.msra.mxu0 %v4062
  %5338 = vmatprep.subr.mxu0 %v4067
  %5339 = vmatpush1.msra.mxu0 %v4066
  %5340 = vmatprep.subr.mxu0 %v4071
  %5341 = vmatpush1.msra.mxu0 %v4070
  %5342 = vmatprep.subr.mxu0 %v4075
  %5343 = vmatpush1.msra.mxu0 %v4074
  %5344 = vmatprep.subr.mxu0 %v4079
  %5345 = vmatpush1.msra.mxu0 %v4078
  %5346 = vmatprep.subr.mxu0 %v4083
  %5347 = vmatpush1.msra.mxu0 %v4082
  %5348 = vmatprep.subr.mxu0 %v4087
  %5349 = vmatpush1.msra.mxu0 %v4086
  %5350 = vmatprep.subr.mxu0 %v4091
  %5351 = vmatpush1.msra.mxu0 %v4090
  %5352 = vmatprep.subr.mxu0 %v4095
  %5353 = vmatpush1.msra.mxu0 %v4094
  %5354 = vmatprep.subr.mxu0 %v4099
  %5355 = vmatpush1.msra.mxu0 %v4098
  %5356 = vmatprep.subr.mxu0 0.0
  %5357 = vmatpush1.msra.mxu0 0.0
  %5358 = vmatprep.subr.mxu0 0.0
  %5359 = vmatpush1.msra.mxu0 0.0
  %5360 = vmatprep.subr.mxu0 0.0
  %5361 = vmatpush1.msra.mxu0 0.0
  %5362 = vmatprep.subr.mxu0 0.0
  %5363 = vmatpush1.msra.mxu0 0.0
  %5364 = vmatprep.subr.mxu0 0.0
  %5365 = vmatpush1.msra.mxu0 0.0
  %5366 = vmatprep.subr.mxu0 0.0
  %5367 = vmatpush1.msra.mxu0 0.0
  %5368 = vmatprep.subr.mxu0 0.0
  %5369 = vmatpush1.msra.mxu0 0.0
  %5370 = vmatprep.subr.mxu0 0.0
  %5371 = vmatpush1.msra.mxu0 0.0
  %5372 = vmatprep.subr.mxu0 0.0
  %5373 = vmatpush1.msra.mxu0 0.0
  %5374 = vmatprep.subr.mxu0 0.0
  %5375 = vmatpush1.msra.mxu0 0.0
  %5376 = vmatprep.subr.mxu0 0.0
  %5377 = vmatpush1.msra.mxu0 0.0
  %5378 = vmatprep.subr.mxu0 0.0
  %5379 = vmatpush1.msra.mxu0 0.0
  %5380 = vmatprep.subr.mxu0 0.0
  %5381 = vmatpush1.msra.mxu0 0.0
  %5382 = vmatprep.subr.mxu0 0.0
  %5383 = vmatpush1.msra.mxu0 0.0
  %5384 = vmatprep.subr.mxu0 0.0
  %5385 = vmatpush1.msra.mxu0 0.0
  %5386 = vmatprep.subr.mxu0 0.0
  %5387 = vmatpush1.msra.mxu0 0.0
  %5388 = vmatprep.mubr.f32.mxu0 0.0
  %5389 = vmatmul.mubr.f32.gmra.mrb[0].mxu0 %v5319
  %v5390 = vpop.f32.mrb[0].mxu0
  %v5391 = vadd.f32 0.0, %v5390
  %v5392 = vpop.f32.mrb[0].mxu0
  %v5393 = vadd.f32 0.0, %v5392
  %5394 = vdwg.mxu0
  %5395 = vmatprep.subr.mxu0 %v4041
  %5396 = vmatpush1.msra.mxu0 %v4040
  %5397 = vmatprep.subr.mxu0 %v4045
  %5398 = vmatpush1.msra.mxu0 %v4044
  %5399 = vmatprep.subr.mxu0 %v4049
  %5400 = vmatpush1.msra.mxu0 %v4048
  %5401 = vmatprep.subr.mxu0 %v4053
  %5402 = vmatpush1.msra.mxu0 %v4052
  %5403 = vmatprep.subr.mxu0 %v4057
  %5404 = vmatpush1.msra.mxu0 %v4056
  %5405 = vmatprep.subr.mxu0 %v4061
  %5406 = vmatpush1.msra.mxu0 %v4060
  %5407 = vmatprep.subr.mxu0 %v4065
  %5408 = vmatpush1.msra.mxu0 %v4064
  %5409 = vmatprep.subr.mxu0 %v4069
  %5410 = vmatpush1.msra.mxu0 %v4068
  %5411 = vmatprep.subr.mxu0 %v4073
  %5412 = vmatpush1.msra.mxu0 %v4072
  %5413 = vmatprep.subr.mxu0 %v4077
  %5414 = vmatpush1.msra.mxu0 %v4076
  %5415 = vmatprep.subr.mxu0 %v4081
  %5416 = vmatpush1.msra.mxu0 %v4080
  %5417 = vmatprep.subr.mxu0 %v4085
  %5418 = vmatpush1.msra.mxu0 %v4084
  %5419 = vmatprep.subr.mxu0 %v4089
  %5420 = vmatpush1.msra.mxu0 %v4088
  %5421 = vmatprep.subr.mxu0 %v4093
  %5422 = vmatpush1.msra.mxu0 %v4092
  %5423 = vmatprep.subr.mxu0 %v4097
  %5424 = vmatpush1.msra.mxu0 %v4096
  %5425 = vmatprep.subr.mxu0 %v4101
  %5426 = vmatpush1.msra.mxu0 %v4100
  %5427 = vmatprep.subr.mxu0 0.0
  %5428 = vmatpush1.msra.mxu0 0.0
  %5429 = vmatprep.subr.mxu0 0.0
  %5430 = vmatpush1.msra.mxu0 0.0
  %5431 = vmatprep.subr.mxu0 0.0
  %5432 = vmatpush1.msra.mxu0 0.0
  %5433 = vmatprep.subr.mxu0 0.0
  %5434 = vmatpush1.msra.mxu0 0.0
  %5435 = vmatprep.subr.mxu0 0.0
  %5436 = vmatpush1.msra.mxu0 0.0
  %5437 = vmatprep.subr.mxu0 0.0
  %5438 = vmatpush1.msra.mxu0 0.0
  %5439 = vmatprep.subr.mxu0 0.0
  %5440 = vmatpush1.msra.mxu0 0.0
  %5441 = vmatprep.subr.mxu0 0.0
  %5442 = vmatpush1.msra.mxu0 0.0
  %5443 = vmatprep.subr.mxu0 0.0
  %5444 = vmatpush1.msra.mxu0 0.0
  %5445 = vmatprep.subr.mxu0 0.0
  %5446 = vmatpush1.msra.mxu0 0.0
  %5447 = vmatprep.subr.mxu0 0.0
  %5448 = vmatpush1.msra.mxu0 0.0
  %5449 = vmatprep.subr.mxu0 0.0
  %5450 = vmatpush1.msra.mxu0 0.0
  %5451 = vmatprep.subr.mxu0 0.0
  %5452 = vmatpush1.msra.mxu0 0.0
  %5453 = vmatprep.subr.mxu0 0.0
  %5454 = vmatpush1.msra.mxu0 0.0
  %5455 = vmatprep.subr.mxu0 0.0
  %5456 = vmatpush1.msra.mxu0 0.0
  %5457 = vmatprep.subr.mxu0 0.0
  %5458 = vmatpush1.msra.mxu0 0.0
  %5459 = vmatprep.mubr.f32.mxu0 0.0
  %5460 = vmatmul.mubr.f32.gmra.mrb[0].mxu0 %v5319
  %v5461 = vpop.f32.mrb[0].mxu0
  %v5462 = vadd.f32 0.0, %v5461
  %v5463 = vpop.f32.mrb[0].mxu0
  %v5464 = vadd.f32 0.0, %v5463
  %5465 = vdwg.mxu0
  %v5466 = vadd.f32 %v5320, %v5391
  %v5467 = vadd.f32 %v5321, %v5393
  %v5468 = vadd.f32 %v5322, %v5462
  %v5469 = vadd.f32 %v5323, %v5464
  %v5470 = vxor.u32 %v5466, 2147483648
  %v5471 = vxor.u32 %v5467, 2147483648
  %v5472 = vxor.u32 %v5468, 2147483648
  %v5473 = vmul.f32 %v5470, 1.442695
  %v5474 = vpow.pop %v5473
  %v5475 = vmul.f32 %v5471, 1.442695
  %v5476 = vpow.pop %v5475
  %v5477 = vmul.f32 %v5472, 1.442695
  %v5478 = vpow.pop %v5477
  %v5479 = vadd.f32 %v5474, 1.0
  %v5480 = vadd.f32 %v5476, 1.0
  %v5481 = vadd.f32 %v5478, 1.0
  %v5482 = vrcp.pop %v5479
  %v5483 = vmul.f32 1.0, %v5482
  %v5484 = vrcp.pop %v5480
  %v5485 = vmul.f32 1.0, %v5484
  %v5486 = vrcp.pop %v5481
  %v5487 = vmul.f32 1.0, %v5486
  %v5488 = vtanh.pop %v5469
  %v5489 = vmul.f32 %v5485, %v5317
  %v5490 = vmul.f32 %v5483, %v5488
  %v5491 = vadd.f32 %v5489, %v5490
  %v5492 = vtanh.pop %v5491
  %v5493 = vmul.f32 %v5487, %v5492
  %v5494 = vld [vmem:[%s10] sm:$0xff]
  %v5495 = vld [vmem:[%s10 + $0x8] sm:$0xff]
  %v5496 = vld [vmem:[%s10 + $0x10] sm:$0xff]
  %v5497 = vld [vmem:[%s10 + $0x18] sm:$0xff]
  %v5498 = vld [vmem:[%s10 + $0x20] sm:$0xff]
  %v5499 = vld [vmem:[%s10 + $0x28] sm:$0xff]
  %v5500 = vld [vmem:[%s10 + $0x30] sm:$0xff]
  %v5501 = vld [vmem:[%s10 + $0x38] sm:$0xff]
  %v5502 = vld [vmem:[%s10 + $0x40] sm:$0xff]
  %v5503 = vld [vmem:[%s10 + $0x48] sm:$0xff]
  %v5504 = vld [vmem:[%s10 + $0x50] sm:$0xff]
  %v5505 = vld [vmem:[%s10 + $0x58] sm:$0xff]
  %v5506 = vld [vmem:[%s10 + $0x60] sm:$0xff]
  %v5507 = vld [vmem:[%s10 + $0x68] sm:$0xff]
  %v5508 = vld [vmem:[%s10 + $0x70] sm:$0xff]
  %v5509 = vld [vmem:[%s10 + $0x78] sm:$0xff]
  %v5510 = vld [vmem:[%s11] sm:$0x1]
  %v5512 = vlaneseq
  %v5513 = vshrl.u32 %v5512, 7
  %v5514 = vsub.s32 0, %v5513
  %v5515 = vrot.slane %v5510, %v5514
  %5517 = vmatprep.subr.mxu0 0.0
  %5518 = vmatpush1.msra.mxu0 %v5494
  %5519 = vmatprep.subr.mxu0 0.0
  %5520 = vmatpush1.msra.mxu0 %v5495
  %5521 = vmatprep.subr.mxu0 0.0
  %5522 = vmatpush1.msra.mxu0 %v5496
  %5523 = vmatprep.subr.mxu0 0.0
  %5524 = vmatpush1.msra.mxu0 %v5497
  %5525 = vmatprep.subr.mxu0 0.0
  %5526 = vmatpush1.msra.mxu0 %v5498
  %5527 = vmatprep.subr.mxu0 0.0
  %5528 = vmatpush1.msra.mxu0 %v5499
  %5529 = vmatprep.subr.mxu0 0.0
  %5530 = vmatpush1.msra.mxu0 %v5500
  %5531 = vmatprep.subr.mxu0 0.0
  %5532 = vmatpush1.msra.mxu0 %v5501
  %5533 = vmatprep.subr.mxu0 0.0
  %5534 = vmatpush1.msra.mxu0 %v5502
  %5535 = vmatprep.subr.mxu0 0.0
  %5536 = vmatpush1.msra.mxu0 %v5503
  %5537 = vmatprep.subr.mxu0 0.0
  %5538 = vmatpush1.msra.mxu0 %v5504
  %5539 = vmatprep.subr.mxu0 0.0
  %5540 = vmatpush1.msra.mxu0 %v5505
  %5541 = vmatprep.subr.mxu0 0.0
  %5542 = vmatpush1.msra.mxu0 %v5506
  %5543 = vmatprep.subr.mxu0 0.0
  %5544 = vmatpush1.msra.mxu0 %v5507
  %5545 = vmatprep.subr.mxu0 0.0
  %5546 = vmatpush1.msra.mxu0 %v5508
  %5547 = vmatprep.subr.mxu0 0.0
  %5548 = vmatpush1.msra.mxu0 %v5509
  %5549 = vmatprep.subr.mxu0 0.0
  %5550 = vmatpush1.msra.mxu0 0.0
  %5551 = vmatprep.subr.mxu0 0.0
  %5552 = vmatpush1.msra.mxu0 0.0
  %5553 = vmatprep.subr.mxu0 0.0
  %5554 = vmatpush1.msra.mxu0 0.0
  %5555 = vmatprep.subr.mxu0 0.0
  %5556 = vmatpush1.msra.mxu0 0.0
  %5557 = vmatprep.subr.mxu0 0.0
  %5558 = vmatpush1.msra.mxu0 0.0
  %5559 = vmatprep.subr.mxu0 0.0
  %5560 = vmatpush1.msra.mxu0 0.0
  %5561 = vmatprep.subr.mxu0 0.0
  %5562 = vmatpush1.msra.mxu0 0.0
  %5563 = vmatprep.subr.mxu0 0.0
  %5564 = vmatpush1.msra.mxu0 0.0
  %5565 = vmatprep.subr.mxu0 0.0
  %5566 = vmatpush1.msra.mxu0 0.0
  %5567 = vmatprep.subr.mxu0 0.0
  %5568 = vmatpush1.msra.mxu0 0.0
  %5569 = vmatprep.subr.mxu0 0.0
  %5570 = vmatpush1.msra.mxu0 0.0
  %5571 = vmatprep.subr.mxu0 0.0
  %5572 = vmatpush1.msra.mxu0 0.0
  %5573 = vmatprep.subr.mxu0 0.0
  %5574 = vmatpush1.msra.mxu0 0.0
  %5575 = vmatprep.subr.mxu0 0.0
  %5576 = vmatpush1.msra.mxu0 0.0
  %5577 = vmatprep.subr.mxu0 0.0
  %5578 = vmatpush1.msra.mxu0 0.0
  %5579 = vmatprep.subr.mxu0 0.0
  %5580 = vmatpush1.msra.mxu0 0.0
  %5581 = vmatprep.mubr.f32.mxu0 0.0
  %5582 = vmatmul.mubr.f32.gmra.mrb[0].mxu0 %v5493
  %v5583 = vpop.f32.mrb[0].mxu0
  %v5584 = vadd.f32 %v5515, %v5583
  %v5585 = vpop.f32.mrb[0].mxu0
  %5586 = vdwg.mxu0
  %v5587 = vmax.f32 %v5584, 0.0
  %v5588 = vld [vmem:[%s12] sm:$0xff]
  %v5589 = vld [vmem:[%s12 + $0x8] sm:$0xff]
  %v5590 = vld [vmem:[%s12 + $0x10] sm:$0xff]
  %v5591 = vld [vmem:[%s12 + $0x18] sm:$0xff]
  %v5592 = vld [vmem:[%s12 + $0x20] sm:$0xff]
  %v5593 = vld [vmem:[%s12 + $0x28] sm:$0xff]
  %v5594 = vld [vmem:[%s12 + $0x30] sm:$0xff]
  %v5595 = vld [vmem:[%s12 + $0x38] sm:$0xff]
  %v5596 = vld [vmem:[%s13] sm:$0x1]
  %v5598 = vlaneseq
  %v5599 = vshrl.u32 %v5598, 7
  %v5600 = vsub.s32 0, %v5599
  %v5601 = vrot.slane %v5596, %v5600
  %vm5603 = vcmask 523264
  %v5605 = vsel %vm5603, %v5587, 0
  %5607 = vmatprep.subr.mxu0 0.0
  %5608 = vmatpush1.msra.mxu0 %v5588
  %5609 = vmatprep.subr.mxu0 0.0
  %5610 = vmatpush1.msra.mxu0 %v5589
  %5611 = vmatprep.subr.mxu0 0.0
  %5612 = vmatpush1.msra.mxu0 %v5590
  %5613 = vmatprep.subr.mxu0 0.0
  %5614 = vmatpush1.msra.mxu0 %v5591
  %5615 = vmatprep.subr.mxu0 0.0
  %5616 = vmatpush1.msra.mxu0 %v5592
  %5617 = vmatprep.subr.mxu0 0.0
  %5618 = vmatpush1.msra.mxu0 %v5593
  %5619 = vmatprep.subr.mxu0 0.0
  %5620 = vmatpush1.msra.mxu0 %v5594
  %5621 = vmatprep.subr.mxu0 0.0
  %5622 = vmatpush1.msra.mxu0 %v5595
  %5623 = vmatprep.subr.mxu0 0.0
  %5624 = vmatpush1.msra.mxu0 0.0
  %5625 = vmatprep.subr.mxu0 0.0
  %5626 = vmatpush1.msra.mxu0 0.0
  %5627 = vmatprep.subr.mxu0 0.0
  %5628 = vmatpush1.msra.mxu0 0.0
  %5629 = vmatprep.subr.mxu0 0.0
  %5630 = vmatpush1.msra.mxu0 0.0
  %5631 = vmatprep.subr.mxu0 0.0
  %5632 = vmatpush1.msra.mxu0 0.0
  %5633 = vmatprep.subr.mxu0 0.0
  %5634 = vmatpush1.msra.mxu0 0.0
  %5635 = vmatprep.subr.mxu0 0.0
  %5636 = vmatpush1.msra.mxu0 0.0
  %5637 = vmatprep.subr.mxu0 0.0
  %5638 = vmatpush1.msra.mxu0 0.0
  %5639 = vmatprep.subr.mxu0 0.0
  %5640 = vmatpush1.msra.mxu0 0.0
  %5641 = vmatprep.subr.mxu0 0.0
  %5642 = vmatpush1.msra.mxu0 0.0
  %5643 = vmatprep.subr.mxu0 0.0
  %5644 = vmatpush1.msra.mxu0 0.0
  %5645 = vmatprep.subr.mxu0 0.0
  %5646 = vmatpush1.msra.mxu0 0.0
  %5647 = vmatprep.subr.mxu0 0.0
  %5648 = vmatpush1.msra.mxu0 0.0
  %5649 = vmatprep.subr.mxu0 0.0
  %5650 = vmatpush1.msra.mxu0 0.0
  %5651 = vmatprep.subr.mxu0 0.0
  %5652 = vmatpush1.msra.mxu0 0.0
  %5653 = vmatprep.subr.mxu0 0.0
  %5654 = vmatpush1.msra.mxu0 0.0
  %5655 = vmatprep.subr.mxu0 0.0
  %5656 = vmatpush1.msra.mxu0 0.0
  %5657 = vmatprep.subr.mxu0 0.0
  %5658 = vmatpush1.msra.mxu0 0.0
  %5659 = vmatprep.subr.mxu0 0.0
  %5660 = vmatpush1.msra.mxu0 0.0
  %5661 = vmatprep.subr.mxu0 0.0
  %5662 = vmatpush1.msra.mxu0 0.0
  %5663 = vmatprep.subr.mxu0 0.0
  %5664 = vmatpush1.msra.mxu0 0.0
  %5665 = vmatprep.subr.mxu0 0.0
  %5666 = vmatpush1.msra.mxu0 0.0
  %5667 = vmatprep.subr.mxu0 0.0
  %5668 = vmatpush1.msra.mxu0 0.0
  %5669 = vmatprep.subr.mxu0 0.0
  %5670 = vmatpush1.msra.mxu0 0.0
  %5671 = vmatprep.mubr.f32.mxu0 0.0
  %5672 = vmatmul.mubr.f32.gmra.mrb[0].mxu0 %v5605
  %v5673 = vpop.f32.mrb[0].mxu0
  %v5674 = vadd.f32 %v5601, %v5673
  %v5675 = vpop.f32.mrb[0].mxu0
  %5676 = vdwg.mxu0
  %vm5677 = vcmask 64512
  %5678 = vst.msk [vmem:[%s14] sm:$0xff] %vm5677, %v5674
  // Predicated region
  $region58: #{simple_lstm_forward.1} parent=0 // pred_check
    _
  $region59: #{simple_lstm_forward.1} parent=0 // pred_check_branch
    %5680 = sbr.rel (0) target = $region61
  $region60: #{simple_lstm_forward.1} parent=0 // pred_region
    _
  $region61: #{simple_lstm_forward.1} parent=0 // pred_fallthru
    _
  // Predicated region
  $region62: #{simple_lstm_forward.1} parent=0 // pred_check
    _
  $region63: #{simple_lstm_forward.1} parent=0 // pred_check_branch
    %5682 = sbr.rel (0) target = $region65
  $region64: #{simple_lstm_forward.1} parent=0 // pred_region
    _
  $region65: #{simple_lstm_forward.1} parent=0 // pred_fallthru
    _

</llo_original>
